<compile_context>
chip_gen: v5e
topology: v5e:2x2
jax: 0.10.0
libtpu: 0.0.40
codegen_flags: <defaults>
</compile_context>

<pallas_src>
import jax
import jax.numpy as jnp
from jax import lax
from jax.experimental import pallas as pl
from jax.experimental.pallas import tpu as pltpu

NEG_SLOPE = 0.01   # nn.LeakyReLU default
BN_EPS = 1e-5      # nn.BatchNorm1d default
K = 7              # COURSE kernel size
PAD = 1            # ConvBlock padding


def _lrelu(x):
    return jnp.where(x >= 0, x, NEG_SLOPE * x)


# ------------------------- fused forward kernel -----------------------------
def _make_fused_kernel(n, stride, cin_stem, c_stem, block_cfgs):
    """Builds the fused kernel for a static config.

    All activations are (n*stride, C) f32 values; sample s occupies rows
    [s*stride, s*stride + l_valid), the tail rows are don't-care.
    block_cfgs: tuple of (cin, cout, has_downsample, lin, l1, l2) per block.
    Ref order: x, stem(w, b), per-block params, out, per-conv slab scratches.
    """
    n_blk_refs = [6 if cfg[2] else 4 for cfg in block_cfgs]

    def im2col(slab_ref, h, lin, l_out, cin):
        # slab[s*stride + t, k*cin:(k+1)*cin] = padded_input_s[t + k, :]
        # (padding=1 on each end).  Every slab row is overwritten: head / tail
        # rows that map to the conv halo (or past l_out) are zeroed, so no
        # stale VMEM is ever read.
        for s_idx in range(n):
            base = s_idx * stride
            for k in range(K):
                s = k - PAD
                src_lo = max(0, s)
                src_hi = min(lin, s + l_out)
                rows = src_hi - src_lo
                lo = src_lo - s                      # leading halo-zero rows
                col = slice(k * cin, (k + 1) * cin)
                if lo > 0:
                    slab_ref[base:base + lo, col] = (
                        jnp.zeros((lo, cin), jnp.float32))
                slab_ref[base + lo:base + lo + rows, col] = (
                    h[base + src_lo:base + src_hi, :])
                tail = stride - (lo + rows)
                if tail > 0:
                    slab_ref[base + lo + rows:base + stride, col] = (
                        jnp.zeros((tail, cin), jnp.float32))

    def kernel(*refs):
        idx = 0
        x_ref = refs[idx]; idx += 1
        w0_ref, b0_ref = refs[idx:idx + 2]; idx += 2
        blk_params = []
        for nrefs in n_blk_refs:
            blk_params.append(refs[idx:idx + nrefs]); idx += nrefs
        o_ref = refs[idx]; idx += 1
        slabs = refs[idx:]

        # ----- stem: 1x1 conv (BN scale folded into weight) + bias + LReLU --
        x = x_ref[...]                                   # (n*stride, cin_stem)
        if cin_stem == 1:
            # Cin==1 1x1 conv is an outer product -> pure VPU broadcast mul.
            h = x * w0_ref[...]                          # (M,1)*(1,C0) -> (M,C0)
        else:
            h = jnp.dot(x, w0_ref[...], preferred_element_type=jnp.float32)
        h = _lrelu(h + b0_ref[...])                      # (n*stride, c_stem)

        # ------------------------------ blocks ------------------------------
        for bi, (cin, cout, has_ds, lin, l1, l2) in enumerate(block_cfgs):
            p = blk_params[bi]
            w1_ref, b1_ref, w2_ref, b2_ref = p[:4]
            slab1, slab2 = slabs[2 * bi], slabs[2 * bi + 1]

            # conv1: im2col slab -> one matmul -> bias -> LReLU
            im2col(slab1, h, lin, l1, cin)
            h1 = jnp.dot(slab1[...], w1_ref[...],
                         preferred_element_type=jnp.float32)
            h1 = _lrelu(h1 + b1_ref[...])                # valid rows: l1

            # conv2: same -> bias (no LReLU before residual add)
            im2col(slab2, h1, l1, l2, cout)
            out = jnp.dot(slab2[...], w2_ref[...],
                          preferred_element_type=jnp.float32)
            out = out + b2_ref[...]                      # valid rows: l2

            # Residual: COURSE crop = first l2 rows of the block input, which
            # are row-aligned with `out` (same per-sample stride), so the add
            # is a plain element-wise op.
            if has_ds:
                wd_ref, bd_ref = p[4:6]
                res = jnp.dot(h, wd_ref[...],
                              preferred_element_type=jnp.float32)
                res = res + bd_ref[...]
            else:
                res = h                                  # identity (cin == cout)
            h = _lrelu(out + res)                        # valid rows: l2

        l_f = block_cfgs[-1][5]
        for s_idx in range(n):
            o_ref[s_idx] = h[s_idx * stride:s_idx * stride + l_f, :].astype(
                o_ref.dtype)

    return kernel


# --------------------------------- wrapper -----------------------------------
def _const_map(ndim):
    zeros = (0,) * ndim
    return lambda i: zeros


def msfe_scale_forward(x_ncl, params):
    """Fused MSFEScale forward: one pallas_call, one grid step, whole batch."""
    x_nlc = jnp.transpose(x_ncl, (0, 2, 1))             # NCL -> NLC
    N, L, cin_stem = x_nlc.shape
    c_stem = params["stem_w"].shape[0]
    x2 = x_nlc.reshape(N * L, cin_stem)                 # batch folded into M

    inputs = []
    in_specs = []

    def add_input(arr):
        inputs.append(arr)
        in_specs.append(pl.BlockSpec(arr.shape, _const_map(arr.ndim)))

    add_input(x2)

    # Stem: fold BN scale into the 1x1 conv weight; keep only the bias.
    w0 = (jnp.transpose(params["stem_w"][:, :, 0], (1, 0))
          * params["stem_s"][None, :])
    add_input(w0)                                        # (cin, C0)
    add_input(params["stem_b"][None, :])                 # (1, C0)

    def stack_w(w, s):
        # PyTorch (cout, cin, K) -> im2col-stacked (K*cin, cout), BN scale
        # folded along cout.
        kcw = jnp.transpose(w, (2, 1, 0)) * s[None, None, :]
        return kcw.reshape(w.shape[2] * w.shape[1], w.shape[0])

    block_cfgs = []
    scratch_shapes = []
    lin, cin = L, c_stem
    for blk in params["blocks"]:
        cout = blk["w1"].shape[0]
        has_ds = blk["wd"] is not None
        l1 = lin + 2 * PAD - K + 1                       # conv1 output length
        l2 = l1 + 2 * PAD - K + 1                        # conv2 output length
        block_cfgs.append((cin, cout, has_ds, lin, l1, l2))

        add_input(stack_w(blk["w1"], blk["s1"]))         # (K*cin, cout)
        add_input(blk["b1"][None, :])
        add_input(stack_w(blk["w2"], blk["s2"]))         # (K*cout, cout)
        add_input(blk["b2"][None, :])
        if has_ds:
            wd = (jnp.transpose(blk["wd"][:, :, 0], (1, 0))
                  * blk["sd"][None, :])
            add_input(wd)                                # (cin, cout)
            add_input(blk["bd"][None, :])
        scratch_shapes.append(pltpu.VMEM((N * L, K * cin), jnp.float32))
        scratch_shapes.append(pltpu.VMEM((N * L, K * cout), jnp.float32))
        lin, cin = l2, cout

    kernel = _make_fused_kernel(N, L, cin_stem, c_stem, tuple(block_cfgs))
    out_nlc = pl.pallas_call(
        kernel,
        out_shape=jax.ShapeDtypeStruct((N, lin, cin), jnp.float32),
        grid_spec=pltpu.PrefetchScalarGridSpec(
            num_scalar_prefetch=0,
            grid=(1,),                                   # whole batch, one step
            in_specs=in_specs,
            out_specs=pl.BlockSpec((N, lin, cin), _const_map(3)),
            scratch_shapes=scratch_shapes,
        ),
        compiler_params=pltpu.CompilerParams(
            dimension_semantics=("arbitrary",)),
    )(*inputs)
    return jnp.transpose(out_nlc, (0, 2, 1))             # NLC -> NCL


# ------------------------- parameters (deterministic) -----------------------
def init_params(key, in_ch=1, out_main_ch=32, filters=(32, 64, 128)):
    keys = iter(jax.random.split(key, 64))

    def conv_w(cout, cin, k):
        return 0.1 * jax.random.normal(next(keys), (cout, cin, k), jnp.float32)

    def bn(c):
        gamma = 1.0 + 0.1 * jax.random.normal(next(keys), (c,), jnp.float32)
        beta = 0.1 * jax.random.normal(next(keys), (c,), jnp.float32)
        mean = 0.1 * jax.random.normal(next(keys), (c,), jnp.float32)
        var = 1.0 + 0.1 * jax.random.uniform(next(keys), (c,), jnp.float32)
        scale = gamma / jnp.sqrt(var + BN_EPS)
        bias = beta - mean * scale
        return scale, bias

    stem_w = conv_w(out_main_ch, in_ch, 1)               # PyTorch (Cout, Cin, K)
    stem_s, stem_b = bn(out_main_ch)

    blocks = []
    inplanes = out_main_ch
    for f in filters:
        w1 = conv_w(f, inplanes, K)
        s1, b1 = bn(f)
        w2 = conv_w(f, f, K)
        s2, b2 = bn(f)
        if inplanes != f:                                # downsample branch
            wd = conv_w(f, inplanes, 1)
            sd, bd = bn(f)
        else:                                            # identity residual
            wd = sd = bd = None
        blocks.append(dict(w1=w1, s1=s1, b1=b1, w2=w2, s2=s2, b2=b2,
                           wd=wd, sd=sd, bd=bd))
        inplanes = f
    return dict(stem_w=stem_w, stem_s=stem_s, stem_b=stem_b, blocks=blocks)


# --------------------------- pure-JAX reference -----------------------------
def _conv1d_ncl(x, w, padding):
    return lax.conv_general_dilated(
        x, w, window_strides=(1,), padding=[(padding, padding)],
        dimension_numbers=("NCH", "OIH", "NCH"))


def ref_forward(x_ncl, params):
    x = _conv1d_ncl(x_ncl, params["stem_w"], 0)
    x = x * params["stem_s"][None, :, None] + params["stem_b"][None, :, None]
    x = _lrelu(x)
    for blk in params["blocks"]:
        residual = x
        out = _conv1d_ncl(x, blk["w1"], PAD)
        out = out * blk["s1"][None, :, None] + blk["b1"][None, :, None]
        out = _lrelu(out)
        out = _conv1d_ncl(out, blk["w2"], PAD)
        out = out * blk["s2"][None, :, None] + blk["b2"][None, :, None]
        if blk["wd"] is not None:
            residual = _conv1d_ncl(x, blk["wd"], 0)
            residual = (residual * blk["sd"][None, :, None]
                        + blk["bd"][None, :, None])
        d = residual.shape[2] - out.shape[2]             # COURSE residual crop
        out = residual[:, :, 0:-d] + out
        x = _lrelu(out)
    return x


# ----------------------------------- main ------------------------------------
if __name__ == "__main__":
    key = jax.random.PRNGKey(0)
    k_param, k_x = jax.random.split(key)

    N, Cin, L = 2, 1, 64                                 # x_in: (N, in_ch, L) NCL
    params = init_params(k_param, in_ch=Cin, out_main_ch=32,
                         filters=(32, 64, 128))
    x_ncl = jax.random.normal(k_x, (N, Cin, L), jnp.float32)

    out = msfe_scale_forward(x_ncl, params)
    out = jax.block_until_ready(out)

    ref = ref_forward(x_ncl, params)
    assert out.shape == ref.shape == (N, 128, L - 24), (out.shape, ref.shape)
    rel_err = jnp.max(jnp.abs(out - ref)) / (jnp.max(jnp.abs(ref)) + 1e-6)
    assert float(rel_err) < 1e-3, f"mismatch: rel_err={float(rel_err)}"

    print("KERNEL_OK")
</pallas_src>

<mosaic_0001>
module attributes {stable_mosaic.version = 11 : i64} {
  func.func @kernel(%arg0: i32, %arg1: memref<128x1xf32, #tpu.memory_space<vmem>>, %arg2: memref<1x32xf32, #tpu.memory_space<vmem>>, %arg3: memref<1x32xf32, #tpu.memory_space<vmem>>, %arg4: memref<224x32xf32, #tpu.memory_space<vmem>>, %arg5: memref<1x32xf32, #tpu.memory_space<vmem>>, %arg6: memref<224x32xf32, #tpu.memory_space<vmem>>, %arg7: memref<1x32xf32, #tpu.memory_space<vmem>>, %arg8: memref<224x64xf32, #tpu.memory_space<vmem>>, %arg9: memref<1x64xf32, #tpu.memory_space<vmem>>, %arg10: memref<448x64xf32, #tpu.memory_space<vmem>>, %arg11: memref<1x64xf32, #tpu.memory_space<vmem>>, %arg12: memref<32x64xf32, #tpu.memory_space<vmem>>, %arg13: memref<1x64xf32, #tpu.memory_space<vmem>>, %arg14: memref<448x128xf32, #tpu.memory_space<vmem>>, %arg15: memref<1x128xf32, #tpu.memory_space<vmem>>, %arg16: memref<896x128xf32, #tpu.memory_space<vmem>>, %arg17: memref<1x128xf32, #tpu.memory_space<vmem>>, %arg18: memref<64x128xf32, #tpu.memory_space<vmem>>, %arg19: memref<1x128xf32, #tpu.memory_space<vmem>>, %arg20: memref<2x40x128xf32, #tpu.memory_space<vmem>>, %arg21: memref<128x224xf32, #tpu.memory_space<vmem>>, %arg22: memref<128x224xf32, #tpu.memory_space<vmem>>, %arg23: memref<128x224xf32, #tpu.memory_space<vmem>>, %arg24: memref<128x448xf32, #tpu.memory_space<vmem>>, %arg25: memref<128x448xf32, #tpu.memory_space<vmem>>, %arg26: memref<128x896xf32, #tpu.memory_space<vmem>>) attributes {dimension_semantics = [#tpu.dimension_semantics<arbitrary>], iteration_bounds = array<i64: 1>, scalar_prefetch = 0 : i64, scratch_operands = 6 : i64, tpu.core_type = #tpu.core_type<tc>, window_params = [{pipeline_mode = #tpu.pipeline_mode<synchronous>, transform_indices = @transform_0, window_bounds = array<i64: 128, 1>}, {pipeline_mode = #tpu.pipeline_mode<synchronous>, transform_indices = @transform_1, window_bounds = array<i64: 1, 32>}, {pipeline_mode = #tpu.pipeline_mode<synchronous>, transform_indices = @transform_2, window_bounds = array<i64: 1, 32>}, {pipeline_mode = #tpu.pipeline_mode<synchronous>, transform_indices = @transform_3, window_bounds = array<i64: 224, 32>}, {pipeline_mode = #tpu.pipeline_mode<synchronous>, transform_indices = @transform_4, window_bounds = array<i64: 1, 32>}, {pipeline_mode = #tpu.pipeline_mode<synchronous>, transform_indices = @transform_5, window_bounds = array<i64: 224, 32>}, {pipeline_mode = #tpu.pipeline_mode<synchronous>, transform_indices = @transform_6, window_bounds = array<i64: 1, 32>}, {pipeline_mode = #tpu.pipeline_mode<synchronous>, transform_indices = @transform_7, window_bounds = array<i64: 224, 64>}, {pipeline_mode = #tpu.pipeline_mode<synchronous>, transform_indices = @transform_8, window_bounds = array<i64: 1, 64>}, {pipeline_mode = #tpu.pipeline_mode<synchronous>, transform_indices = @transform_9, window_bounds = array<i64: 448, 64>}, {pipeline_mode = #tpu.pipeline_mode<synchronous>, transform_indices = @transform_10, window_bounds = array<i64: 1, 64>}, {pipeline_mode = #tpu.pipeline_mode<synchronous>, transform_indices = @transform_11, window_bounds = array<i64: 32, 64>}, {pipeline_mode = #tpu.pipeline_mode<synchronous>, transform_indices = @transform_12, window_bounds = array<i64: 1, 64>}, {pipeline_mode = #tpu.pipeline_mode<synchronous>, transform_indices = @transform_13, window_bounds = array<i64: 448, 128>}, {pipeline_mode = #tpu.pipeline_mode<synchronous>, transform_indices = @transform_14, window_bounds = array<i64: 1, 128>}, {pipeline_mode = #tpu.pipeline_mode<synchronous>, transform_indices = @transform_15, window_bounds = array<i64: 896, 128>}, {pipeline_mode = #tpu.pipeline_mode<synchronous>, transform_indices = @transform_16, window_bounds = array<i64: 1, 128>}, {pipeline_mode = #tpu.pipeline_mode<synchronous>, transform_indices = @transform_17, window_bounds = array<i64: 64, 128>}, {pipeline_mode = #tpu.pipeline_mode<synchronous>, transform_indices = @transform_18, window_bounds = array<i64: 1, 128>}, {pipeline_mode = #tpu.pipeline_mode<synchronous>, transform_indices = @transform_19, window_bounds = array<i64: 2, 40, 128>}]} {
    %c0 = arith.constant 0 : index
    %c0_0 = arith.constant 0 : index
    %0 = vector.load %arg1[%c0, %c0_0] : memref<128x1xf32, #tpu.memory_space<vmem>>, vector<128x1xf32>
    %c0_1 = arith.constant 0 : index
    %c0_2 = arith.constant 0 : index
    %1 = vector.load %arg2[%c0_1, %c0_2] : memref<1x32xf32, #tpu.memory_space<vmem>>, vector<1x32xf32>
    %2 = vector.broadcast %0 : vector<128x1xf32> to vector<128x32xf32>
    %3 = vector.broadcast %1 : vector<1x32xf32> to vector<128x32xf32>
    %4 = arith.mulf %2, %3 : vector<128x32xf32>
    %c0_3 = arith.constant 0 : index
    %c0_4 = arith.constant 0 : index
    %5 = vector.load %arg3[%c0_3, %c0_4] : memref<1x32xf32, #tpu.memory_space<vmem>>, vector<1x32xf32>
    %6 = vector.broadcast %5 : vector<1x32xf32> to vector<128x32xf32>
    %7 = arith.addf %4, %6 : vector<128x32xf32>
    %cst = arith.constant 0.000000e+00 : f32
    %8 = vector.broadcast %cst : f32 to vector<128x32xf32>
    %9 = arith.cmpf oge, %7, %8 : vector<128x32xf32>
    %cst_5 = arith.constant 0.00999999977 : f32
    %10 = vector.broadcast %cst_5 : f32 to vector<128x32xf32>
    %11 = arith.mulf %10, %7 : vector<128x32xf32>
    %12 = arith.select %9, %7, %11 : vector<128x32xi1>, vector<128x32xf32>
    %cst_6 = arith.constant 0.000000e+00 : f32
    %13 = vector.broadcast %cst_6 : f32 to vector<1x32xf32>
    %c0_7 = arith.constant 0 : index
    %c0_8 = arith.constant 0 : index
    %14 = vector.load %arg21[%c0_7, %c0_8] : memref<128x224xf32, #tpu.memory_space<vmem>>, vector<1x32xf32>
    tpu.vector_store %arg21[%c0_7, %c0_8], %13 {strides = array<i32>} : memref<128x224xf32, #tpu.memory_space<vmem>>, vector<1x32xf32>,
    %15 = vector.extract_strided_slice %12 {offsets = [0, 0], sizes = [59, 32], strides = [1, 1]} : vector<128x32xf32> to vector<59x32xf32>
    %c1 = arith.constant 1 : index
    %c0_9 = arith.constant 0 : index
    %16 = vector.load %arg21[%c1, %c0_9] : memref<128x224xf32, #tpu.memory_space<vmem>>, vector<59x32xf32>
    tpu.vector_store %arg21[%c1, %c0_9], %15 {strides = array<i32>} : memref<128x224xf32, #tpu.memory_space<vmem>>, vector<59x32xf32>,
    %cst_10 = arith.constant 0.000000e+00 : f32
    %17 = vector.broadcast %cst_10 : f32 to vector<4x32xf32>
    %c60 = arith.constant 60 : index
    %c0_11 = arith.constant 0 : index
    %18 = vector.load %arg21[%c60, %c0_11] : memref<128x224xf32, #tpu.memory_space<vmem>>, vector<4x32xf32>
    tpu.vector_store %arg21[%c60, %c0_11], %17 {strides = array<i32>} : memref<128x224xf32, #tpu.memory_space<vmem>>, vector<4x32xf32>,
    %19 = vector.extract_strided_slice %12 {offsets = [0, 0], sizes = [60, 32], strides = [1, 1]} : vector<128x32xf32> to vector<60x32xf32>
    %c0_12 = arith.constant 0 : index
    %c32 = arith.constant 32 : index
    %20 = vector.load %arg21[%c0_12, %c32] : memref<128x224xf32, #tpu.memory_space<vmem>>, vector<60x32xf32>
    tpu.vector_store %arg21[%c0_12, %c32], %19 {strides = array<i32>} : memref<128x224xf32, #tpu.memory_space<vmem>>, vector<60x32xf32>,
    %cst_13 = arith.constant 0.000000e+00 : f32
    %21 = vector.broadcast %cst_13 : f32 to vector<4x32xf32>
    %c60_14 = arith.constant 60 : index
    %c32_15 = arith.constant 32 : index
    %22 = vector.load %arg21[%c60_14, %c32_15] : memref<128x224xf32, #tpu.memory_space<vmem>>, vector<4x32xf32>
    tpu.vector_store %arg21[%c60_14, %c32_15], %21 {strides = array<i32>} : memref<128x224xf32, #tpu.memory_space<vmem>>, vector<4x32xf32>,
    %23 = vector.extract_strided_slice %12 {offsets = [1, 0], sizes = [60, 32], strides = [1, 1]} : vector<128x32xf32> to vector<60x32xf32>
    %c0_16 = arith.constant 0 : index
    %c64 = arith.constant 64 : index
    %24 = vector.load %arg21[%c0_16, %c64] : memref<128x224xf32, #tpu.memory_space<vmem>>, vector<60x32xf32>
    tpu.vector_store %arg21[%c0_16, %c64], %23 {strides = array<i32>} : memref<128x224xf32, #tpu.memory_space<vmem>>, vector<60x32xf32>,
    %cst_17 = arith.constant 0.000000e+00 : f32
    %25 = vector.broadcast %cst_17 : f32 to vector<4x32xf32>
    %c60_18 = arith.constant 60 : index
    %c64_19 = arith.constant 64 : index
    %26 = vector.load %arg21[%c60_18, %c64_19] : memref<128x224xf32, #tpu.memory_space<vmem>>, vector<4x32xf32>
    tpu.vector_store %arg21[%c60_18, %c64_19], %25 {strides = array<i32>} : memref<128x224xf32, #tpu.memory_space<vmem>>, vector<4x32xf32>,
    %27 = vector.extract_strided_slice %12 {offsets = [2, 0], sizes = [60, 32], strides = [1, 1]} : vector<128x32xf32> to vector<60x32xf32>
    %c0_20 = arith.constant 0 : index
    %c96 = arith.constant 96 : index
    %28 = vector.load %arg21[%c0_20, %c96] : memref<128x224xf32, #tpu.memory_space<vmem>>, vector<60x32xf32>
    tpu.vector_store %arg21[%c0_20, %c96], %27 {strides = array<i32>} : memref<128x224xf32, #tpu.memory_space<vmem>>, vector<60x32xf32>,
    %cst_21 = arith.constant 0.000000e+00 : f32
    %29 = vector.broadcast %cst_21 : f32 to vector<4x32xf32>
    %c60_22 = arith.constant 60 : index
    %c96_23 = arith.constant 96 : index
    %30 = vector.load %arg21[%c60_22, %c96_23] : memref<128x224xf32, #tpu.memory_space<vmem>>, vector<4x32xf32>
    tpu.vector_store %arg21[%c60_22, %c96_23], %29 {strides = array<i32>} : memref<128x224xf32, #tpu.memory_space<vmem>>, vector<4x32xf32>,
    %31 = vector.extract_strided_slice %12 {offsets = [3, 0], sizes = [60, 32], strides = [1, 1]} : vector<128x32xf32> to vector<60x32xf32>
    %c0_24 = arith.constant 0 : index
    %c128 = arith.constant 128 : index
    %32 = vector.load %arg21[%c0_24, %c128] : memref<128x224xf32, #tpu.memory_space<vmem>>, vector<60x32xf32>
    tpu.vector_store %arg21[%c0_24, %c128], %31 {strides = array<i32>} : memref<128x224xf32, #tpu.memory_space<vmem>>, vector<60x32xf32>,
    %cst_25 = arith.constant 0.000000e+00 : f32
    %33 = vector.broadcast %cst_25 : f32 to vector<4x32xf32>
    %c60_26 = arith.constant 60 : index
    %c128_27 = arith.constant 128 : index
    %34 = vector.load %arg21[%c60_26, %c128_27] : memref<128x224xf32, #tpu.memory_space<vmem>>, vector<4x32xf32>
    tpu.vector_store %arg21[%c60_26, %c128_27], %33 {strides = array<i32>} : memref<128x224xf32, #tpu.memory_space<vmem>>, vector<4x32xf32>,
    %35 = vector.extract_strided_slice %12 {offsets = [4, 0], sizes = [60, 32], strides = [1, 1]} : vector<128x32xf32> to vector<60x32xf32>
    %c0_28 = arith.constant 0 : index
    %c160 = arith.constant 160 : index
    %36 = vector.load %arg21[%c0_28, %c160] : memref<128x224xf32, #tpu.memory_space<vmem>>, vector<60x32xf32>
    tpu.vector_store %arg21[%c0_28, %c160], %35 {strides = array<i32>} : memref<128x224xf32, #tpu.memory_space<vmem>>, vector<60x32xf32>,
    %cst_29 = arith.constant 0.000000e+00 : f32
    %37 = vector.broadcast %cst_29 : f32 to vector<4x32xf32>
    %c60_30 = arith.constant 60 : index
    %c160_31 = arith.constant 160 : index
    %38 = vector.load %arg21[%c60_30, %c160_31] : memref<128x224xf32, #tpu.memory_space<vmem>>, vector<4x32xf32>
    tpu.vector_store %arg21[%c60_30, %c160_31], %37 {strides = array<i32>} : memref<128x224xf32, #tpu.memory_space<vmem>>, vector<4x32xf32>,
    %39 = vector.extract_strided_slice %12 {offsets = [5, 0], sizes = [59, 32], strides = [1, 1]} : vector<128x32xf32> to vector<59x32xf32>
    %c0_32 = arith.constant 0 : index
    %c192 = arith.constant 192 : index
    %40 = vector.load %arg21[%c0_32, %c192] : memref<128x224xf32, #tpu.memory_space<vmem>>, vector<59x32xf32>
    tpu.vector_store %arg21[%c0_32, %c192], %39 {strides = array<i32>} : memref<128x224xf32, #tpu.memory_space<vmem>>, vector<59x32xf32>,
    %cst_33 = arith.constant 0.000000e+00 : f32
    %41 = vector.broadcast %cst_33 : f32 to vector<5x32xf32>
    %c59 = arith.constant 59 : index
    %c192_34 = arith.constant 192 : index
    %42 = vector.load %arg21[%c59, %c192_34] : memref<128x224xf32, #tpu.memory_space<vmem>>, vector<5x32xf32>
    tpu.vector_store %arg21[%c59, %c192_34], %41 {strides = array<i32>} : memref<128x224xf32, #tpu.memory_space<vmem>>, vector<5x32xf32>,
    %cst_35 = arith.constant 0.000000e+00 : f32
    %43 = vector.broadcast %cst_35 : f32 to vector<1x32xf32>
    %c64_36 = arith.constant 64 : index
    %c0_37 = arith.constant 0 : index
    %44 = vector.load %arg21[%c64_36, %c0_37] : memref<128x224xf32, #tpu.memory_space<vmem>>, vector<1x32xf32>
    tpu.vector_store %arg21[%c64_36, %c0_37], %43 {strides = array<i32>} : memref<128x224xf32, #tpu.memory_space<vmem>>, vector<1x32xf32>,
    %45 = vector.extract_strided_slice %12 {offsets = [64, 0], sizes = [59, 32], strides = [1, 1]} : vector<128x32xf32> to vector<59x32xf32>
    %c65 = arith.constant 65 : index
    %c0_38 = arith.constant 0 : index
    %46 = vector.load %arg21[%c65, %c0_38] : memref<128x224xf32, #tpu.memory_space<vmem>>, vector<59x32xf32>
    tpu.vector_store %arg21[%c65, %c0_38], %45 {strides = array<i32>} : memref<128x224xf32, #tpu.memory_space<vmem>>, vector<59x32xf32>,
    %cst_39 = arith.constant 0.000000e+00 : f32
    %47 = vector.broadcast %cst_39 : f32 to vector<4x32xf32>
    %c124 = arith.constant 124 : index
    %c0_40 = arith.constant 0 : index
    %48 = vector.load %arg21[%c124, %c0_40] : memref<128x224xf32, #tpu.memory_space<vmem>>, vector<4x32xf32>
    tpu.vector_store %arg21[%c124, %c0_40], %47 {strides = array<i32>} : memref<128x224xf32, #tpu.memory_space<vmem>>, vector<4x32xf32>,
    %49 = vector.extract_strided_slice %12 {offsets = [64, 0], sizes = [60, 32], strides = [1, 1]} : vector<128x32xf32> to vector<60x32xf32>
    %c64_41 = arith.constant 64 : index
    %c32_42 = arith.constant 32 : index
    %50 = vector.load %arg21[%c64_41, %c32_42] : memref<128x224xf32, #tpu.memory_space<vmem>>, vector<60x32xf32>
    tpu.vector_store %arg21[%c64_41, %c32_42], %49 {strides = array<i32>} : memref<128x224xf32, #tpu.memory_space<vmem>>, vector<60x32xf32>,
    %cst_43 = arith.constant 0.000000e+00 : f32
    %51 = vector.broadcast %cst_43 : f32 to vector<4x32xf32>
    %c124_44 = arith.constant 124 : index
    %c32_45 = arith.constant 32 : index
    %52 = vector.load %arg21[%c124_44, %c32_45] : memref<128x224xf32, #tpu.memory_space<vmem>>, vector<4x32xf32>
    tpu.vector_store %arg21[%c124_44, %c32_45], %51 {strides = array<i32>} : memref<128x224xf32, #tpu.memory_space<vmem>>, vector<4x32xf32>,
    %53 = vector.extract_strided_slice %12 {offsets = [65, 0], sizes = [60, 32], strides = [1, 1]} : vector<128x32xf32> to vector<60x32xf32>
    %c64_46 = arith.constant 64 : index
    %c64_47 = arith.constant 64 : index
    %54 = vector.load %arg21[%c64_46, %c64_47] : memref<128x224xf32, #tpu.memory_space<vmem>>, vector<60x32xf32>
    tpu.vector_store %arg21[%c64_46, %c64_47], %53 {strides = array<i32>} : memref<128x224xf32, #tpu.memory_space<vmem>>, vector<60x32xf32>,
    %cst_48 = arith.constant 0.000000e+00 : f32
    %55 = vector.broadcast %cst_48 : f32 to vector<4x32xf32>
    %c124_49 = arith.constant 124 : index
    %c64_50 = arith.constant 64 : index
    %56 = vector.load %arg21[%c124_49, %c64_50] : memref<128x224xf32, #tpu.memory_space<vmem>>, vector<4x32xf32>
    tpu.vector_store %arg21[%c124_49, %c64_50], %55 {strides = array<i32>} : memref<128x224xf32, #tpu.memory_space<vmem>>, vector<4x32xf32>,
    %57 = vector.extract_strided_slice %12 {offsets = [66, 0], sizes = [60, 32], strides = [1, 1]} : vector<128x32xf32> to vector<60x32xf32>
    %c64_51 = arith.constant 64 : index
    %c96_52 = arith.constant 96 : index
    %58 = vector.load %arg21[%c64_51, %c96_52] : memref<128x224xf32, #tpu.memory_space<vmem>>, vector<60x32xf32>
    tpu.vector_store %arg21[%c64_51, %c96_52], %57 {strides = array<i32>} : memref<128x224xf32, #tpu.memory_space<vmem>>, vector<60x32xf32>,
    %cst_53 = arith.constant 0.000000e+00 : f32
    %59 = vector.broadcast %cst_53 : f32 to vector<4x32xf32>
    %c124_54 = arith.constant 124 : index
    %c96_55 = arith.constant 96 : index
    %60 = vector.load %arg21[%c124_54, %c96_55] : memref<128x224xf32, #tpu.memory_space<vmem>>, vector<4x32xf32>
    tpu.vector_store %arg21[%c124_54, %c96_55], %59 {strides = array<i32>} : memref<128x224xf32, #tpu.memory_space<vmem>>, vector<4x32xf32>,
    %61 = vector.extract_strided_slice %12 {offsets = [67, 0], sizes = [60, 32], strides = [1, 1]} : vector<128x32xf32> to vector<60x32xf32>
    %c64_56 = arith.constant 64 : index
    %c128_57 = arith.constant 128 : index
    %62 = vector.load %arg21[%c64_56, %c128_57] : memref<128x224xf32, #tpu.memory_space<vmem>>, vector<60x32xf32>
    tpu.vector_store %arg21[%c64_56, %c128_57], %61 {strides = array<i32>} : memref<128x224xf32, #tpu.memory_space<vmem>>, vector<60x32xf32>,
    %cst_58 = arith.constant 0.000000e+00 : f32
    %63 = vector.broadcast %cst_58 : f32 to vector<4x32xf32>
    %c124_59 = arith.constant 124 : index
    %c128_60 = arith.constant 128 : index
    %64 = vector.load %arg21[%c124_59, %c128_60] : memref<128x224xf32, #tpu.memory_space<vmem>>, vector<4x32xf32>
    tpu.vector_store %arg21[%c124_59, %c128_60], %63 {strides = array<i32>} : memref<128x224xf32, #tpu.memory_space<vmem>>, vector<4x32xf32>,
    %65 = vector.extract_strided_slice %12 {offsets = [68, 0], sizes = [60, 32], strides = [1, 1]} : vector<128x32xf32> to vector<60x32xf32>
    %c64_61 = arith.constant 64 : index
    %c160_62 = arith.constant 160 : index
    %66 = vector.load %arg21[%c64_61, %c160_62] : memref<128x224xf32, #tpu.memory_space<vmem>>, vector<60x32xf32>
    tpu.vector_store %arg21[%c64_61, %c160_62], %65 {strides = array<i32>} : memref<128x224xf32, #tpu.memory_space<vmem>>, vector<60x32xf32>,
    %cst_63 = arith.constant 0.000000e+00 : f32
    %67 = vector.broadcast %cst_63 : f32 to vector<4x32xf32>
    %c124_64 = arith.constant 124 : index
    %c160_65 = arith.constant 160 : index
    %68 = vector.load %arg21[%c124_64, %c160_65] : memref<128x224xf32, #tpu.memory_space<vmem>>, vector<4x32xf32>
    tpu.vector_store %arg21[%c124_64, %c160_65], %67 {strides = array<i32>} : memref<128x224xf32, #tpu.memory_space<vmem>>, vector<4x32xf32>,
    %69 = vector.extract_strided_slice %12 {offsets = [69, 0], sizes = [59, 32], strides = [1, 1]} : vector<128x32xf32> to vector<59x32xf32>
    %c64_66 = arith.constant 64 : index
    %c192_67 = arith.constant 192 : index
    %70 = vector.load %arg21[%c64_66, %c192_67] : memref<128x224xf32, #tpu.memory_space<vmem>>, vector<59x32xf32>
    tpu.vector_store %arg21[%c64_66, %c192_67], %69 {strides = array<i32>} : memref<128x224xf32, #tpu.memory_space<vmem>>, vector<59x32xf32>,
    %cst_68 = arith.constant 0.000000e+00 : f32
    %71 = vector.broadcast %cst_68 : f32 to vector<5x32xf32>
    %c123 = arith.constant 123 : index
    %c192_69 = arith.constant 192 : index
    %72 = vector.load %arg21[%c123, %c192_69] : memref<128x224xf32, #tpu.memory_space<vmem>>, vector<5x32xf32>
    tpu.vector_store %arg21[%c123, %c192_69], %71 {strides = array<i32>} : memref<128x224xf32, #tpu.memory_space<vmem>>, vector<5x32xf32>,
    %c0_70 = arith.constant 0 : index
    %c0_71 = arith.constant 0 : index
    %73 = vector.load %arg21[%c0_70, %c0_71] : memref<128x224xf32, #tpu.memory_space<vmem>>, vector<128x224xf32>
    %c0_72 = arith.constant 0 : index
    %c0_73 = arith.constant 0 : index
    %74 = vector.load %arg4[%c0_72, %c0_73] : memref<224x32xf32, #tpu.memory_space<vmem>>, vector<224x32xf32>
    %cst_74 = arith.constant dense<0.000000e+00> : vector<128x32xf32>
    %75 = tpu.matmul %73, %74, %cst_74 {dimension_numbers = #tpu.dot_dimension_numbers<[1], [0], [0], [1], [0, 0, 1, 1], [], []>} : vector<128x224xf32>, vector<224x32xf32>, vector<128x32xf32> -> vector<128x32xf32>
    %c0_75 = arith.constant 0 : index
    %c0_76 = arith.constant 0 : index
    %76 = vector.load %arg5[%c0_75, %c0_76] : memref<1x32xf32, #tpu.memory_space<vmem>>, vector<1x32xf32>
    %77 = vector.broadcast %76 : vector<1x32xf32> to vector<128x32xf32>
    %78 = arith.addf %75, %77 : vector<128x32xf32>
    %cst_77 = arith.constant 0.000000e+00 : f32
    %79 = vector.broadcast %cst_77 : f32 to vector<128x32xf32>
    %80 = arith.cmpf oge, %78, %79 : vector<128x32xf32>
    %cst_78 = arith.constant 0.00999999977 : f32
    %81 = vector.broadcast %cst_78 : f32 to vector<128x32xf32>
    %82 = arith.mulf %81, %78 : vector<128x32xf32>
    %83 = arith.select %80, %78, %82 : vector<128x32xi1>, vector<128x32xf32>
    %cst_79 = arith.constant 0.000000e+00 : f32
    %84 = vector.broadcast %cst_79 : f32 to vector<1x32xf32>
    %c0_80 = arith.constant 0 : index
    %c0_81 = arith.constant 0 : index
    %85 = vector.load %arg22[%c0_80, %c0_81] : memref<128x224xf32, #tpu.memory_space<vmem>>, vector<1x32xf32>
    tpu.vector_store %arg22[%c0_80, %c0_81], %84 {strides = array<i32>} : memref<128x224xf32, #tpu.memory_space<vmem>>, vector<1x32xf32>,
    %86 = vector.extract_strided_slice %83 {offsets = [0, 0], sizes = [55, 32], strides = [1, 1]} : vector<128x32xf32> to vector<55x32xf32>
    %c1_82 = arith.constant 1 : index
    %c0_83 = arith.constant 0 : index
    %87 = vector.load %arg22[%c1_82, %c0_83] : memref<128x224xf32, #tpu.memory_space<vmem>>, vector<55x32xf32>
    tpu.vector_store %arg22[%c1_82, %c0_83], %86 {strides = array<i32>} : memref<128x224xf32, #tpu.memory_space<vmem>>, vector<55x32xf32>,
    %cst_84 = arith.constant 0.000000e+00 : f32
    %88 = vector.broadcast %cst_84 : f32 to vector<8x32xf32>
    %c56 = arith.constant 56 : index
    %c0_85 = arith.constant 0 : index
    %89 = vector.load %arg22[%c56, %c0_85] : memref<128x224xf32, #tpu.memory_space<vmem>>, vector<8x32xf32>
    tpu.vector_store %arg22[%c56, %c0_85], %88 {strides = array<i32>} : memref<128x224xf32, #tpu.memory_space<vmem>>, vector<8x32xf32>,
    %90 = vector.extract_strided_slice %83 {offsets = [0, 0], sizes = [56, 32], strides = [1, 1]} : vector<128x32xf32> to vector<56x32xf32>
    %c0_86 = arith.constant 0 : index
    %c32_87 = arith.constant 32 : index
    %91 = vector.load %arg22[%c0_86, %c32_87] : memref<128x224xf32, #tpu.memory_space<vmem>>, vector<56x32xf32>
    tpu.vector_store %arg22[%c0_86, %c32_87], %90 {strides = array<i32>} : memref<128x224xf32, #tpu.memory_space<vmem>>, vector<56x32xf32>,
    %cst_88 = arith.constant 0.000000e+00 : f32
    %92 = vector.broadcast %cst_88 : f32 to vector<8x32xf32>
    %c56_89 = arith.constant 56 : index
    %c32_90 = arith.constant 32 : index
    %93 = vector.load %arg22[%c56_89, %c32_90] : memref<128x224xf32, #tpu.memory_space<vmem>>, vector<8x32xf32>
    tpu.vector_store %arg22[%c56_89, %c32_90], %92 {strides = array<i32>} : memref<128x224xf32, #tpu.memory_space<vmem>>, vector<8x32xf32>,
    %94 = vector.extract_strided_slice %83 {offsets = [1, 0], sizes = [56, 32], strides = [1, 1]} : vector<128x32xf32> to vector<56x32xf32>
    %c0_91 = arith.constant 0 : index
    %c64_92 = arith.constant 64 : index
    %95 = vector.load %arg22[%c0_91, %c64_92] : memref<128x224xf32, #tpu.memory_space<vmem>>, vector<56x32xf32>
    tpu.vector_store %arg22[%c0_91, %c64_92], %94 {strides = array<i32>} : memref<128x224xf32, #tpu.memory_space<vmem>>, vector<56x32xf32>,
    %cst_93 = arith.constant 0.000000e+00 : f32
    %96 = vector.broadcast %cst_93 : f32 to vector<8x32xf32>
    %c56_94 = arith.constant 56 : index
    %c64_95 = arith.constant 64 : index
    %97 = vector.load %arg22[%c56_94, %c64_95] : memref<128x224xf32, #tpu.memory_space<vmem>>, vector<8x32xf32>
    tpu.vector_store %arg22[%c56_94, %c64_95], %96 {strides = array<i32>} : memref<128x224xf32, #tpu.memory_space<vmem>>, vector<8x32xf32>,
    %98 = vector.extract_strided_slice %83 {offsets = [2, 0], sizes = [56, 32], strides = [1, 1]} : vector<128x32xf32> to vector<56x32xf32>
    %c0_96 = arith.constant 0 : index
    %c96_97 = arith.constant 96 : index
    %99 = vector.load %arg22[%c0_96, %c96_97] : memref<128x224xf32, #tpu.memory_space<vmem>>, vector<56x32xf32>
    tpu.vector_store %arg22[%c0_96, %c96_97], %98 {strides = array<i32>} : memref<128x224xf32, #tpu.memory_space<vmem>>, vector<56x32xf32>,
    %cst_98 = arith.constant 0.000000e+00 : f32
    %100 = vector.broadcast %cst_98 : f32 to vector<8x32xf32>
    %c56_99 = arith.constant 56 : index
    %c96_100 = arith.constant 96 : index
    %101 = vector.load %arg22[%c56_99, %c96_100] : memref<128x224xf32, #tpu.memory_space<vmem>>, vector<8x32xf32>
    tpu.vector_store %arg22[%c56_99, %c96_100], %100 {strides = array<i32>} : memref<128x224xf32, #tpu.memory_space<vmem>>, vector<8x32xf32>,
    %102 = vector.extract_strided_slice %83 {offsets = [3, 0], sizes = [56, 32], strides = [1, 1]} : vector<128x32xf32> to vector<56x32xf32>
    %c0_101 = arith.constant 0 : index
    %c128_102 = arith.constant 128 : index
    %103 = vector.load %arg22[%c0_101, %c128_102] : memref<128x224xf32, #tpu.memory_space<vmem>>, vector<56x32xf32>
    tpu.vector_store %arg22[%c0_101, %c128_102], %102 {strides = array<i32>} : memref<128x224xf32, #tpu.memory_space<vmem>>, vector<56x32xf32>,
    %cst_103 = arith.constant 0.000000e+00 : f32
    %104 = vector.broadcast %cst_103 : f32 to vector<8x32xf32>
    %c56_104 = arith.constant 56 : index
    %c128_105 = arith.constant 128 : index
    %105 = vector.load %arg22[%c56_104, %c128_105] : memref<128x224xf32, #tpu.memory_space<vmem>>, vector<8x32xf32>
    tpu.vector_store %arg22[%c56_104, %c128_105], %104 {strides = array<i32>} : memref<128x224xf32, #tpu.memory_space<vmem>>, vector<8x32xf32>,
    %106 = vector.extract_strided_slice %83 {offsets = [4, 0], sizes = [56, 32], strides = [1, 1]} : vector<128x32xf32> to vector<56x32xf32>
    %c0_106 = arith.constant 0 : index
    %c160_107 = arith.constant 160 : index
    %107 = vector.load %arg22[%c0_106, %c160_107] : memref<128x224xf32, #tpu.memory_space<vmem>>, vector<56x32xf32>
    tpu.vector_store %arg22[%c0_106, %c160_107], %106 {strides = array<i32>} : memref<128x224xf32, #tpu.memory_space<vmem>>, vector<56x32xf32>,
    %cst_108 = arith.constant 0.000000e+00 : f32
    %108 = vector.broadcast %cst_108 : f32 to vector<8x32xf32>
    %c56_109 = arith.constant 56 : index
    %c160_110 = arith.constant 160 : index
    %109 = vector.load %arg22[%c56_109, %c160_110] : memref<128x224xf32, #tpu.memory_space<vmem>>, vector<8x32xf32>
    tpu.vector_store %arg22[%c56_109, %c160_110], %108 {strides = array<i32>} : memref<128x224xf32, #tpu.memory_space<vmem>>, vector<8x32xf32>,
    %110 = vector.extract_strided_slice %83 {offsets = [5, 0], sizes = [55, 32], strides = [1, 1]} : vector<128x32xf32> to vector<55x32xf32>
    %c0_111 = arith.constant 0 : index
    %c192_112 = arith.constant 192 : index
    %111 = vector.load %arg22[%c0_111, %c192_112] : memref<128x224xf32, #tpu.memory_space<vmem>>, vector<55x32xf32>
    tpu.vector_store %arg22[%c0_111, %c192_112], %110 {strides = array<i32>} : memref<128x224xf32, #tpu.memory_space<vmem>>, vector<55x32xf32>,
    %cst_113 = arith.constant 0.000000e+00 : f32
    %112 = vector.broadcast %cst_113 : f32 to vector<9x32xf32>
    %c55 = arith.constant 55 : index
    %c192_114 = arith.constant 192 : index
    %113 = vector.load %arg22[%c55, %c192_114] : memref<128x224xf32, #tpu.memory_space<vmem>>, vector<9x32xf32>
    tpu.vector_store %arg22[%c55, %c192_114], %112 {strides = array<i32>} : memref<128x224xf32, #tpu.memory_space<vmem>>, vector<9x32xf32>,
    %cst_115 = arith.constant 0.000000e+00 : f32
    %114 = vector.broadcast %cst_115 : f32 to vector<1x32xf32>
    %c64_116 = arith.constant 64 : index
    %c0_117 = arith.constant 0 : index
    %115 = vector.load %arg22[%c64_116, %c0_117] : memref<128x224xf32, #tpu.memory_space<vmem>>, vector<1x32xf32>
    tpu.vector_store %arg22[%c64_116, %c0_117], %114 {strides = array<i32>} : memref<128x224xf32, #tpu.memory_space<vmem>>, vector<1x32xf32>,
    %116 = vector.extract_strided_slice %83 {offsets = [64, 0], sizes = [55, 32], strides = [1, 1]} : vector<128x32xf32> to vector<55x32xf32>
    %c65_118 = arith.constant 65 : index
    %c0_119 = arith.constant 0 : index
    %117 = vector.load %arg22[%c65_118, %c0_119] : memref<128x224xf32, #tpu.memory_space<vmem>>, vector<55x32xf32>
    tpu.vector_store %arg22[%c65_118, %c0_119], %116 {strides = array<i32>} : memref<128x224xf32, #tpu.memory_space<vmem>>, vector<55x32xf32>,
    %cst_120 = arith.constant 0.000000e+00 : f32
    %118 = vector.broadcast %cst_120 : f32 to vector<8x32xf32>
    %c120 = arith.constant 120 : index
    %c0_121 = arith.constant 0 : index
    %119 = vector.load %arg22[%c120, %c0_121] : memref<128x224xf32, #tpu.memory_space<vmem>>, vector<8x32xf32>
    tpu.vector_store %arg22[%c120, %c0_121], %118 {strides = array<i32>} : memref<128x224xf32, #tpu.memory_space<vmem>>, vector<8x32xf32>,
    %120 = vector.extract_strided_slice %83 {offsets = [64, 0], sizes = [56, 32], strides = [1, 1]} : vector<128x32xf32> to vector<56x32xf32>
    %c64_122 = arith.constant 64 : index
    %c32_123 = arith.constant 32 : index
    %121 = vector.load %arg22[%c64_122, %c32_123] : memref<128x224xf32, #tpu.memory_space<vmem>>, vector<56x32xf32>
    tpu.vector_store %arg22[%c64_122, %c32_123], %120 {strides = array<i32>} : memref<128x224xf32, #tpu.memory_space<vmem>>, vector<56x32xf32>,
    %cst_124 = arith.constant 0.000000e+00 : f32
    %122 = vector.broadcast %cst_124 : f32 to vector<8x32xf32>
    %c120_125 = arith.constant 120 : index
    %c32_126 = arith.constant 32 : index
    %123 = vector.load %arg22[%c120_125, %c32_126] : memref<128x224xf32, #tpu.memory_space<vmem>>, vector<8x32xf32>
    tpu.vector_store %arg22[%c120_125, %c32_126], %122 {strides = array<i32>} : memref<128x224xf32, #tpu.memory_space<vmem>>, vector<8x32xf32>,
    %124 = vector.extract_strided_slice %83 {offsets = [65, 0], sizes = [56, 32], strides = [1, 1]} : vector<128x32xf32> to vector<56x32xf32>
    %c64_127 = arith.constant 64 : index
    %c64_128 = arith.constant 64 : index
    %125 = vector.load %arg22[%c64_127, %c64_128] : memref<128x224xf32, #tpu.memory_space<vmem>>, vector<56x32xf32>
    tpu.vector_store %arg22[%c64_127, %c64_128], %124 {strides = array<i32>} : memref<128x224xf32, #tpu.memory_space<vmem>>, vector<56x32xf32>,
    %cst_129 = arith.constant 0.000000e+00 : f32
    %126 = vector.broadcast %cst_129 : f32 to vector<8x32xf32>
    %c120_130 = arith.constant 120 : index
    %c64_131 = arith.constant 64 : index
    %127 = vector.load %arg22[%c120_130, %c64_131] : memref<128x224xf32, #tpu.memory_space<vmem>>, vector<8x32xf32>
    tpu.vector_store %arg22[%c120_130, %c64_131], %126 {strides = array<i32>} : memref<128x224xf32, #tpu.memory_space<vmem>>, vector<8x32xf32>,
    %128 = vector.extract_strided_slice %83 {offsets = [66, 0], sizes = [56, 32], strides = [1, 1]} : vector<128x32xf32> to vector<56x32xf32>
    %c64_132 = arith.constant 64 : index
    %c96_133 = arith.constant 96 : index
    %129 = vector.load %arg22[%c64_132, %c96_133] : memref<128x224xf32, #tpu.memory_space<vmem>>, vector<56x32xf32>
    tpu.vector_store %arg22[%c64_132, %c96_133], %128 {strides = array<i32>} : memref<128x224xf32, #tpu.memory_space<vmem>>, vector<56x32xf32>,
    %cst_134 = arith.constant 0.000000e+00 : f32
    %130 = vector.broadcast %cst_134 : f32 to vector<8x32xf32>
    %c120_135 = arith.constant 120 : index
    %c96_136 = arith.constant 96 : index
    %131 = vector.load %arg22[%c120_135, %c96_136] : memref<128x224xf32, #tpu.memory_space<vmem>>, vector<8x32xf32>
    tpu.vector_store %arg22[%c120_135, %c96_136], %130 {strides = array<i32>} : memref<128x224xf32, #tpu.memory_space<vmem>>, vector<8x32xf32>,
    %132 = vector.extract_strided_slice %83 {offsets = [67, 0], sizes = [56, 32], strides = [1, 1]} : vector<128x32xf32> to vector<56x32xf32>
    %c64_137 = arith.constant 64 : index
    %c128_138 = arith.constant 128 : index
    %133 = vector.load %arg22[%c64_137, %c128_138] : memref<128x224xf32, #tpu.memory_space<vmem>>, vector<56x32xf32>
    tpu.vector_store %arg22[%c64_137, %c128_138], %132 {strides = array<i32>} : memref<128x224xf32, #tpu.memory_space<vmem>>, vector<56x32xf32>,
    %cst_139 = arith.constant 0.000000e+00 : f32
    %134 = vector.broadcast %cst_139 : f32 to vector<8x32xf32>
    %c120_140 = arith.constant 120 : index
    %c128_141 = arith.constant 128 : index
    %135 = vector.load %arg22[%c120_140, %c128_141] : memref<128x224xf32, #tpu.memory_space<vmem>>, vector<8x32xf32>
    tpu.vector_store %arg22[%c120_140, %c128_141], %134 {strides = array<i32>} : memref<128x224xf32, #tpu.memory_space<vmem>>, vector<8x32xf32>,
    %136 = vector.extract_strided_slice %83 {offsets = [68, 0], sizes = [56, 32], strides = [1, 1]} : vector<128x32xf32> to vector<56x32xf32>
    %c64_142 = arith.constant 64 : index
    %c160_143 = arith.constant 160 : index
    %137 = vector.load %arg22[%c64_142, %c160_143] : memref<128x224xf32, #tpu.memory_space<vmem>>, vector<56x32xf32>
    tpu.vector_store %arg22[%c64_142, %c160_143], %136 {strides = array<i32>} : memref<128x224xf32, #tpu.memory_space<vmem>>, vector<56x32xf32>,
    %cst_144 = arith.constant 0.000000e+00 : f32
    %138 = vector.broadcast %cst_144 : f32 to vector<8x32xf32>
    %c120_145 = arith.constant 120 : index
    %c160_146 = arith.constant 160 : index
    %139 = vector.load %arg22[%c120_145, %c160_146] : memref<128x224xf32, #tpu.memory_space<vmem>>, vector<8x32xf32>
    tpu.vector_store %arg22[%c120_145, %c160_146], %138 {strides = array<i32>} : memref<128x224xf32, #tpu.memory_space<vmem>>, vector<8x32xf32>,
    %140 = vector.extract_strided_slice %83 {offsets = [69, 0], sizes = [55, 32], strides = [1, 1]} : vector<128x32xf32> to vector<55x32xf32>
    %c64_147 = arith.constant 64 : index
    %c192_148 = arith.constant 192 : index
    %141 = vector.load %arg22[%c64_147, %c192_148] : memref<128x224xf32, #tpu.memory_space<vmem>>, vector<55x32xf32>
    tpu.vector_store %arg22[%c64_147, %c192_148], %140 {strides = array<i32>} : memref<128x224xf32, #tpu.memory_space<vmem>>, vector<55x32xf32>,
    %cst_149 = arith.constant 0.000000e+00 : f32
    %142 = vector.broadcast %cst_149 : f32 to vector<9x32xf32>
    %c119 = arith.constant 119 : index
    %c192_150 = arith.constant 192 : index
    %143 = vector.load %arg22[%c119, %c192_150] : memref<128x224xf32, #tpu.memory_space<vmem>>, vector<9x32xf32>
    tpu.vector_store %arg22[%c119, %c192_150], %142 {strides = array<i32>} : memref<128x224xf32, #tpu.memory_space<vmem>>, vector<9x32xf32>,
    %c0_151 = arith.constant 0 : index
    %c0_152 = arith.constant 0 : index
    %144 = vector.load %arg22[%c0_151, %c0_152] : memref<128x224xf32, #tpu.memory_space<vmem>>, vector<128x224xf32>
    %c0_153 = arith.constant 0 : index
    %c0_154 = arith.constant 0 : index
    %145 = vector.load %arg6[%c0_153, %c0_154] : memref<224x32xf32, #tpu.memory_space<vmem>>, vector<224x32xf32>
    %cst_155 = arith.constant dense<0.000000e+00> : vector<128x32xf32>
    %146 = tpu.matmul %144, %145, %cst_155 {dimension_numbers = #tpu.dot_dimension_numbers<[1], [0], [0], [1], [0, 0, 1, 1], [], []>} : vector<128x224xf32>, vector<224x32xf32>, vector<128x32xf32> -> vector<128x32xf32>
    %c0_156 = arith.constant 0 : index
    %c0_157 = arith.constant 0 : index
    %147 = vector.load %arg7[%c0_156, %c0_157] : memref<1x32xf32, #tpu.memory_space<vmem>>, vector<1x32xf32>
    %148 = vector.broadcast %147 : vector<1x32xf32> to vector<128x32xf32>
    %149 = arith.addf %146, %148 : vector<128x32xf32>
    %150 = arith.addf %149, %12 : vector<128x32xf32>
    %cst_158 = arith.constant 0.000000e+00 : f32
    %151 = vector.broadcast %cst_158 : f32 to vector<128x32xf32>
    %152 = arith.cmpf oge, %150, %151 : vector<128x32xf32>
    %cst_159 = arith.constant 0.00999999977 : f32
    %153 = vector.broadcast %cst_159 : f32 to vector<128x32xf32>
    %154 = arith.mulf %153, %150 : vector<128x32xf32>
    %155 = arith.select %152, %150, %154 : vector<128x32xi1>, vector<128x32xf32>
    %cst_160 = arith.constant 0.000000e+00 : f32
    %156 = vector.broadcast %cst_160 : f32 to vector<1x32xf32>
    %c0_161 = arith.constant 0 : index
    %c0_162 = arith.constant 0 : index
    %157 = vector.load %arg23[%c0_161, %c0_162] : memref<128x224xf32, #tpu.memory_space<vmem>>, vector<1x32xf32>
    tpu.vector_store %arg23[%c0_161, %c0_162], %156 {strides = array<i32>} : memref<128x224xf32, #tpu.memory_space<vmem>>, vector<1x32xf32>,
    %158 = vector.extract_strided_slice %155 {offsets = [0, 0], sizes = [51, 32], strides = [1, 1]} : vector<128x32xf32> to vector<51x32xf32>
    %c1_163 = arith.constant 1 : index
    %c0_164 = arith.constant 0 : index
    %159 = vector.load %arg23[%c1_163, %c0_164] : memref<128x224xf32, #tpu.memory_space<vmem>>, vector<51x32xf32>
    tpu.vector_store %arg23[%c1_163, %c0_164], %158 {strides = array<i32>} : memref<128x224xf32, #tpu.memory_space<vmem>>, vector<51x32xf32>,
    %cst_165 = arith.constant 0.000000e+00 : f32
    %160 = vector.broadcast %cst_165 : f32 to vector<12x32xf32>
    %c52 = arith.constant 52 : index
    %c0_166 = arith.constant 0 : index
    %161 = vector.load %arg23[%c52, %c0_166] : memref<128x224xf32, #tpu.memory_space<vmem>>, vector<12x32xf32>
    tpu.vector_store %arg23[%c52, %c0_166], %160 {strides = array<i32>} : memref<128x224xf32, #tpu.memory_space<vmem>>, vector<12x32xf32>,
    %162 = vector.extract_strided_slice %155 {offsets = [0, 0], sizes = [52, 32], strides = [1, 1]} : vector<128x32xf32> to vector<52x32xf32>
    %c0_167 = arith.constant 0 : index
    %c32_168 = arith.constant 32 : index
    %163 = vector.load %arg23[%c0_167, %c32_168] : memref<128x224xf32, #tpu.memory_space<vmem>>, vector<52x32xf32>
    tpu.vector_store %arg23[%c0_167, %c32_168], %162 {strides = array<i32>} : memref<128x224xf32, #tpu.memory_space<vmem>>, vector<52x32xf32>,
    %cst_169 = arith.constant 0.000000e+00 : f32
    %164 = vector.broadcast %cst_169 : f32 to vector<12x32xf32>
    %c52_170 = arith.constant 52 : index
    %c32_171 = arith.constant 32 : index
    %165 = vector.load %arg23[%c52_170, %c32_171] : memref<128x224xf32, #tpu.memory_space<vmem>>, vector<12x32xf32>
    tpu.vector_store %arg23[%c52_170, %c32_171], %164 {strides = array<i32>} : memref<128x224xf32, #tpu.memory_space<vmem>>, vector<12x32xf32>,
    %166 = vector.extract_strided_slice %155 {offsets = [1, 0], sizes = [52, 32], strides = [1, 1]} : vector<128x32xf32> to vector<52x32xf32>
    %c0_172 = arith.constant 0 : index
    %c64_173 = arith.constant 64 : index
    %167 = vector.load %arg23[%c0_172, %c64_173] : memref<128x224xf32, #tpu.memory_space<vmem>>, vector<52x32xf32>
    tpu.vector_store %arg23[%c0_172, %c64_173], %166 {strides = array<i32>} : memref<128x224xf32, #tpu.memory_space<vmem>>, vector<52x32xf32>,
    %cst_174 = arith.constant 0.000000e+00 : f32
    %168 = vector.broadcast %cst_174 : f32 to vector<12x32xf32>
    %c52_175 = arith.constant 52 : index
    %c64_176 = arith.constant 64 : index
    %169 = vector.load %arg23[%c52_175, %c64_176] : memref<128x224xf32, #tpu.memory_space<vmem>>, vector<12x32xf32>
    tpu.vector_store %arg23[%c52_175, %c64_176], %168 {strides = array<i32>} : memref<128x224xf32, #tpu.memory_space<vmem>>, vector<12x32xf32>,
    %170 = vector.extract_strided_slice %155 {offsets = [2, 0], sizes = [52, 32], strides = [1, 1]} : vector<128x32xf32> to vector<52x32xf32>
    %c0_177 = arith.constant 0 : index
    %c96_178 = arith.constant 96 : index
    %171 = vector.load %arg23[%c0_177, %c96_178] : memref<128x224xf32, #tpu.memory_space<vmem>>, vector<52x32xf32>
    tpu.vector_store %arg23[%c0_177, %c96_178], %170 {strides = array<i32>} : memref<128x224xf32, #tpu.memory_space<vmem>>, vector<52x32xf32>,
    %cst_179 = arith.constant 0.000000e+00 : f32
    %172 = vector.broadcast %cst_179 : f32 to vector<12x32xf32>
    %c52_180 = arith.constant 52 : index
    %c96_181 = arith.constant 96 : index
    %173 = vector.load %arg23[%c52_180, %c96_181] : memref<128x224xf32, #tpu.memory_space<vmem>>, vector<12x32xf32>
    tpu.vector_store %arg23[%c52_180, %c96_181], %172 {strides = array<i32>} : memref<128x224xf32, #tpu.memory_space<vmem>>, vector<12x32xf32>,
    %174 = vector.extract_strided_slice %155 {offsets = [3, 0], sizes = [52, 32], strides = [1, 1]} : vector<128x32xf32> to vector<52x32xf32>
    %c0_182 = arith.constant 0 : index
    %c128_183 = arith.constant 128 : index
    %175 = vector.load %arg23[%c0_182, %c128_183] : memref<128x224xf32, #tpu.memory_space<vmem>>, vector<52x32xf32>
    tpu.vector_store %arg23[%c0_182, %c128_183], %174 {strides = array<i32>} : memref<128x224xf32, #tpu.memory_space<vmem>>, vector<52x32xf32>,
    %cst_184 = arith.constant 0.000000e+00 : f32
    %176 = vector.broadcast %cst_184 : f32 to vector<12x32xf32>
    %c52_185 = arith.constant 52 : index
    %c128_186 = arith.constant 128 : index
    %177 = vector.load %arg23[%c52_185, %c128_186] : memref<128x224xf32, #tpu.memory_space<vmem>>, vector<12x32xf32>
    tpu.vector_store %arg23[%c52_185, %c128_186], %176 {strides = array<i32>} : memref<128x224xf32, #tpu.memory_space<vmem>>, vector<12x32xf32>,
    %178 = vector.extract_strided_slice %155 {offsets = [4, 0], sizes = [52, 32], strides = [1, 1]} : vector<128x32xf32> to vector<52x32xf32>
    %c0_187 = arith.constant 0 : index
    %c160_188 = arith.constant 160 : index
    %179 = vector.load %arg23[%c0_187, %c160_188] : memref<128x224xf32, #tpu.memory_space<vmem>>, vector<52x32xf32>
    tpu.vector_store %arg23[%c0_187, %c160_188], %178 {strides = array<i32>} : memref<128x224xf32, #tpu.memory_space<vmem>>, vector<52x32xf32>,
    %cst_189 = arith.constant 0.000000e+00 : f32
    %180 = vector.broadcast %cst_189 : f32 to vector<12x32xf32>
    %c52_190 = arith.constant 52 : index
    %c160_191 = arith.constant 160 : index
    %181 = vector.load %arg23[%c52_190, %c160_191] : memref<128x224xf32, #tpu.memory_space<vmem>>, vector<12x32xf32>
    tpu.vector_store %arg23[%c52_190, %c160_191], %180 {strides = array<i32>} : memref<128x224xf32, #tpu.memory_space<vmem>>, vector<12x32xf32>,
    %182 = vector.extract_strided_slice %155 {offsets = [5, 0], sizes = [51, 32], strides = [1, 1]} : vector<128x32xf32> to vector<51x32xf32>
    %c0_192 = arith.constant 0 : index
    %c192_193 = arith.constant 192 : index
    %183 = vector.load %arg23[%c0_192, %c192_193] : memref<128x224xf32, #tpu.memory_space<vmem>>, vector<51x32xf32>
    tpu.vector_store %arg23[%c0_192, %c192_193], %182 {strides = array<i32>} : memref<128x224xf32, #tpu.memory_space<vmem>>, vector<51x32xf32>,
    %cst_194 = arith.constant 0.000000e+00 : f32
    %184 = vector.broadcast %cst_194 : f32 to vector<13x32xf32>
    %c51 = arith.constant 51 : index
    %c192_195 = arith.constant 192 : index
    %185 = vector.load %arg23[%c51, %c192_195] : memref<128x224xf32, #tpu.memory_space<vmem>>, vector<13x32xf32>
    tpu.vector_store %arg23[%c51, %c192_195], %184 {strides = array<i32>} : memref<128x224xf32, #tpu.memory_space<vmem>>, vector<13x32xf32>,
    %cst_196 = arith.constant 0.000000e+00 : f32
    %186 = vector.broadcast %cst_196 : f32 to vector<1x32xf32>
    %c64_197 = arith.constant 64 : index
    %c0_198 = arith.constant 0 : index
    %187 = vector.load %arg23[%c64_197, %c0_198] : memref<128x224xf32, #tpu.memory_space<vmem>>, vector<1x32xf32>
    tpu.vector_store %arg23[%c64_197, %c0_198], %186 {strides = array<i32>} : memref<128x224xf32, #tpu.memory_space<vmem>>, vector<1x32xf32>,
    %188 = vector.extract_strided_slice %155 {offsets = [64, 0], sizes = [51, 32], strides = [1, 1]} : vector<128x32xf32> to vector<51x32xf32>
    %c65_199 = arith.constant 65 : index
    %c0_200 = arith.constant 0 : index
    %189 = vector.load %arg23[%c65_199, %c0_200] : memref<128x224xf32, #tpu.memory_space<vmem>>, vector<51x32xf32>
    tpu.vector_store %arg23[%c65_199, %c0_200], %188 {strides = array<i32>} : memref<128x224xf32, #tpu.memory_space<vmem>>, vector<51x32xf32>,
    %cst_201 = arith.constant 0.000000e+00 : f32
    %190 = vector.broadcast %cst_201 : f32 to vector<12x32xf32>
    %c116 = arith.constant 116 : index
    %c0_202 = arith.constant 0 : index
    %191 = vector.load %arg23[%c116, %c0_202] : memref<128x224xf32, #tpu.memory_space<vmem>>, vector<12x32xf32>
    tpu.vector_store %arg23[%c116, %c0_202], %190 {strides = array<i32>} : memref<128x224xf32, #tpu.memory_space<vmem>>, vector<12x32xf32>,
    %192 = vector.extract_strided_slice %155 {offsets = [64, 0], sizes = [52, 32], strides = [1, 1]} : vector<128x32xf32> to vector<52x32xf32>
    %c64_203 = arith.constant 64 : index
    %c32_204 = arith.constant 32 : index
    %193 = vector.load %arg23[%c64_203, %c32_204] : memref<128x224xf32, #tpu.memory_space<vmem>>, vector<52x32xf32>
    tpu.vector_store %arg23[%c64_203, %c32_204], %192 {strides = array<i32>} : memref<128x224xf32, #tpu.memory_space<vmem>>, vector<52x32xf32>,
    %cst_205 = arith.constant 0.000000e+00 : f32
    %194 = vector.broadcast %cst_205 : f32 to vector<12x32xf32>
    %c116_206 = arith.constant 116 : index
    %c32_207 = arith.constant 32 : index
    %195 = vector.load %arg23[%c116_206, %c32_207] : memref<128x224xf32, #tpu.memory_space<vmem>>, vector<12x32xf32>
    tpu.vector_store %arg23[%c116_206, %c32_207], %194 {strides = array<i32>} : memref<128x224xf32, #tpu.memory_space<vmem>>, vector<12x32xf32>,
    %196 = vector.extract_strided_slice %155 {offsets = [65, 0], sizes = [52, 32], strides = [1, 1]} : vector<128x32xf32> to vector<52x32xf32>
    %c64_208 = arith.constant 64 : index
    %c64_209 = arith.constant 64 : index
    %197 = vector.load %arg23[%c64_208, %c64_209] : memref<128x224xf32, #tpu.memory_space<vmem>>, vector<52x32xf32>
    tpu.vector_store %arg23[%c64_208, %c64_209], %196 {strides = array<i32>} : memref<128x224xf32, #tpu.memory_space<vmem>>, vector<52x32xf32>,
    %cst_210 = arith.constant 0.000000e+00 : f32
    %198 = vector.broadcast %cst_210 : f32 to vector<12x32xf32>
    %c116_211 = arith.constant 116 : index
    %c64_212 = arith.constant 64 : index
    %199 = vector.load %arg23[%c116_211, %c64_212] : memref<128x224xf32, #tpu.memory_space<vmem>>, vector<12x32xf32>
    tpu.vector_store %arg23[%c116_211, %c64_212], %198 {strides = array<i32>} : memref<128x224xf32, #tpu.memory_space<vmem>>, vector<12x32xf32>,
    %200 = vector.extract_strided_slice %155 {offsets = [66, 0], sizes = [52, 32], strides = [1, 1]} : vector<128x32xf32> to vector<52x32xf32>
    %c64_213 = arith.constant 64 : index
    %c96_214 = arith.constant 96 : index
    %201 = vector.load %arg23[%c64_213, %c96_214] : memref<128x224xf32, #tpu.memory_space<vmem>>, vector<52x32xf32>
    tpu.vector_store %arg23[%c64_213, %c96_214], %200 {strides = array<i32>} : memref<128x224xf32, #tpu.memory_space<vmem>>, vector<52x32xf32>,
    %cst_215 = arith.constant 0.000000e+00 : f32
    %202 = vector.broadcast %cst_215 : f32 to vector<12x32xf32>
    %c116_216 = arith.constant 116 : index
    %c96_217 = arith.constant 96 : index
    %203 = vector.load %arg23[%c116_216, %c96_217] : memref<128x224xf32, #tpu.memory_space<vmem>>, vector<12x32xf32>
    tpu.vector_store %arg23[%c116_216, %c96_217], %202 {strides = array<i32>} : memref<128x224xf32, #tpu.memory_space<vmem>>, vector<12x32xf32>,
    %204 = vector.extract_strided_slice %155 {offsets = [67, 0], sizes = [52, 32], strides = [1, 1]} : vector<128x32xf32> to vector<52x32xf32>
    %c64_218 = arith.constant 64 : index
    %c128_219 = arith.constant 128 : index
    %205 = vector.load %arg23[%c64_218, %c128_219] : memref<128x224xf32, #tpu.memory_space<vmem>>, vector<52x32xf32>
    tpu.vector_store %arg23[%c64_218, %c128_219], %204 {strides = array<i32>} : memref<128x224xf32, #tpu.memory_space<vmem>>, vector<52x32xf32>,
    %cst_220 = arith.constant 0.000000e+00 : f32
    %206 = vector.broadcast %cst_220 : f32 to vector<12x32xf32>
    %c116_221 = arith.constant 116 : index
    %c128_222 = arith.constant 128 : index
    %207 = vector.load %arg23[%c116_221, %c128_222] : memref<128x224xf32, #tpu.memory_space<vmem>>, vector<12x32xf32>
    tpu.vector_store %arg23[%c116_221, %c128_222], %206 {strides = array<i32>} : memref<128x224xf32, #tpu.memory_space<vmem>>, vector<12x32xf32>,
    %208 = vector.extract_strided_slice %155 {offsets = [68, 0], sizes = [52, 32], strides = [1, 1]} : vector<128x32xf32> to vector<52x32xf32>
    %c64_223 = arith.constant 64 : index
    %c160_224 = arith.constant 160 : index
    %209 = vector.load %arg23[%c64_223, %c160_224] : memref<128x224xf32, #tpu.memory_space<vmem>>, vector<52x32xf32>
    tpu.vector_store %arg23[%c64_223, %c160_224], %208 {strides = array<i32>} : memref<128x224xf32, #tpu.memory_space<vmem>>, vector<52x32xf32>,
    %cst_225 = arith.constant 0.000000e+00 : f32
    %210 = vector.broadcast %cst_225 : f32 to vector<12x32xf32>
    %c116_226 = arith.constant 116 : index
    %c160_227 = arith.constant 160 : index
    %211 = vector.load %arg23[%c116_226, %c160_227] : memref<128x224xf32, #tpu.memory_space<vmem>>, vector<12x32xf32>
    tpu.vector_store %arg23[%c116_226, %c160_227], %210 {strides = array<i32>} : memref<128x224xf32, #tpu.memory_space<vmem>>, vector<12x32xf32>,
    %212 = vector.extract_strided_slice %155 {offsets = [69, 0], sizes = [51, 32], strides = [1, 1]} : vector<128x32xf32> to vector<51x32xf32>
    %c64_228 = arith.constant 64 : index
    %c192_229 = arith.constant 192 : index
    %213 = vector.load %arg23[%c64_228, %c192_229] : memref<128x224xf32, #tpu.memory_space<vmem>>, vector<51x32xf32>
    tpu.vector_store %arg23[%c64_228, %c192_229], %212 {strides = array<i32>} : memref<128x224xf32, #tpu.memory_space<vmem>>, vector<51x32xf32>,
    %cst_230 = arith.constant 0.000000e+00 : f32
    %214 = vector.broadcast %cst_230 : f32 to vector<13x32xf32>
    %c115 = arith.constant 115 : index
    %c192_231 = arith.constant 192 : index
    %215 = vector.load %arg23[%c115, %c192_231] : memref<128x224xf32, #tpu.memory_space<vmem>>, vector<13x32xf32>
    tpu.vector_store %arg23[%c115, %c192_231], %214 {strides = array<i32>} : memref<128x224xf32, #tpu.memory_space<vmem>>, vector<13x32xf32>,
    %c0_232 = arith.constant 0 : index
    %c0_233 = arith.constant 0 : index
    %216 = vector.load %arg23[%c0_232, %c0_233] : memref<128x224xf32, #tpu.memory_space<vmem>>, vector<128x224xf32>
    %c0_234 = arith.constant 0 : index
    %c0_235 = arith.constant 0 : index
    %217 = vector.load %arg8[%c0_234, %c0_235] : memref<224x64xf32, #tpu.memory_space<vmem>>, vector<224x64xf32>
    %cst_236 = arith.constant dense<0.000000e+00> : vector<128x64xf32>
    %218 = tpu.matmul %216, %217, %cst_236 {dimension_numbers = #tpu.dot_dimension_numbers<[1], [0], [0], [1], [0, 0, 1, 1], [], []>} : vector<128x224xf32>, vector<224x64xf32>, vector<128x64xf32> -> vector<128x64xf32>
    %c0_237 = arith.constant 0 : index
    %c0_238 = arith.constant 0 : index
    %219 = vector.load %arg9[%c0_237, %c0_238] : memref<1x64xf32, #tpu.memory_space<vmem>>, vector<1x64xf32>
    %220 = vector.broadcast %219 : vector<1x64xf32> to vector<128x64xf32>
    %221 = arith.addf %218, %220 : vector<128x64xf32>
    %cst_239 = arith.constant 0.000000e+00 : f32
    %222 = vector.broadcast %cst_239 : f32 to vector<128x64xf32>
    %223 = arith.cmpf oge, %221, %222 : vector<128x64xf32>
    %cst_240 = arith.constant 0.00999999977 : f32
    %224 = vector.broadcast %cst_240 : f32 to vector<128x64xf32>
    %225 = arith.mulf %224, %221 : vector<128x64xf32>
    %226 = arith.select %223, %221, %225 : vector<128x64xi1>, vector<128x64xf32>
    %cst_241 = arith.constant 0.000000e+00 : f32
    %227 = vector.broadcast %cst_241 : f32 to vector<1x64xf32>
    %c0_242 = arith.constant 0 : index
    %c0_243 = arith.constant 0 : index
    %228 = vector.load %arg24[%c0_242, %c0_243] : memref<128x448xf32, #tpu.memory_space<vmem>>, vector<1x64xf32>
    tpu.vector_store %arg24[%c0_242, %c0_243], %227 {strides = array<i32>} : memref<128x448xf32, #tpu.memory_space<vmem>>, vector<1x64xf32>,
    %229 = vector.extract_strided_slice %226 {offsets = [0, 0], sizes = [47, 64], strides = [1, 1]} : vector<128x64xf32> to vector<47x64xf32>
    %c1_244 = arith.constant 1 : index
    %c0_245 = arith.constant 0 : index
    %230 = vector.load %arg24[%c1_244, %c0_245] : memref<128x448xf32, #tpu.memory_space<vmem>>, vector<47x64xf32>
    tpu.vector_store %arg24[%c1_244, %c0_245], %229 {strides = array<i32>} : memref<128x448xf32, #tpu.memory_space<vmem>>, vector<47x64xf32>,
    %cst_246 = arith.constant 0.000000e+00 : f32
    %231 = vector.broadcast %cst_246 : f32 to vector<16x64xf32>
    %c48 = arith.constant 48 : index
    %c0_247 = arith.constant 0 : index
    %232 = vector.load %arg24[%c48, %c0_247] : memref<128x448xf32, #tpu.memory_space<vmem>>, vector<16x64xf32>
    tpu.vector_store %arg24[%c48, %c0_247], %231 {strides = array<i32>} : memref<128x448xf32, #tpu.memory_space<vmem>>, vector<16x64xf32>,
    %233 = vector.extract_strided_slice %226 {offsets = [0, 0], sizes = [48, 64], strides = [1, 1]} : vector<128x64xf32> to vector<48x64xf32>
    %c0_248 = arith.constant 0 : index
    %c64_249 = arith.constant 64 : index
    %234 = vector.load %arg24[%c0_248, %c64_249] : memref<128x448xf32, #tpu.memory_space<vmem>>, vector<48x64xf32>
    tpu.vector_store %arg24[%c0_248, %c64_249], %233 {strides = array<i32>} : memref<128x448xf32, #tpu.memory_space<vmem>>, vector<48x64xf32>,
    %cst_250 = arith.constant 0.000000e+00 : f32
    %235 = vector.broadcast %cst_250 : f32 to vector<16x64xf32>
    %c48_251 = arith.constant 48 : index
    %c64_252 = arith.constant 64 : index
    %236 = vector.load %arg24[%c48_251, %c64_252] : memref<128x448xf32, #tpu.memory_space<vmem>>, vector<16x64xf32>
    tpu.vector_store %arg24[%c48_251, %c64_252], %235 {strides = array<i32>} : memref<128x448xf32, #tpu.memory_space<vmem>>, vector<16x64xf32>,
    %237 = vector.extract_strided_slice %226 {offsets = [1, 0], sizes = [48, 64], strides = [1, 1]} : vector<128x64xf32> to vector<48x64xf32>
    %c0_253 = arith.constant 0 : index
    %c128_254 = arith.constant 128 : index
    %238 = vector.load %arg24[%c0_253, %c128_254] : memref<128x448xf32, #tpu.memory_space<vmem>>, vector<48x64xf32>
    tpu.vector_store %arg24[%c0_253, %c128_254], %237 {strides = array<i32>} : memref<128x448xf32, #tpu.memory_space<vmem>>, vector<48x64xf32>,
    %cst_255 = arith.constant 0.000000e+00 : f32
    %239 = vector.broadcast %cst_255 : f32 to vector<16x64xf32>
    %c48_256 = arith.constant 48 : index
    %c128_257 = arith.constant 128 : index
    %240 = vector.load %arg24[%c48_256, %c128_257] : memref<128x448xf32, #tpu.memory_space<vmem>>, vector<16x64xf32>
    tpu.vector_store %arg24[%c48_256, %c128_257], %239 {strides = array<i32>} : memref<128x448xf32, #tpu.memory_space<vmem>>, vector<16x64xf32>,
    %241 = vector.extract_strided_slice %226 {offsets = [2, 0], sizes = [48, 64], strides = [1, 1]} : vector<128x64xf32> to vector<48x64xf32>
    %c0_258 = arith.constant 0 : index
    %c192_259 = arith.constant 192 : index
    %242 = vector.load %arg24[%c0_258, %c192_259] : memref<128x448xf32, #tpu.memory_space<vmem>>, vector<48x64xf32>
    tpu.vector_store %arg24[%c0_258, %c192_259], %241 {strides = array<i32>} : memref<128x448xf32, #tpu.memory_space<vmem>>, vector<48x64xf32>,
    %cst_260 = arith.constant 0.000000e+00 : f32
    %243 = vector.broadcast %cst_260 : f32 to vector<16x64xf32>
    %c48_261 = arith.constant 48 : index
    %c192_262 = arith.constant 192 : index
    %244 = vector.load %arg24[%c48_261, %c192_262] : memref<128x448xf32, #tpu.memory_space<vmem>>, vector<16x64xf32>
    tpu.vector_store %arg24[%c48_261, %c192_262], %243 {strides = array<i32>} : memref<128x448xf32, #tpu.memory_space<vmem>>, vector<16x64xf32>,
    %245 = vector.extract_strided_slice %226 {offsets = [3, 0], sizes = [48, 64], strides = [1, 1]} : vector<128x64xf32> to vector<48x64xf32>
    %c0_263 = arith.constant 0 : index
    %c256 = arith.constant 256 : index
    %246 = vector.load %arg24[%c0_263, %c256] : memref<128x448xf32, #tpu.memory_space<vmem>>, vector<48x64xf32>
    tpu.vector_store %arg24[%c0_263, %c256], %245 {strides = array<i32>} : memref<128x448xf32, #tpu.memory_space<vmem>>, vector<48x64xf32>,
    %cst_264 = arith.constant 0.000000e+00 : f32
    %247 = vector.broadcast %cst_264 : f32 to vector<16x64xf32>
    %c48_265 = arith.constant 48 : index
    %c256_266 = arith.constant 256 : index
    %248 = vector.load %arg24[%c48_265, %c256_266] : memref<128x448xf32, #tpu.memory_space<vmem>>, vector<16x64xf32>
    tpu.vector_store %arg24[%c48_265, %c256_266], %247 {strides = array<i32>} : memref<128x448xf32, #tpu.memory_space<vmem>>, vector<16x64xf32>,
    %249 = vector.extract_strided_slice %226 {offsets = [4, 0], sizes = [48, 64], strides = [1, 1]} : vector<128x64xf32> to vector<48x64xf32>
    %c0_267 = arith.constant 0 : index
    %c320 = arith.constant 320 : index
    %250 = vector.load %arg24[%c0_267, %c320] : memref<128x448xf32, #tpu.memory_space<vmem>>, vector<48x64xf32>
    tpu.vector_store %arg24[%c0_267, %c320], %249 {strides = array<i32>} : memref<128x448xf32, #tpu.memory_space<vmem>>, vector<48x64xf32>,
    %cst_268 = arith.constant 0.000000e+00 : f32
    %251 = vector.broadcast %cst_268 : f32 to vector<16x64xf32>
    %c48_269 = arith.constant 48 : index
    %c320_270 = arith.constant 320 : index
    %252 = vector.load %arg24[%c48_269, %c320_270] : memref<128x448xf32, #tpu.memory_space<vmem>>, vector<16x64xf32>
    tpu.vector_store %arg24[%c48_269, %c320_270], %251 {strides = array<i32>} : memref<128x448xf32, #tpu.memory_space<vmem>>, vector<16x64xf32>,
    %253 = vector.extract_strided_slice %226 {offsets = [5, 0], sizes = [47, 64], strides = [1, 1]} : vector<128x64xf32> to vector<47x64xf32>
    %c0_271 = arith.constant 0 : index
    %c384 = arith.constant 384 : index
    %254 = vector.load %arg24[%c0_271, %c384] : memref<128x448xf32, #tpu.memory_space<vmem>>, vector<47x64xf32>
    tpu.vector_store %arg24[%c0_271, %c384], %253 {strides = array<i32>} : memref<128x448xf32, #tpu.memory_space<vmem>>, vector<47x64xf32>,
    %cst_272 = arith.constant 0.000000e+00 : f32
    %255 = vector.broadcast %cst_272 : f32 to vector<17x64xf32>
    %c47 = arith.constant 47 : index
    %c384_273 = arith.constant 384 : index
    %256 = vector.load %arg24[%c47, %c384_273] : memref<128x448xf32, #tpu.memory_space<vmem>>, vector<17x64xf32>
    tpu.vector_store %arg24[%c47, %c384_273], %255 {strides = array<i32>} : memref<128x448xf32, #tpu.memory_space<vmem>>, vector<17x64xf32>,
    %cst_274 = arith.constant 0.000000e+00 : f32
    %257 = vector.broadcast %cst_274 : f32 to vector<1x64xf32>
    %c64_275 = arith.constant 64 : index
    %c0_276 = arith.constant 0 : index
    %258 = vector.load %arg24[%c64_275, %c0_276] : memref<128x448xf32, #tpu.memory_space<vmem>>, vector<1x64xf32>
    tpu.vector_store %arg24[%c64_275, %c0_276], %257 {strides = array<i32>} : memref<128x448xf32, #tpu.memory_space<vmem>>, vector<1x64xf32>,
    %259 = vector.extract_strided_slice %226 {offsets = [64, 0], sizes = [47, 64], strides = [1, 1]} : vector<128x64xf32> to vector<47x64xf32>
    %c65_277 = arith.constant 65 : index
    %c0_278 = arith.constant 0 : index
    %260 = vector.load %arg24[%c65_277, %c0_278] : memref<128x448xf32, #tpu.memory_space<vmem>>, vector<47x64xf32>
    tpu.vector_store %arg24[%c65_277, %c0_278], %259 {strides = array<i32>} : memref<128x448xf32, #tpu.memory_space<vmem>>, vector<47x64xf32>,
    %cst_279 = arith.constant 0.000000e+00 : f32
    %261 = vector.broadcast %cst_279 : f32 to vector<16x64xf32>
    %c112 = arith.constant 112 : index
    %c0_280 = arith.constant 0 : index
    %262 = vector.load %arg24[%c112, %c0_280] : memref<128x448xf32, #tpu.memory_space<vmem>>, vector<16x64xf32>
    tpu.vector_store %arg24[%c112, %c0_280], %261 {strides = array<i32>} : memref<128x448xf32, #tpu.memory_space<vmem>>, vector<16x64xf32>,
    %263 = vector.extract_strided_slice %226 {offsets = [64, 0], sizes = [48, 64], strides = [1, 1]} : vector<128x64xf32> to vector<48x64xf32>
    %c64_281 = arith.constant 64 : index
    %c64_282 = arith.constant 64 : index
    %264 = vector.load %arg24[%c64_281, %c64_282] : memref<128x448xf32, #tpu.memory_space<vmem>>, vector<48x64xf32>
    tpu.vector_store %arg24[%c64_281, %c64_282], %263 {strides = array<i32>} : memref<128x448xf32, #tpu.memory_space<vmem>>, vector<48x64xf32>,
    %cst_283 = arith.constant 0.000000e+00 : f32
    %265 = vector.broadcast %cst_283 : f32 to vector<16x64xf32>
    %c112_284 = arith.constant 112 : index
    %c64_285 = arith.constant 64 : index
    %266 = vector.load %arg24[%c112_284, %c64_285] : memref<128x448xf32, #tpu.memory_space<vmem>>, vector<16x64xf32>
    tpu.vector_store %arg24[%c112_284, %c64_285], %265 {strides = array<i32>} : memref<128x448xf32, #tpu.memory_space<vmem>>, vector<16x64xf32>,
    %267 = vector.extract_strided_slice %226 {offsets = [65, 0], sizes = [48, 64], strides = [1, 1]} : vector<128x64xf32> to vector<48x64xf32>
    %c64_286 = arith.constant 64 : index
    %c128_287 = arith.constant 128 : index
    %268 = vector.load %arg24[%c64_286, %c128_287] : memref<128x448xf32, #tpu.memory_space<vmem>>, vector<48x64xf32>
    tpu.vector_store %arg24[%c64_286, %c128_287], %267 {strides = array<i32>} : memref<128x448xf32, #tpu.memory_space<vmem>>, vector<48x64xf32>,
    %cst_288 = arith.constant 0.000000e+00 : f32
    %269 = vector.broadcast %cst_288 : f32 to vector<16x64xf32>
    %c112_289 = arith.constant 112 : index
    %c128_290 = arith.constant 128 : index
    %270 = vector.load %arg24[%c112_289, %c128_290] : memref<128x448xf32, #tpu.memory_space<vmem>>, vector<16x64xf32>
    tpu.vector_store %arg24[%c112_289, %c128_290], %269 {strides = array<i32>} : memref<128x448xf32, #tpu.memory_space<vmem>>, vector<16x64xf32>,
    %271 = vector.extract_strided_slice %226 {offsets = [66, 0], sizes = [48, 64], strides = [1, 1]} : vector<128x64xf32> to vector<48x64xf32>
    %c64_291 = arith.constant 64 : index
    %c192_292 = arith.constant 192 : index
    %272 = vector.load %arg24[%c64_291, %c192_292] : memref<128x448xf32, #tpu.memory_space<vmem>>, vector<48x64xf32>
    tpu.vector_store %arg24[%c64_291, %c192_292], %271 {strides = array<i32>} : memref<128x448xf32, #tpu.memory_space<vmem>>, vector<48x64xf32>,
    %cst_293 = arith.constant 0.000000e+00 : f32
    %273 = vector.broadcast %cst_293 : f32 to vector<16x64xf32>
    %c112_294 = arith.constant 112 : index
    %c192_295 = arith.constant 192 : index
    %274 = vector.load %arg24[%c112_294, %c192_295] : memref<128x448xf32, #tpu.memory_space<vmem>>, vector<16x64xf32>
    tpu.vector_store %arg24[%c112_294, %c192_295], %273 {strides = array<i32>} : memref<128x448xf32, #tpu.memory_space<vmem>>, vector<16x64xf32>,
    %275 = vector.extract_strided_slice %226 {offsets = [67, 0], sizes = [48, 64], strides = [1, 1]} : vector<128x64xf32> to vector<48x64xf32>
    %c64_296 = arith.constant 64 : index
    %c256_297 = arith.constant 256 : index
    %276 = vector.load %arg24[%c64_296, %c256_297] : memref<128x448xf32, #tpu.memory_space<vmem>>, vector<48x64xf32>
    tpu.vector_store %arg24[%c64_296, %c256_297], %275 {strides = array<i32>} : memref<128x448xf32, #tpu.memory_space<vmem>>, vector<48x64xf32>,
    %cst_298 = arith.constant 0.000000e+00 : f32
    %277 = vector.broadcast %cst_298 : f32 to vector<16x64xf32>
    %c112_299 = arith.constant 112 : index
    %c256_300 = arith.constant 256 : index
    %278 = vector.load %arg24[%c112_299, %c256_300] : memref<128x448xf32, #tpu.memory_space<vmem>>, vector<16x64xf32>
    tpu.vector_store %arg24[%c112_299, %c256_300], %277 {strides = array<i32>} : memref<128x448xf32, #tpu.memory_space<vmem>>, vector<16x64xf32>,
    %279 = vector.extract_strided_slice %226 {offsets = [68, 0], sizes = [48, 64], strides = [1, 1]} : vector<128x64xf32> to vector<48x64xf32>
    %c64_301 = arith.constant 64 : index
    %c320_302 = arith.constant 320 : index
    %280 = vector.load %arg24[%c64_301, %c320_302] : memref<128x448xf32, #tpu.memory_space<vmem>>, vector<48x64xf32>
    tpu.vector_store %arg24[%c64_301, %c320_302], %279 {strides = array<i32>} : memref<128x448xf32, #tpu.memory_space<vmem>>, vector<48x64xf32>,
    %cst_303 = arith.constant 0.000000e+00 : f32
    %281 = vector.broadcast %cst_303 : f32 to vector<16x64xf32>
    %c112_304 = arith.constant 112 : index
    %c320_305 = arith.constant 320 : index
    %282 = vector.load %arg24[%c112_304, %c320_305] : memref<128x448xf32, #tpu.memory_space<vmem>>, vector<16x64xf32>
    tpu.vector_store %arg24[%c112_304, %c320_305], %281 {strides = array<i32>} : memref<128x448xf32, #tpu.memory_space<vmem>>, vector<16x64xf32>,
    %283 = vector.extract_strided_slice %226 {offsets = [69, 0], sizes = [47, 64], strides = [1, 1]} : vector<128x64xf32> to vector<47x64xf32>
    %c64_306 = arith.constant 64 : index
    %c384_307 = arith.constant 384 : index
    %284 = vector.load %arg24[%c64_306, %c384_307] : memref<128x448xf32, #tpu.memory_space<vmem>>, vector<47x64xf32>
    tpu.vector_store %arg24[%c64_306, %c384_307], %283 {strides = array<i32>} : memref<128x448xf32, #tpu.memory_space<vmem>>, vector<47x64xf32>,
    %cst_308 = arith.constant 0.000000e+00 : f32
    %285 = vector.broadcast %cst_308 : f32 to vector<17x64xf32>
    %c111 = arith.constant 111 : index
    %c384_309 = arith.constant 384 : index
    %286 = vector.load %arg24[%c111, %c384_309] : memref<128x448xf32, #tpu.memory_space<vmem>>, vector<17x64xf32>
    tpu.vector_store %arg24[%c111, %c384_309], %285 {strides = array<i32>} : memref<128x448xf32, #tpu.memory_space<vmem>>, vector<17x64xf32>,
    %c0_310 = arith.constant 0 : index
    %c0_311 = arith.constant 0 : index
    %287 = vector.load %arg24[%c0_310, %c0_311] : memref<128x448xf32, #tpu.memory_space<vmem>>, vector<128x448xf32>
    %c0_312 = arith.constant 0 : index
    %c0_313 = arith.constant 0 : index
    %288 = vector.load %arg10[%c0_312, %c0_313] : memref<448x64xf32, #tpu.memory_space<vmem>>, vector<448x64xf32>
    %cst_314 = arith.constant dense<0.000000e+00> : vector<128x64xf32>
    %289 = tpu.matmul %287, %288, %cst_314 {dimension_numbers = #tpu.dot_dimension_numbers<[1], [0], [0], [1], [0, 0, 1, 1], [], []>} : vector<128x448xf32>, vector<448x64xf32>, vector<128x64xf32> -> vector<128x64xf32>
    %c0_315 = arith.constant 0 : index
    %c0_316 = arith.constant 0 : index
    %290 = vector.load %arg11[%c0_315, %c0_316] : memref<1x64xf32, #tpu.memory_space<vmem>>, vector<1x64xf32>
    %291 = vector.broadcast %290 : vector<1x64xf32> to vector<128x64xf32>
    %292 = arith.addf %289, %291 : vector<128x64xf32>
    %c0_317 = arith.constant 0 : index
    %c0_318 = arith.constant 0 : index
    %293 = vector.load %arg12[%c0_317, %c0_318] : memref<32x64xf32, #tpu.memory_space<vmem>>, vector<32x64xf32>
    %cst_319 = arith.constant dense<0.000000e+00> : vector<128x64xf32>
    %294 = tpu.matmul %155, %293, %cst_319 {dimension_numbers = #tpu.dot_dimension_numbers<[1], [0], [0], [1], [0, 0, 1, 1], [], []>} : vector<128x32xf32>, vector<32x64xf32>, vector<128x64xf32> -> vector<128x64xf32>
    %c0_320 = arith.constant 0 : index
    %c0_321 = arith.constant 0 : index
    %295 = vector.load %arg13[%c0_320, %c0_321] : memref<1x64xf32, #tpu.memory_space<vmem>>, vector<1x64xf32>
    %296 = vector.broadcast %295 : vector<1x64xf32> to vector<128x64xf32>
    %297 = arith.addf %294, %296 : vector<128x64xf32>
    %298 = arith.addf %292, %297 : vector<128x64xf32>
    %cst_322 = arith.constant 0.000000e+00 : f32
    %299 = vector.broadcast %cst_322 : f32 to vector<128x64xf32>
    %300 = arith.cmpf oge, %298, %299 : vector<128x64xf32>
    %cst_323 = arith.constant 0.00999999977 : f32
    %301 = vector.broadcast %cst_323 : f32 to vector<128x64xf32>
    %302 = arith.mulf %301, %298 : vector<128x64xf32>
    %303 = arith.select %300, %298, %302 : vector<128x64xi1>, vector<128x64xf32>
    %cst_324 = arith.constant 0.000000e+00 : f32
    %304 = vector.broadcast %cst_324 : f32 to vector<1x64xf32>
    %c0_325 = arith.constant 0 : index
    %c0_326 = arith.constant 0 : index
    %305 = vector.load %arg25[%c0_325, %c0_326] : memref<128x448xf32, #tpu.memory_space<vmem>>, vector<1x64xf32>
    tpu.vector_store %arg25[%c0_325, %c0_326], %304 {strides = array<i32>} : memref<128x448xf32, #tpu.memory_space<vmem>>, vector<1x64xf32>,
    %306 = vector.extract_strided_slice %303 {offsets = [0, 0], sizes = [43, 64], strides = [1, 1]} : vector<128x64xf32> to vector<43x64xf32>
    %c1_327 = arith.constant 1 : index
    %c0_328 = arith.constant 0 : index
    %307 = vector.load %arg25[%c1_327, %c0_328] : memref<128x448xf32, #tpu.memory_space<vmem>>, vector<43x64xf32>
    tpu.vector_store %arg25[%c1_327, %c0_328], %306 {strides = array<i32>} : memref<128x448xf32, #tpu.memory_space<vmem>>, vector<43x64xf32>,
    %cst_329 = arith.constant 0.000000e+00 : f32
    %308 = vector.broadcast %cst_329 : f32 to vector<20x64xf32>
    %c44 = arith.constant 44 : index
    %c0_330 = arith.constant 0 : index
    %309 = vector.load %arg25[%c44, %c0_330] : memref<128x448xf32, #tpu.memory_space<vmem>>, vector<20x64xf32>
    tpu.vector_store %arg25[%c44, %c0_330], %308 {strides = array<i32>} : memref<128x448xf32, #tpu.memory_space<vmem>>, vector<20x64xf32>,
    %310 = vector.extract_strided_slice %303 {offsets = [0, 0], sizes = [44, 64], strides = [1, 1]} : vector<128x64xf32> to vector<44x64xf32>
    %c0_331 = arith.constant 0 : index
    %c64_332 = arith.constant 64 : index
    %311 = vector.load %arg25[%c0_331, %c64_332] : memref<128x448xf32, #tpu.memory_space<vmem>>, vector<44x64xf32>
    tpu.vector_store %arg25[%c0_331, %c64_332], %310 {strides = array<i32>} : memref<128x448xf32, #tpu.memory_space<vmem>>, vector<44x64xf32>,
    %cst_333 = arith.constant 0.000000e+00 : f32
    %312 = vector.broadcast %cst_333 : f32 to vector<20x64xf32>
    %c44_334 = arith.constant 44 : index
    %c64_335 = arith.constant 64 : index
    %313 = vector.load %arg25[%c44_334, %c64_335] : memref<128x448xf32, #tpu.memory_space<vmem>>, vector<20x64xf32>
    tpu.vector_store %arg25[%c44_334, %c64_335], %312 {strides = array<i32>} : memref<128x448xf32, #tpu.memory_space<vmem>>, vector<20x64xf32>,
    %314 = vector.extract_strided_slice %303 {offsets = [1, 0], sizes = [44, 64], strides = [1, 1]} : vector<128x64xf32> to vector<44x64xf32>
    %c0_336 = arith.constant 0 : index
    %c128_337 = arith.constant 128 : index
    %315 = vector.load %arg25[%c0_336, %c128_337] : memref<128x448xf32, #tpu.memory_space<vmem>>, vector<44x64xf32>
    tpu.vector_store %arg25[%c0_336, %c128_337], %314 {strides = array<i32>} : memref<128x448xf32, #tpu.memory_space<vmem>>, vector<44x64xf32>,
    %cst_338 = arith.constant 0.000000e+00 : f32
    %316 = vector.broadcast %cst_338 : f32 to vector<20x64xf32>
    %c44_339 = arith.constant 44 : index
    %c128_340 = arith.constant 128 : index
    %317 = vector.load %arg25[%c44_339, %c128_340] : memref<128x448xf32, #tpu.memory_space<vmem>>, vector<20x64xf32>
    tpu.vector_store %arg25[%c44_339, %c128_340], %316 {strides = array<i32>} : memref<128x448xf32, #tpu.memory_space<vmem>>, vector<20x64xf32>,
    %318 = vector.extract_strided_slice %303 {offsets = [2, 0], sizes = [44, 64], strides = [1, 1]} : vector<128x64xf32> to vector<44x64xf32>
    %c0_341 = arith.constant 0 : index
    %c192_342 = arith.constant 192 : index
    %319 = vector.load %arg25[%c0_341, %c192_342] : memref<128x448xf32, #tpu.memory_space<vmem>>, vector<44x64xf32>
    tpu.vector_store %arg25[%c0_341, %c192_342], %318 {strides = array<i32>} : memref<128x448xf32, #tpu.memory_space<vmem>>, vector<44x64xf32>,
    %cst_343 = arith.constant 0.000000e+00 : f32
    %320 = vector.broadcast %cst_343 : f32 to vector<20x64xf32>
    %c44_344 = arith.constant 44 : index
    %c192_345 = arith.constant 192 : index
    %321 = vector.load %arg25[%c44_344, %c192_345] : memref<128x448xf32, #tpu.memory_space<vmem>>, vector<20x64xf32>
    tpu.vector_store %arg25[%c44_344, %c192_345], %320 {strides = array<i32>} : memref<128x448xf32, #tpu.memory_space<vmem>>, vector<20x64xf32>,
    %322 = vector.extract_strided_slice %303 {offsets = [3, 0], sizes = [44, 64], strides = [1, 1]} : vector<128x64xf32> to vector<44x64xf32>
    %c0_346 = arith.constant 0 : index
    %c256_347 = arith.constant 256 : index
    %323 = vector.load %arg25[%c0_346, %c256_347] : memref<128x448xf32, #tpu.memory_space<vmem>>, vector<44x64xf32>
    tpu.vector_store %arg25[%c0_346, %c256_347], %322 {strides = array<i32>} : memref<128x448xf32, #tpu.memory_space<vmem>>, vector<44x64xf32>,
    %cst_348 = arith.constant 0.000000e+00 : f32
    %324 = vector.broadcast %cst_348 : f32 to vector<20x64xf32>
    %c44_349 = arith.constant 44 : index
    %c256_350 = arith.constant 256 : index
    %325 = vector.load %arg25[%c44_349, %c256_350] : memref<128x448xf32, #tpu.memory_space<vmem>>, vector<20x64xf32>
    tpu.vector_store %arg25[%c44_349, %c256_350], %324 {strides = array<i32>} : memref<128x448xf32, #tpu.memory_space<vmem>>, vector<20x64xf32>,
    %326 = vector.extract_strided_slice %303 {offsets = [4, 0], sizes = [44, 64], strides = [1, 1]} : vector<128x64xf32> to vector<44x64xf32>
    %c0_351 = arith.constant 0 : index
    %c320_352 = arith.constant 320 : index
    %327 = vector.load %arg25[%c0_351, %c320_352] : memref<128x448xf32, #tpu.memory_space<vmem>>, vector<44x64xf32>
    tpu.vector_store %arg25[%c0_351, %c320_352], %326 {strides = array<i32>} : memref<128x448xf32, #tpu.memory_space<vmem>>, vector<44x64xf32>,
    %cst_353 = arith.constant 0.000000e+00 : f32
    %328 = vector.broadcast %cst_353 : f32 to vector<20x64xf32>
    %c44_354 = arith.constant 44 : index
    %c320_355 = arith.constant 320 : index
    %329 = vector.load %arg25[%c44_354, %c320_355] : memref<128x448xf32, #tpu.memory_space<vmem>>, vector<20x64xf32>
    tpu.vector_store %arg25[%c44_354, %c320_355], %328 {strides = array<i32>} : memref<128x448xf32, #tpu.memory_space<vmem>>, vector<20x64xf32>,
    %330 = vector.extract_strided_slice %303 {offsets = [5, 0], sizes = [43, 64], strides = [1, 1]} : vector<128x64xf32> to vector<43x64xf32>
    %c0_356 = arith.constant 0 : index
    %c384_357 = arith.constant 384 : index
    %331 = vector.load %arg25[%c0_356, %c384_357] : memref<128x448xf32, #tpu.memory_space<vmem>>, vector<43x64xf32>
    tpu.vector_store %arg25[%c0_356, %c384_357], %330 {strides = array<i32>} : memref<128x448xf32, #tpu.memory_space<vmem>>, vector<43x64xf32>,
    %cst_358 = arith.constant 0.000000e+00 : f32
    %332 = vector.broadcast %cst_358 : f32 to vector<21x64xf32>
    %c43 = arith.constant 43 : index
    %c384_359 = arith.constant 384 : index
    %333 = vector.load %arg25[%c43, %c384_359] : memref<128x448xf32, #tpu.memory_space<vmem>>, vector<21x64xf32>
    tpu.vector_store %arg25[%c43, %c384_359], %332 {strides = array<i32>} : memref<128x448xf32, #tpu.memory_space<vmem>>, vector<21x64xf32>,
    %cst_360 = arith.constant 0.000000e+00 : f32
    %334 = vector.broadcast %cst_360 : f32 to vector<1x64xf32>
    %c64_361 = arith.constant 64 : index
    %c0_362 = arith.constant 0 : index
    %335 = vector.load %arg25[%c64_361, %c0_362] : memref<128x448xf32, #tpu.memory_space<vmem>>, vector<1x64xf32>
    tpu.vector_store %arg25[%c64_361, %c0_362], %334 {strides = array<i32>} : memref<128x448xf32, #tpu.memory_space<vmem>>, vector<1x64xf32>,
    %336 = vector.extract_strided_slice %303 {offsets = [64, 0], sizes = [43, 64], strides = [1, 1]} : vector<128x64xf32> to vector<43x64xf32>
    %c65_363 = arith.constant 65 : index
    %c0_364 = arith.constant 0 : index
    %337 = vector.load %arg25[%c65_363, %c0_364] : memref<128x448xf32, #tpu.memory_space<vmem>>, vector<43x64xf32>
    tpu.vector_store %arg25[%c65_363, %c0_364], %336 {strides = array<i32>} : memref<128x448xf32, #tpu.memory_space<vmem>>, vector<43x64xf32>,
    %cst_365 = arith.constant 0.000000e+00 : f32
    %338 = vector.broadcast %cst_365 : f32 to vector<20x64xf32>
    %c108 = arith.constant 108 : index
    %c0_366 = arith.constant 0 : index
    %339 = vector.load %arg25[%c108, %c0_366] : memref<128x448xf32, #tpu.memory_space<vmem>>, vector<20x64xf32>
    tpu.vector_store %arg25[%c108, %c0_366], %338 {strides = array<i32>} : memref<128x448xf32, #tpu.memory_space<vmem>>, vector<20x64xf32>,
    %340 = vector.extract_strided_slice %303 {offsets = [64, 0], sizes = [44, 64], strides = [1, 1]} : vector<128x64xf32> to vector<44x64xf32>
    %c64_367 = arith.constant 64 : index
    %c64_368 = arith.constant 64 : index
    %341 = vector.load %arg25[%c64_367, %c64_368] : memref<128x448xf32, #tpu.memory_space<vmem>>, vector<44x64xf32>
    tpu.vector_store %arg25[%c64_367, %c64_368], %340 {strides = array<i32>} : memref<128x448xf32, #tpu.memory_space<vmem>>, vector<44x64xf32>,
    %cst_369 = arith.constant 0.000000e+00 : f32
    %342 = vector.broadcast %cst_369 : f32 to vector<20x64xf32>
    %c108_370 = arith.constant 108 : index
    %c64_371 = arith.constant 64 : index
    %343 = vector.load %arg25[%c108_370, %c64_371] : memref<128x448xf32, #tpu.memory_space<vmem>>, vector<20x64xf32>
    tpu.vector_store %arg25[%c108_370, %c64_371], %342 {strides = array<i32>} : memref<128x448xf32, #tpu.memory_space<vmem>>, vector<20x64xf32>,
    %344 = vector.extract_strided_slice %303 {offsets = [65, 0], sizes = [44, 64], strides = [1, 1]} : vector<128x64xf32> to vector<44x64xf32>
    %c64_372 = arith.constant 64 : index
    %c128_373 = arith.constant 128 : index
    %345 = vector.load %arg25[%c64_372, %c128_373] : memref<128x448xf32, #tpu.memory_space<vmem>>, vector<44x64xf32>
    tpu.vector_store %arg25[%c64_372, %c128_373], %344 {strides = array<i32>} : memref<128x448xf32, #tpu.memory_space<vmem>>, vector<44x64xf32>,
    %cst_374 = arith.constant 0.000000e+00 : f32
    %346 = vector.broadcast %cst_374 : f32 to vector<20x64xf32>
    %c108_375 = arith.constant 108 : index
    %c128_376 = arith.constant 128 : index
    %347 = vector.load %arg25[%c108_375, %c128_376] : memref<128x448xf32, #tpu.memory_space<vmem>>, vector<20x64xf32>
    tpu.vector_store %arg25[%c108_375, %c128_376], %346 {strides = array<i32>} : memref<128x448xf32, #tpu.memory_space<vmem>>, vector<20x64xf32>,
    %348 = vector.extract_strided_slice %303 {offsets = [66, 0], sizes = [44, 64], strides = [1, 1]} : vector<128x64xf32> to vector<44x64xf32>
    %c64_377 = arith.constant 64 : index
    %c192_378 = arith.constant 192 : index
    %349 = vector.load %arg25[%c64_377, %c192_378] : memref<128x448xf32, #tpu.memory_space<vmem>>, vector<44x64xf32>
    tpu.vector_store %arg25[%c64_377, %c192_378], %348 {strides = array<i32>} : memref<128x448xf32, #tpu.memory_space<vmem>>, vector<44x64xf32>,
    %cst_379 = arith.constant 0.000000e+00 : f32
    %350 = vector.broadcast %cst_379 : f32 to vector<20x64xf32>
    %c108_380 = arith.constant 108 : index
    %c192_381 = arith.constant 192 : index
    %351 = vector.load %arg25[%c108_380, %c192_381] : memref<128x448xf32, #tpu.memory_space<vmem>>, vector<20x64xf32>
    tpu.vector_store %arg25[%c108_380, %c192_381], %350 {strides = array<i32>} : memref<128x448xf32, #tpu.memory_space<vmem>>, vector<20x64xf32>,
    %352 = vector.extract_strided_slice %303 {offsets = [67, 0], sizes = [44, 64], strides = [1, 1]} : vector<128x64xf32> to vector<44x64xf32>
    %c64_382 = arith.constant 64 : index
    %c256_383 = arith.constant 256 : index
    %353 = vector.load %arg25[%c64_382, %c256_383] : memref<128x448xf32, #tpu.memory_space<vmem>>, vector<44x64xf32>
    tpu.vector_store %arg25[%c64_382, %c256_383], %352 {strides = array<i32>} : memref<128x448xf32, #tpu.memory_space<vmem>>, vector<44x64xf32>,
    %cst_384 = arith.constant 0.000000e+00 : f32
    %354 = vector.broadcast %cst_384 : f32 to vector<20x64xf32>
    %c108_385 = arith.constant 108 : index
    %c256_386 = arith.constant 256 : index
    %355 = vector.load %arg25[%c108_385, %c256_386] : memref<128x448xf32, #tpu.memory_space<vmem>>, vector<20x64xf32>
    tpu.vector_store %arg25[%c108_385, %c256_386], %354 {strides = array<i32>} : memref<128x448xf32, #tpu.memory_space<vmem>>, vector<20x64xf32>,
    %356 = vector.extract_strided_slice %303 {offsets = [68, 0], sizes = [44, 64], strides = [1, 1]} : vector<128x64xf32> to vector<44x64xf32>
    %c64_387 = arith.constant 64 : index
    %c320_388 = arith.constant 320 : index
    %357 = vector.load %arg25[%c64_387, %c320_388] : memref<128x448xf32, #tpu.memory_space<vmem>>, vector<44x64xf32>
    tpu.vector_store %arg25[%c64_387, %c320_388], %356 {strides = array<i32>} : memref<128x448xf32, #tpu.memory_space<vmem>>, vector<44x64xf32>,
    %cst_389 = arith.constant 0.000000e+00 : f32
    %358 = vector.broadcast %cst_389 : f32 to vector<20x64xf32>
    %c108_390 = arith.constant 108 : index
    %c320_391 = arith.constant 320 : index
    %359 = vector.load %arg25[%c108_390, %c320_391] : memref<128x448xf32, #tpu.memory_space<vmem>>, vector<20x64xf32>
    tpu.vector_store %arg25[%c108_390, %c320_391], %358 {strides = array<i32>} : memref<128x448xf32, #tpu.memory_space<vmem>>, vector<20x64xf32>,
    %360 = vector.extract_strided_slice %303 {offsets = [69, 0], sizes = [43, 64], strides = [1, 1]} : vector<128x64xf32> to vector<43x64xf32>
    %c64_392 = arith.constant 64 : index
    %c384_393 = arith.constant 384 : index
    %361 = vector.load %arg25[%c64_392, %c384_393] : memref<128x448xf32, #tpu.memory_space<vmem>>, vector<43x64xf32>
    tpu.vector_store %arg25[%c64_392, %c384_393], %360 {strides = array<i32>} : memref<128x448xf32, #tpu.memory_space<vmem>>, vector<43x64xf32>,
    %cst_394 = arith.constant 0.000000e+00 : f32
    %362 = vector.broadcast %cst_394 : f32 to vector<21x64xf32>
    %c107 = arith.constant 107 : index
    %c384_395 = arith.constant 384 : index
    %363 = vector.load %arg25[%c107, %c384_395] : memref<128x448xf32, #tpu.memory_space<vmem>>, vector<21x64xf32>
    tpu.vector_store %arg25[%c107, %c384_395], %362 {strides = array<i32>} : memref<128x448xf32, #tpu.memory_space<vmem>>, vector<21x64xf32>,
    %c0_396 = arith.constant 0 : index
    %c0_397 = arith.constant 0 : index
    %364 = vector.load %arg25[%c0_396, %c0_397] : memref<128x448xf32, #tpu.memory_space<vmem>>, vector<128x448xf32>
    %c0_398 = arith.constant 0 : index
    %c0_399 = arith.constant 0 : index
    %365 = vector.load %arg14[%c0_398, %c0_399] : memref<448x128xf32, #tpu.memory_space<vmem>>, vector<448x128xf32>
    %cst_400 = arith.constant dense<0.000000e+00> : vector<128x128xf32>
    %366 = tpu.matmul %364, %365, %cst_400 {dimension_numbers = #tpu.dot_dimension_numbers<[1], [0], [0], [1], [0, 0, 1, 1], [], []>} : vector<128x448xf32>, vector<448x128xf32>, vector<128x128xf32> -> vector<128x128xf32>
    %c0_401 = arith.constant 0 : index
    %c0_402 = arith.constant 0 : index
    %367 = vector.load %arg15[%c0_401, %c0_402] : memref<1x128xf32, #tpu.memory_space<vmem>>, vector<1x128xf32>
    %368 = vector.broadcast %367 : vector<1x128xf32> to vector<128x128xf32>
    %369 = arith.addf %366, %368 : vector<128x128xf32>
    %cst_403 = arith.constant 0.000000e+00 : f32
    %370 = vector.broadcast %cst_403 : f32 to vector<128x128xf32>
    %371 = arith.cmpf oge, %369, %370 : vector<128x128xf32>
    %cst_404 = arith.constant 0.00999999977 : f32
    %372 = vector.broadcast %cst_404 : f32 to vector<128x128xf32>
    %373 = arith.mulf %372, %369 : vector<128x128xf32>
    %374 = arith.select %371, %369, %373 : vector<128x128xi1>, vector<128x128xf32>
    %cst_405 = arith.constant 0.000000e+00 : f32
    %375 = vector.broadcast %cst_405 : f32 to vector<1x128xf32>
    %c0_406 = arith.constant 0 : index
    %c0_407 = arith.constant 0 : index
    %376 = vector.load %arg26[%c0_406, %c0_407] : memref<128x896xf32, #tpu.memory_space<vmem>>, vector<1x128xf32>
    tpu.vector_store %arg26[%c0_406, %c0_407], %375 {strides = array<i32>} : memref<128x896xf32, #tpu.memory_space<vmem>>, vector<1x128xf32>,
    %377 = vector.extract_strided_slice %374 {offsets = [0, 0], sizes = [39, 128], strides = [1, 1]} : vector<128x128xf32> to vector<39x128xf32>
    %c1_408 = arith.constant 1 : index
    %c0_409 = arith.constant 0 : index
    %378 = vector.load %arg26[%c1_408, %c0_409] : memref<128x896xf32, #tpu.memory_space<vmem>>, vector<39x128xf32>
    tpu.vector_store %arg26[%c1_408, %c0_409], %377 {strides = array<i32>} : memref<128x896xf32, #tpu.memory_space<vmem>>, vector<39x128xf32>,
    %cst_410 = arith.constant 0.000000e+00 : f32
    %379 = vector.broadcast %cst_410 : f32 to vector<24x128xf32>
    %c40 = arith.constant 40 : index
    %c0_411 = arith.constant 0 : index
    %380 = vector.load %arg26[%c40, %c0_411] : memref<128x896xf32, #tpu.memory_space<vmem>>, vector<24x128xf32>
    tpu.vector_store %arg26[%c40, %c0_411], %379 {strides = array<i32>} : memref<128x896xf32, #tpu.memory_space<vmem>>, vector<24x128xf32>,
    %381 = vector.extract_strided_slice %374 {offsets = [0, 0], sizes = [40, 128], strides = [1, 1]} : vector<128x128xf32> to vector<40x128xf32>
    %c0_412 = arith.constant 0 : index
    %c128_413 = arith.constant 128 : index
    %382 = vector.load %arg26[%c0_412, %c128_413] : memref<128x896xf32, #tpu.memory_space<vmem>>, vector<40x128xf32>
    tpu.vector_store %arg26[%c0_412, %c128_413], %381 {strides = array<i32>} : memref<128x896xf32, #tpu.memory_space<vmem>>, vector<40x128xf32>,
    %cst_414 = arith.constant 0.000000e+00 : f32
    %383 = vector.broadcast %cst_414 : f32 to vector<24x128xf32>
    %c40_415 = arith.constant 40 : index
    %c128_416 = arith.constant 128 : index
    %384 = vector.load %arg26[%c40_415, %c128_416] : memref<128x896xf32, #tpu.memory_space<vmem>>, vector<24x128xf32>
    tpu.vector_store %arg26[%c40_415, %c128_416], %383 {strides = array<i32>} : memref<128x896xf32, #tpu.memory_space<vmem>>, vector<24x128xf32>,
    %385 = vector.extract_strided_slice %374 {offsets = [1, 0], sizes = [40, 128], strides = [1, 1]} : vector<128x128xf32> to vector<40x128xf32>
    %c0_417 = arith.constant 0 : index
    %c256_418 = arith.constant 256 : index
    %386 = vector.load %arg26[%c0_417, %c256_418] : memref<128x896xf32, #tpu.memory_space<vmem>>, vector<40x128xf32>
    tpu.vector_store %arg26[%c0_417, %c256_418], %385 {strides = array<i32>} : memref<128x896xf32, #tpu.memory_space<vmem>>, vector<40x128xf32>,
    %cst_419 = arith.constant 0.000000e+00 : f32
    %387 = vector.broadcast %cst_419 : f32 to vector<24x128xf32>
    %c40_420 = arith.constant 40 : index
    %c256_421 = arith.constant 256 : index
    %388 = vector.load %arg26[%c40_420, %c256_421] : memref<128x896xf32, #tpu.memory_space<vmem>>, vector<24x128xf32>
    tpu.vector_store %arg26[%c40_420, %c256_421], %387 {strides = array<i32>} : memref<128x896xf32, #tpu.memory_space<vmem>>, vector<24x128xf32>,
    %389 = vector.extract_strided_slice %374 {offsets = [2, 0], sizes = [40, 128], strides = [1, 1]} : vector<128x128xf32> to vector<40x128xf32>
    %c0_422 = arith.constant 0 : index
    %c384_423 = arith.constant 384 : index
    %390 = vector.load %arg26[%c0_422, %c384_423] : memref<128x896xf32, #tpu.memory_space<vmem>>, vector<40x128xf32>
    tpu.vector_store %arg26[%c0_422, %c384_423], %389 {strides = array<i32>} : memref<128x896xf32, #tpu.memory_space<vmem>>, vector<40x128xf32>,
    %cst_424 = arith.constant 0.000000e+00 : f32
    %391 = vector.broadcast %cst_424 : f32 to vector<24x128xf32>
    %c40_425 = arith.constant 40 : index
    %c384_426 = arith.constant 384 : index
    %392 = vector.load %arg26[%c40_425, %c384_426] : memref<128x896xf32, #tpu.memory_space<vmem>>, vector<24x128xf32>
    tpu.vector_store %arg26[%c40_425, %c384_426], %391 {strides = array<i32>} : memref<128x896xf32, #tpu.memory_space<vmem>>, vector<24x128xf32>,
    %393 = vector.extract_strided_slice %374 {offsets = [3, 0], sizes = [40, 128], strides = [1, 1]} : vector<128x128xf32> to vector<40x128xf32>
    %c0_427 = arith.constant 0 : index
    %c512 = arith.constant 512 : index
    %394 = vector.load %arg26[%c0_427, %c512] : memref<128x896xf32, #tpu.memory_space<vmem>>, vector<40x128xf32>
    tpu.vector_store %arg26[%c0_427, %c512], %393 {strides = array<i32>} : memref<128x896xf32, #tpu.memory_space<vmem>>, vector<40x128xf32>,
    %cst_428 = arith.constant 0.000000e+00 : f32
    %395 = vector.broadcast %cst_428 : f32 to vector<24x128xf32>
    %c40_429 = arith.constant 40 : index
    %c512_430 = arith.constant 512 : index
    %396 = vector.load %arg26[%c40_429, %c512_430] : memref<128x896xf32, #tpu.memory_space<vmem>>, vector<24x128xf32>
    tpu.vector_store %arg26[%c40_429, %c512_430], %395 {strides = array<i32>} : memref<128x896xf32, #tpu.memory_space<vmem>>, vector<24x128xf32>,
    %397 = vector.extract_strided_slice %374 {offsets = [4, 0], sizes = [40, 128], strides = [1, 1]} : vector<128x128xf32> to vector<40x128xf32>
    %c0_431 = arith.constant 0 : index
    %c640 = arith.constant 640 : index
    %398 = vector.load %arg26[%c0_431, %c640] : memref<128x896xf32, #tpu.memory_space<vmem>>, vector<40x128xf32>
    tpu.vector_store %arg26[%c0_431, %c640], %397 {strides = array<i32>} : memref<128x896xf32, #tpu.memory_space<vmem>>, vector<40x128xf32>,
    %cst_432 = arith.constant 0.000000e+00 : f32
    %399 = vector.broadcast %cst_432 : f32 to vector<24x128xf32>
    %c40_433 = arith.constant 40 : index
    %c640_434 = arith.constant 640 : index
    %400 = vector.load %arg26[%c40_433, %c640_434] : memref<128x896xf32, #tpu.memory_space<vmem>>, vector<24x128xf32>
    tpu.vector_store %arg26[%c40_433, %c640_434], %399 {strides = array<i32>} : memref<128x896xf32, #tpu.memory_space<vmem>>, vector<24x128xf32>,
    %401 = vector.extract_strided_slice %374 {offsets = [5, 0], sizes = [39, 128], strides = [1, 1]} : vector<128x128xf32> to vector<39x128xf32>
    %c0_435 = arith.constant 0 : index
    %c768 = arith.constant 768 : index
    %402 = vector.load %arg26[%c0_435, %c768] : memref<128x896xf32, #tpu.memory_space<vmem>>, vector<39x128xf32>
    tpu.vector_store %arg26[%c0_435, %c768], %401 {strides = array<i32>} : memref<128x896xf32, #tpu.memory_space<vmem>>, vector<39x128xf32>,
    %cst_436 = arith.constant 0.000000e+00 : f32
    %403 = vector.broadcast %cst_436 : f32 to vector<25x128xf32>
    %c39 = arith.constant 39 : index
    %c768_437 = arith.constant 768 : index
    %404 = vector.load %arg26[%c39, %c768_437] : memref<128x896xf32, #tpu.memory_space<vmem>>, vector<25x128xf32>
    tpu.vector_store %arg26[%c39, %c768_437], %403 {strides = array<i32>} : memref<128x896xf32, #tpu.memory_space<vmem>>, vector<25x128xf32>,
    %cst_438 = arith.constant 0.000000e+00 : f32
    %405 = vector.broadcast %cst_438 : f32 to vector<1x128xf32>
    %c64_439 = arith.constant 64 : index
    %c0_440 = arith.constant 0 : index
    %406 = vector.load %arg26[%c64_439, %c0_440] : memref<128x896xf32, #tpu.memory_space<vmem>>, vector<1x128xf32>
    tpu.vector_store %arg26[%c64_439, %c0_440], %405 {strides = array<i32>} : memref<128x896xf32, #tpu.memory_space<vmem>>, vector<1x128xf32>,
    %407 = vector.extract_strided_slice %374 {offsets = [64, 0], sizes = [39, 128], strides = [1, 1]} : vector<128x128xf32> to vector<39x128xf32>
    %c65_441 = arith.constant 65 : index
    %c0_442 = arith.constant 0 : index
    %408 = vector.load %arg26[%c65_441, %c0_442] : memref<128x896xf32, #tpu.memory_space<vmem>>, vector<39x128xf32>
    tpu.vector_store %arg26[%c65_441, %c0_442], %407 {strides = array<i32>} : memref<128x896xf32, #tpu.memory_space<vmem>>, vector<39x128xf32>,
    %cst_443 = arith.constant 0.000000e+00 : f32
    %409 = vector.broadcast %cst_443 : f32 to vector<24x128xf32>
    %c104 = arith.constant 104 : index
    %c0_444 = arith.constant 0 : index
    %410 = vector.load %arg26[%c104, %c0_444] : memref<128x896xf32, #tpu.memory_space<vmem>>, vector<24x128xf32>
    tpu.vector_store %arg26[%c104, %c0_444], %409 {strides = array<i32>} : memref<128x896xf32, #tpu.memory_space<vmem>>, vector<24x128xf32>,
    %411 = vector.extract_strided_slice %374 {offsets = [64, 0], sizes = [40, 128], strides = [1, 1]} : vector<128x128xf32> to vector<40x128xf32>
    %c64_445 = arith.constant 64 : index
    %c128_446 = arith.constant 128 : index
    %412 = vector.load %arg26[%c64_445, %c128_446] : memref<128x896xf32, #tpu.memory_space<vmem>>, vector<40x128xf32>
    tpu.vector_store %arg26[%c64_445, %c128_446], %411 {strides = array<i32>} : memref<128x896xf32, #tpu.memory_space<vmem>>, vector<40x128xf32>,
    %cst_447 = arith.constant 0.000000e+00 : f32
    %413 = vector.broadcast %cst_447 : f32 to vector<24x128xf32>
    %c104_448 = arith.constant 104 : index
    %c128_449 = arith.constant 128 : index
    %414 = vector.load %arg26[%c104_448, %c128_449] : memref<128x896xf32, #tpu.memory_space<vmem>>, vector<24x128xf32>
    tpu.vector_store %arg26[%c104_448, %c128_449], %413 {strides = array<i32>} : memref<128x896xf32, #tpu.memory_space<vmem>>, vector<24x128xf32>,
    %415 = vector.extract_strided_slice %374 {offsets = [65, 0], sizes = [40, 128], strides = [1, 1]} : vector<128x128xf32> to vector<40x128xf32>
    %c64_450 = arith.constant 64 : index
    %c256_451 = arith.constant 256 : index
    %416 = vector.load %arg26[%c64_450, %c256_451] : memref<128x896xf32, #tpu.memory_space<vmem>>, vector<40x128xf32>
    tpu.vector_store %arg26[%c64_450, %c256_451], %415 {strides = array<i32>} : memref<128x896xf32, #tpu.memory_space<vmem>>, vector<40x128xf32>,
    %cst_452 = arith.constant 0.000000e+00 : f32
    %417 = vector.broadcast %cst_452 : f32 to vector<24x128xf32>
    %c104_453 = arith.constant 104 : index
    %c256_454 = arith.constant 256 : index
    %418 = vector.load %arg26[%c104_453, %c256_454] : memref<128x896xf32, #tpu.memory_space<vmem>>, vector<24x128xf32>
    tpu.vector_store %arg26[%c104_453, %c256_454], %417 {strides = array<i32>} : memref<128x896xf32, #tpu.memory_space<vmem>>, vector<24x128xf32>,
    %419 = vector.extract_strided_slice %374 {offsets = [66, 0], sizes = [40, 128], strides = [1, 1]} : vector<128x128xf32> to vector<40x128xf32>
    %c64_455 = arith.constant 64 : index
    %c384_456 = arith.constant 384 : index
    %420 = vector.load %arg26[%c64_455, %c384_456] : memref<128x896xf32, #tpu.memory_space<vmem>>, vector<40x128xf32>
    tpu.vector_store %arg26[%c64_455, %c384_456], %419 {strides = array<i32>} : memref<128x896xf32, #tpu.memory_space<vmem>>, vector<40x128xf32>,
    %cst_457 = arith.constant 0.000000e+00 : f32
    %421 = vector.broadcast %cst_457 : f32 to vector<24x128xf32>
    %c104_458 = arith.constant 104 : index
    %c384_459 = arith.constant 384 : index
    %422 = vector.load %arg26[%c104_458, %c384_459] : memref<128x896xf32, #tpu.memory_space<vmem>>, vector<24x128xf32>
    tpu.vector_store %arg26[%c104_458, %c384_459], %421 {strides = array<i32>} : memref<128x896xf32, #tpu.memory_space<vmem>>, vector<24x128xf32>,
    %423 = vector.extract_strided_slice %374 {offsets = [67, 0], sizes = [40, 128], strides = [1, 1]} : vector<128x128xf32> to vector<40x128xf32>
    %c64_460 = arith.constant 64 : index
    %c512_461 = arith.constant 512 : index
    %424 = vector.load %arg26[%c64_460, %c512_461] : memref<128x896xf32, #tpu.memory_space<vmem>>, vector<40x128xf32>
    tpu.vector_store %arg26[%c64_460, %c512_461], %423 {strides = array<i32>} : memref<128x896xf32, #tpu.memory_space<vmem>>, vector<40x128xf32>,
    %cst_462 = arith.constant 0.000000e+00 : f32
    %425 = vector.broadcast %cst_462 : f32 to vector<24x128xf32>
    %c104_463 = arith.constant 104 : index
    %c512_464 = arith.constant 512 : index
    %426 = vector.load %arg26[%c104_463, %c512_464] : memref<128x896xf32, #tpu.memory_space<vmem>>, vector<24x128xf32>
    tpu.vector_store %arg26[%c104_463, %c512_464], %425 {strides = array<i32>} : memref<128x896xf32, #tpu.memory_space<vmem>>, vector<24x128xf32>,
    %427 = vector.extract_strided_slice %374 {offsets = [68, 0], sizes = [40, 128], strides = [1, 1]} : vector<128x128xf32> to vector<40x128xf32>
    %c64_465 = arith.constant 64 : index
    %c640_466 = arith.constant 640 : index
    %428 = vector.load %arg26[%c64_465, %c640_466] : memref<128x896xf32, #tpu.memory_space<vmem>>, vector<40x128xf32>
    tpu.vector_store %arg26[%c64_465, %c640_466], %427 {strides = array<i32>} : memref<128x896xf32, #tpu.memory_space<vmem>>, vector<40x128xf32>,
    %cst_467 = arith.constant 0.000000e+00 : f32
    %429 = vector.broadcast %cst_467 : f32 to vector<24x128xf32>
    %c104_468 = arith.constant 104 : index
    %c640_469 = arith.constant 640 : index
    %430 = vector.load %arg26[%c104_468, %c640_469] : memref<128x896xf32, #tpu.memory_space<vmem>>, vector<24x128xf32>
    tpu.vector_store %arg26[%c104_468, %c640_469], %429 {strides = array<i32>} : memref<128x896xf32, #tpu.memory_space<vmem>>, vector<24x128xf32>,
    %431 = vector.extract_strided_slice %374 {offsets = [69, 0], sizes = [39, 128], strides = [1, 1]} : vector<128x128xf32> to vector<39x128xf32>
    %c64_470 = arith.constant 64 : index
    %c768_471 = arith.constant 768 : index
    %432 = vector.load %arg26[%c64_470, %c768_471] : memref<128x896xf32, #tpu.memory_space<vmem>>, vector<39x128xf32>
    tpu.vector_store %arg26[%c64_470, %c768_471], %431 {strides = array<i32>} : memref<128x896xf32, #tpu.memory_space<vmem>>, vector<39x128xf32>,
    %cst_472 = arith.constant 0.000000e+00 : f32
    %433 = vector.broadcast %cst_472 : f32 to vector<25x128xf32>
    %c103 = arith.constant 103 : index
    %c768_473 = arith.constant 768 : index
    %434 = vector.load %arg26[%c103, %c768_473] : memref<128x896xf32, #tpu.memory_space<vmem>>, vector<25x128xf32>
    tpu.vector_store %arg26[%c103, %c768_473], %433 {strides = array<i32>} : memref<128x896xf32, #tpu.memory_space<vmem>>, vector<25x128xf32>,
    %c0_474 = arith.constant 0 : index
    %c0_475 = arith.constant 0 : index
    %435 = vector.load %arg26[%c0_474, %c0_475] : memref<128x896xf32, #tpu.memory_space<vmem>>, vector<128x896xf32>
    %c0_476 = arith.constant 0 : index
    %c0_477 = arith.constant 0 : index
    %436 = vector.load %arg16[%c0_476, %c0_477] : memref<896x128xf32, #tpu.memory_space<vmem>>, vector<896x128xf32>
    %cst_478 = arith.constant dense<0.000000e+00> : vector<128x128xf32>
    %437 = tpu.matmul %435, %436, %cst_478 {dimension_numbers = #tpu.dot_dimension_numbers<[1], [0], [0], [1], [0, 0, 1, 1], [], []>} : vector<128x896xf32>, vector<896x128xf32>, vector<128x128xf32> -> vector<128x128xf32>
    %c0_479 = arith.constant 0 : index
    %c0_480 = arith.constant 0 : index
    %438 = vector.load %arg17[%c0_479, %c0_480] : memref<1x128xf32, #tpu.memory_space<vmem>>, vector<1x128xf32>
    %439 = vector.broadcast %438 : vector<1x128xf32> to vector<128x128xf32>
    %440 = arith.addf %437, %439 : vector<128x128xf32>
    %c0_481 = arith.constant 0 : index
    %c0_482 = arith.constant 0 : index
    %441 = vector.load %arg18[%c0_481, %c0_482] : memref<64x128xf32, #tpu.memory_space<vmem>>, vector<64x128xf32>
    %cst_483 = arith.constant dense<0.000000e+00> : vector<128x128xf32>
    %442 = tpu.matmul %303, %441, %cst_483 {dimension_numbers = #tpu.dot_dimension_numbers<[1], [0], [0], [1], [0, 0, 1, 1], [], []>} : vector<128x64xf32>, vector<64x128xf32>, vector<128x128xf32> -> vector<128x128xf32>
    %c0_484 = arith.constant 0 : index
    %c0_485 = arith.constant 0 : index
    %443 = vector.load %arg19[%c0_484, %c0_485] : memref<1x128xf32, #tpu.memory_space<vmem>>, vector<1x128xf32>
    %444 = vector.broadcast %443 : vector<1x128xf32> to vector<128x128xf32>
    %445 = arith.addf %442, %444 : vector<128x128xf32>
    %446 = arith.addf %440, %445 : vector<128x128xf32>
    %cst_486 = arith.constant 0.000000e+00 : f32
    %447 = vector.broadcast %cst_486 : f32 to vector<128x128xf32>
    %448 = arith.cmpf oge, %446, %447 : vector<128x128xf32>
    %cst_487 = arith.constant 0.00999999977 : f32
    %449 = vector.broadcast %cst_487 : f32 to vector<128x128xf32>
    %450 = arith.mulf %449, %446 : vector<128x128xf32>
    %451 = arith.select %448, %446, %450 : vector<128x128xi1>, vector<128x128xf32>
    %452 = vector.extract_strided_slice %451 {offsets = [0, 0], sizes = [40, 128], strides = [1, 1]} : vector<128x128xf32> to vector<40x128xf32>
    %c0_488 = arith.constant 0 : index
    %c0_489 = arith.constant 0 : index
    %c0_490 = arith.constant 0 : index
    %453 = vector.load %arg20[%c0_488, %c0_489, %c0_490] : memref<2x40x128xf32, #tpu.memory_space<vmem>>, vector<1x40x128xf32>
    %454 = vector.shape_cast %453 : vector<1x40x128xf32> to vector<40x128xf32>
    %455 = vector.shape_cast %452 : vector<40x128xf32> to vector<1x40x128xf32>
    tpu.vector_store %arg20[%c0_488, %c0_489, %c0_490], %455 {strides = array<i32>} : memref<2x40x128xf32, #tpu.memory_space<vmem>>, vector<1x40x128xf32>,
    %456 = vector.extract_strided_slice %451 {offsets = [64, 0], sizes = [40, 128], strides = [1, 1]} : vector<128x128xf32> to vector<40x128xf32>
    %c1_491 = arith.constant 1 : index
    %c0_492 = arith.constant 0 : index
    %c0_493 = arith.constant 0 : index
    %457 = vector.load %arg20[%c1_491, %c0_492, %c0_493] : memref<2x40x128xf32, #tpu.memory_space<vmem>>, vector<1x40x128xf32>
    %458 = vector.shape_cast %457 : vector<1x40x128xf32> to vector<40x128xf32>
    %459 = vector.shape_cast %456 : vector<40x128xf32> to vector<1x40x128xf32>
    tpu.vector_store %arg20[%c1_491, %c0_492, %c0_493], %459 {strides = array<i32>} : memref<2x40x128xf32, #tpu.memory_space<vmem>>, vector<1x40x128xf32>,
    return
  }
  func.func @transform_0(%arg0: i32) -> (i32, i32) {
    %c0_i32 = arith.constant 0 : i32
    %c0_i32_0 = arith.constant 0 : i32
    %c0_i32_1 = arith.constant 0 : i32
    return %c0_i32, %c0_i32_0 : i32, i32
  }
  func.func @transform_1(%arg0: i32) -> (i32, i32) {
    %c0_i32 = arith.constant 0 : i32
    %c0_i32_0 = arith.constant 0 : i32
    %c0_i32_1 = arith.constant 0 : i32
    return %c0_i32, %c0_i32_0 : i32, i32
  }
  func.func @transform_2(%arg0: i32) -> (i32, i32) {
    %c0_i32 = arith.constant 0 : i32
    %c0_i32_0 = arith.constant 0 : i32
    %c0_i32_1 = arith.constant 0 : i32
    return %c0_i32, %c0_i32_0 : i32, i32
  }
  func.func @transform_3(%arg0: i32) -> (i32, i32) {
    %c0_i32 = arith.constant 0 : i32
    %c0_i32_0 = arith.constant 0 : i32
    %c0_i32_1 = arith.constant 0 : i32
    return %c0_i32, %c0_i32_0 : i32, i32
  }
  func.func @transform_4(%arg0: i32) -> (i32, i32) {
    %c0_i32 = arith.constant 0 : i32
    %c0_i32_0 = arith.constant 0 : i32
    %c0_i32_1 = arith.constant 0 : i32
    return %c0_i32, %c0_i32_0 : i32, i32
  }
  func.func @transform_5(%arg0: i32) -> (i32, i32) {
    %c0_i32 = arith.constant 0 : i32
    %c0_i32_0 = arith.constant 0 : i32
    %c0_i32_1 = arith.constant 0 : i32
    return %c0_i32, %c0_i32_0 : i32, i32
  }
  func.func @transform_6(%arg0: i32) -> (i32, i32) {
    %c0_i32 = arith.constant 0 : i32
    %c0_i32_0 = arith.constant 0 : i32
    %c0_i32_1 = arith.constant 0 : i32
    return %c0_i32, %c0_i32_0 : i32, i32
  }
  func.func @transform_7(%arg0: i32) -> (i32, i32) {
    %c0_i32 = arith.constant 0 : i32
    %c0_i32_0 = arith.constant 0 : i32
    %c0_i32_1 = arith.constant 0 : i32
    return %c0_i32, %c0_i32_0 : i32, i32
  }
  func.func @transform_8(%arg0: i32) -> (i32, i32) {
    %c0_i32 = arith.constant 0 : i32
    %c0_i32_0 = arith.constant 0 : i32
    %c0_i32_1 = arith.constant 0 : i32
    return %c0_i32, %c0_i32_0 : i32, i32
  }
  func.func @transform_9(%arg0: i32) -> (i32, i32) {
    %c0_i32 = arith.constant 0 : i32
    %c0_i32_0 = arith.constant 0 : i32
    %c0_i32_1 = arith.constant 0 : i32
    return %c0_i32, %c0_i32_0 : i32, i32
  }
  func.func @transform_10(%arg0: i32) -> (i32, i32) {
    %c0_i32 = arith.constant 0 : i32
    %c0_i32_0 = arith.constant 0 : i32
    %c0_i32_1 = arith.constant 0 : i32
    return %c0_i32, %c0_i32_0 : i32, i32
  }
  func.func @transform_11(%arg0: i32) -> (i32, i32) {
    %c0_i32 = arith.constant 0 : i32
    %c0_i32_0 = arith.constant 0 : i32
    %c0_i32_1 = arith.constant 0 : i32
    return %c0_i32, %c0_i32_0 : i32, i32
  }
  func.func @transform_12(%arg0: i32) -> (i32, i32) {
    %c0_i32 = arith.constant 0 : i32
    %c0_i32_0 = arith.constant 0 : i32
    %c0_i32_1 = arith.constant 0 : i32
    return %c0_i32, %c0_i32_0 : i32, i32
  }
  func.func @transform_13(%arg0: i32) -> (i32, i32) {
    %c0_i32 = arith.constant 0 : i32
    %c0_i32_0 = arith.constant 0 : i32
    %c0_i32_1 = arith.constant 0 : i32
    return %c0_i32, %c0_i32_0 : i32, i32
  }
  func.func @transform_14(%arg0: i32) -> (i32, i32) {
    %c0_i32 = arith.constant 0 : i32
    %c0_i32_0 = arith.constant 0 : i32
    %c0_i32_1 = arith.constant 0 : i32
    return %c0_i32, %c0_i32_0 : i32, i32
  }
  func.func @transform_15(%arg0: i32) -> (i32, i32) {
    %c0_i32 = arith.constant 0 : i32
    %c0_i32_0 = arith.constant 0 : i32
    %c0_i32_1 = arith.constant 0 : i32
    return %c0_i32, %c0_i32_0 : i32, i32
  }
  func.func @transform_16(%arg0: i32) -> (i32, i32) {
    %c0_i32 = arith.constant 0 : i32
    %c0_i32_0 = arith.constant 0 : i32
    %c0_i32_1 = arith.constant 0 : i32
    return %c0_i32, %c0_i32_0 : i32, i32
  }
  func.func @transform_17(%arg0: i32) -> (i32, i32) {
    %c0_i32 = arith.constant 0 : i32
    %c0_i32_0 = arith.constant 0 : i32
    %c0_i32_1 = arith.constant 0 : i32
    return %c0_i32, %c0_i32_0 : i32, i32
  }
  func.func @transform_18(%arg0: i32) -> (i32, i32) {
    %c0_i32 = arith.constant 0 : i32
    %c0_i32_0 = arith.constant 0 : i32
    %c0_i32_1 = arith.constant 0 : i32
    return %c0_i32, %c0_i32_0 : i32, i32
  }
  func.func @transform_19(%arg0: i32) -> (i32, i32, i32) {
    %c0_i32 = arith.constant 0 : i32
    %c0_i32_0 = arith.constant 0 : i32
    %c0_i32_1 = arith.constant 0 : i32
    %c0_i32_2 = arith.constant 0 : i32
    return %c0_i32, %c0_i32_0, %c0_i32_1 : i32, i32, i32
  }
}

</mosaic_0001>

<llo_original>
// kernel: tpu_custom_call.1
$region0: #{tpu_custom_call.1}
  #allocation0 [shape = 'u32[]', space=smem, size = 0x4, offset = 0x4, fixed_abs, tag = 'smem constant byte address 0x4 - core index']
  #allocation1 [shape = 'u32[72,128]{1,0:T(1,128)}', space=vmem, size = 0x9000, scoped, tag = 'internal scratch']
  #allocation2 [shape = 'f32[128,224]{1,0:T(8,128)}', space=vmem, size = 0x20000, scoped, tag = 'scratch operand']
  #allocation3 [shape = 'f32[128,224]{1,0:T(8,128)}', space=vmem, size = 0x20000, scoped, tag = 'scratch operand']
  #allocation4 [shape = 'f32[128,224]{1,0:T(8,128)}', space=vmem, size = 0x20000, scoped, tag = 'scratch operand']
  #allocation5 [shape = 'f32[128,448]{1,0:T(8,128)}', space=vmem, size = 0x40000, scoped, tag = 'scratch operand']
  #allocation6 [shape = 'f32[128,448]{1,0:T(8,128)}', space=vmem, size = 0x40000, scoped, tag = 'scratch operand']
  #allocation7 [shape = 'f32[128,896]{1,0:T(8,128)}', space=vmem, size = 0x70000, scoped, tag = 'scratch operand']
  %s0 = inlined_call_operand.vmem [shape: f32[128,1], index: 0, kind: input, shape index: {}]
  %s1 = inlined_call_operand.vmem [shape: f32[1,32], index: 1, kind: input, shape index: {}]
  %s2 = inlined_call_operand.vmem [shape: f32[1,32], index: 2, kind: input, shape index: {}]
  %s3 = inlined_call_operand.vmem [shape: f32[224,32], index: 3, kind: input, shape index: {}]
  %s4 = inlined_call_operand.vmem [shape: f32[1,32], index: 4, kind: input, shape index: {}]
  %s5 = inlined_call_operand.vmem [shape: f32[224,32], index: 5, kind: input, shape index: {}]
  %s6 = inlined_call_operand.vmem [shape: f32[1,32], index: 6, kind: input, shape index: {}]
  %s7 = inlined_call_operand.vmem [shape: f32[224,64], index: 7, kind: input, shape index: {}]
  %s8 = inlined_call_operand.vmem [shape: f32[1,64], index: 8, kind: input, shape index: {}]
  %s9 = inlined_call_operand.vmem [shape: f32[448,64], index: 9, kind: input, shape index: {}]
  %s10 = inlined_call_operand.vmem [shape: f32[1,64], index: 10, kind: input, shape index: {}]
  %s11 = inlined_call_operand.vmem [shape: f32[32,64], index: 11, kind: input, shape index: {}]
  %s12 = inlined_call_operand.vmem [shape: f32[1,64], index: 12, kind: input, shape index: {}]
  %s13 = inlined_call_operand.hbm [shape: f32[448,128], index: 13, kind: input, shape index: {}]
  %s14 = inlined_call_operand.vmem [shape: f32[1,128], index: 14, kind: input, shape index: {}]
  %s15 = inlined_call_operand.vmem [shape: f32[896,128], index: 15, kind: input, shape index: {}]
  %s16 = inlined_call_operand.vmem [shape: f32[1,128], index: 16, kind: input, shape index: {}]
  %s17 = inlined_call_operand.vmem [shape: f32[64,128], index: 17, kind: input, shape index: {}]
  %s18 = inlined_call_operand.vmem [shape: f32[1,128], index: 18, kind: input, shape index: {}]
  %s19 = inlined_call_operand.hbm [shape: f32[2,40,128], index: 19, kind: output, shape index: {}]
  %s20 = sld [smem:[#allocation0]]
  $region90: #{tpu_custom_call.1} parent=0
    _
  %s22 = ssub.s32 1, %s20
  %s23 = scalar_select 0, %s22, %s20
  $region1: #{tpu_custom_call.1} parent=0
    #allocation8 [shape = 'u8[229376]{0}', space=vmem, size = 0x38000, scoped, tag = 'input window, operand 13, single buffered']
    #allocation9 [shape = 's32[1]{0}', space=sflag, size = 0x4, scoped, tag = 'scoped memory for tpu_custom_call.1']
    #allocation10 [shape = 's32[1]{0}', space=sflag, size = 0x4, scoped, tag = 'scoped memory for tpu_custom_call.1']
    #allocation11 [shape = 'u8[40960]{0}', space=vmem, size = 0xa000, scoped, tag = 'output window, operand 0, single buffered']
    %24 = vsyncpa [#allocation9], 0
    %25 = vsyncpa [#allocation10], 0
    // Predicated region
    $region2: #{tpu_custom_call.1} parent=1 // pred_check
      _
    $region3: #{tpu_custom_call.1} parent=1 // pred_check_branch
      %27 = sbr.rel (0) target = $region5
    $region4: #{tpu_custom_call.1} parent=1 // pred_region
      _
    $region5: #{tpu_custom_call.1} parent=1 // pred_fallthru
      _
    // Predicated region
    $region6: #{tpu_custom_call.1} parent=1 // pred_check
      _
    $region7: #{tpu_custom_call.1} parent=1 // pred_check_branch
      %29 = sbr.rel (0) target = $region9
    $region8: #{tpu_custom_call.1} parent=1 // pred_region
      _
    $region9: #{tpu_custom_call.1} parent=1 // pred_fallthru
      _
    // Predicated region
    $region10: #{tpu_custom_call.1} parent=1 // pred_check
      _
    $region11: #{tpu_custom_call.1} parent=1 // pred_check_branch
      %31 = sbr.rel (0) target = $region13
    $region12: #{tpu_custom_call.1} parent=1 // pred_region
      _
    $region13: #{tpu_custom_call.1} parent=1 // pred_fallthru
      _
    // Predicated region
    $region14: #{tpu_custom_call.1} parent=1 // pred_check
      _
    $region15: #{tpu_custom_call.1} parent=1 // pred_check_branch
      %33 = sbr.rel (0) target = $region17
    $region16: #{tpu_custom_call.1} parent=1 // pred_region
      _
    $region17: #{tpu_custom_call.1} parent=1 // pred_fallthru
      _
    // Predicated region
    $region18: #{tpu_custom_call.1} parent=1 // pred_check
      _
    $region19: #{tpu_custom_call.1} parent=1 // pred_check_branch
      %35 = sbr.rel (0) target = $region21
    $region20: #{tpu_custom_call.1} parent=1 // pred_region
      _
    $region21: #{tpu_custom_call.1} parent=1 // pred_fallthru
      _
    // Predicated region
    $region22: #{tpu_custom_call.1} parent=1 // pred_check
      _
    $region23: #{tpu_custom_call.1} parent=1 // pred_check_branch
      %37 = sbr.rel (0) target = $region25
    $region24: #{tpu_custom_call.1} parent=1 // pred_region
      _
    $region25: #{tpu_custom_call.1} parent=1 // pred_fallthru
      _
    // Predicated region
    $region26: #{tpu_custom_call.1} parent=1 // pred_check
      _
    $region27: #{tpu_custom_call.1} parent=1 // pred_check_branch
      %39 = sbr.rel (0) target = $region29
    $region28: #{tpu_custom_call.1} parent=1 // pred_region
      _
    $region29: #{tpu_custom_call.1} parent=1 // pred_fallthru
      _
    // Predicated region
    $region30: #{tpu_custom_call.1} parent=1 // pred_check
      _
    $region31: #{tpu_custom_call.1} parent=1 // pred_check_branch
      %41 = sbr.rel (0) target = $region33
    $region32: #{tpu_custom_call.1} parent=1 // pred_region
      _
    $region33: #{tpu_custom_call.1} parent=1 // pred_fallthru
      _
    // Predicated region
    $region34: #{tpu_custom_call.1} parent=1 // pred_check
      _
    $region35: #{tpu_custom_call.1} parent=1 // pred_check_branch
      %43 = sbr.rel (0) target = $region37
    $region36: #{tpu_custom_call.1} parent=1 // pred_region
      _
    $region37: #{tpu_custom_call.1} parent=1 // pred_fallthru
      _
    // Predicated region
    $region38: #{tpu_custom_call.1} parent=1 // pred_check
      _
    $region39: #{tpu_custom_call.1} parent=1 // pred_check_branch
      %45 = sbr.rel (0) target = $region41
    $region40: #{tpu_custom_call.1} parent=1 // pred_region
      _
    $region41: #{tpu_custom_call.1} parent=1 // pred_fallthru
      _
    // Predicated region
    $region42: #{tpu_custom_call.1} parent=1 // pred_check
      _
    $region43: #{tpu_custom_call.1} parent=1 // pred_check_branch
      %47 = sbr.rel (0) target = $region45
    $region44: #{tpu_custom_call.1} parent=1 // pred_region
      _
    $region45: #{tpu_custom_call.1} parent=1 // pred_fallthru
      _
    // Predicated region
    $region46: #{tpu_custom_call.1} parent=1 // pred_check
      _
    $region47: #{tpu_custom_call.1} parent=1 // pred_check_branch
      %49 = sbr.rel (0) target = $region49
    $region48: #{tpu_custom_call.1} parent=1 // pred_region
      _
    $region49: #{tpu_custom_call.1} parent=1 // pred_fallthru
      _
    // Predicated region
    $region50: #{tpu_custom_call.1} parent=1 // pred_check
      _
    $region51: #{tpu_custom_call.1} parent=1 // pred_check_branch
      %51 = sbr.rel (0) target = $region53
    $region52: #{tpu_custom_call.1} parent=1 // pred_region
      _
    $region53: #{tpu_custom_call.1} parent=1 // pred_fallthru
      _
    // Predicated region
    $region54: #{tpu_custom_call.1} parent=1 // pred_check
      _
    $region55: #{tpu_custom_call.1} parent=1 // pred_check_branch
      %53 = sbr.rel (0) target = $region57
    $region56: #{tpu_custom_call.1} parent=1 // pred_region
      %55 = vsyncadd [#allocation9], 0
      %s56 = sshll.u32 %s13, 4
      %s57 = int_to_ptr.hbm [resolvable:$true] %s56
      %s58 = sshll.u32 [#allocation8], 4
      %s59 = int_to_ptr.vmem [resolvable:$true] %s58
      %64 = dma.hbm_to_vmem [thread:$0]  %s57, 7168, %s59, [#allocation9], 128, 128, 8
    $region57: #{tpu_custom_call.1} parent=1 // pred_fallthru
      _
    // Predicated region
    $region58: #{tpu_custom_call.1} parent=1 // pred_check
      _
    $region59: #{tpu_custom_call.1} parent=1 // pred_check_branch
      %66 = sbr.rel (0) target = $region61
    $region60: #{tpu_custom_call.1} parent=1 // pred_region
      _
    $region61: #{tpu_custom_call.1} parent=1 // pred_fallthru
      _
    // Predicated region
    $region62: #{tpu_custom_call.1} parent=1 // pred_check
      _
    $region63: #{tpu_custom_call.1} parent=1 // pred_check_branch
      %68 = sbr.rel (0) target = $region65
    $region64: #{tpu_custom_call.1} parent=1 // pred_region
      _
    $region65: #{tpu_custom_call.1} parent=1 // pred_fallthru
      _
    // Predicated region
    $region66: #{tpu_custom_call.1} parent=1 // pred_check
      _
    $region67: #{tpu_custom_call.1} parent=1 // pred_check_branch
      %70 = sbr.rel (0) target = $region69
    $region68: #{tpu_custom_call.1} parent=1 // pred_region
      _
    $region69: #{tpu_custom_call.1} parent=1 // pred_fallthru
      _
    // Predicated region
    $region70: #{tpu_custom_call.1} parent=1 // pred_check
      _
    $region71: #{tpu_custom_call.1} parent=1 // pred_check_branch
      %72 = sbr.rel (0) target = $region73
    $region72: #{tpu_custom_call.1} parent=1 // pred_region
      _
    $region73: #{tpu_custom_call.1} parent=1 // pred_fallthru
      _
    // Predicated region
    $region74: #{tpu_custom_call.1} parent=1 // pred_check
      _
    $region75: #{tpu_custom_call.1} parent=1 // pred_check_branch
      %74 = sbr.rel (0) target = $region77
    $region76: #{tpu_custom_call.1} parent=1 // pred_region
      _
    $region77: #{tpu_custom_call.1} parent=1 // pred_fallthru
      _
    // Predicated region
    $region78: #{tpu_custom_call.1} parent=1 // pred_check
      _
    $region79: #{tpu_custom_call.1} parent=1 // pred_check_branch
      %76 = sbr.rel (0) target = $region81
    $region80: #{tpu_custom_call.1} parent=1 // pred_region
      %78 = dma.done [#allocation9], 7168
    $region81: #{tpu_custom_call.1} parent=1 // pred_fallthru
      _
    %v79 = vld [vmem:[%s0] sm:$0xff]
    %v80 = vld [vmem:[%s0 + $0x8] sm:$0xff]
    %v81 = vld [vmem:[%s0 + $0x10] sm:$0xff]
    %v82 = vld [vmem:[%s0 + $0x18] sm:$0xff]
    %v83 = vld [vmem:[%s0 + $0x20] sm:$0xff]
    %v84 = vld [vmem:[%s0 + $0x28] sm:$0xff]
    %v85 = vld [vmem:[%s0 + $0x30] sm:$0xff]
    %v86 = vld [vmem:[%s0 + $0x38] sm:$0xff]
    %v87 = vld [vmem:[%s0 + $0x40] sm:$0xff]
    %v88 = vld [vmem:[%s0 + $0x48] sm:$0xff]
    %v89 = vld [vmem:[%s0 + $0x50] sm:$0xff]
    %v90 = vld [vmem:[%s0 + $0x58] sm:$0xff]
    %v91 = vld [vmem:[%s0 + $0x60] sm:$0xff]
    %v92 = vld [vmem:[%s0 + $0x68] sm:$0xff]
    %v93 = vld [vmem:[%s0 + $0x70] sm:$0xff]
    %v94 = vld [vmem:[%s0 + $0x78] sm:$0xff]
    %v95 = vld [vmem:[%s1] sm:$0x1]
    %97 = vset.pattern.permute.xlu0 0
    %98 = vperm.xlu0 %97, %v79
    %v99 = vpop.permute.xlu0 %98
    %102 = vset.pattern.permute.xlu0 0
    %103 = vperm.xlu0 %102, %v80
    %v104 = vpop.permute.xlu0 %103
    %107 = vset.pattern.permute.xlu0 0
    %108 = vperm.xlu0 %107, %v81
    %v109 = vpop.permute.xlu0 %108
    %112 = vset.pattern.permute.xlu0 0
    %113 = vperm.xlu0 %112, %v82
    %v114 = vpop.permute.xlu0 %113
    %117 = vset.pattern.permute.xlu0 0
    %118 = vperm.xlu0 %117, %v83
    %v119 = vpop.permute.xlu0 %118
    %122 = vset.pattern.permute.xlu0 0
    %123 = vperm.xlu0 %122, %v84
    %v124 = vpop.permute.xlu0 %123
    %127 = vset.pattern.permute.xlu0 0
    %128 = vperm.xlu0 %127, %v85
    %v129 = vpop.permute.xlu0 %128
    %132 = vset.pattern.permute.xlu0 0
    %133 = vperm.xlu0 %132, %v86
    %v134 = vpop.permute.xlu0 %133
    %137 = vset.pattern.permute.xlu0 0
    %138 = vperm.xlu0 %137, %v87
    %v139 = vpop.permute.xlu0 %138
    %142 = vset.pattern.permute.xlu0 0
    %143 = vperm.xlu0 %142, %v88
    %v144 = vpop.permute.xlu0 %143
    %147 = vset.pattern.permute.xlu0 0
    %148 = vperm.xlu0 %147, %v89
    %v149 = vpop.permute.xlu0 %148
    %152 = vset.pattern.permute.xlu0 0
    %153 = vperm.xlu0 %152, %v90
    %v154 = vpop.permute.xlu0 %153
    %157 = vset.pattern.permute.xlu0 0
    %158 = vperm.xlu0 %157, %v91
    %v159 = vpop.permute.xlu0 %158
    %162 = vset.pattern.permute.xlu0 0
    %163 = vperm.xlu0 %162, %v92
    %v164 = vpop.permute.xlu0 %163
    %167 = vset.pattern.permute.xlu0 0
    %168 = vperm.xlu0 %167, %v93
    %v169 = vpop.permute.xlu0 %168
    %172 = vset.pattern.permute.xlu0 0
    %173 = vperm.xlu0 %172, %v94
    %v174 = vpop.permute.xlu0 %173
    %v177 = vperm.slane %v95, 0
    %v179 = vmul.f32 %v99, %v177
    %v180 = vmul.f32 %v104, %v177
    %v181 = vmul.f32 %v109, %v177
    %v182 = vmul.f32 %v114, %v177
    %v183 = vmul.f32 %v119, %v177
    %v184 = vmul.f32 %v124, %v177
    %v185 = vmul.f32 %v129, %v177
    %v186 = vmul.f32 %v134, %v177
    %v187 = vmul.f32 %v139, %v177
    %v188 = vmul.f32 %v144, %v177
    %v189 = vmul.f32 %v149, %v177
    %v190 = vmul.f32 %v154, %v177
    %v191 = vmul.f32 %v159, %v177
    %v192 = vmul.f32 %v164, %v177
    %v193 = vmul.f32 %v169, %v177
    %v194 = vmul.f32 %v174, %v177
    %v195 = vld [vmem:[%s2] sm:$0x1]
    %v197 = vperm.slane %v195, 0
    %v199 = vadd.f32 %v179, %v197
    %v200 = vadd.f32 %v180, %v197
    %v201 = vadd.f32 %v181, %v197
    %v202 = vadd.f32 %v182, %v197
    %v203 = vadd.f32 %v183, %v197
    %v204 = vadd.f32 %v184, %v197
    %v205 = vadd.f32 %v185, %v197
    %v206 = vadd.f32 %v186, %v197
    %v207 = vadd.f32 %v187, %v197
    %v208 = vadd.f32 %v188, %v197
    %v209 = vadd.f32 %v189, %v197
    %v210 = vadd.f32 %v190, %v197
    %v211 = vadd.f32 %v191, %v197
    %v212 = vadd.f32 %v192, %v197
    %v213 = vadd.f32 %v193, %v197
    %v214 = vadd.f32 %v194, %v197
    %vm215 = vcmp.ge.f32.partialorder %v199, 0.0
    %vm216 = vcmp.ge.f32.partialorder %v200, 0.0
    %vm217 = vcmp.ge.f32.partialorder %v201, 0.0
    %vm218 = vcmp.ge.f32.partialorder %v202, 0.0
    %vm219 = vcmp.ge.f32.partialorder %v203, 0.0
    %vm220 = vcmp.ge.f32.partialorder %v204, 0.0
    %vm221 = vcmp.ge.f32.partialorder %v205, 0.0
    %vm222 = vcmp.ge.f32.partialorder %v206, 0.0
    %vm223 = vcmp.ge.f32.partialorder %v207, 0.0
    %vm224 = vcmp.ge.f32.partialorder %v208, 0.0
    %vm225 = vcmp.ge.f32.partialorder %v209, 0.0
    %vm226 = vcmp.ge.f32.partialorder %v210, 0.0
    %vm227 = vcmp.ge.f32.partialorder %v211, 0.0
    %vm228 = vcmp.ge.f32.partialorder %v212, 0.0
    %vm229 = vcmp.ge.f32.partialorder %v213, 0.0
    %vm230 = vcmp.ge.f32.partialorder %v214, 0.0
    %v231 = vmul.f32 %v199, 0.01
    %v232 = vmul.f32 %v200, 0.01
    %v233 = vmul.f32 %v201, 0.01
    %v234 = vmul.f32 %v202, 0.01
    %v235 = vmul.f32 %v203, 0.01
    %v236 = vmul.f32 %v204, 0.01
    %v237 = vmul.f32 %v205, 0.01
    %v238 = vmul.f32 %v206, 0.01
    %v239 = vmul.f32 %v207, 0.01
    %v240 = vmul.f32 %v208, 0.01
    %v241 = vmul.f32 %v209, 0.01
    %v242 = vmul.f32 %v210, 0.01
    %v243 = vmul.f32 %v211, 0.01
    %v244 = vmul.f32 %v212, 0.01
    %v245 = vmul.f32 %v213, 0.01
    %v246 = vmul.f32 %v214, 0.01
    %v247 = vsel %vm215, %v199, %v231
    %v248 = vsel %vm216, %v200, %v232
    %v249 = vsel %vm217, %v201, %v233
    %v250 = vsel %vm218, %v202, %v234
    %v251 = vsel %vm219, %v203, %v235
    %v252 = vsel %vm220, %v204, %v236
    %v253 = vsel %vm221, %v205, %v237
    %v254 = vsel %vm222, %v206, %v238
    %v255 = vsel %vm223, %v207, %v239
    %v256 = vsel %vm224, %v208, %v240
    %v257 = vsel %vm225, %v209, %v241
    %v258 = vsel %vm226, %v210, %v242
    %v259 = vsel %vm227, %v211, %v243
    %v260 = vsel %vm228, %v212, %v244
    %v261 = vsel %vm229, %v213, %v245
    %v262 = vsel %vm230, %v214, %v246
    %vm263 = vcmask 253952
    %264 = vst.msk [vmem:[#allocation2] sm:$0x1] %vm263, 0.0
    %vm273 = vcmask 1040384
    %v274 = vrot.slane %v247, 7
    %v275 = vrot.slane %v248, 7
    %v276 = vsel %vm273, %v274, %v275
    %v277 = vrot.slane %v249, 7
    %v278 = vsel %vm273, %v275, %v277
    %v279 = vrot.slane %v250, 7
    %v280 = vsel %vm273, %v277, %v279
    %v281 = vrot.slane %v251, 7
    %v282 = vsel %vm273, %v279, %v281
    %v283 = vrot.slane %v252, 7
    %v284 = vsel %vm273, %v281, %v283
    %v285 = vrot.slane %v253, 7
    %v286 = vsel %vm273, %v283, %v285
    %v287 = vrot.slane %v254, 7
    %v288 = vsel %vm273, %v285, %v287
    %vm297 = vcmask 261121
    %298 = vst.msk [vmem:[#allocation2] sm:$0xfe] %vm297, %v274
    %vm299 = vcmask 261120
    %300 = vst.msk [vmem:[#allocation2 + $0x10] sm:$0xff] %vm299, %v276
    %301 = vst.msk [vmem:[#allocation2 + $0x20] sm:$0xff] %vm299, %v278
    %302 = vst.msk [vmem:[#allocation2 + $0x30] sm:$0xff] %vm299, %v280
    %303 = vst.msk [vmem:[#allocation2 + $0x40] sm:$0xff] %vm299, %v282
    %304 = vst.msk [vmem:[#allocation2 + $0x50] sm:$0xff] %vm299, %v284
    %305 = vst.msk [vmem:[#allocation2 + $0x60] sm:$0xff] %vm299, %v286
    %vm306 = vcmask 257024
    %307 = vst.msk [vmem:[#allocation2 + $0x70] sm:$0xf] %vm306, %v288
    %vm308 = vcmask 261124
    %309 = vst.msk [vmem:[#allocation2 + $0x70] sm:$0xf0] %vm308, 0.0
    %310 = vrot.lane.b32.xlu0 %v247, 32
    %v311 = vpop.permute.xlu0 %310
    %312 = vrot.lane.b32.xlu0 %v248, 32
    %v313 = vpop.permute.xlu0 %312
    %314 = vrot.lane.b32.xlu0 %v249, 32
    %v315 = vpop.permute.xlu0 %314
    %316 = vrot.lane.b32.xlu0 %v250, 32
    %v317 = vpop.permute.xlu0 %316
    %318 = vrot.lane.b32.xlu0 %v251, 32
    %v319 = vpop.permute.xlu0 %318
    %320 = vrot.lane.b32.xlu0 %v252, 32
    %v321 = vpop.permute.xlu0 %320
    %322 = vrot.lane.b32.xlu0 %v253, 32
    %v323 = vpop.permute.xlu0 %322
    %324 = vrot.lane.b32.xlu0 %v254, 32
    %v325 = vpop.permute.xlu0 %324
    %vm334 = vcmask 523520
    %335 = vst.msk [vmem:[#allocation2] sm:$0xff] %vm334, %v311
    %336 = vst.msk [vmem:[#allocation2 + $0x10] sm:$0xff] %vm334, %v313
    %337 = vst.msk [vmem:[#allocation2 + $0x20] sm:$0xff] %vm334, %v315
    %338 = vst.msk [vmem:[#allocation2 + $0x30] sm:$0xff] %vm334, %v317
    %339 = vst.msk [vmem:[#allocation2 + $0x40] sm:$0xff] %vm334, %v319
    %340 = vst.msk [vmem:[#allocation2 + $0x50] sm:$0xff] %vm334, %v321
    %341 = vst.msk [vmem:[#allocation2 + $0x60] sm:$0xff] %vm334, %v323
    %vm342 = vcmask 519424
    %343 = vst.msk [vmem:[#allocation2 + $0x70] sm:$0xf] %vm342, %v325
    %vm344 = vcmask 523524
    %345 = vst.msk [vmem:[#allocation2 + $0x70] sm:$0xf0] %vm344, 0.0
    %vm346 = vcmask 1046528
    %v347 = vrot.slane %v247, 1
    %v348 = vrot.slane %v248, 1
    %v349 = vsel %vm346, %v347, %v348
    %v350 = vrot.slane %v249, 1
    %v351 = vsel %vm346, %v348, %v350
    %v352 = vrot.slane %v250, 1
    %v353 = vsel %vm346, %v350, %v352
    %v354 = vrot.slane %v251, 1
    %v355 = vsel %vm346, %v352, %v354
    %v356 = vrot.slane %v252, 1
    %v357 = vsel %vm346, %v354, %v356
    %v358 = vrot.slane %v253, 1
    %v359 = vsel %vm346, %v356, %v358
    %v360 = vrot.slane %v254, 1
    %v361 = vsel %vm346, %v358, %v360
    %362 = vrot.lane.b32.xlu0 %v349, 64
    %v363 = vpop.permute.xlu0 %362
    %364 = vrot.lane.b32.xlu0 %v351, 64
    %v365 = vpop.permute.xlu0 %364
    %366 = vrot.lane.b32.xlu0 %v353, 64
    %v367 = vpop.permute.xlu0 %366
    %368 = vrot.lane.b32.xlu0 %v355, 64
    %v369 = vpop.permute.xlu0 %368
    %370 = vrot.lane.b32.xlu0 %v357, 64
    %v371 = vpop.permute.xlu0 %370
    %372 = vrot.lane.b32.xlu0 %v359, 64
    %v373 = vpop.permute.xlu0 %372
    %374 = vrot.lane.b32.xlu0 %v361, 64
    %v375 = vpop.permute.xlu0 %374
    %376 = vrot.lane.b32.xlu0 %v360, 64
    %v377 = vpop.permute.xlu0 %376
    %vm386 = vcmask 785920
    %387 = vst.msk [vmem:[#allocation2] sm:$0xff] %vm386, %v363
    %388 = vst.msk [vmem:[#allocation2 + $0x10] sm:$0xff] %vm386, %v365
    %389 = vst.msk [vmem:[#allocation2 + $0x20] sm:$0xff] %vm386, %v367
    %390 = vst.msk [vmem:[#allocation2 + $0x30] sm:$0xff] %vm386, %v369
    %391 = vst.msk [vmem:[#allocation2 + $0x40] sm:$0xff] %vm386, %v371
    %392 = vst.msk [vmem:[#allocation2 + $0x50] sm:$0xff] %vm386, %v373
    %393 = vst.msk [vmem:[#allocation2 + $0x60] sm:$0xff] %vm386, %v375
    %vm394 = vcmask 781824
    %395 = vst.msk [vmem:[#allocation2 + $0x70] sm:$0xf] %vm394, %v377
    %vm396 = vcmask 785924
    %397 = vst.msk [vmem:[#allocation2 + $0x70] sm:$0xf0] %vm396, 0.0
    %vm398 = vcmask 1045504
    %v399 = vrot.slane %v247, 2
    %v400 = vrot.slane %v248, 2
    %v401 = vsel %vm398, %v399, %v400
    %v402 = vrot.slane %v249, 2
    %v403 = vsel %vm398, %v400, %v402
    %v404 = vrot.slane %v250, 2
    %v405 = vsel %vm398, %v402, %v404
    %v406 = vrot.slane %v251, 2
    %v407 = vsel %vm398, %v404, %v406
    %v408 = vrot.slane %v252, 2
    %v409 = vsel %vm398, %v406, %v408
    %v410 = vrot.slane %v253, 2
    %v411 = vsel %vm398, %v408, %v410
    %v412 = vrot.slane %v254, 2
    %v413 = vsel %vm398, %v410, %v412
    %414 = vrot.lane.b32.xlu0 %v401, 96
    %v415 = vpop.permute.xlu0 %414
    %416 = vrot.lane.b32.xlu0 %v403, 96
    %v417 = vpop.permute.xlu0 %416
    %418 = vrot.lane.b32.xlu0 %v405, 96
    %v419 = vpop.permute.xlu0 %418
    %420 = vrot.lane.b32.xlu0 %v407, 96
    %v421 = vpop.permute.xlu0 %420
    %422 = vrot.lane.b32.xlu0 %v409, 96
    %v423 = vpop.permute.xlu0 %422
    %424 = vrot.lane.b32.xlu0 %v411, 96
    %v425 = vpop.permute.xlu0 %424
    %426 = vrot.lane.b32.xlu0 %v413, 96
    %v427 = vpop.permute.xlu0 %426
    %428 = vrot.lane.b32.xlu0 %v412, 96
    %v429 = vpop.permute.xlu0 %428
    %vm438 = vcmask 1048320
    %439 = vst.msk [vmem:[#allocation2] sm:$0xff] %vm438, %v415
    %440 = vst.msk [vmem:[#allocation2 + $0x10] sm:$0xff] %vm438, %v417
    %441 = vst.msk [vmem:[#allocation2 + $0x20] sm:$0xff] %vm438, %v419
    %442 = vst.msk [vmem:[#allocation2 + $0x30] sm:$0xff] %vm438, %v421
    %443 = vst.msk [vmem:[#allocation2 + $0x40] sm:$0xff] %vm438, %v423
    %444 = vst.msk [vmem:[#allocation2 + $0x50] sm:$0xff] %vm438, %v425
    %445 = vst.msk [vmem:[#allocation2 + $0x60] sm:$0xff] %vm438, %v427
    %vm446 = vcmask 1044224
    %447 = vst.msk [vmem:[#allocation2 + $0x70] sm:$0xf] %vm446, %v429
    %vm448 = vcmask 1048324
    %449 = vst.msk [vmem:[#allocation2 + $0x70] sm:$0xf0] %vm448, 0.0
    %vm450 = vcmask 1044480
    %v451 = vrot.slane %v247, 3
    %v452 = vrot.slane %v248, 3
    %v453 = vsel %vm450, %v451, %v452
    %v454 = vrot.slane %v249, 3
    %v455 = vsel %vm450, %v452, %v454
    %v456 = vrot.slane %v250, 3
    %v457 = vsel %vm450, %v454, %v456
    %v458 = vrot.slane %v251, 3
    %v459 = vsel %vm450, %v456, %v458
    %v460 = vrot.slane %v252, 3
    %v461 = vsel %vm450, %v458, %v460
    %v462 = vrot.slane %v253, 3
    %v463 = vsel %vm450, %v460, %v462
    %v464 = vrot.slane %v254, 3
    %v465 = vsel %vm450, %v462, %v464
    %474 = vst.msk [vmem:[#allocation2 + $0x8] sm:$0xff] %vm299, %v453
    %475 = vst.msk [vmem:[#allocation2 + $0x18] sm:$0xff] %vm299, %v455
    %476 = vst.msk [vmem:[#allocation2 + $0x28] sm:$0xff] %vm299, %v457
    %477 = vst.msk [vmem:[#allocation2 + $0x38] sm:$0xff] %vm299, %v459
    %478 = vst.msk [vmem:[#allocation2 + $0x48] sm:$0xff] %vm299, %v461
    %479 = vst.msk [vmem:[#allocation2 + $0x58] sm:$0xff] %vm299, %v463
    %480 = vst.msk [vmem:[#allocation2 + $0x68] sm:$0xff] %vm299, %v465
    %481 = vst.msk [vmem:[#allocation2 + $0x78] sm:$0xf] %vm306, %v464
    %482 = vst.msk [vmem:[#allocation2 + $0x78] sm:$0xf0] %vm308, 0.0
    %vm483 = vcmask 1043456
    %v484 = vrot.slane %v247, 4
    %v485 = vrot.slane %v248, 4
    %v486 = vsel %vm483, %v484, %v485
    %v487 = vrot.slane %v249, 4
    %v488 = vsel %vm483, %v485, %v487
    %v489 = vrot.slane %v250, 4
    %v490 = vsel %vm483, %v487, %v489
    %v491 = vrot.slane %v251, 4
    %v492 = vsel %vm483, %v489, %v491
    %v493 = vrot.slane %v252, 4
    %v494 = vsel %vm483, %v491, %v493
    %v495 = vrot.slane %v253, 4
    %v496 = vsel %vm483, %v493, %v495
    %v497 = vrot.slane %v254, 4
    %v498 = vsel %vm483, %v495, %v497
    %499 = vrot.lane.b32.xlu0 %v486, 32
    %v500 = vpop.permute.xlu0 %499
    %501 = vrot.lane.b32.xlu0 %v488, 32
    %v502 = vpop.permute.xlu0 %501
    %503 = vrot.lane.b32.xlu0 %v490, 32
    %v504 = vpop.permute.xlu0 %503
    %505 = vrot.lane.b32.xlu0 %v492, 32
    %v506 = vpop.permute.xlu0 %505
    %507 = vrot.lane.b32.xlu0 %v494, 32
    %v508 = vpop.permute.xlu0 %507
    %509 = vrot.lane.b32.xlu0 %v496, 32
    %v510 = vpop.permute.xlu0 %509
    %511 = vrot.lane.b32.xlu0 %v498, 32
    %v512 = vpop.permute.xlu0 %511
    %513 = vrot.lane.b32.xlu0 %v497, 32
    %v514 = vpop.permute.xlu0 %513
    %523 = vst.msk [vmem:[#allocation2 + $0x8] sm:$0xff] %vm334, %v500
    %524 = vst.msk [vmem:[#allocation2 + $0x18] sm:$0xff] %vm334, %v502
    %525 = vst.msk [vmem:[#allocation2 + $0x28] sm:$0xff] %vm334, %v504
    %526 = vst.msk [vmem:[#allocation2 + $0x38] sm:$0xff] %vm334, %v506
    %527 = vst.msk [vmem:[#allocation2 + $0x48] sm:$0xff] %vm334, %v508
    %528 = vst.msk [vmem:[#allocation2 + $0x58] sm:$0xff] %vm334, %v510
    %529 = vst.msk [vmem:[#allocation2 + $0x68] sm:$0xff] %vm334, %v512
    %530 = vst.msk [vmem:[#allocation2 + $0x78] sm:$0xf] %vm342, %v514
    %531 = vst.msk [vmem:[#allocation2 + $0x78] sm:$0xf0] %vm344, 0.0
    %vm532 = vcmask 1042432
    %v533 = vrot.slane %v247, 5
    %v534 = vrot.slane %v248, 5
    %v535 = vsel %vm532, %v533, %v534
    %v536 = vrot.slane %v249, 5
    %v537 = vsel %vm532, %v534, %v536
    %v538 = vrot.slane %v250, 5
    %v539 = vsel %vm532, %v536, %v538
    %v540 = vrot.slane %v251, 5
    %v541 = vsel %vm532, %v538, %v540
    %v542 = vrot.slane %v252, 5
    %v543 = vsel %vm532, %v540, %v542
    %v544 = vrot.slane %v253, 5
    %v545 = vsel %vm532, %v542, %v544
    %v546 = vrot.slane %v254, 5
    %v547 = vsel %vm532, %v544, %v546
    %548 = vrot.lane.b32.xlu0 %v535, 64
    %v549 = vpop.permute.xlu0 %548
    %550 = vrot.lane.b32.xlu0 %v537, 64
    %v551 = vpop.permute.xlu0 %550
    %552 = vrot.lane.b32.xlu0 %v539, 64
    %v553 = vpop.permute.xlu0 %552
    %554 = vrot.lane.b32.xlu0 %v541, 64
    %v555 = vpop.permute.xlu0 %554
    %556 = vrot.lane.b32.xlu0 %v543, 64
    %v557 = vpop.permute.xlu0 %556
    %558 = vrot.lane.b32.xlu0 %v545, 64
    %v559 = vpop.permute.xlu0 %558
    %560 = vrot.lane.b32.xlu0 %v547, 64
    %v561 = vpop.permute.xlu0 %560
    %562 = vrot.lane.b32.xlu0 %v546, 64
    %v563 = vpop.permute.xlu0 %562
    %572 = vst.msk [vmem:[#allocation2 + $0x8] sm:$0xff] %vm386, %v549
    %573 = vst.msk [vmem:[#allocation2 + $0x18] sm:$0xff] %vm386, %v551
    %574 = vst.msk [vmem:[#allocation2 + $0x28] sm:$0xff] %vm386, %v553
    %575 = vst.msk [vmem:[#allocation2 + $0x38] sm:$0xff] %vm386, %v555
    %576 = vst.msk [vmem:[#allocation2 + $0x48] sm:$0xff] %vm386, %v557
    %577 = vst.msk [vmem:[#allocation2 + $0x58] sm:$0xff] %vm386, %v559
    %578 = vst.msk [vmem:[#allocation2 + $0x68] sm:$0xff] %vm386, %v561
    %vm579 = vcmask 780800
    %580 = vst.msk [vmem:[#allocation2 + $0x78] sm:$0x7] %vm579, %v563
    %vm581 = vcmask 785923
    %582 = vst.msk [vmem:[#allocation2 + $0x78] sm:$0xf8] %vm581, 0.0
    %583 = vst.msk [vmem:[#allocation2 + $0x80] sm:$0x1] %vm263, 0.0
    %v592 = vrot.slane %v255, 7
    %v593 = vrot.slane %v256, 7
    %v594 = vsel %vm273, %v592, %v593
    %v595 = vrot.slane %v257, 7
    %v596 = vsel %vm273, %v593, %v595
    %v597 = vrot.slane %v258, 7
    %v598 = vsel %vm273, %v595, %v597
    %v599 = vrot.slane %v259, 7
    %v600 = vsel %vm273, %v597, %v599
    %v601 = vrot.slane %v260, 7
    %v602 = vsel %vm273, %v599, %v601
    %v603 = vrot.slane %v261, 7
    %v604 = vsel %vm273, %v601, %v603
    %v605 = vrot.slane %v262, 7
    %v606 = vsel %vm273, %v603, %v605
    %615 = vst.msk [vmem:[#allocation2 + $0x80] sm:$0xfe] %vm297, %v592
    %616 = vst.msk [vmem:[#allocation2 + $0x90] sm:$0xff] %vm299, %v594
    %617 = vst.msk [vmem:[#allocation2 + $0xa0] sm:$0xff] %vm299, %v596
    %618 = vst.msk [vmem:[#allocation2 + $0xb0] sm:$0xff] %vm299, %v598
    %619 = vst.msk [vmem:[#allocation2 + $0xc0] sm:$0xff] %vm299, %v600
    %620 = vst.msk [vmem:[#allocation2 + $0xd0] sm:$0xff] %vm299, %v602
    %621 = vst.msk [vmem:[#allocation2 + $0xe0] sm:$0xff] %vm299, %v604
    %622 = vst.msk [vmem:[#allocation2 + $0xf0] sm:$0xf] %vm306, %v606
    %623 = vst.msk [vmem:[#allocation2 + $0xf0] sm:$0xf0] %vm308, 0.0
    %624 = vrot.lane.b32.xlu0 %v255, 32
    %v625 = vpop.permute.xlu0 %624
    %626 = vrot.lane.b32.xlu0 %v256, 32
    %v627 = vpop.permute.xlu0 %626
    %628 = vrot.lane.b32.xlu0 %v257, 32
    %v629 = vpop.permute.xlu0 %628
    %630 = vrot.lane.b32.xlu0 %v258, 32
    %v631 = vpop.permute.xlu0 %630
    %632 = vrot.lane.b32.xlu0 %v259, 32
    %v633 = vpop.permute.xlu0 %632
    %634 = vrot.lane.b32.xlu0 %v260, 32
    %v635 = vpop.permute.xlu0 %634
    %636 = vrot.lane.b32.xlu0 %v261, 32
    %v637 = vpop.permute.xlu0 %636
    %638 = vrot.lane.b32.xlu0 %v262, 32
    %v639 = vpop.permute.xlu0 %638
    %648 = vst.msk [vmem:[#allocation2 + $0x80] sm:$0xff] %vm334, %v625
    %649 = vst.msk [vmem:[#allocation2 + $0x90] sm:$0xff] %vm334, %v627
    %650 = vst.msk [vmem:[#allocation2 + $0xa0] sm:$0xff] %vm334, %v629
    %651 = vst.msk [vmem:[#allocation2 + $0xb0] sm:$0xff] %vm334, %v631
    %652 = vst.msk [vmem:[#allocation2 + $0xc0] sm:$0xff] %vm334, %v633
    %653 = vst.msk [vmem:[#allocation2 + $0xd0] sm:$0xff] %vm334, %v635
    %654 = vst.msk [vmem:[#allocation2 + $0xe0] sm:$0xff] %vm334, %v637
    %655 = vst.msk [vmem:[#allocation2 + $0xf0] sm:$0xf] %vm342, %v639
    %656 = vst.msk [vmem:[#allocation2 + $0xf0] sm:$0xf0] %vm344, 0.0
    %v657 = vrot.slane %v255, 1
    %v658 = vrot.slane %v256, 1
    %v659 = vsel %vm346, %v657, %v658
    %v660 = vrot.slane %v257, 1
    %v661 = vsel %vm346, %v658, %v660
    %v662 = vrot.slane %v258, 1
    %v663 = vsel %vm346, %v660, %v662
    %v664 = vrot.slane %v259, 1
    %v665 = vsel %vm346, %v662, %v664
    %v666 = vrot.slane %v260, 1
    %v667 = vsel %vm346, %v664, %v666
    %v668 = vrot.slane %v261, 1
    %v669 = vsel %vm346, %v666, %v668
    %v670 = vrot.slane %v262, 1
    %v671 = vsel %vm346, %v668, %v670
    %672 = vrot.lane.b32.xlu0 %v659, 64
    %v673 = vpop.permute.xlu0 %672
    %674 = vrot.lane.b32.xlu0 %v661, 64
    %v675 = vpop.permute.xlu0 %674
    %676 = vrot.lane.b32.xlu0 %v663, 64
    %v677 = vpop.permute.xlu0 %676
    %678 = vrot.lane.b32.xlu0 %v665, 64
    %v679 = vpop.permute.xlu0 %678
    %680 = vrot.lane.b32.xlu0 %v667, 64
    %v681 = vpop.permute.xlu0 %680
    %682 = vrot.lane.b32.xlu0 %v669, 64
    %v683 = vpop.permute.xlu0 %682
    %684 = vrot.lane.b32.xlu0 %v671, 64
    %v685 = vpop.permute.xlu0 %684
    %686 = vrot.lane.b32.xlu0 %v670, 64
    %v687 = vpop.permute.xlu0 %686
    %696 = vst.msk [vmem:[#allocation2 + $0x80] sm:$0xff] %vm386, %v673
    %697 = vst.msk [vmem:[#allocation2 + $0x90] sm:$0xff] %vm386, %v675
    %698 = vst.msk [vmem:[#allocation2 + $0xa0] sm:$0xff] %vm386, %v677
    %699 = vst.msk [vmem:[#allocation2 + $0xb0] sm:$0xff] %vm386, %v679
    %700 = vst.msk [vmem:[#allocation2 + $0xc0] sm:$0xff] %vm386, %v681
    %701 = vst.msk [vmem:[#allocation2 + $0xd0] sm:$0xff] %vm386, %v683
    %702 = vst.msk [vmem:[#allocation2 + $0xe0] sm:$0xff] %vm386, %v685
    %703 = vst.msk [vmem:[#allocation2 + $0xf0] sm:$0xf] %vm394, %v687
    %704 = vst.msk [vmem:[#allocation2 + $0xf0] sm:$0xf0] %vm396, 0.0
    %v705 = vrot.slane %v255, 2
    %v706 = vrot.slane %v256, 2
    %v707 = vsel %vm398, %v705, %v706
    %v708 = vrot.slane %v257, 2
    %v709 = vsel %vm398, %v706, %v708
    %v710 = vrot.slane %v258, 2
    %v711 = vsel %vm398, %v708, %v710
    %v712 = vrot.slane %v259, 2
    %v713 = vsel %vm398, %v710, %v712
    %v714 = vrot.slane %v260, 2
    %v715 = vsel %vm398, %v712, %v714
    %v716 = vrot.slane %v261, 2
    %v717 = vsel %vm398, %v714, %v716
    %v718 = vrot.slane %v262, 2
    %v719 = vsel %vm398, %v716, %v718
    %720 = vrot.lane.b32.xlu0 %v707, 96
    %v721 = vpop.permute.xlu0 %720
    %722 = vrot.lane.b32.xlu0 %v709, 96
    %v723 = vpop.permute.xlu0 %722
    %724 = vrot.lane.b32.xlu0 %v711, 96
    %v725 = vpop.permute.xlu0 %724
    %726 = vrot.lane.b32.xlu0 %v713, 96
    %v727 = vpop.permute.xlu0 %726
    %728 = vrot.lane.b32.xlu0 %v715, 96
    %v729 = vpop.permute.xlu0 %728
    %730 = vrot.lane.b32.xlu0 %v717, 96
    %v731 = vpop.permute.xlu0 %730
    %732 = vrot.lane.b32.xlu0 %v719, 96
    %v733 = vpop.permute.xlu0 %732
    %734 = vrot.lane.b32.xlu0 %v718, 96
    %v735 = vpop.permute.xlu0 %734
    %744 = vst.msk [vmem:[#allocation2 + $0x80] sm:$0xff] %vm438, %v721
    %745 = vst.msk [vmem:[#allocation2 + $0x90] sm:$0xff] %vm438, %v723
    %746 = vst.msk [vmem:[#allocation2 + $0xa0] sm:$0xff] %vm438, %v725
    %747 = vst.msk [vmem:[#allocation2 + $0xb0] sm:$0xff] %vm438, %v727
    %748 = vst.msk [vmem:[#allocation2 + $0xc0] sm:$0xff] %vm438, %v729
    %749 = vst.msk [vmem:[#allocation2 + $0xd0] sm:$0xff] %vm438, %v731
    %750 = vst.msk [vmem:[#allocation2 + $0xe0] sm:$0xff] %vm438, %v733
    %751 = vst.msk [vmem:[#allocation2 + $0xf0] sm:$0xf] %vm446, %v735
    %752 = vst.msk [vmem:[#allocation2 + $0xf0] sm:$0xf0] %vm448, 0.0
    %v753 = vrot.slane %v255, 3
    %v754 = vrot.slane %v256, 3
    %v755 = vsel %vm450, %v753, %v754
    %v756 = vrot.slane %v257, 3
    %v757 = vsel %vm450, %v754, %v756
    %v758 = vrot.slane %v258, 3
    %v759 = vsel %vm450, %v756, %v758
    %v760 = vrot.slane %v259, 3
    %v761 = vsel %vm450, %v758, %v760
    %v762 = vrot.slane %v260, 3
    %v763 = vsel %vm450, %v760, %v762
    %v764 = vrot.slane %v261, 3
    %v765 = vsel %vm450, %v762, %v764
    %v766 = vrot.slane %v262, 3
    %v767 = vsel %vm450, %v764, %v766
    %776 = vst.msk [vmem:[#allocation2 + $0x88] sm:$0xff] %vm299, %v755
    %777 = vst.msk [vmem:[#allocation2 + $0x98] sm:$0xff] %vm299, %v757
    %778 = vst.msk [vmem:[#allocation2 + $0xa8] sm:$0xff] %vm299, %v759
    %779 = vst.msk [vmem:[#allocation2 + $0xb8] sm:$0xff] %vm299, %v761
    %780 = vst.msk [vmem:[#allocation2 + $0xc8] sm:$0xff] %vm299, %v763
    %781 = vst.msk [vmem:[#allocation2 + $0xd8] sm:$0xff] %vm299, %v765
    %782 = vst.msk [vmem:[#allocation2 + $0xe8] sm:$0xff] %vm299, %v767
    %783 = vst.msk [vmem:[#allocation2 + $0xf8] sm:$0xf] %vm306, %v766
    %784 = vst.msk [vmem:[#allocation2 + $0xf8] sm:$0xf0] %vm308, 0.0
    %v785 = vrot.slane %v255, 4
    %v786 = vrot.slane %v256, 4
    %v787 = vsel %vm483, %v785, %v786
    %v788 = vrot.slane %v257, 4
    %v789 = vsel %vm483, %v786, %v788
    %v790 = vrot.slane %v258, 4
    %v791 = vsel %vm483, %v788, %v790
    %v792 = vrot.slane %v259, 4
    %v793 = vsel %vm483, %v790, %v792
    %v794 = vrot.slane %v260, 4
    %v795 = vsel %vm483, %v792, %v794
    %v796 = vrot.slane %v261, 4
    %v797 = vsel %vm483, %v794, %v796
    %v798 = vrot.slane %v262, 4
    %v799 = vsel %vm483, %v796, %v798
    %800 = vrot.lane.b32.xlu0 %v787, 32
    %v801 = vpop.permute.xlu0 %800
    %802 = vrot.lane.b32.xlu0 %v789, 32
    %v803 = vpop.permute.xlu0 %802
    %804 = vrot.lane.b32.xlu0 %v791, 32
    %v805 = vpop.permute.xlu0 %804
    %806 = vrot.lane.b32.xlu0 %v793, 32
    %v807 = vpop.permute.xlu0 %806
    %808 = vrot.lane.b32.xlu0 %v795, 32
    %v809 = vpop.permute.xlu0 %808
    %810 = vrot.lane.b32.xlu0 %v797, 32
    %v811 = vpop.permute.xlu0 %810
    %812 = vrot.lane.b32.xlu0 %v799, 32
    %v813 = vpop.permute.xlu0 %812
    %814 = vrot.lane.b32.xlu0 %v798, 32
    %v815 = vpop.permute.xlu0 %814
    %824 = vst.msk [vmem:[#allocation2 + $0x88] sm:$0xff] %vm334, %v801
    %825 = vst.msk [vmem:[#allocation2 + $0x98] sm:$0xff] %vm334, %v803
    %826 = vst.msk [vmem:[#allocation2 + $0xa8] sm:$0xff] %vm334, %v805
    %827 = vst.msk [vmem:[#allocation2 + $0xb8] sm:$0xff] %vm334, %v807
    %828 = vst.msk [vmem:[#allocation2 + $0xc8] sm:$0xff] %vm334, %v809
    %829 = vst.msk [vmem:[#allocation2 + $0xd8] sm:$0xff] %vm334, %v811
    %830 = vst.msk [vmem:[#allocation2 + $0xe8] sm:$0xff] %vm334, %v813
    %831 = vst.msk [vmem:[#allocation2 + $0xf8] sm:$0xf] %vm342, %v815
    %832 = vst.msk [vmem:[#allocation2 + $0xf8] sm:$0xf0] %vm344, 0.0
    %v833 = vrot.slane %v255, 5
    %v834 = vrot.slane %v256, 5
    %v835 = vsel %vm532, %v833, %v834
    %v836 = vrot.slane %v257, 5
    %v837 = vsel %vm532, %v834, %v836
    %v838 = vrot.slane %v258, 5
    %v839 = vsel %vm532, %v836, %v838
    %v840 = vrot.slane %v259, 5
    %v841 = vsel %vm532, %v838, %v840
    %v842 = vrot.slane %v260, 5
    %v843 = vsel %vm532, %v840, %v842
    %v844 = vrot.slane %v261, 5
    %v845 = vsel %vm532, %v842, %v844
    %v846 = vrot.slane %v262, 5
    %v847 = vsel %vm532, %v844, %v846
    %848 = vrot.lane.b32.xlu0 %v835, 64
    %v849 = vpop.permute.xlu0 %848
    %850 = vrot.lane.b32.xlu0 %v837, 64
    %v851 = vpop.permute.xlu0 %850
    %852 = vrot.lane.b32.xlu0 %v839, 64
    %v853 = vpop.permute.xlu0 %852
    %854 = vrot.lane.b32.xlu0 %v841, 64
    %v855 = vpop.permute.xlu0 %854
    %856 = vrot.lane.b32.xlu0 %v843, 64
    %v857 = vpop.permute.xlu0 %856
    %858 = vrot.lane.b32.xlu0 %v845, 64
    %v859 = vpop.permute.xlu0 %858
    %860 = vrot.lane.b32.xlu0 %v847, 64
    %v861 = vpop.permute.xlu0 %860
    %862 = vrot.lane.b32.xlu0 %v846, 64
    %v863 = vpop.permute.xlu0 %862
    %872 = vst.msk [vmem:[#allocation2 + $0x88] sm:$0xff] %vm386, %v849
    %873 = vst.msk [vmem:[#allocation2 + $0x98] sm:$0xff] %vm386, %v851
    %874 = vst.msk [vmem:[#allocation2 + $0xa8] sm:$0xff] %vm386, %v853
    %875 = vst.msk [vmem:[#allocation2 + $0xb8] sm:$0xff] %vm386, %v855
    %876 = vst.msk [vmem:[#allocation2 + $0xc8] sm:$0xff] %vm386, %v857
    %877 = vst.msk [vmem:[#allocation2 + $0xd8] sm:$0xff] %vm386, %v859
    %878 = vst.msk [vmem:[#allocation2 + $0xe8] sm:$0xff] %vm386, %v861
    %879 = vst.msk [vmem:[#allocation2 + $0xf8] sm:$0x7] %vm579, %v863
    %880 = vst.msk [vmem:[#allocation2 + $0xf8] sm:$0xf8] %vm581, 0.0
    %v881 = vld [vmem:[#allocation2] sm:$0xff]
    %v882 = vld [vmem:[#allocation2 + $0x8] sm:$0xff]
    %v883 = vld [vmem:[#allocation2 + $0x10] sm:$0xff]
    %v884 = vld [vmem:[#allocation2 + $0x18] sm:$0xff]
    %v885 = vld [vmem:[#allocation2 + $0x20] sm:$0xff]
    %v886 = vld [vmem:[#allocation2 + $0x28] sm:$0xff]
    %v887 = vld [vmem:[#allocation2 + $0x30] sm:$0xff]
    %v888 = vld [vmem:[#allocation2 + $0x38] sm:$0xff]
    %v889 = vld [vmem:[#allocation2 + $0x40] sm:$0xff]
    %v890 = vld [vmem:[#allocation2 + $0x48] sm:$0xff]
    %v891 = vld [vmem:[#allocation2 + $0x50] sm:$0xff]
    %v892 = vld [vmem:[#allocation2 + $0x58] sm:$0xff]
    %v893 = vld [vmem:[#allocation2 + $0x60] sm:$0xff]
    %v894 = vld [vmem:[#allocation2 + $0x68] sm:$0xff]
    %v895 = vld [vmem:[#allocation2 + $0x70] sm:$0xff]
    %v896 = vld [vmem:[#allocation2 + $0x78] sm:$0xff]
    %v897 = vld [vmem:[#allocation2 + $0x80] sm:$0xff]
    %v898 = vld [vmem:[#allocation2 + $0x88] sm:$0xff]
    %v899 = vld [vmem:[#allocation2 + $0x90] sm:$0xff]
    %v900 = vld [vmem:[#allocation2 + $0x98] sm:$0xff]
    %v901 = vld [vmem:[#allocation2 + $0xa0] sm:$0xff]
    %v902 = vld [vmem:[#allocation2 + $0xa8] sm:$0xff]
    %v903 = vld [vmem:[#allocation2 + $0xb0] sm:$0xff]
    %v904 = vld [vmem:[#allocation2 + $0xb8] sm:$0xff]
    %v905 = vld [vmem:[#allocation2 + $0xc0] sm:$0xff]
    %v906 = vld [vmem:[#allocation2 + $0xc8] sm:$0xff]
    %v907 = vld [vmem:[#allocation2 + $0xd0] sm:$0xff]
    %v908 = vld [vmem:[#allocation2 + $0xd8] sm:$0xff]
    %v909 = vld [vmem:[#allocation2 + $0xe0] sm:$0xff]
    %v910 = vld [vmem:[#allocation2 + $0xe8] sm:$0xff]
    %v911 = vld [vmem:[#allocation2 + $0xf0] sm:$0xff]
    %v912 = vld [vmem:[#allocation2 + $0xf8] sm:$0xff]
    %v913 = vld [vmem:[%s3] sm:$0xff]
    %v914 = vld [vmem:[%s3 + $0x8] sm:$0xff]
    %v915 = vld [vmem:[%s3 + $0x10] sm:$0xff]
    %v916 = vld [vmem:[%s3 + $0x18] sm:$0xff]
    %v917 = vld [vmem:[%s3 + $0x20] sm:$0xff]
    %v918 = vld [vmem:[%s3 + $0x28] sm:$0xff]
    %v919 = vld [vmem:[%s3 + $0x30] sm:$0xff]
    %v920 = vld [vmem:[%s3 + $0x38] sm:$0xff]
    %v921 = vld [vmem:[%s3 + $0x40] sm:$0xff]
    %v922 = vld [vmem:[%s3 + $0x48] sm:$0xff]
    %v923 = vld [vmem:[%s3 + $0x50] sm:$0xff]
    %v924 = vld [vmem:[%s3 + $0x58] sm:$0xff]
    %v925 = vld [vmem:[%s3 + $0x60] sm:$0xff]
    %v926 = vld [vmem:[%s3 + $0x68] sm:$0xff]
    %v927 = vld [vmem:[%s3 + $0x70] sm:$0xff]
    %v928 = vld [vmem:[%s3 + $0x78] sm:$0xff]
    %v929 = vld [vmem:[%s3 + $0x80] sm:$0xff]
    %v930 = vld [vmem:[%s3 + $0x88] sm:$0xff]
    %v931 = vld [vmem:[%s3 + $0x90] sm:$0xff]
    %v932 = vld [vmem:[%s3 + $0x98] sm:$0xff]
    %v933 = vld [vmem:[%s3 + $0xa0] sm:$0xff]
    %v934 = vld [vmem:[%s3 + $0xa8] sm:$0xff]
    %v935 = vld [vmem:[%s3 + $0xb0] sm:$0xff]
    %v936 = vld [vmem:[%s3 + $0xb8] sm:$0xff]
    %v937 = vld [vmem:[%s3 + $0xc0] sm:$0xff]
    %v938 = vld [vmem:[%s3 + $0xc8] sm:$0xff]
    %v939 = vld [vmem:[%s3 + $0xd0] sm:$0xff]
    %v940 = vld [vmem:[%s3 + $0xd8] sm:$0xff]
    %v941 = vld [vmem:[%s4] sm:$0x1]
    %v943 = vperm.slane %v941, 0
    %vm945 = vcmask 785408
    %v947 = vsel %vm945, %v882, 0
    %v950 = vsel %vm945, %v884, 0
    %v953 = vsel %vm945, %v886, 0
    %v956 = vsel %vm945, %v888, 0
    %v959 = vsel %vm945, %v890, 0
    %v962 = vsel %vm945, %v892, 0
    %v965 = vsel %vm945, %v894, 0
    %v968 = vsel %vm945, %v896, 0
    %v971 = vsel %vm945, %v898, 0
    %v974 = vsel %vm945, %v900, 0
    %v977 = vsel %vm945, %v902, 0
    %v980 = vsel %vm945, %v904, 0
    %v983 = vsel %vm945, %v906, 0
    %v986 = vsel %vm945, %v908, 0
    %v989 = vsel %vm945, %v910, 0
    %v992 = vsel %vm945, %v912, 0
    %994 = vmatpush.msra.mxu0 %v928
    %995 = vmatpush.msra.mxu0 %v927
    %996 = vmatpush.msra.mxu0 %v926
    %997 = vmatpush.msra.mxu0 %v925
    %998 = vmatpush.msra.mxu0 %v924
    %999 = vmatpush.msra.mxu0 %v923
    %1000 = vmatpush.msra.mxu0 %v922
    %1001 = vmatpush.msra.mxu0 %v921
    %1002 = vmatpush.msra.mxu0 %v920
    %1003 = vmatpush.msra.mxu0 %v919
    %1004 = vmatpush.msra.mxu0 %v918
    %1005 = vmatpush.msra.mxu0 %v917
    %1006 = vmatpush.msra.mxu0 %v916
    %1007 = vmatpush.msra.mxu0 %v915
    %1008 = vmatpush.msra.mxu0 %v914
    %1009 = vmatpush.msra.mxu0 %v913
    %1010 = vmatmul.f32.gmra.mxu0 %v881
    %v1011 = vpop.f32.mrf.mxu0
    %v1012 = vadd.f32 %v943, %v1011
    %1013 = vmatmul.f32.gmra.mxu0 %v883
    %v1014 = vpop.f32.mrf.mxu0
    %v1015 = vadd.f32 %v943, %v1014
    %1016 = vmatmul.f32.gmra.mxu0 %v885
    %v1017 = vpop.f32.mrf.mxu0
    %v1018 = vadd.f32 %v943, %v1017
    %1019 = vmatmul.f32.gmra.mxu0 %v887
    %v1020 = vpop.f32.mrf.mxu0
    %v1021 = vadd.f32 %v943, %v1020
    %1022 = vmatmul.f32.gmra.mxu0 %v889
    %v1023 = vpop.f32.mrf.mxu0
    %v1024 = vadd.f32 %v943, %v1023
    %1025 = vmatmul.f32.gmra.mxu0 %v891
    %v1026 = vpop.f32.mrf.mxu0
    %v1027 = vadd.f32 %v943, %v1026
    %1028 = vmatmul.f32.gmra.mxu0 %v893
    %v1029 = vpop.f32.mrf.mxu0
    %v1030 = vadd.f32 %v943, %v1029
    %1031 = vmatmul.f32.gmra.mxu0 %v895
    %v1032 = vpop.f32.mrf.mxu0
    %v1033 = vadd.f32 %v943, %v1032
    %1034 = vmatmul.f32.gmra.mxu0 %v897
    %v1035 = vpop.f32.mrf.mxu0
    %v1036 = vadd.f32 %v943, %v1035
    %1037 = vmatmul.f32.gmra.mxu0 %v899
    %v1038 = vpop.f32.mrf.mxu0
    %v1039 = vadd.f32 %v943, %v1038
    %1040 = vmatmul.f32.gmra.mxu0 %v901
    %v1041 = vpop.f32.mrf.mxu0
    %v1042 = vadd.f32 %v943, %v1041
    %1043 = vmatmul.f32.gmra.mxu0 %v903
    %v1044 = vpop.f32.mrf.mxu0
    %v1045 = vadd.f32 %v943, %v1044
    %1046 = vmatmul.f32.gmra.mxu0 %v905
    %v1047 = vpop.f32.mrf.mxu0
    %v1048 = vadd.f32 %v943, %v1047
    %1049 = vmatmul.f32.gmra.mxu0 %v907
    %v1050 = vpop.f32.mrf.mxu0
    %v1051 = vadd.f32 %v943, %v1050
    %1052 = vmatmul.f32.gmra.mxu0 %v909
    %v1053 = vpop.f32.mrf.mxu0
    %v1054 = vadd.f32 %v943, %v1053
    %1055 = vmatmul.f32.gmra.mxu0 %v911
    %v1056 = vpop.f32.mrf.mxu0
    %v1057 = vadd.f32 %v943, %v1056
    %1058 = vdwg.mxu0
    %1059 = vmatpush.msra.mxu0 0.0
    %1060 = vmatpush.msra.mxu0 0.0
    %1061 = vmatpush.msra.mxu0 0.0
    %1062 = vmatpush.msra.mxu0 0.0
    %1063 = vmatpush.msra.mxu0 %v940
    %1064 = vmatpush.msra.mxu0 %v939
    %1065 = vmatpush.msra.mxu0 %v938
    %1066 = vmatpush.msra.mxu0 %v937
    %1067 = vmatpush.msra.mxu0 %v936
    %1068 = vmatpush.msra.mxu0 %v935
    %1069 = vmatpush.msra.mxu0 %v934
    %1070 = vmatpush.msra.mxu0 %v933
    %1071 = vmatpush.msra.mxu0 %v932
    %1072 = vmatpush.msra.mxu0 %v931
    %1073 = vmatpush.msra.mxu0 %v930
    %1074 = vmatpush.msra.mxu0 %v929
    %1075 = vmatmul.f32.gmra.mxu0 %v947
    %v1076 = vpop.f32.mrf.mxu0
    %v1077 = vadd.f32 %v1012, %v1076
    %1078 = vmatmul.f32.gmra.mxu0 %v950
    %v1079 = vpop.f32.mrf.mxu0
    %v1080 = vadd.f32 %v1015, %v1079
    %1081 = vmatmul.f32.gmra.mxu0 %v953
    %v1082 = vpop.f32.mrf.mxu0
    %v1083 = vadd.f32 %v1018, %v1082
    %1084 = vmatmul.f32.gmra.mxu0 %v956
    %v1085 = vpop.f32.mrf.mxu0
    %v1086 = vadd.f32 %v1021, %v1085
    %1087 = vmatmul.f32.gmra.mxu0 %v959
    %v1088 = vpop.f32.mrf.mxu0
    %v1089 = vadd.f32 %v1024, %v1088
    %1090 = vmatmul.f32.gmra.mxu0 %v962
    %v1091 = vpop.f32.mrf.mxu0
    %v1092 = vadd.f32 %v1027, %v1091
    %1093 = vmatmul.f32.gmra.mxu0 %v965
    %v1094 = vpop.f32.mrf.mxu0
    %v1095 = vadd.f32 %v1030, %v1094
    %1096 = vmatmul.f32.gmra.mxu0 %v968
    %v1097 = vpop.f32.mrf.mxu0
    %v1098 = vadd.f32 %v1033, %v1097
    %1099 = vmatmul.f32.gmra.mxu0 %v971
    %v1100 = vpop.f32.mrf.mxu0
    %v1101 = vadd.f32 %v1036, %v1100
    %1102 = vmatmul.f32.gmra.mxu0 %v974
    %v1103 = vpop.f32.mrf.mxu0
    %v1104 = vadd.f32 %v1039, %v1103
    %1105 = vmatmul.f32.gmra.mxu0 %v977
    %v1106 = vpop.f32.mrf.mxu0
    %v1107 = vadd.f32 %v1042, %v1106
    %1108 = vmatmul.f32.gmra.mxu0 %v980
    %v1109 = vpop.f32.mrf.mxu0
    %v1110 = vadd.f32 %v1045, %v1109
    %1111 = vmatmul.f32.gmra.mxu0 %v983
    %v1112 = vpop.f32.mrf.mxu0
    %v1113 = vadd.f32 %v1048, %v1112
    %1114 = vmatmul.f32.gmra.mxu0 %v986
    %v1115 = vpop.f32.mrf.mxu0
    %v1116 = vadd.f32 %v1051, %v1115
    %1117 = vmatmul.f32.gmra.mxu0 %v989
    %v1118 = vpop.f32.mrf.mxu0
    %v1119 = vadd.f32 %v1054, %v1118
    %1120 = vmatmul.f32.gmra.mxu0 %v992
    %v1121 = vpop.f32.mrf.mxu0
    %v1122 = vadd.f32 %v1057, %v1121
    %1123 = vdwg.mxu0
    %vm1124 = vcmp.ge.f32.partialorder %v1077, 0.0
    %vm1125 = vcmp.ge.f32.partialorder %v1080, 0.0
    %vm1126 = vcmp.ge.f32.partialorder %v1083, 0.0
    %vm1127 = vcmp.ge.f32.partialorder %v1086, 0.0
    %vm1128 = vcmp.ge.f32.partialorder %v1089, 0.0
    %vm1129 = vcmp.ge.f32.partialorder %v1092, 0.0
    %vm1130 = vcmp.ge.f32.partialorder %v1095, 0.0
    %vm1131 = vcmp.ge.f32.partialorder %v1098, 0.0
    %vm1132 = vcmp.ge.f32.partialorder %v1101, 0.0
    %vm1133 = vcmp.ge.f32.partialorder %v1104, 0.0
    %vm1134 = vcmp.ge.f32.partialorder %v1107, 0.0
    %vm1135 = vcmp.ge.f32.partialorder %v1110, 0.0
    %vm1136 = vcmp.ge.f32.partialorder %v1113, 0.0
    %vm1137 = vcmp.ge.f32.partialorder %v1116, 0.0
    %vm1138 = vcmp.ge.f32.partialorder %v1119, 0.0
    %vm1139 = vcmp.ge.f32.partialorder %v1122, 0.0
    %v1140 = vmul.f32 %v1077, 0.01
    %v1141 = vmul.f32 %v1080, 0.01
    %v1142 = vmul.f32 %v1083, 0.01
    %v1143 = vmul.f32 %v1086, 0.01
    %v1144 = vmul.f32 %v1089, 0.01
    %v1145 = vmul.f32 %v1092, 0.01
    %v1146 = vmul.f32 %v1095, 0.01
    %v1147 = vmul.f32 %v1098, 0.01
    %v1148 = vmul.f32 %v1101, 0.01
    %v1149 = vmul.f32 %v1104, 0.01
    %v1150 = vmul.f32 %v1107, 0.01
    %v1151 = vmul.f32 %v1110, 0.01
    %v1152 = vmul.f32 %v1113, 0.01
    %v1153 = vmul.f32 %v1116, 0.01
    %v1154 = vmul.f32 %v1119, 0.01
    %v1155 = vmul.f32 %v1122, 0.01
    %v1156 = vsel %vm1124, %v1077, %v1140
    %v1157 = vsel %vm1125, %v1080, %v1141
    %v1158 = vsel %vm1126, %v1083, %v1142
    %v1159 = vsel %vm1127, %v1086, %v1143
    %v1160 = vsel %vm1128, %v1089, %v1144
    %v1161 = vsel %vm1129, %v1092, %v1145
    %v1162 = vsel %vm1130, %v1095, %v1146
    %v1163 = vsel %vm1131, %v1098, %v1147
    %v1164 = vsel %vm1132, %v1101, %v1148
    %v1165 = vsel %vm1133, %v1104, %v1149
    %v1166 = vsel %vm1134, %v1107, %v1150
    %v1167 = vsel %vm1135, %v1110, %v1151
    %v1168 = vsel %vm1136, %v1113, %v1152
    %v1169 = vsel %vm1137, %v1116, %v1153
    %v1170 = vsel %vm1138, %v1119, %v1154
    %v1171 = vsel %vm1139, %v1122, %v1155
    %1172 = vst.msk [vmem:[#allocation3] sm:$0x1] %vm263, 0.0
    %v1180 = vrot.slane %v1156, 7
    %v1181 = vrot.slane %v1157, 7
    %v1182 = vsel %vm273, %v1180, %v1181
    %v1183 = vrot.slane %v1158, 7
    %v1184 = vsel %vm273, %v1181, %v1183
    %v1185 = vrot.slane %v1159, 7
    %v1186 = vsel %vm273, %v1183, %v1185
    %v1187 = vrot.slane %v1160, 7
    %v1188 = vsel %vm273, %v1185, %v1187
    %v1189 = vrot.slane %v1161, 7
    %v1190 = vsel %vm273, %v1187, %v1189
    %v1191 = vrot.slane %v1162, 7
    %v1192 = vsel %vm273, %v1189, %v1191
    %1200 = vst.msk [vmem:[#allocation3] sm:$0xfe] %vm297, %v1180
    %1201 = vst.msk [vmem:[#allocation3 + $0x10] sm:$0xff] %vm299, %v1182
    %1202 = vst.msk [vmem:[#allocation3 + $0x20] sm:$0xff] %vm299, %v1184
    %1203 = vst.msk [vmem:[#allocation3 + $0x30] sm:$0xff] %vm299, %v1186
    %1204 = vst.msk [vmem:[#allocation3 + $0x40] sm:$0xff] %vm299, %v1188
    %1205 = vst.msk [vmem:[#allocation3 + $0x50] sm:$0xff] %vm299, %v1190
    %1206 = vst.msk [vmem:[#allocation3 + $0x60] sm:$0xff] %vm299, %v1192
    %1207 = vst.msk [vmem:[#allocation3 + $0x70] sm:$0xff] %vm299, 0.0
    %1208 = vrot.lane.b32.xlu0 %v1156, 32
    %v1209 = vpop.permute.xlu0 %1208
    %1210 = vrot.lane.b32.xlu0 %v1157, 32
    %v1211 = vpop.permute.xlu0 %1210
    %1212 = vrot.lane.b32.xlu0 %v1158, 32
    %v1213 = vpop.permute.xlu0 %1212
    %1214 = vrot.lane.b32.xlu0 %v1159, 32
    %v1215 = vpop.permute.xlu0 %1214
    %1216 = vrot.lane.b32.xlu0 %v1160, 32
    %v1217 = vpop.permute.xlu0 %1216
    %1218 = vrot.lane.b32.xlu0 %v1161, 32
    %v1219 = vpop.permute.xlu0 %1218
    %1220 = vrot.lane.b32.xlu0 %v1162, 32
    %v1221 = vpop.permute.xlu0 %1220
    %1229 = vst.msk [vmem:[#allocation3] sm:$0xff] %vm334, %v1209
    %1230 = vst.msk [vmem:[#allocation3 + $0x10] sm:$0xff] %vm334, %v1211
    %1231 = vst.msk [vmem:[#allocation3 + $0x20] sm:$0xff] %vm334, %v1213
    %1232 = vst.msk [vmem:[#allocation3 + $0x30] sm:$0xff] %vm334, %v1215
    %1233 = vst.msk [vmem:[#allocation3 + $0x40] sm:$0xff] %vm334, %v1217
    %1234 = vst.msk [vmem:[#allocation3 + $0x50] sm:$0xff] %vm334, %v1219
    %1235 = vst.msk [vmem:[#allocation3 + $0x60] sm:$0xff] %vm334, %v1221
    %1236 = vst.msk [vmem:[#allocation3 + $0x70] sm:$0xff] %vm334, 0.0
    %v1238 = vrot.slane %v1156, 1
    %v1239 = vrot.slane %v1157, 1
    %v1240 = vsel %vm346, %v1238, %v1239
    %v1241 = vrot.slane %v1158, 1
    %v1242 = vsel %vm346, %v1239, %v1241
    %v1243 = vrot.slane %v1159, 1
    %v1244 = vsel %vm346, %v1241, %v1243
    %v1245 = vrot.slane %v1160, 1
    %v1246 = vsel %vm346, %v1243, %v1245
    %v1247 = vrot.slane %v1161, 1
    %v1248 = vsel %vm346, %v1245, %v1247
    %v1249 = vrot.slane %v1162, 1
    %v1250 = vsel %vm346, %v1247, %v1249
    %v1251 = vrot.slane %v1163, 1
    %v1252 = vsel %vm346, %v1249, %v1251
    %1253 = vrot.lane.b32.xlu0 %v1240, 64
    %v1254 = vpop.permute.xlu0 %1253
    %1255 = vrot.lane.b32.xlu0 %v1242, 64
    %v1256 = vpop.permute.xlu0 %1255
    %1257 = vrot.lane.b32.xlu0 %v1244, 64
    %v1258 = vpop.permute.xlu0 %1257
    %1259 = vrot.lane.b32.xlu0 %v1246, 64
    %v1260 = vpop.permute.xlu0 %1259
    %1261 = vrot.lane.b32.xlu0 %v1248, 64
    %v1262 = vpop.permute.xlu0 %1261
    %1263 = vrot.lane.b32.xlu0 %v1250, 64
    %v1264 = vpop.permute.xlu0 %1263
    %1265 = vrot.lane.b32.xlu0 %v1252, 64
    %v1266 = vpop.permute.xlu0 %1265
    %1274 = vst.msk [vmem:[#allocation3] sm:$0xff] %vm386, %v1254
    %1275 = vst.msk [vmem:[#allocation3 + $0x10] sm:$0xff] %vm386, %v1256
    %1276 = vst.msk [vmem:[#allocation3 + $0x20] sm:$0xff] %vm386, %v1258
    %1277 = vst.msk [vmem:[#allocation3 + $0x30] sm:$0xff] %vm386, %v1260
    %1278 = vst.msk [vmem:[#allocation3 + $0x40] sm:$0xff] %vm386, %v1262
    %1279 = vst.msk [vmem:[#allocation3 + $0x50] sm:$0xff] %vm386, %v1264
    %1280 = vst.msk [vmem:[#allocation3 + $0x60] sm:$0xff] %vm386, %v1266
    %1281 = vst.msk [vmem:[#allocation3 + $0x70] sm:$0xff] %vm386, 0.0
    %v1282 = vrot.slane %v1156, 2
    %v1283 = vrot.slane %v1157, 2
    %v1284 = vsel %vm398, %v1282, %v1283
    %v1285 = vrot.slane %v1158, 2
    %v1286 = vsel %vm398, %v1283, %v1285
    %v1287 = vrot.slane %v1159, 2
    %v1288 = vsel %vm398, %v1285, %v1287
    %v1289 = vrot.slane %v1160, 2
    %v1290 = vsel %vm398, %v1287, %v1289
    %v1291 = vrot.slane %v1161, 2
    %v1292 = vsel %vm398, %v1289, %v1291
    %v1293 = vrot.slane %v1162, 2
    %v1294 = vsel %vm398, %v1291, %v1293
    %v1295 = vrot.slane %v1163, 2
    %v1296 = vsel %vm398, %v1293, %v1295
    %1297 = vrot.lane.b32.xlu0 %v1284, 96
    %v1298 = vpop.permute.xlu0 %1297
    %1299 = vrot.lane.b32.xlu0 %v1286, 96
    %v1300 = vpop.permute.xlu0 %1299
    %1301 = vrot.lane.b32.xlu0 %v1288, 96
    %v1302 = vpop.permute.xlu0 %1301
    %1303 = vrot.lane.b32.xlu0 %v1290, 96
    %v1304 = vpop.permute.xlu0 %1303
    %1305 = vrot.lane.b32.xlu0 %v1292, 96
    %v1306 = vpop.permute.xlu0 %1305
    %1307 = vrot.lane.b32.xlu0 %v1294, 96
    %v1308 = vpop.permute.xlu0 %1307
    %1309 = vrot.lane.b32.xlu0 %v1296, 96
    %v1310 = vpop.permute.xlu0 %1309
    %1318 = vst.msk [vmem:[#allocation3] sm:$0xff] %vm438, %v1298
    %1319 = vst.msk [vmem:[#allocation3 + $0x10] sm:$0xff] %vm438, %v1300
    %1320 = vst.msk [vmem:[#allocation3 + $0x20] sm:$0xff] %vm438, %v1302
    %1321 = vst.msk [vmem:[#allocation3 + $0x30] sm:$0xff] %vm438, %v1304
    %1322 = vst.msk [vmem:[#allocation3 + $0x40] sm:$0xff] %vm438, %v1306
    %1323 = vst.msk [vmem:[#allocation3 + $0x50] sm:$0xff] %vm438, %v1308
    %1324 = vst.msk [vmem:[#allocation3 + $0x60] sm:$0xff] %vm438, %v1310
    %1325 = vst.msk [vmem:[#allocation3 + $0x70] sm:$0xff] %vm438, 0.0
    %v1326 = vrot.slane %v1156, 3
    %v1327 = vrot.slane %v1157, 3
    %v1328 = vsel %vm450, %v1326, %v1327
    %v1329 = vrot.slane %v1158, 3
    %v1330 = vsel %vm450, %v1327, %v1329
    %v1331 = vrot.slane %v1159, 3
    %v1332 = vsel %vm450, %v1329, %v1331
    %v1333 = vrot.slane %v1160, 3
    %v1334 = vsel %vm450, %v1331, %v1333
    %v1335 = vrot.slane %v1161, 3
    %v1336 = vsel %vm450, %v1333, %v1335
    %v1337 = vrot.slane %v1162, 3
    %v1338 = vsel %vm450, %v1335, %v1337
    %v1339 = vrot.slane %v1163, 3
    %v1340 = vsel %vm450, %v1337, %v1339
    %1348 = vst.msk [vmem:[#allocation3 + $0x8] sm:$0xff] %vm299, %v1328
    %1349 = vst.msk [vmem:[#allocation3 + $0x18] sm:$0xff] %vm299, %v1330
    %1350 = vst.msk [vmem:[#allocation3 + $0x28] sm:$0xff] %vm299, %v1332
    %1351 = vst.msk [vmem:[#allocation3 + $0x38] sm:$0xff] %vm299, %v1334
    %1352 = vst.msk [vmem:[#allocation3 + $0x48] sm:$0xff] %vm299, %v1336
    %1353 = vst.msk [vmem:[#allocation3 + $0x58] sm:$0xff] %vm299, %v1338
    %1354 = vst.msk [vmem:[#allocation3 + $0x68] sm:$0xff] %vm299, %v1340
    %1355 = vst.msk [vmem:[#allocation3 + $0x78] sm:$0xff] %vm299, 0.0
    %v1356 = vrot.slane %v1156, 4
    %v1357 = vrot.slane %v1157, 4
    %v1358 = vsel %vm483, %v1356, %v1357
    %v1359 = vrot.slane %v1158, 4
    %v1360 = vsel %vm483, %v1357, %v1359
    %v1361 = vrot.slane %v1159, 4
    %v1362 = vsel %vm483, %v1359, %v1361
    %v1363 = vrot.slane %v1160, 4
    %v1364 = vsel %vm483, %v1361, %v1363
    %v1365 = vrot.slane %v1161, 4
    %v1366 = vsel %vm483, %v1363, %v1365
    %v1367 = vrot.slane %v1162, 4
    %v1368 = vsel %vm483, %v1365, %v1367
    %v1369 = vrot.slane %v1163, 4
    %v1370 = vsel %vm483, %v1367, %v1369
    %1371 = vrot.lane.b32.xlu0 %v1358, 32
    %v1372 = vpop.permute.xlu0 %1371
    %1373 = vrot.lane.b32.xlu0 %v1360, 32
    %v1374 = vpop.permute.xlu0 %1373
    %1375 = vrot.lane.b32.xlu0 %v1362, 32
    %v1376 = vpop.permute.xlu0 %1375
    %1377 = vrot.lane.b32.xlu0 %v1364, 32
    %v1378 = vpop.permute.xlu0 %1377
    %1379 = vrot.lane.b32.xlu0 %v1366, 32
    %v1380 = vpop.permute.xlu0 %1379
    %1381 = vrot.lane.b32.xlu0 %v1368, 32
    %v1382 = vpop.permute.xlu0 %1381
    %1383 = vrot.lane.b32.xlu0 %v1370, 32
    %v1384 = vpop.permute.xlu0 %1383
    %1392 = vst.msk [vmem:[#allocation3 + $0x8] sm:$0xff] %vm334, %v1372
    %1393 = vst.msk [vmem:[#allocation3 + $0x18] sm:$0xff] %vm334, %v1374
    %1394 = vst.msk [vmem:[#allocation3 + $0x28] sm:$0xff] %vm334, %v1376
    %1395 = vst.msk [vmem:[#allocation3 + $0x38] sm:$0xff] %vm334, %v1378
    %1396 = vst.msk [vmem:[#allocation3 + $0x48] sm:$0xff] %vm334, %v1380
    %1397 = vst.msk [vmem:[#allocation3 + $0x58] sm:$0xff] %vm334, %v1382
    %1398 = vst.msk [vmem:[#allocation3 + $0x68] sm:$0xff] %vm334, %v1384
    %1399 = vst.msk [vmem:[#allocation3 + $0x78] sm:$0xff] %vm334, 0.0
    %v1400 = vrot.slane %v1156, 5
    %v1401 = vrot.slane %v1157, 5
    %v1402 = vsel %vm532, %v1400, %v1401
    %v1403 = vrot.slane %v1158, 5
    %v1404 = vsel %vm532, %v1401, %v1403
    %v1405 = vrot.slane %v1159, 5
    %v1406 = vsel %vm532, %v1403, %v1405
    %v1407 = vrot.slane %v1160, 5
    %v1408 = vsel %vm532, %v1405, %v1407
    %v1409 = vrot.slane %v1161, 5
    %v1410 = vsel %vm532, %v1407, %v1409
    %v1411 = vrot.slane %v1162, 5
    %v1412 = vsel %vm532, %v1409, %v1411
    %v1413 = vrot.slane %v1163, 5
    %v1414 = vsel %vm532, %v1411, %v1413
    %1415 = vrot.lane.b32.xlu0 %v1402, 64
    %v1416 = vpop.permute.xlu0 %1415
    %1417 = vrot.lane.b32.xlu0 %v1404, 64
    %v1418 = vpop.permute.xlu0 %1417
    %1419 = vrot.lane.b32.xlu0 %v1406, 64
    %v1420 = vpop.permute.xlu0 %1419
    %1421 = vrot.lane.b32.xlu0 %v1408, 64
    %v1422 = vpop.permute.xlu0 %1421
    %1423 = vrot.lane.b32.xlu0 %v1410, 64
    %v1424 = vpop.permute.xlu0 %1423
    %1425 = vrot.lane.b32.xlu0 %v1412, 64
    %v1426 = vpop.permute.xlu0 %1425
    %1427 = vrot.lane.b32.xlu0 %v1414, 64
    %v1428 = vpop.permute.xlu0 %1427
    %1436 = vst.msk [vmem:[#allocation3 + $0x8] sm:$0xff] %vm386, %v1416
    %1437 = vst.msk [vmem:[#allocation3 + $0x18] sm:$0xff] %vm386, %v1418
    %1438 = vst.msk [vmem:[#allocation3 + $0x28] sm:$0xff] %vm386, %v1420
    %1439 = vst.msk [vmem:[#allocation3 + $0x38] sm:$0xff] %vm386, %v1422
    %1440 = vst.msk [vmem:[#allocation3 + $0x48] sm:$0xff] %vm386, %v1424
    %1441 = vst.msk [vmem:[#allocation3 + $0x58] sm:$0xff] %vm386, %v1426
    %vm1442 = vcmask 784896
    %1443 = vst.msk [vmem:[#allocation3 + $0x68] sm:$0x7f] %vm1442, %v1428
    %vm1444 = vcmask 785927
    %1445 = vst.msk [vmem:[#allocation3 + $0x68] sm:$0x80] %vm1444, 0.0
    %1446 = vst.msk [vmem:[#allocation3 + $0x78] sm:$0xff] %vm386, 0.0
    %1447 = vst.msk [vmem:[#allocation3 + $0x80] sm:$0x1] %vm263, 0.0
    %v1455 = vrot.slane %v1164, 7
    %v1456 = vrot.slane %v1165, 7
    %v1457 = vsel %vm273, %v1455, %v1456
    %v1458 = vrot.slane %v1166, 7
    %v1459 = vsel %vm273, %v1456, %v1458
    %v1460 = vrot.slane %v1167, 7
    %v1461 = vsel %vm273, %v1458, %v1460
    %v1462 = vrot.slane %v1168, 7
    %v1463 = vsel %vm273, %v1460, %v1462
    %v1464 = vrot.slane %v1169, 7
    %v1465 = vsel %vm273, %v1462, %v1464
    %v1466 = vrot.slane %v1170, 7
    %v1467 = vsel %vm273, %v1464, %v1466
    %1475 = vst.msk [vmem:[#allocation3 + $0x80] sm:$0xfe] %vm297, %v1455
    %1476 = vst.msk [vmem:[#allocation3 + $0x90] sm:$0xff] %vm299, %v1457
    %1477 = vst.msk [vmem:[#allocation3 + $0xa0] sm:$0xff] %vm299, %v1459
    %1478 = vst.msk [vmem:[#allocation3 + $0xb0] sm:$0xff] %vm299, %v1461
    %1479 = vst.msk [vmem:[#allocation3 + $0xc0] sm:$0xff] %vm299, %v1463
    %1480 = vst.msk [vmem:[#allocation3 + $0xd0] sm:$0xff] %vm299, %v1465
    %1481 = vst.msk [vmem:[#allocation3 + $0xe0] sm:$0xff] %vm299, %v1467
    %1482 = vst.msk [vmem:[#allocation3 + $0xf0] sm:$0xff] %vm299, 0.0
    %1483 = vrot.lane.b32.xlu0 %v1164, 32
    %v1484 = vpop.permute.xlu0 %1483
    %1485 = vrot.lane.b32.xlu0 %v1165, 32
    %v1486 = vpop.permute.xlu0 %1485
    %1487 = vrot.lane.b32.xlu0 %v1166, 32
    %v1488 = vpop.permute.xlu0 %1487
    %1489 = vrot.lane.b32.xlu0 %v1167, 32
    %v1490 = vpop.permute.xlu0 %1489
    %1491 = vrot.lane.b32.xlu0 %v1168, 32
    %v1492 = vpop.permute.xlu0 %1491
    %1493 = vrot.lane.b32.xlu0 %v1169, 32
    %v1494 = vpop.permute.xlu0 %1493
    %1495 = vrot.lane.b32.xlu0 %v1170, 32
    %v1496 = vpop.permute.xlu0 %1495
    %1504 = vst.msk [vmem:[#allocation3 + $0x80] sm:$0xff] %vm334, %v1484
    %1505 = vst.msk [vmem:[#allocation3 + $0x90] sm:$0xff] %vm334, %v1486
    %1506 = vst.msk [vmem:[#allocation3 + $0xa0] sm:$0xff] %vm334, %v1488
    %1507 = vst.msk [vmem:[#allocation3 + $0xb0] sm:$0xff] %vm334, %v1490
    %1508 = vst.msk [vmem:[#allocation3 + $0xc0] sm:$0xff] %vm334, %v1492
    %1509 = vst.msk [vmem:[#allocation3 + $0xd0] sm:$0xff] %vm334, %v1494
    %1510 = vst.msk [vmem:[#allocation3 + $0xe0] sm:$0xff] %vm334, %v1496
    %1511 = vst.msk [vmem:[#allocation3 + $0xf0] sm:$0xff] %vm334, 0.0
    %v1513 = vrot.slane %v1164, 1
    %v1514 = vrot.slane %v1165, 1
    %v1515 = vsel %vm346, %v1513, %v1514
    %v1516 = vrot.slane %v1166, 1
    %v1517 = vsel %vm346, %v1514, %v1516
    %v1518 = vrot.slane %v1167, 1
    %v1519 = vsel %vm346, %v1516, %v1518
    %v1520 = vrot.slane %v1168, 1
    %v1521 = vsel %vm346, %v1518, %v1520
    %v1522 = vrot.slane %v1169, 1
    %v1523 = vsel %vm346, %v1520, %v1522
    %v1524 = vrot.slane %v1170, 1
    %v1525 = vsel %vm346, %v1522, %v1524
    %v1526 = vrot.slane %v1171, 1
    %v1527 = vsel %vm346, %v1524, %v1526
    %1528 = vrot.lane.b32.xlu0 %v1515, 64
    %v1529 = vpop.permute.xlu0 %1528
    %1530 = vrot.lane.b32.xlu0 %v1517, 64
    %v1531 = vpop.permute.xlu0 %1530
    %1532 = vrot.lane.b32.xlu0 %v1519, 64
    %v1533 = vpop.permute.xlu0 %1532
    %1534 = vrot.lane.b32.xlu0 %v1521, 64
    %v1535 = vpop.permute.xlu0 %1534
    %1536 = vrot.lane.b32.xlu0 %v1523, 64
    %v1537 = vpop.permute.xlu0 %1536
    %1538 = vrot.lane.b32.xlu0 %v1525, 64
    %v1539 = vpop.permute.xlu0 %1538
    %1540 = vrot.lane.b32.xlu0 %v1527, 64
    %v1541 = vpop.permute.xlu0 %1540
    %1549 = vst.msk [vmem:[#allocation3 + $0x80] sm:$0xff] %vm386, %v1529
    %1550 = vst.msk [vmem:[#allocation3 + $0x90] sm:$0xff] %vm386, %v1531
    %1551 = vst.msk [vmem:[#allocation3 + $0xa0] sm:$0xff] %vm386, %v1533
    %1552 = vst.msk [vmem:[#allocation3 + $0xb0] sm:$0xff] %vm386, %v1535
    %1553 = vst.msk [vmem:[#allocation3 + $0xc0] sm:$0xff] %vm386, %v1537
    %1554 = vst.msk [vmem:[#allocation3 + $0xd0] sm:$0xff] %vm386, %v1539
    %1555 = vst.msk [vmem:[#allocation3 + $0xe0] sm:$0xff] %vm386, %v1541
    %1556 = vst.msk [vmem:[#allocation3 + $0xf0] sm:$0xff] %vm386, 0.0
    %v1557 = vrot.slane %v1164, 2
    %v1558 = vrot.slane %v1165, 2
    %v1559 = vsel %vm398, %v1557, %v1558
    %v1560 = vrot.slane %v1166, 2
    %v1561 = vsel %vm398, %v1558, %v1560
    %v1562 = vrot.slane %v1167, 2
    %v1563 = vsel %vm398, %v1560, %v1562
    %v1564 = vrot.slane %v1168, 2
    %v1565 = vsel %vm398, %v1562, %v1564
    %v1566 = vrot.slane %v1169, 2
    %v1567 = vsel %vm398, %v1564, %v1566
    %v1568 = vrot.slane %v1170, 2
    %v1569 = vsel %vm398, %v1566, %v1568
    %v1570 = vrot.slane %v1171, 2
    %v1571 = vsel %vm398, %v1568, %v1570
    %1572 = vrot.lane.b32.xlu0 %v1559, 96
    %v1573 = vpop.permute.xlu0 %1572
    %1574 = vrot.lane.b32.xlu0 %v1561, 96
    %v1575 = vpop.permute.xlu0 %1574
    %1576 = vrot.lane.b32.xlu0 %v1563, 96
    %v1577 = vpop.permute.xlu0 %1576
    %1578 = vrot.lane.b32.xlu0 %v1565, 96
    %v1579 = vpop.permute.xlu0 %1578
    %1580 = vrot.lane.b32.xlu0 %v1567, 96
    %v1581 = vpop.permute.xlu0 %1580
    %1582 = vrot.lane.b32.xlu0 %v1569, 96
    %v1583 = vpop.permute.xlu0 %1582
    %1584 = vrot.lane.b32.xlu0 %v1571, 96
    %v1585 = vpop.permute.xlu0 %1584
    %1593 = vst.msk [vmem:[#allocation3 + $0x80] sm:$0xff] %vm438, %v1573
    %1594 = vst.msk [vmem:[#allocation3 + $0x90] sm:$0xff] %vm438, %v1575
    %1595 = vst.msk [vmem:[#allocation3 + $0xa0] sm:$0xff] %vm438, %v1577
    %1596 = vst.msk [vmem:[#allocation3 + $0xb0] sm:$0xff] %vm438, %v1579
    %1597 = vst.msk [vmem:[#allocation3 + $0xc0] sm:$0xff] %vm438, %v1581
    %1598 = vst.msk [vmem:[#allocation3 + $0xd0] sm:$0xff] %vm438, %v1583
    %1599 = vst.msk [vmem:[#allocation3 + $0xe0] sm:$0xff] %vm438, %v1585
    %1600 = vst.msk [vmem:[#allocation3 + $0xf0] sm:$0xff] %vm438, 0.0
    %v1601 = vrot.slane %v1164, 3
    %v1602 = vrot.slane %v1165, 3
    %v1603 = vsel %vm450, %v1601, %v1602
    %v1604 = vrot.slane %v1166, 3
    %v1605 = vsel %vm450, %v1602, %v1604
    %v1606 = vrot.slane %v1167, 3
    %v1607 = vsel %vm450, %v1604, %v1606
    %v1608 = vrot.slane %v1168, 3
    %v1609 = vsel %vm450, %v1606, %v1608
    %v1610 = vrot.slane %v1169, 3
    %v1611 = vsel %vm450, %v1608, %v1610
    %v1612 = vrot.slane %v1170, 3
    %v1613 = vsel %vm450, %v1610, %v1612
    %v1614 = vrot.slane %v1171, 3
    %v1615 = vsel %vm450, %v1612, %v1614
    %1623 = vst.msk [vmem:[#allocation3 + $0x88] sm:$0xff] %vm299, %v1603
    %1624 = vst.msk [vmem:[#allocation3 + $0x98] sm:$0xff] %vm299, %v1605
    %1625 = vst.msk [vmem:[#allocation3 + $0xa8] sm:$0xff] %vm299, %v1607
    %1626 = vst.msk [vmem:[#allocation3 + $0xb8] sm:$0xff] %vm299, %v1609
    %1627 = vst.msk [vmem:[#allocation3 + $0xc8] sm:$0xff] %vm299, %v1611
    %1628 = vst.msk [vmem:[#allocation3 + $0xd8] sm:$0xff] %vm299, %v1613
    %1629 = vst.msk [vmem:[#allocation3 + $0xe8] sm:$0xff] %vm299, %v1615
    %1630 = vst.msk [vmem:[#allocation3 + $0xf8] sm:$0xff] %vm299, 0.0
    %v1631 = vrot.slane %v1164, 4
    %v1632 = vrot.slane %v1165, 4
    %v1633 = vsel %vm483, %v1631, %v1632
    %v1634 = vrot.slane %v1166, 4
    %v1635 = vsel %vm483, %v1632, %v1634
    %v1636 = vrot.slane %v1167, 4
    %v1637 = vsel %vm483, %v1634, %v1636
    %v1638 = vrot.slane %v1168, 4
    %v1639 = vsel %vm483, %v1636, %v1638
    %v1640 = vrot.slane %v1169, 4
    %v1641 = vsel %vm483, %v1638, %v1640
    %v1642 = vrot.slane %v1170, 4
    %v1643 = vsel %vm483, %v1640, %v1642
    %v1644 = vrot.slane %v1171, 4
    %v1645 = vsel %vm483, %v1642, %v1644
    %1646 = vrot.lane.b32.xlu0 %v1633, 32
    %v1647 = vpop.permute.xlu0 %1646
    %1648 = vrot.lane.b32.xlu0 %v1635, 32
    %v1649 = vpop.permute.xlu0 %1648
    %1650 = vrot.lane.b32.xlu0 %v1637, 32
    %v1651 = vpop.permute.xlu0 %1650
    %1652 = vrot.lane.b32.xlu0 %v1639, 32
    %v1653 = vpop.permute.xlu0 %1652
    %1654 = vrot.lane.b32.xlu0 %v1641, 32
    %v1655 = vpop.permute.xlu0 %1654
    %1656 = vrot.lane.b32.xlu0 %v1643, 32
    %v1657 = vpop.permute.xlu0 %1656
    %1658 = vrot.lane.b32.xlu0 %v1645, 32
    %v1659 = vpop.permute.xlu0 %1658
    %1667 = vst.msk [vmem:[#allocation3 + $0x88] sm:$0xff] %vm334, %v1647
    %1668 = vst.msk [vmem:[#allocation3 + $0x98] sm:$0xff] %vm334, %v1649
    %1669 = vst.msk [vmem:[#allocation3 + $0xa8] sm:$0xff] %vm334, %v1651
    %1670 = vst.msk [vmem:[#allocation3 + $0xb8] sm:$0xff] %vm334, %v1653
    %1671 = vst.msk [vmem:[#allocation3 + $0xc8] sm:$0xff] %vm334, %v1655
    %1672 = vst.msk [vmem:[#allocation3 + $0xd8] sm:$0xff] %vm334, %v1657
    %1673 = vst.msk [vmem:[#allocation3 + $0xe8] sm:$0xff] %vm334, %v1659
    %1674 = vst.msk [vmem:[#allocation3 + $0xf8] sm:$0xff] %vm334, 0.0
    %v1675 = vrot.slane %v1164, 5
    %v1676 = vrot.slane %v1165, 5
    %v1677 = vsel %vm532, %v1675, %v1676
    %v1678 = vrot.slane %v1166, 5
    %v1679 = vsel %vm532, %v1676, %v1678
    %v1680 = vrot.slane %v1167, 5
    %v1681 = vsel %vm532, %v1678, %v1680
    %v1682 = vrot.slane %v1168, 5
    %v1683 = vsel %vm532, %v1680, %v1682
    %v1684 = vrot.slane %v1169, 5
    %v1685 = vsel %vm532, %v1682, %v1684
    %v1686 = vrot.slane %v1170, 5
    %v1687 = vsel %vm532, %v1684, %v1686
    %v1688 = vrot.slane %v1171, 5
    %v1689 = vsel %vm532, %v1686, %v1688
    %1690 = vrot.lane.b32.xlu0 %v1677, 64
    %v1691 = vpop.permute.xlu0 %1690
    %1692 = vrot.lane.b32.xlu0 %v1679, 64
    %v1693 = vpop.permute.xlu0 %1692
    %1694 = vrot.lane.b32.xlu0 %v1681, 64
    %v1695 = vpop.permute.xlu0 %1694
    %1696 = vrot.lane.b32.xlu0 %v1683, 64
    %v1697 = vpop.permute.xlu0 %1696
    %1698 = vrot.lane.b32.xlu0 %v1685, 64
    %v1699 = vpop.permute.xlu0 %1698
    %1700 = vrot.lane.b32.xlu0 %v1687, 64
    %v1701 = vpop.permute.xlu0 %1700
    %1702 = vrot.lane.b32.xlu0 %v1689, 64
    %v1703 = vpop.permute.xlu0 %1702
    %1711 = vst.msk [vmem:[#allocation3 + $0x88] sm:$0xff] %vm386, %v1691
    %1712 = vst.msk [vmem:[#allocation3 + $0x98] sm:$0xff] %vm386, %v1693
    %1713 = vst.msk [vmem:[#allocation3 + $0xa8] sm:$0xff] %vm386, %v1695
    %1714 = vst.msk [vmem:[#allocation3 + $0xb8] sm:$0xff] %vm386, %v1697
    %1715 = vst.msk [vmem:[#allocation3 + $0xc8] sm:$0xff] %vm386, %v1699
    %1716 = vst.msk [vmem:[#allocation3 + $0xd8] sm:$0xff] %vm386, %v1701
    %1717 = vst.msk [vmem:[#allocation3 + $0xe8] sm:$0x7f] %vm1442, %v1703
    %1718 = vst.msk [vmem:[#allocation3 + $0xe8] sm:$0x80] %vm1444, 0.0
    %1719 = vst.msk [vmem:[#allocation3 + $0xf8] sm:$0xff] %vm386, 0.0
    %v1720 = vld [vmem:[#allocation3] sm:$0xff]
    %v1721 = vld [vmem:[#allocation3 + $0x8] sm:$0xff]
    %v1722 = vld [vmem:[#allocation3 + $0x10] sm:$0xff]
    %v1723 = vld [vmem:[#allocation3 + $0x18] sm:$0xff]
    %v1724 = vld [vmem:[#allocation3 + $0x20] sm:$0xff]
    %v1725 = vld [vmem:[#allocation3 + $0x28] sm:$0xff]
    %v1726 = vld [vmem:[#allocation3 + $0x30] sm:$0xff]
    %v1727 = vld [vmem:[#allocation3 + $0x38] sm:$0xff]
    %v1728 = vld [vmem:[#allocation3 + $0x40] sm:$0xff]
    %v1729 = vld [vmem:[#allocation3 + $0x48] sm:$0xff]
    %v1730 = vld [vmem:[#allocation3 + $0x50] sm:$0xff]
    %v1731 = vld [vmem:[#allocation3 + $0x58] sm:$0xff]
    %v1732 = vld [vmem:[#allocation3 + $0x60] sm:$0xff]
    %v1733 = vld [vmem:[#allocation3 + $0x68] sm:$0xff]
    %v1734 = vld [vmem:[#allocation3 + $0x70] sm:$0xff]
    %v1735 = vld [vmem:[#allocation3 + $0x78] sm:$0xff]
    %v1736 = vld [vmem:[#allocation3 + $0x80] sm:$0xff]
    %v1737 = vld [vmem:[#allocation3 + $0x88] sm:$0xff]
    %v1738 = vld [vmem:[#allocation3 + $0x90] sm:$0xff]
    %v1739 = vld [vmem:[#allocation3 + $0x98] sm:$0xff]
    %v1740 = vld [vmem:[#allocation3 + $0xa0] sm:$0xff]
    %v1741 = vld [vmem:[#allocation3 + $0xa8] sm:$0xff]
    %v1742 = vld [vmem:[#allocation3 + $0xb0] sm:$0xff]
    %v1743 = vld [vmem:[#allocation3 + $0xb8] sm:$0xff]
    %v1744 = vld [vmem:[#allocation3 + $0xc0] sm:$0xff]
    %v1745 = vld [vmem:[#allocation3 + $0xc8] sm:$0xff]
    %v1746 = vld [vmem:[#allocation3 + $0xd0] sm:$0xff]
    %v1747 = vld [vmem:[#allocation3 + $0xd8] sm:$0xff]
    %v1748 = vld [vmem:[#allocation3 + $0xe0] sm:$0xff]
    %v1749 = vld [vmem:[#allocation3 + $0xe8] sm:$0xff]
    %v1750 = vld [vmem:[#allocation3 + $0xf0] sm:$0xff]
    %v1751 = vld [vmem:[#allocation3 + $0xf8] sm:$0xff]
    %v1752 = vld [vmem:[%s5] sm:$0xff]
    %v1753 = vld [vmem:[%s5 + $0x8] sm:$0xff]
    %v1754 = vld [vmem:[%s5 + $0x10] sm:$0xff]
    %v1755 = vld [vmem:[%s5 + $0x18] sm:$0xff]
    %v1756 = vld [vmem:[%s5 + $0x20] sm:$0xff]
    %v1757 = vld [vmem:[%s5 + $0x28] sm:$0xff]
    %v1758 = vld [vmem:[%s5 + $0x30] sm:$0xff]
    %v1759 = vld [vmem:[%s5 + $0x38] sm:$0xff]
    %v1760 = vld [vmem:[%s5 + $0x40] sm:$0xff]
    %v1761 = vld [vmem:[%s5 + $0x48] sm:$0xff]
    %v1762 = vld [vmem:[%s5 + $0x50] sm:$0xff]
    %v1763 = vld [vmem:[%s5 + $0x58] sm:$0xff]
    %v1764 = vld [vmem:[%s5 + $0x60] sm:$0xff]
    %v1765 = vld [vmem:[%s5 + $0x68] sm:$0xff]
    %v1766 = vld [vmem:[%s5 + $0x70] sm:$0xff]
    %v1767 = vld [vmem:[%s5 + $0x78] sm:$0xff]
    %v1768 = vld [vmem:[%s5 + $0x80] sm:$0xff]
    %v1769 = vld [vmem:[%s5 + $0x88] sm:$0xff]
    %v1770 = vld [vmem:[%s5 + $0x90] sm:$0xff]
    %v1771 = vld [vmem:[%s5 + $0x98] sm:$0xff]
    %v1772 = vld [vmem:[%s5 + $0xa0] sm:$0xff]
    %v1773 = vld [vmem:[%s5 + $0xa8] sm:$0xff]
    %v1774 = vld [vmem:[%s5 + $0xb0] sm:$0xff]
    %v1775 = vld [vmem:[%s5 + $0xb8] sm:$0xff]
    %v1776 = vld [vmem:[%s5 + $0xc0] sm:$0xff]
    %v1777 = vld [vmem:[%s5 + $0xc8] sm:$0xff]
    %v1778 = vld [vmem:[%s5 + $0xd0] sm:$0xff]
    %v1779 = vld [vmem:[%s5 + $0xd8] sm:$0xff]
    %v1780 = vld [vmem:[%s6] sm:$0x1]
    %v1782 = vperm.slane %v1780, 0
    %v1785 = vsel %vm945, %v1721, 0
    %v1788 = vsel %vm945, %v1723, 0
    %v1791 = vsel %vm945, %v1725, 0
    %v1794 = vsel %vm945, %v1727, 0
    %v1797 = vsel %vm945, %v1729, 0
    %v1800 = vsel %vm945, %v1731, 0
    %v1803 = vsel %vm945, %v1733, 0
    %v1806 = vsel %vm945, %v1735, 0
    %v1809 = vsel %vm945, %v1737, 0
    %v1812 = vsel %vm945, %v1739, 0
    %v1815 = vsel %vm945, %v1741, 0
    %v1818 = vsel %vm945, %v1743, 0
    %v1821 = vsel %vm945, %v1745, 0
    %v1824 = vsel %vm945, %v1747, 0
    %v1827 = vsel %vm945, %v1749, 0
    %v1830 = vsel %vm945, %v1751, 0
    %1832 = vmatpush.msra.mxu0 %v1767
    %1833 = vmatpush.msra.mxu0 %v1766
    %1834 = vmatpush.msra.mxu0 %v1765
    %1835 = vmatpush.msra.mxu0 %v1764
    %1836 = vmatpush.msra.mxu0 %v1763
    %1837 = vmatpush.msra.mxu0 %v1762
    %1838 = vmatpush.msra.mxu0 %v1761
    %1839 = vmatpush.msra.mxu0 %v1760
    %1840 = vmatpush.msra.mxu0 %v1759
    %1841 = vmatpush.msra.mxu0 %v1758
    %1842 = vmatpush.msra.mxu0 %v1757
    %1843 = vmatpush.msra.mxu0 %v1756
    %1844 = vmatpush.msra.mxu0 %v1755
    %1845 = vmatpush.msra.mxu0 %v1754
    %1846 = vmatpush.msra.mxu0 %v1753
    %1847 = vmatpush.msra.mxu0 %v1752
    %1848 = vmatmul.f32.gmra.mxu0 %v1720
    %v1849 = vpop.f32.mrf.mxu0
    %v1850 = vadd.f32 %v1782, %v1849
    %1851 = vmatmul.f32.gmra.mxu0 %v1722
    %v1852 = vpop.f32.mrf.mxu0
    %v1853 = vadd.f32 %v1782, %v1852
    %1854 = vmatmul.f32.gmra.mxu0 %v1724
    %v1855 = vpop.f32.mrf.mxu0
    %v1856 = vadd.f32 %v1782, %v1855
    %1857 = vmatmul.f32.gmra.mxu0 %v1726
    %v1858 = vpop.f32.mrf.mxu0
    %v1859 = vadd.f32 %v1782, %v1858
    %1860 = vmatmul.f32.gmra.mxu0 %v1728
    %v1861 = vpop.f32.mrf.mxu0
    %v1862 = vadd.f32 %v1782, %v1861
    %1863 = vmatmul.f32.gmra.mxu0 %v1730
    %v1864 = vpop.f32.mrf.mxu0
    %v1865 = vadd.f32 %v1782, %v1864
    %1866 = vmatmul.f32.gmra.mxu0 %v1732
    %v1867 = vpop.f32.mrf.mxu0
    %v1868 = vadd.f32 %v1782, %v1867
    %1869 = vmatmul.f32.gmra.mxu0 %v1734
    %v1870 = vpop.f32.mrf.mxu0
    %v1871 = vadd.f32 %v1782, %v1870
    %1872 = vmatmul.f32.gmra.mxu0 %v1736
    %v1873 = vpop.f32.mrf.mxu0
    %v1874 = vadd.f32 %v1782, %v1873
    %1875 = vmatmul.f32.gmra.mxu0 %v1738
    %v1876 = vpop.f32.mrf.mxu0
    %v1877 = vadd.f32 %v1782, %v1876
    %1878 = vmatmul.f32.gmra.mxu0 %v1740
    %v1879 = vpop.f32.mrf.mxu0
    %v1880 = vadd.f32 %v1782, %v1879
    %1881 = vmatmul.f32.gmra.mxu0 %v1742
    %v1882 = vpop.f32.mrf.mxu0
    %v1883 = vadd.f32 %v1782, %v1882
    %1884 = vmatmul.f32.gmra.mxu0 %v1744
    %v1885 = vpop.f32.mrf.mxu0
    %v1886 = vadd.f32 %v1782, %v1885
    %1887 = vmatmul.f32.gmra.mxu0 %v1746
    %v1888 = vpop.f32.mrf.mxu0
    %v1889 = vadd.f32 %v1782, %v1888
    %1890 = vmatmul.f32.gmra.mxu0 %v1748
    %v1891 = vpop.f32.mrf.mxu0
    %v1892 = vadd.f32 %v1782, %v1891
    %1893 = vmatmul.f32.gmra.mxu0 %v1750
    %v1894 = vpop.f32.mrf.mxu0
    %v1895 = vadd.f32 %v1782, %v1894
    %1896 = vdwg.mxu0
    %1897 = vmatpush.msra.mxu0 0.0
    %1898 = vmatpush.msra.mxu0 0.0
    %1899 = vmatpush.msra.mxu0 0.0
    %1900 = vmatpush.msra.mxu0 0.0
    %1901 = vmatpush.msra.mxu0 %v1779
    %1902 = vmatpush.msra.mxu0 %v1778
    %1903 = vmatpush.msra.mxu0 %v1777
    %1904 = vmatpush.msra.mxu0 %v1776
    %1905 = vmatpush.msra.mxu0 %v1775
    %1906 = vmatpush.msra.mxu0 %v1774
    %1907 = vmatpush.msra.mxu0 %v1773
    %1908 = vmatpush.msra.mxu0 %v1772
    %1909 = vmatpush.msra.mxu0 %v1771
    %1910 = vmatpush.msra.mxu0 %v1770
    %1911 = vmatpush.msra.mxu0 %v1769
    %1912 = vmatpush.msra.mxu0 %v1768
    %1913 = vmatmul.f32.gmra.mxu0 %v1785
    %v1914 = vpop.f32.mrf.mxu0
    %v1915 = vadd.f32 %v1850, %v1914
    %1916 = vmatmul.f32.gmra.mxu0 %v1788
    %v1917 = vpop.f32.mrf.mxu0
    %v1918 = vadd.f32 %v1853, %v1917
    %1919 = vmatmul.f32.gmra.mxu0 %v1791
    %v1920 = vpop.f32.mrf.mxu0
    %v1921 = vadd.f32 %v1856, %v1920
    %1922 = vmatmul.f32.gmra.mxu0 %v1794
    %v1923 = vpop.f32.mrf.mxu0
    %v1924 = vadd.f32 %v1859, %v1923
    %1925 = vmatmul.f32.gmra.mxu0 %v1797
    %v1926 = vpop.f32.mrf.mxu0
    %v1927 = vadd.f32 %v1862, %v1926
    %1928 = vmatmul.f32.gmra.mxu0 %v1800
    %v1929 = vpop.f32.mrf.mxu0
    %v1930 = vadd.f32 %v1865, %v1929
    %1931 = vmatmul.f32.gmra.mxu0 %v1803
    %v1932 = vpop.f32.mrf.mxu0
    %v1933 = vadd.f32 %v1868, %v1932
    %1934 = vmatmul.f32.gmra.mxu0 %v1806
    %v1935 = vpop.f32.mrf.mxu0
    %v1936 = vadd.f32 %v1871, %v1935
    %1937 = vmatmul.f32.gmra.mxu0 %v1809
    %v1938 = vpop.f32.mrf.mxu0
    %v1939 = vadd.f32 %v1874, %v1938
    %1940 = vmatmul.f32.gmra.mxu0 %v1812
    %v1941 = vpop.f32.mrf.mxu0
    %v1942 = vadd.f32 %v1877, %v1941
    %1943 = vmatmul.f32.gmra.mxu0 %v1815
    %v1944 = vpop.f32.mrf.mxu0
    %v1945 = vadd.f32 %v1880, %v1944
    %1946 = vmatmul.f32.gmra.mxu0 %v1818
    %v1947 = vpop.f32.mrf.mxu0
    %v1948 = vadd.f32 %v1883, %v1947
    %1949 = vmatmul.f32.gmra.mxu0 %v1821
    %v1950 = vpop.f32.mrf.mxu0
    %v1951 = vadd.f32 %v1886, %v1950
    %1952 = vmatmul.f32.gmra.mxu0 %v1824
    %v1953 = vpop.f32.mrf.mxu0
    %v1954 = vadd.f32 %v1889, %v1953
    %1955 = vmatmul.f32.gmra.mxu0 %v1827
    %v1956 = vpop.f32.mrf.mxu0
    %v1957 = vadd.f32 %v1892, %v1956
    %1958 = vmatmul.f32.gmra.mxu0 %v1830
    %v1959 = vpop.f32.mrf.mxu0
    %v1960 = vadd.f32 %v1895, %v1959
    %1961 = vdwg.mxu0
    %v1962 = vadd.f32 %v1915, %v247
    %v1963 = vadd.f32 %v1918, %v248
    %v1964 = vadd.f32 %v1921, %v249
    %v1965 = vadd.f32 %v1924, %v250
    %v1966 = vadd.f32 %v1927, %v251
    %v1967 = vadd.f32 %v1930, %v252
    %v1968 = vadd.f32 %v1933, %v253
    %v1969 = vadd.f32 %v1936, %v254
    %v1970 = vadd.f32 %v1939, %v255
    %v1971 = vadd.f32 %v1942, %v256
    %v1972 = vadd.f32 %v1945, %v257
    %v1973 = vadd.f32 %v1948, %v258
    %v1974 = vadd.f32 %v1951, %v259
    %v1975 = vadd.f32 %v1954, %v260
    %v1976 = vadd.f32 %v1957, %v261
    %v1977 = vadd.f32 %v1960, %v262
    %vm1978 = vcmp.ge.f32.partialorder %v1962, 0.0
    %vm1979 = vcmp.ge.f32.partialorder %v1963, 0.0
    %vm1980 = vcmp.ge.f32.partialorder %v1964, 0.0
    %vm1981 = vcmp.ge.f32.partialorder %v1965, 0.0
    %vm1982 = vcmp.ge.f32.partialorder %v1966, 0.0
    %vm1983 = vcmp.ge.f32.partialorder %v1967, 0.0
    %vm1984 = vcmp.ge.f32.partialorder %v1968, 0.0
    %vm1985 = vcmp.ge.f32.partialorder %v1969, 0.0
    %vm1986 = vcmp.ge.f32.partialorder %v1970, 0.0
    %vm1987 = vcmp.ge.f32.partialorder %v1971, 0.0
    %vm1988 = vcmp.ge.f32.partialorder %v1972, 0.0
    %vm1989 = vcmp.ge.f32.partialorder %v1973, 0.0
    %vm1990 = vcmp.ge.f32.partialorder %v1974, 0.0
    %vm1991 = vcmp.ge.f32.partialorder %v1975, 0.0
    %vm1992 = vcmp.ge.f32.partialorder %v1976, 0.0
    %vm1993 = vcmp.ge.f32.partialorder %v1977, 0.0
    %v1994 = vmul.f32 %v1962, 0.01
    %v1995 = vmul.f32 %v1963, 0.01
    %v1996 = vmul.f32 %v1964, 0.01
    %v1997 = vmul.f32 %v1965, 0.01
    %v1998 = vmul.f32 %v1966, 0.01
    %v1999 = vmul.f32 %v1967, 0.01
    %v2000 = vmul.f32 %v1968, 0.01
    %v2001 = vmul.f32 %v1969, 0.01
    %v2002 = vmul.f32 %v1970, 0.01
    %v2003 = vmul.f32 %v1971, 0.01
    %v2004 = vmul.f32 %v1972, 0.01
    %v2005 = vmul.f32 %v1973, 0.01
    %v2006 = vmul.f32 %v1974, 0.01
    %v2007 = vmul.f32 %v1975, 0.01
    %v2008 = vmul.f32 %v1976, 0.01
    %v2009 = vmul.f32 %v1977, 0.01
    %v2010 = vsel %vm1978, %v1962, %v1994
    %v2011 = vsel %vm1979, %v1963, %v1995
    %v2012 = vsel %vm1980, %v1964, %v1996
    %v2013 = vsel %vm1981, %v1965, %v1997
    %v2014 = vsel %vm1982, %v1966, %v1998
    %v2015 = vsel %vm1983, %v1967, %v1999
    %v2016 = vsel %vm1984, %v1968, %v2000
    %v2017 = vsel %vm1985, %v1969, %v2001
    %v2018 = vsel %vm1986, %v1970, %v2002
    %v2019 = vsel %vm1987, %v1971, %v2003
    %v2020 = vsel %vm1988, %v1972, %v2004
    %v2021 = vsel %vm1989, %v1973, %v2005
    %v2022 = vsel %vm1990, %v1974, %v2006
    %v2023 = vsel %vm1991, %v1975, %v2007
    %v2024 = vsel %vm1992, %v1976, %v2008
    %v2025 = vsel %vm1993, %v1977, %v2009
    %2026 = vst.msk [vmem:[#allocation4] sm:$0x1] %vm263, 0.0
    %v2034 = vrot.slane %v2010, 7
    %v2035 = vrot.slane %v2011, 7
    %v2036 = vsel %vm273, %v2034, %v2035
    %v2037 = vrot.slane %v2012, 7
    %v2038 = vsel %vm273, %v2035, %v2037
    %v2039 = vrot.slane %v2013, 7
    %v2040 = vsel %vm273, %v2037, %v2039
    %v2041 = vrot.slane %v2014, 7
    %v2042 = vsel %vm273, %v2039, %v2041
    %v2043 = vrot.slane %v2015, 7
    %v2044 = vsel %vm273, %v2041, %v2043
    %v2045 = vrot.slane %v2016, 7
    %v2046 = vsel %vm273, %v2043, %v2045
    %2054 = vst.msk [vmem:[#allocation4] sm:$0xfe] %vm297, %v2034
    %2055 = vst.msk [vmem:[#allocation4 + $0x10] sm:$0xff] %vm299, %v2036
    %2056 = vst.msk [vmem:[#allocation4 + $0x20] sm:$0xff] %vm299, %v2038
    %2057 = vst.msk [vmem:[#allocation4 + $0x30] sm:$0xff] %vm299, %v2040
    %2058 = vst.msk [vmem:[#allocation4 + $0x40] sm:$0xff] %vm299, %v2042
    %2059 = vst.msk [vmem:[#allocation4 + $0x50] sm:$0xff] %vm299, %v2044
    %2060 = vst.msk [vmem:[#allocation4 + $0x60] sm:$0xf] %vm306, %v2046
    %2061 = vst.msk [vmem:[#allocation4 + $0x60] sm:$0xf0] %vm308, 0.0
    %2062 = vst.msk [vmem:[#allocation4 + $0x70] sm:$0xff] %vm299, 0.0
    %2063 = vrot.lane.b32.xlu0 %v2010, 32
    %v2064 = vpop.permute.xlu0 %2063
    %2065 = vrot.lane.b32.xlu0 %v2011, 32
    %v2066 = vpop.permute.xlu0 %2065
    %2067 = vrot.lane.b32.xlu0 %v2012, 32
    %v2068 = vpop.permute.xlu0 %2067
    %2069 = vrot.lane.b32.xlu0 %v2013, 32
    %v2070 = vpop.permute.xlu0 %2069
    %2071 = vrot.lane.b32.xlu0 %v2014, 32
    %v2072 = vpop.permute.xlu0 %2071
    %2073 = vrot.lane.b32.xlu0 %v2015, 32
    %v2074 = vpop.permute.xlu0 %2073
    %2075 = vrot.lane.b32.xlu0 %v2016, 32
    %v2076 = vpop.permute.xlu0 %2075
    %2084 = vst.msk [vmem:[#allocation4] sm:$0xff] %vm334, %v2064
    %2085 = vst.msk [vmem:[#allocation4 + $0x10] sm:$0xff] %vm334, %v2066
    %2086 = vst.msk [vmem:[#allocation4 + $0x20] sm:$0xff] %vm334, %v2068
    %2087 = vst.msk [vmem:[#allocation4 + $0x30] sm:$0xff] %vm334, %v2070
    %2088 = vst.msk [vmem:[#allocation4 + $0x40] sm:$0xff] %vm334, %v2072
    %2089 = vst.msk [vmem:[#allocation4 + $0x50] sm:$0xff] %vm334, %v2074
    %2090 = vst.msk [vmem:[#allocation4 + $0x60] sm:$0xf] %vm342, %v2076
    %2091 = vst.msk [vmem:[#allocation4 + $0x60] sm:$0xf0] %vm344, 0.0
    %2092 = vst.msk [vmem:[#allocation4 + $0x70] sm:$0xff] %vm334, 0.0
    %v2093 = vrot.slane %v2010, 1
    %v2094 = vrot.slane %v2011, 1
    %v2095 = vsel %vm346, %v2093, %v2094
    %v2096 = vrot.slane %v2012, 1
    %v2097 = vsel %vm346, %v2094, %v2096
    %v2098 = vrot.slane %v2013, 1
    %v2099 = vsel %vm346, %v2096, %v2098
    %v2100 = vrot.slane %v2014, 1
    %v2101 = vsel %vm346, %v2098, %v2100
    %v2102 = vrot.slane %v2015, 1
    %v2103 = vsel %vm346, %v2100, %v2102
    %v2104 = vrot.slane %v2016, 1
    %v2105 = vsel %vm346, %v2102, %v2104
    %2106 = vrot.lane.b32.xlu0 %v2095, 64
    %v2107 = vpop.permute.xlu0 %2106
    %2108 = vrot.lane.b32.xlu0 %v2097, 64
    %v2109 = vpop.permute.xlu0 %2108
    %2110 = vrot.lane.b32.xlu0 %v2099, 64
    %v2111 = vpop.permute.xlu0 %2110
    %2112 = vrot.lane.b32.xlu0 %v2101, 64
    %v2113 = vpop.permute.xlu0 %2112
    %2114 = vrot.lane.b32.xlu0 %v2103, 64
    %v2115 = vpop.permute.xlu0 %2114
    %2116 = vrot.lane.b32.xlu0 %v2105, 64
    %v2117 = vpop.permute.xlu0 %2116
    %2118 = vrot.lane.b32.xlu0 %v2104, 64
    %v2119 = vpop.permute.xlu0 %2118
    %2127 = vst.msk [vmem:[#allocation4] sm:$0xff] %vm386, %v2107
    %2128 = vst.msk [vmem:[#allocation4 + $0x10] sm:$0xff] %vm386, %v2109
    %2129 = vst.msk [vmem:[#allocation4 + $0x20] sm:$0xff] %vm386, %v2111
    %2130 = vst.msk [vmem:[#allocation4 + $0x30] sm:$0xff] %vm386, %v2113
    %2131 = vst.msk [vmem:[#allocation4 + $0x40] sm:$0xff] %vm386, %v2115
    %2132 = vst.msk [vmem:[#allocation4 + $0x50] sm:$0xff] %vm386, %v2117
    %2133 = vst.msk [vmem:[#allocation4 + $0x60] sm:$0xf] %vm394, %v2119
    %2134 = vst.msk [vmem:[#allocation4 + $0x60] sm:$0xf0] %vm396, 0.0
    %2135 = vst.msk [vmem:[#allocation4 + $0x70] sm:$0xff] %vm386, 0.0
    %v2136 = vrot.slane %v2010, 2
    %v2137 = vrot.slane %v2011, 2
    %v2138 = vsel %vm398, %v2136, %v2137
    %v2139 = vrot.slane %v2012, 2
    %v2140 = vsel %vm398, %v2137, %v2139
    %v2141 = vrot.slane %v2013, 2
    %v2142 = vsel %vm398, %v2139, %v2141
    %v2143 = vrot.slane %v2014, 2
    %v2144 = vsel %vm398, %v2141, %v2143
    %v2145 = vrot.slane %v2015, 2
    %v2146 = vsel %vm398, %v2143, %v2145
    %v2147 = vrot.slane %v2016, 2
    %v2148 = vsel %vm398, %v2145, %v2147
    %2149 = vrot.lane.b32.xlu0 %v2138, 96
    %v2150 = vpop.permute.xlu0 %2149
    %2151 = vrot.lane.b32.xlu0 %v2140, 96
    %v2152 = vpop.permute.xlu0 %2151
    %2153 = vrot.lane.b32.xlu0 %v2142, 96
    %v2154 = vpop.permute.xlu0 %2153
    %2155 = vrot.lane.b32.xlu0 %v2144, 96
    %v2156 = vpop.permute.xlu0 %2155
    %2157 = vrot.lane.b32.xlu0 %v2146, 96
    %v2158 = vpop.permute.xlu0 %2157
    %2159 = vrot.lane.b32.xlu0 %v2148, 96
    %v2160 = vpop.permute.xlu0 %2159
    %2161 = vrot.lane.b32.xlu0 %v2147, 96
    %v2162 = vpop.permute.xlu0 %2161
    %2170 = vst.msk [vmem:[#allocation4] sm:$0xff] %vm438, %v2150
    %2171 = vst.msk [vmem:[#allocation4 + $0x10] sm:$0xff] %vm438, %v2152
    %2172 = vst.msk [vmem:[#allocation4 + $0x20] sm:$0xff] %vm438, %v2154
    %2173 = vst.msk [vmem:[#allocation4 + $0x30] sm:$0xff] %vm438, %v2156
    %2174 = vst.msk [vmem:[#allocation4 + $0x40] sm:$0xff] %vm438, %v2158
    %2175 = vst.msk [vmem:[#allocation4 + $0x50] sm:$0xff] %vm438, %v2160
    %2176 = vst.msk [vmem:[#allocation4 + $0x60] sm:$0xf] %vm446, %v2162
    %2177 = vst.msk [vmem:[#allocation4 + $0x60] sm:$0xf0] %vm448, 0.0
    %2178 = vst.msk [vmem:[#allocation4 + $0x70] sm:$0xff] %vm438, 0.0
    %v2179 = vrot.slane %v2010, 3
    %v2180 = vrot.slane %v2011, 3
    %v2181 = vsel %vm450, %v2179, %v2180
    %v2182 = vrot.slane %v2012, 3
    %v2183 = vsel %vm450, %v2180, %v2182
    %v2184 = vrot.slane %v2013, 3
    %v2185 = vsel %vm450, %v2182, %v2184
    %v2186 = vrot.slane %v2014, 3
    %v2187 = vsel %vm450, %v2184, %v2186
    %v2188 = vrot.slane %v2015, 3
    %v2189 = vsel %vm450, %v2186, %v2188
    %v2190 = vrot.slane %v2016, 3
    %v2191 = vsel %vm450, %v2188, %v2190
    %2199 = vst.msk [vmem:[#allocation4 + $0x8] sm:$0xff] %vm299, %v2181
    %2200 = vst.msk [vmem:[#allocation4 + $0x18] sm:$0xff] %vm299, %v2183
    %2201 = vst.msk [vmem:[#allocation4 + $0x28] sm:$0xff] %vm299, %v2185
    %2202 = vst.msk [vmem:[#allocation4 + $0x38] sm:$0xff] %vm299, %v2187
    %2203 = vst.msk [vmem:[#allocation4 + $0x48] sm:$0xff] %vm299, %v2189
    %2204 = vst.msk [vmem:[#allocation4 + $0x58] sm:$0xff] %vm299, %v2191
    %2205 = vst.msk [vmem:[#allocation4 + $0x68] sm:$0xf] %vm306, %v2190
    %2206 = vst.msk [vmem:[#allocation4 + $0x68] sm:$0xf0] %vm308, 0.0
    %2207 = vst.msk [vmem:[#allocation4 + $0x78] sm:$0xff] %vm299, 0.0
    %v2208 = vrot.slane %v2010, 4
    %v2209 = vrot.slane %v2011, 4
    %v2210 = vsel %vm483, %v2208, %v2209
    %v2211 = vrot.slane %v2012, 4
    %v2212 = vsel %vm483, %v2209, %v2211
    %v2213 = vrot.slane %v2013, 4
    %v2214 = vsel %vm483, %v2211, %v2213
    %v2215 = vrot.slane %v2014, 4
    %v2216 = vsel %vm483, %v2213, %v2215
    %v2217 = vrot.slane %v2015, 4
    %v2218 = vsel %vm483, %v2215, %v2217
    %v2219 = vrot.slane %v2016, 4
    %v2220 = vsel %vm483, %v2217, %v2219
    %2221 = vrot.lane.b32.xlu0 %v2210, 32
    %v2222 = vpop.permute.xlu0 %2221
    %2223 = vrot.lane.b32.xlu0 %v2212, 32
    %v2224 = vpop.permute.xlu0 %2223
    %2225 = vrot.lane.b32.xlu0 %v2214, 32
    %v2226 = vpop.permute.xlu0 %2225
    %2227 = vrot.lane.b32.xlu0 %v2216, 32
    %v2228 = vpop.permute.xlu0 %2227
    %2229 = vrot.lane.b32.xlu0 %v2218, 32
    %v2230 = vpop.permute.xlu0 %2229
    %2231 = vrot.lane.b32.xlu0 %v2220, 32
    %v2232 = vpop.permute.xlu0 %2231
    %2233 = vrot.lane.b32.xlu0 %v2219, 32
    %v2234 = vpop.permute.xlu0 %2233
    %2242 = vst.msk [vmem:[#allocation4 + $0x8] sm:$0xff] %vm334, %v2222
    %2243 = vst.msk [vmem:[#allocation4 + $0x18] sm:$0xff] %vm334, %v2224
    %2244 = vst.msk [vmem:[#allocation4 + $0x28] sm:$0xff] %vm334, %v2226
    %2245 = vst.msk [vmem:[#allocation4 + $0x38] sm:$0xff] %vm334, %v2228
    %2246 = vst.msk [vmem:[#allocation4 + $0x48] sm:$0xff] %vm334, %v2230
    %2247 = vst.msk [vmem:[#allocation4 + $0x58] sm:$0xff] %vm334, %v2232
    %2248 = vst.msk [vmem:[#allocation4 + $0x68] sm:$0xf] %vm342, %v2234
    %2249 = vst.msk [vmem:[#allocation4 + $0x68] sm:$0xf0] %vm344, 0.0
    %2250 = vst.msk [vmem:[#allocation4 + $0x78] sm:$0xff] %vm334, 0.0
    %v2251 = vrot.slane %v2010, 5
    %v2252 = vrot.slane %v2011, 5
    %v2253 = vsel %vm532, %v2251, %v2252
    %v2254 = vrot.slane %v2012, 5
    %v2255 = vsel %vm532, %v2252, %v2254
    %v2256 = vrot.slane %v2013, 5
    %v2257 = vsel %vm532, %v2254, %v2256
    %v2258 = vrot.slane %v2014, 5
    %v2259 = vsel %vm532, %v2256, %v2258
    %v2260 = vrot.slane %v2015, 5
    %v2261 = vsel %vm532, %v2258, %v2260
    %v2262 = vrot.slane %v2016, 5
    %v2263 = vsel %vm532, %v2260, %v2262
    %2264 = vrot.lane.b32.xlu0 %v2253, 64
    %v2265 = vpop.permute.xlu0 %2264
    %2266 = vrot.lane.b32.xlu0 %v2255, 64
    %v2267 = vpop.permute.xlu0 %2266
    %2268 = vrot.lane.b32.xlu0 %v2257, 64
    %v2269 = vpop.permute.xlu0 %2268
    %2270 = vrot.lane.b32.xlu0 %v2259, 64
    %v2271 = vpop.permute.xlu0 %2270
    %2272 = vrot.lane.b32.xlu0 %v2261, 64
    %v2273 = vpop.permute.xlu0 %2272
    %2274 = vrot.lane.b32.xlu0 %v2263, 64
    %v2275 = vpop.permute.xlu0 %2274
    %2276 = vrot.lane.b32.xlu0 %v2262, 64
    %v2277 = vpop.permute.xlu0 %2276
    %2285 = vst.msk [vmem:[#allocation4 + $0x8] sm:$0xff] %vm386, %v2265
    %2286 = vst.msk [vmem:[#allocation4 + $0x18] sm:$0xff] %vm386, %v2267
    %2287 = vst.msk [vmem:[#allocation4 + $0x28] sm:$0xff] %vm386, %v2269
    %2288 = vst.msk [vmem:[#allocation4 + $0x38] sm:$0xff] %vm386, %v2271
    %2289 = vst.msk [vmem:[#allocation4 + $0x48] sm:$0xff] %vm386, %v2273
    %2290 = vst.msk [vmem:[#allocation4 + $0x58] sm:$0xff] %vm386, %v2275
    %2291 = vst.msk [vmem:[#allocation4 + $0x68] sm:$0x7] %vm579, %v2277
    %2292 = vst.msk [vmem:[#allocation4 + $0x68] sm:$0xf8] %vm581, 0.0
    %2293 = vst.msk [vmem:[#allocation4 + $0x78] sm:$0xff] %vm386, 0.0
    %2294 = vst.msk [vmem:[#allocation4 + $0x80] sm:$0x1] %vm263, 0.0
    %v2302 = vrot.slane %v2018, 7
    %v2303 = vrot.slane %v2019, 7
    %v2304 = vsel %vm273, %v2302, %v2303
    %v2305 = vrot.slane %v2020, 7
    %v2306 = vsel %vm273, %v2303, %v2305
    %v2307 = vrot.slane %v2021, 7
    %v2308 = vsel %vm273, %v2305, %v2307
    %v2309 = vrot.slane %v2022, 7
    %v2310 = vsel %vm273, %v2307, %v2309
    %v2311 = vrot.slane %v2023, 7
    %v2312 = vsel %vm273, %v2309, %v2311
    %v2313 = vrot.slane %v2024, 7
    %v2314 = vsel %vm273, %v2311, %v2313
    %2322 = vst.msk [vmem:[#allocation4 + $0x80] sm:$0xfe] %vm297, %v2302
    %2323 = vst.msk [vmem:[#allocation4 + $0x90] sm:$0xff] %vm299, %v2304
    %2324 = vst.msk [vmem:[#allocation4 + $0xa0] sm:$0xff] %vm299, %v2306
    %2325 = vst.msk [vmem:[#allocation4 + $0xb0] sm:$0xff] %vm299, %v2308
    %2326 = vst.msk [vmem:[#allocation4 + $0xc0] sm:$0xff] %vm299, %v2310
    %2327 = vst.msk [vmem:[#allocation4 + $0xd0] sm:$0xff] %vm299, %v2312
    %2328 = vst.msk [vmem:[#allocation4 + $0xe0] sm:$0xf] %vm306, %v2314
    %2329 = vst.msk [vmem:[#allocation4 + $0xe0] sm:$0xf0] %vm308, 0.0
    %2330 = vst.msk [vmem:[#allocation4 + $0xf0] sm:$0xff] %vm299, 0.0
    %2331 = vrot.lane.b32.xlu0 %v2018, 32
    %v2332 = vpop.permute.xlu0 %2331
    %2333 = vrot.lane.b32.xlu0 %v2019, 32
    %v2334 = vpop.permute.xlu0 %2333
    %2335 = vrot.lane.b32.xlu0 %v2020, 32
    %v2336 = vpop.permute.xlu0 %2335
    %2337 = vrot.lane.b32.xlu0 %v2021, 32
    %v2338 = vpop.permute.xlu0 %2337
    %2339 = vrot.lane.b32.xlu0 %v2022, 32
    %v2340 = vpop.permute.xlu0 %2339
    %2341 = vrot.lane.b32.xlu0 %v2023, 32
    %v2342 = vpop.permute.xlu0 %2341
    %2343 = vrot.lane.b32.xlu0 %v2024, 32
    %v2344 = vpop.permute.xlu0 %2343
    %2352 = vst.msk [vmem:[#allocation4 + $0x80] sm:$0xff] %vm334, %v2332
    %2353 = vst.msk [vmem:[#allocation4 + $0x90] sm:$0xff] %vm334, %v2334
    %2354 = vst.msk [vmem:[#allocation4 + $0xa0] sm:$0xff] %vm334, %v2336
    %2355 = vst.msk [vmem:[#allocation4 + $0xb0] sm:$0xff] %vm334, %v2338
    %2356 = vst.msk [vmem:[#allocation4 + $0xc0] sm:$0xff] %vm334, %v2340
    %2357 = vst.msk [vmem:[#allocation4 + $0xd0] sm:$0xff] %vm334, %v2342
    %2358 = vst.msk [vmem:[#allocation4 + $0xe0] sm:$0xf] %vm342, %v2344
    %2359 = vst.msk [vmem:[#allocation4 + $0xe0] sm:$0xf0] %vm344, 0.0
    %2360 = vst.msk [vmem:[#allocation4 + $0xf0] sm:$0xff] %vm334, 0.0
    %v2361 = vrot.slane %v2018, 1
    %v2362 = vrot.slane %v2019, 1
    %v2363 = vsel %vm346, %v2361, %v2362
    %v2364 = vrot.slane %v2020, 1
    %v2365 = vsel %vm346, %v2362, %v2364
    %v2366 = vrot.slane %v2021, 1
    %v2367 = vsel %vm346, %v2364, %v2366
    %v2368 = vrot.slane %v2022, 1
    %v2369 = vsel %vm346, %v2366, %v2368
    %v2370 = vrot.slane %v2023, 1
    %v2371 = vsel %vm346, %v2368, %v2370
    %v2372 = vrot.slane %v2024, 1
    %v2373 = vsel %vm346, %v2370, %v2372
    %2374 = vrot.lane.b32.xlu0 %v2363, 64
    %v2375 = vpop.permute.xlu0 %2374
    %2376 = vrot.lane.b32.xlu0 %v2365, 64
    %v2377 = vpop.permute.xlu0 %2376
    %2378 = vrot.lane.b32.xlu0 %v2367, 64
    %v2379 = vpop.permute.xlu0 %2378
    %2380 = vrot.lane.b32.xlu0 %v2369, 64
    %v2381 = vpop.permute.xlu0 %2380
    %2382 = vrot.lane.b32.xlu0 %v2371, 64
    %v2383 = vpop.permute.xlu0 %2382
    %2384 = vrot.lane.b32.xlu0 %v2373, 64
    %v2385 = vpop.permute.xlu0 %2384
    %2386 = vrot.lane.b32.xlu0 %v2372, 64
    %v2387 = vpop.permute.xlu0 %2386
    %2395 = vst.msk [vmem:[#allocation4 + $0x80] sm:$0xff] %vm386, %v2375
    %2396 = vst.msk [vmem:[#allocation4 + $0x90] sm:$0xff] %vm386, %v2377
    %2397 = vst.msk [vmem:[#allocation4 + $0xa0] sm:$0xff] %vm386, %v2379
    %2398 = vst.msk [vmem:[#allocation4 + $0xb0] sm:$0xff] %vm386, %v2381
    %2399 = vst.msk [vmem:[#allocation4 + $0xc0] sm:$0xff] %vm386, %v2383
    %2400 = vst.msk [vmem:[#allocation4 + $0xd0] sm:$0xff] %vm386, %v2385
    %2401 = vst.msk [vmem:[#allocation4 + $0xe0] sm:$0xf] %vm394, %v2387
    %2402 = vst.msk [vmem:[#allocation4 + $0xe0] sm:$0xf0] %vm396, 0.0
    %2403 = vst.msk [vmem:[#allocation4 + $0xf0] sm:$0xff] %vm386, 0.0
    %v2404 = vrot.slane %v2018, 2
    %v2405 = vrot.slane %v2019, 2
    %v2406 = vsel %vm398, %v2404, %v2405
    %v2407 = vrot.slane %v2020, 2
    %v2408 = vsel %vm398, %v2405, %v2407
    %v2409 = vrot.slane %v2021, 2
    %v2410 = vsel %vm398, %v2407, %v2409
    %v2411 = vrot.slane %v2022, 2
    %v2412 = vsel %vm398, %v2409, %v2411
    %v2413 = vrot.slane %v2023, 2
    %v2414 = vsel %vm398, %v2411, %v2413
    %v2415 = vrot.slane %v2024, 2
    %v2416 = vsel %vm398, %v2413, %v2415
    %2417 = vrot.lane.b32.xlu0 %v2406, 96
    %v2418 = vpop.permute.xlu0 %2417
    %2419 = vrot.lane.b32.xlu0 %v2408, 96
    %v2420 = vpop.permute.xlu0 %2419
    %2421 = vrot.lane.b32.xlu0 %v2410, 96
    %v2422 = vpop.permute.xlu0 %2421
    %2423 = vrot.lane.b32.xlu0 %v2412, 96
    %v2424 = vpop.permute.xlu0 %2423
    %2425 = vrot.lane.b32.xlu0 %v2414, 96
    %v2426 = vpop.permute.xlu0 %2425
    %2427 = vrot.lane.b32.xlu0 %v2416, 96
    %v2428 = vpop.permute.xlu0 %2427
    %2429 = vrot.lane.b32.xlu0 %v2415, 96
    %v2430 = vpop.permute.xlu0 %2429
    %2438 = vst.msk [vmem:[#allocation4 + $0x80] sm:$0xff] %vm438, %v2418
    %2439 = vst.msk [vmem:[#allocation4 + $0x90] sm:$0xff] %vm438, %v2420
    %2440 = vst.msk [vmem:[#allocation4 + $0xa0] sm:$0xff] %vm438, %v2422
    %2441 = vst.msk [vmem:[#allocation4 + $0xb0] sm:$0xff] %vm438, %v2424
    %2442 = vst.msk [vmem:[#allocation4 + $0xc0] sm:$0xff] %vm438, %v2426
    %2443 = vst.msk [vmem:[#allocation4 + $0xd0] sm:$0xff] %vm438, %v2428
    %2444 = vst.msk [vmem:[#allocation4 + $0xe0] sm:$0xf] %vm446, %v2430
    %2445 = vst.msk [vmem:[#allocation4 + $0xe0] sm:$0xf0] %vm448, 0.0
    %2446 = vst.msk [vmem:[#allocation4 + $0xf0] sm:$0xff] %vm438, 0.0
    %v2447 = vrot.slane %v2018, 3
    %v2448 = vrot.slane %v2019, 3
    %v2449 = vsel %vm450, %v2447, %v2448
    %v2450 = vrot.slane %v2020, 3
    %v2451 = vsel %vm450, %v2448, %v2450
    %v2452 = vrot.slane %v2021, 3
    %v2453 = vsel %vm450, %v2450, %v2452
    %v2454 = vrot.slane %v2022, 3
    %v2455 = vsel %vm450, %v2452, %v2454
    %v2456 = vrot.slane %v2023, 3
    %v2457 = vsel %vm450, %v2454, %v2456
    %v2458 = vrot.slane %v2024, 3
    %v2459 = vsel %vm450, %v2456, %v2458
    %2467 = vst.msk [vmem:[#allocation4 + $0x88] sm:$0xff] %vm299, %v2449
    %2468 = vst.msk [vmem:[#allocation4 + $0x98] sm:$0xff] %vm299, %v2451
    %2469 = vst.msk [vmem:[#allocation4 + $0xa8] sm:$0xff] %vm299, %v2453
    %2470 = vst.msk [vmem:[#allocation4 + $0xb8] sm:$0xff] %vm299, %v2455
    %2471 = vst.msk [vmem:[#allocation4 + $0xc8] sm:$0xff] %vm299, %v2457
    %2472 = vst.msk [vmem:[#allocation4 + $0xd8] sm:$0xff] %vm299, %v2459
    %2473 = vst.msk [vmem:[#allocation4 + $0xe8] sm:$0xf] %vm306, %v2458
    %2474 = vst.msk [vmem:[#allocation4 + $0xe8] sm:$0xf0] %vm308, 0.0
    %2475 = vst.msk [vmem:[#allocation4 + $0xf8] sm:$0xff] %vm299, 0.0
    %v2476 = vrot.slane %v2018, 4
    %v2477 = vrot.slane %v2019, 4
    %v2478 = vsel %vm483, %v2476, %v2477
    %v2479 = vrot.slane %v2020, 4
    %v2480 = vsel %vm483, %v2477, %v2479
    %v2481 = vrot.slane %v2021, 4
    %v2482 = vsel %vm483, %v2479, %v2481
    %v2483 = vrot.slane %v2022, 4
    %v2484 = vsel %vm483, %v2481, %v2483
    %v2485 = vrot.slane %v2023, 4
    %v2486 = vsel %vm483, %v2483, %v2485
    %v2487 = vrot.slane %v2024, 4
    %v2488 = vsel %vm483, %v2485, %v2487
    %2489 = vrot.lane.b32.xlu0 %v2478, 32
    %v2490 = vpop.permute.xlu0 %2489
    %2491 = vrot.lane.b32.xlu0 %v2480, 32
    %v2492 = vpop.permute.xlu0 %2491
    %2493 = vrot.lane.b32.xlu0 %v2482, 32
    %v2494 = vpop.permute.xlu0 %2493
    %2495 = vrot.lane.b32.xlu0 %v2484, 32
    %v2496 = vpop.permute.xlu0 %2495
    %2497 = vrot.lane.b32.xlu0 %v2486, 32
    %v2498 = vpop.permute.xlu0 %2497
    %2499 = vrot.lane.b32.xlu0 %v2488, 32
    %v2500 = vpop.permute.xlu0 %2499
    %2501 = vrot.lane.b32.xlu0 %v2487, 32
    %v2502 = vpop.permute.xlu0 %2501
    %2510 = vst.msk [vmem:[#allocation4 + $0x88] sm:$0xff] %vm334, %v2490
    %2511 = vst.msk [vmem:[#allocation4 + $0x98] sm:$0xff] %vm334, %v2492
    %2512 = vst.msk [vmem:[#allocation4 + $0xa8] sm:$0xff] %vm334, %v2494
    %2513 = vst.msk [vmem:[#allocation4 + $0xb8] sm:$0xff] %vm334, %v2496
    %2514 = vst.msk [vmem:[#allocation4 + $0xc8] sm:$0xff] %vm334, %v2498
    %2515 = vst.msk [vmem:[#allocation4 + $0xd8] sm:$0xff] %vm334, %v2500
    %2516 = vst.msk [vmem:[#allocation4 + $0xe8] sm:$0xf] %vm342, %v2502
    %2517 = vst.msk [vmem:[#allocation4 + $0xe8] sm:$0xf0] %vm344, 0.0
    %2518 = vst.msk [vmem:[#allocation4 + $0xf8] sm:$0xff] %vm334, 0.0
    %v2519 = vrot.slane %v2018, 5
    %v2520 = vrot.slane %v2019, 5
    %v2521 = vsel %vm532, %v2519, %v2520
    %v2522 = vrot.slane %v2020, 5
    %v2523 = vsel %vm532, %v2520, %v2522
    %v2524 = vrot.slane %v2021, 5
    %v2525 = vsel %vm532, %v2522, %v2524
    %v2526 = vrot.slane %v2022, 5
    %v2527 = vsel %vm532, %v2524, %v2526
    %v2528 = vrot.slane %v2023, 5
    %v2529 = vsel %vm532, %v2526, %v2528
    %v2530 = vrot.slane %v2024, 5
    %v2531 = vsel %vm532, %v2528, %v2530
    %2532 = vrot.lane.b32.xlu0 %v2521, 64
    %v2533 = vpop.permute.xlu0 %2532
    %2534 = vrot.lane.b32.xlu0 %v2523, 64
    %v2535 = vpop.permute.xlu0 %2534
    %2536 = vrot.lane.b32.xlu0 %v2525, 64
    %v2537 = vpop.permute.xlu0 %2536
    %2538 = vrot.lane.b32.xlu0 %v2527, 64
    %v2539 = vpop.permute.xlu0 %2538
    %2540 = vrot.lane.b32.xlu0 %v2529, 64
    %v2541 = vpop.permute.xlu0 %2540
    %2542 = vrot.lane.b32.xlu0 %v2531, 64
    %v2543 = vpop.permute.xlu0 %2542
    %2544 = vrot.lane.b32.xlu0 %v2530, 64
    %v2545 = vpop.permute.xlu0 %2544
    %2553 = vst.msk [vmem:[#allocation4 + $0x88] sm:$0xff] %vm386, %v2533
    %2554 = vst.msk [vmem:[#allocation4 + $0x98] sm:$0xff] %vm386, %v2535
    %2555 = vst.msk [vmem:[#allocation4 + $0xa8] sm:$0xff] %vm386, %v2537
    %2556 = vst.msk [vmem:[#allocation4 + $0xb8] sm:$0xff] %vm386, %v2539
    %2557 = vst.msk [vmem:[#allocation4 + $0xc8] sm:$0xff] %vm386, %v2541
    %2558 = vst.msk [vmem:[#allocation4 + $0xd8] sm:$0xff] %vm386, %v2543
    %2559 = vst.msk [vmem:[#allocation4 + $0xe8] sm:$0x7] %vm579, %v2545
    %2560 = vst.msk [vmem:[#allocation4 + $0xe8] sm:$0xf8] %vm581, 0.0
    %2561 = vst.msk [vmem:[#allocation4 + $0xf8] sm:$0xff] %vm386, 0.0
    %v2562 = vld [vmem:[#allocation4] sm:$0xff]
    %v2563 = vld [vmem:[#allocation4 + $0x8] sm:$0xff]
    %v2564 = vld [vmem:[#allocation4 + $0x10] sm:$0xff]
    %v2565 = vld [vmem:[#allocation4 + $0x18] sm:$0xff]
    %v2566 = vld [vmem:[#allocation4 + $0x20] sm:$0xff]
    %v2567 = vld [vmem:[#allocation4 + $0x28] sm:$0xff]
    %v2568 = vld [vmem:[#allocation4 + $0x30] sm:$0xff]
    %v2569 = vld [vmem:[#allocation4 + $0x38] sm:$0xff]
    %v2570 = vld [vmem:[#allocation4 + $0x40] sm:$0xff]
    %v2571 = vld [vmem:[#allocation4 + $0x48] sm:$0xff]
    %v2572 = vld [vmem:[#allocation4 + $0x50] sm:$0xff]
    %v2573 = vld [vmem:[#allocation4 + $0x58] sm:$0xff]
    %v2574 = vld [vmem:[#allocation4 + $0x60] sm:$0xff]
    %v2575 = vld [vmem:[#allocation4 + $0x68] sm:$0xff]
    %v2576 = vld [vmem:[#allocation4 + $0x70] sm:$0xff]
    %v2577 = vld [vmem:[#allocation4 + $0x78] sm:$0xff]
    %v2578 = vld [vmem:[#allocation4 + $0x80] sm:$0xff]
    %v2579 = vld [vmem:[#allocation4 + $0x88] sm:$0xff]
    %v2580 = vld [vmem:[#allocation4 + $0x90] sm:$0xff]
    %v2581 = vld [vmem:[#allocation4 + $0x98] sm:$0xff]
    %v2582 = vld [vmem:[#allocation4 + $0xa0] sm:$0xff]
    %v2583 = vld [vmem:[#allocation4 + $0xa8] sm:$0xff]
    %v2584 = vld [vmem:[#allocation4 + $0xb0] sm:$0xff]
    %v2585 = vld [vmem:[#allocation4 + $0xb8] sm:$0xff]
    %v2586 = vld [vmem:[#allocation4 + $0xc0] sm:$0xff]
    %v2587 = vld [vmem:[#allocation4 + $0xc8] sm:$0xff]
    %v2588 = vld [vmem:[#allocation4 + $0xd0] sm:$0xff]
    %v2589 = vld [vmem:[#allocation4 + $0xd8] sm:$0xff]
    %v2590 = vld [vmem:[#allocation4 + $0xe0] sm:$0xff]
    %v2591 = vld [vmem:[#allocation4 + $0xe8] sm:$0xff]
    %v2592 = vld [vmem:[#allocation4 + $0xf0] sm:$0xff]
    %v2593 = vld [vmem:[#allocation4 + $0xf8] sm:$0xff]
    %v2594 = vld [vmem:[%s7] sm:$0xff]
    %v2595 = vld [vmem:[%s7 + $0x8] sm:$0xff]
    %v2596 = vld [vmem:[%s7 + $0x10] sm:$0xff]
    %v2597 = vld [vmem:[%s7 + $0x18] sm:$0xff]
    %v2598 = vld [vmem:[%s7 + $0x20] sm:$0xff]
    %v2599 = vld [vmem:[%s7 + $0x28] sm:$0xff]
    %v2600 = vld [vmem:[%s7 + $0x30] sm:$0xff]
    %v2601 = vld [vmem:[%s7 + $0x38] sm:$0xff]
    %v2602 = vld [vmem:[%s7 + $0x40] sm:$0xff]
    %v2603 = vld [vmem:[%s7 + $0x48] sm:$0xff]
    %v2604 = vld [vmem:[%s7 + $0x50] sm:$0xff]
    %v2605 = vld [vmem:[%s7 + $0x58] sm:$0xff]
    %v2606 = vld [vmem:[%s7 + $0x60] sm:$0xff]
    %v2607 = vld [vmem:[%s7 + $0x68] sm:$0xff]
    %v2608 = vld [vmem:[%s7 + $0x70] sm:$0xff]
    %v2609 = vld [vmem:[%s7 + $0x78] sm:$0xff]
    %v2610 = vld [vmem:[%s7 + $0x80] sm:$0xff]
    %v2611 = vld [vmem:[%s7 + $0x88] sm:$0xff]
    %v2612 = vld [vmem:[%s7 + $0x90] sm:$0xff]
    %v2613 = vld [vmem:[%s7 + $0x98] sm:$0xff]
    %v2614 = vld [vmem:[%s7 + $0xa0] sm:$0xff]
    %v2615 = vld [vmem:[%s7 + $0xa8] sm:$0xff]
    %v2616 = vld [vmem:[%s7 + $0xb0] sm:$0xff]
    %v2617 = vld [vmem:[%s7 + $0xb8] sm:$0xff]
    %v2618 = vld [vmem:[%s7 + $0xc0] sm:$0xff]
    %v2619 = vld [vmem:[%s7 + $0xc8] sm:$0xff]
    %v2620 = vld [vmem:[%s7 + $0xd0] sm:$0xff]
    %v2621 = vld [vmem:[%s7 + $0xd8] sm:$0xff]
    %v2622 = vld [vmem:[%s8] sm:$0x1]
    %v2624 = vperm.slane %v2622, 0
    %v2627 = vsel %vm945, %v2563, 0
    %v2630 = vsel %vm945, %v2565, 0
    %v2633 = vsel %vm945, %v2567, 0
    %v2636 = vsel %vm945, %v2569, 0
    %v2639 = vsel %vm945, %v2571, 0
    %v2642 = vsel %vm945, %v2573, 0
    %v2645 = vsel %vm945, %v2575, 0
    %v2648 = vsel %vm945, %v2577, 0
    %v2651 = vsel %vm945, %v2579, 0
    %v2654 = vsel %vm945, %v2581, 0
    %v2657 = vsel %vm945, %v2583, 0
    %v2660 = vsel %vm945, %v2585, 0
    %v2663 = vsel %vm945, %v2587, 0
    %v2666 = vsel %vm945, %v2589, 0
    %v2669 = vsel %vm945, %v2591, 0
    %v2672 = vsel %vm945, %v2593, 0
    %2674 = vmatpush.msra.mxu0 %v2609
    %2675 = vmatpush.msra.mxu0 %v2608
    %2676 = vmatpush.msra.mxu0 %v2607
    %2677 = vmatpush.msra.mxu0 %v2606
    %2678 = vmatpush.msra.mxu0 %v2605
    %2679 = vmatpush.msra.mxu0 %v2604
    %2680 = vmatpush.msra.mxu0 %v2603
    %2681 = vmatpush.msra.mxu0 %v2602
    %2682 = vmatpush.msra.mxu0 %v2601
    %2683 = vmatpush.msra.mxu0 %v2600
    %2684 = vmatpush.msra.mxu0 %v2599
    %2685 = vmatpush.msra.mxu0 %v2598
    %2686 = vmatpush.msra.mxu0 %v2597
    %2687 = vmatpush.msra.mxu0 %v2596
    %2688 = vmatpush.msra.mxu0 %v2595
    %2689 = vmatpush.msra.mxu0 %v2594
    %2690 = vmatmul.f32.gmra.mxu0 %v2562
    %v2691 = vpop.f32.mrf.mxu0
    %v2692 = vadd.f32 %v2624, %v2691
    %2693 = vmatmul.f32.gmra.mxu0 %v2564
    %v2694 = vpop.f32.mrf.mxu0
    %v2695 = vadd.f32 %v2624, %v2694
    %2696 = vmatmul.f32.gmra.mxu0 %v2566
    %v2697 = vpop.f32.mrf.mxu0
    %v2698 = vadd.f32 %v2624, %v2697
    %2699 = vmatmul.f32.gmra.mxu0 %v2568
    %v2700 = vpop.f32.mrf.mxu0
    %v2701 = vadd.f32 %v2624, %v2700
    %2702 = vmatmul.f32.gmra.mxu0 %v2570
    %v2703 = vpop.f32.mrf.mxu0
    %v2704 = vadd.f32 %v2624, %v2703
    %2705 = vmatmul.f32.gmra.mxu0 %v2572
    %v2706 = vpop.f32.mrf.mxu0
    %v2707 = vadd.f32 %v2624, %v2706
    %2708 = vmatmul.f32.gmra.mxu0 %v2574
    %v2709 = vpop.f32.mrf.mxu0
    %v2710 = vadd.f32 %v2624, %v2709
    %2711 = vmatmul.f32.gmra.mxu0 %v2576
    %v2712 = vpop.f32.mrf.mxu0
    %2713 = vmatmul.f32.gmra.mxu0 %v2578
    %v2714 = vpop.f32.mrf.mxu0
    %v2715 = vadd.f32 %v2624, %v2714
    %2716 = vmatmul.f32.gmra.mxu0 %v2580
    %v2717 = vpop.f32.mrf.mxu0
    %v2718 = vadd.f32 %v2624, %v2717
    %2719 = vmatmul.f32.gmra.mxu0 %v2582
    %v2720 = vpop.f32.mrf.mxu0
    %v2721 = vadd.f32 %v2624, %v2720
    %2722 = vmatmul.f32.gmra.mxu0 %v2584
    %v2723 = vpop.f32.mrf.mxu0
    %v2724 = vadd.f32 %v2624, %v2723
    %2725 = vmatmul.f32.gmra.mxu0 %v2586
    %v2726 = vpop.f32.mrf.mxu0
    %v2727 = vadd.f32 %v2624, %v2726
    %2728 = vmatmul.f32.gmra.mxu0 %v2588
    %v2729 = vpop.f32.mrf.mxu0
    %v2730 = vadd.f32 %v2624, %v2729
    %2731 = vmatmul.f32.gmra.mxu0 %v2590
    %v2732 = vpop.f32.mrf.mxu0
    %v2733 = vadd.f32 %v2624, %v2732
    %2734 = vmatmul.f32.gmra.mxu0 %v2592
    %v2735 = vpop.f32.mrf.mxu0
    %2736 = vdwg.mxu0
    %2737 = vmatpush.msra.mxu0 0.0
    %2738 = vmatpush.msra.mxu0 0.0
    %2739 = vmatpush.msra.mxu0 0.0
    %2740 = vmatpush.msra.mxu0 0.0
    %2741 = vmatpush.msra.mxu0 %v2621
    %2742 = vmatpush.msra.mxu0 %v2620
    %2743 = vmatpush.msra.mxu0 %v2619
    %2744 = vmatpush.msra.mxu0 %v2618
    %2745 = vmatpush.msra.mxu0 %v2617
    %2746 = vmatpush.msra.mxu0 %v2616
    %2747 = vmatpush.msra.mxu0 %v2615
    %2748 = vmatpush.msra.mxu0 %v2614
    %2749 = vmatpush.msra.mxu0 %v2613
    %2750 = vmatpush.msra.mxu0 %v2612
    %2751 = vmatpush.msra.mxu0 %v2611
    %2752 = vmatpush.msra.mxu0 %v2610
    %2753 = vmatmul.f32.gmra.mxu0 %v2627
    %v2754 = vpop.f32.mrf.mxu0
    %v2755 = vadd.f32 %v2692, %v2754
    %2756 = vmatmul.f32.gmra.mxu0 %v2630
    %v2757 = vpop.f32.mrf.mxu0
    %v2758 = vadd.f32 %v2695, %v2757
    %2759 = vmatmul.f32.gmra.mxu0 %v2633
    %v2760 = vpop.f32.mrf.mxu0
    %v2761 = vadd.f32 %v2698, %v2760
    %2762 = vmatmul.f32.gmra.mxu0 %v2636
    %v2763 = vpop.f32.mrf.mxu0
    %v2764 = vadd.f32 %v2701, %v2763
    %2765 = vmatmul.f32.gmra.mxu0 %v2639
    %v2766 = vpop.f32.mrf.mxu0
    %v2767 = vadd.f32 %v2704, %v2766
    %2768 = vmatmul.f32.gmra.mxu0 %v2642
    %v2769 = vpop.f32.mrf.mxu0
    %v2770 = vadd.f32 %v2707, %v2769
    %2771 = vmatmul.f32.gmra.mxu0 %v2645
    %v2772 = vpop.f32.mrf.mxu0
    %v2773 = vadd.f32 %v2710, %v2772
    %2774 = vmatmul.f32.gmra.mxu0 %v2648
    %v2775 = vpop.f32.mrf.mxu0
    %2776 = vmatmul.f32.gmra.mxu0 %v2651
    %v2777 = vpop.f32.mrf.mxu0
    %v2778 = vadd.f32 %v2715, %v2777
    %2779 = vmatmul.f32.gmra.mxu0 %v2654
    %v2780 = vpop.f32.mrf.mxu0
    %v2781 = vadd.f32 %v2718, %v2780
    %2782 = vmatmul.f32.gmra.mxu0 %v2657
    %v2783 = vpop.f32.mrf.mxu0
    %v2784 = vadd.f32 %v2721, %v2783
    %2785 = vmatmul.f32.gmra.mxu0 %v2660
    %v2786 = vpop.f32.mrf.mxu0
    %v2787 = vadd.f32 %v2724, %v2786
    %2788 = vmatmul.f32.gmra.mxu0 %v2663
    %v2789 = vpop.f32.mrf.mxu0
    %v2790 = vadd.f32 %v2727, %v2789
    %2791 = vmatmul.f32.gmra.mxu0 %v2666
    %v2792 = vpop.f32.mrf.mxu0
    %v2793 = vadd.f32 %v2730, %v2792
    %2794 = vmatmul.f32.gmra.mxu0 %v2669
    %v2795 = vpop.f32.mrf.mxu0
    %v2796 = vadd.f32 %v2733, %v2795
    %2797 = vmatmul.f32.gmra.mxu0 %v2672
    %v2798 = vpop.f32.mrf.mxu0
    %2799 = vdwg.mxu0
    %vm2800 = vcmp.ge.f32.partialorder %v2755, 0.0
    %vm2801 = vcmp.ge.f32.partialorder %v2758, 0.0
    %vm2802 = vcmp.ge.f32.partialorder %v2761, 0.0
    %vm2803 = vcmp.ge.f32.partialorder %v2764, 0.0
    %vm2804 = vcmp.ge.f32.partialorder %v2767, 0.0
    %vm2805 = vcmp.ge.f32.partialorder %v2770, 0.0
    %vm2806 = vcmp.ge.f32.partialorder %v2773, 0.0
    %vm2807 = vcmp.ge.f32.partialorder %v2778, 0.0
    %vm2808 = vcmp.ge.f32.partialorder %v2781, 0.0
    %vm2809 = vcmp.ge.f32.partialorder %v2784, 0.0
    %vm2810 = vcmp.ge.f32.partialorder %v2787, 0.0
    %vm2811 = vcmp.ge.f32.partialorder %v2790, 0.0
    %vm2812 = vcmp.ge.f32.partialorder %v2793, 0.0
    %vm2813 = vcmp.ge.f32.partialorder %v2796, 0.0
    %v2814 = vmul.f32 %v2755, 0.01
    %v2815 = vmul.f32 %v2758, 0.01
    %v2816 = vmul.f32 %v2761, 0.01
    %v2817 = vmul.f32 %v2764, 0.01
    %v2818 = vmul.f32 %v2767, 0.01
    %v2819 = vmul.f32 %v2770, 0.01
    %v2820 = vmul.f32 %v2773, 0.01
    %v2821 = vmul.f32 %v2778, 0.01
    %v2822 = vmul.f32 %v2781, 0.01
    %v2823 = vmul.f32 %v2784, 0.01
    %v2824 = vmul.f32 %v2787, 0.01
    %v2825 = vmul.f32 %v2790, 0.01
    %v2826 = vmul.f32 %v2793, 0.01
    %v2827 = vmul.f32 %v2796, 0.01
    %v2828 = vsel %vm2800, %v2755, %v2814
    %v2829 = vsel %vm2801, %v2758, %v2815
    %v2830 = vsel %vm2802, %v2761, %v2816
    %v2831 = vsel %vm2803, %v2764, %v2817
    %v2832 = vsel %vm2804, %v2767, %v2818
    %v2833 = vsel %vm2805, %v2770, %v2819
    %v2834 = vsel %vm2806, %v2773, %v2820
    %v2835 = vsel %vm2807, %v2778, %v2821
    %v2836 = vsel %vm2808, %v2781, %v2822
    %v2837 = vsel %vm2809, %v2784, %v2823
    %v2838 = vsel %vm2810, %v2787, %v2824
    %v2839 = vsel %vm2811, %v2790, %v2825
    %v2840 = vsel %vm2812, %v2793, %v2826
    %v2841 = vsel %vm2813, %v2796, %v2827
    %vm2842 = vcmask 516096
    %2843 = vst.msk [vmem:[#allocation5] sm:$0x1] %vm2842, 0.0
    %v2850 = vrot.slane %v2828, 7
    %v2851 = vrot.slane %v2829, 7
    %v2852 = vsel %vm273, %v2850, %v2851
    %v2853 = vrot.slane %v2830, 7
    %v2854 = vsel %vm273, %v2851, %v2853
    %v2855 = vrot.slane %v2831, 7
    %v2856 = vsel %vm273, %v2853, %v2855
    %v2857 = vrot.slane %v2832, 7
    %v2858 = vsel %vm273, %v2855, %v2857
    %v2859 = vrot.slane %v2833, 7
    %v2860 = vsel %vm273, %v2857, %v2859
    %vm2867 = vcmask 523265
    %2868 = vst.msk [vmem:[#allocation5] sm:$0xfe] %vm2867, %v2850
    %vm2869 = vcmask 523264
    %2870 = vst.msk [vmem:[#allocation5 + $0x20] sm:$0xff] %vm2869, %v2852
    %2871 = vst.msk [vmem:[#allocation5 + $0x40] sm:$0xff] %vm2869, %v2854
    %2872 = vst.msk [vmem:[#allocation5 + $0x60] sm:$0xff] %vm2869, %v2856
    %2873 = vst.msk [vmem:[#allocation5 + $0x80] sm:$0xff] %vm2869, %v2858
    %2874 = vst.msk [vmem:[#allocation5 + $0xa0] sm:$0xff] %vm2869, %v2860
    %2875 = vst.msk [vmem:[#allocation5 + $0xc0] sm:$0xff] %vm2869, 0.0
    %2876 = vst.msk [vmem:[#allocation5 + $0xe0] sm:$0xff] %vm2869, 0.0
    %2877 = vrot.lane.b32.xlu0 %v2828, 64
    %v2878 = vpop.permute.xlu0 %2877
    %2879 = vrot.lane.b32.xlu0 %v2829, 64
    %v2880 = vpop.permute.xlu0 %2879
    %2881 = vrot.lane.b32.xlu0 %v2830, 64
    %v2882 = vpop.permute.xlu0 %2881
    %2883 = vrot.lane.b32.xlu0 %v2831, 64
    %v2884 = vpop.permute.xlu0 %2883
    %2885 = vrot.lane.b32.xlu0 %v2832, 64
    %v2886 = vpop.permute.xlu0 %2885
    %2887 = vrot.lane.b32.xlu0 %v2833, 64
    %v2888 = vpop.permute.xlu0 %2887
    %vm2895 = vcmask 1048064
    %2896 = vst.msk [vmem:[#allocation5] sm:$0xff] %vm2895, %v2878
    %2897 = vst.msk [vmem:[#allocation5 + $0x20] sm:$0xff] %vm2895, %v2880
    %2898 = vst.msk [vmem:[#allocation5 + $0x40] sm:$0xff] %vm2895, %v2882
    %2899 = vst.msk [vmem:[#allocation5 + $0x60] sm:$0xff] %vm2895, %v2884
    %2900 = vst.msk [vmem:[#allocation5 + $0x80] sm:$0xff] %vm2895, %v2886
    %2901 = vst.msk [vmem:[#allocation5 + $0xa0] sm:$0xff] %vm2895, %v2888
    %2902 = vst.msk [vmem:[#allocation5 + $0xc0] sm:$0xff] %vm2895, 0.0
    %2903 = vst.msk [vmem:[#allocation5 + $0xe0] sm:$0xff] %vm2895, 0.0
    %v2905 = vrot.slane %v2828, 1
    %v2906 = vrot.slane %v2829, 1
    %v2907 = vsel %vm346, %v2905, %v2906
    %v2908 = vrot.slane %v2830, 1
    %v2909 = vsel %vm346, %v2906, %v2908
    %v2910 = vrot.slane %v2831, 1
    %v2911 = vsel %vm346, %v2908, %v2910
    %v2912 = vrot.slane %v2832, 1
    %v2913 = vsel %vm346, %v2910, %v2912
    %v2914 = vrot.slane %v2833, 1
    %v2915 = vsel %vm346, %v2912, %v2914
    %v2916 = vrot.slane %v2834, 1
    %v2917 = vsel %vm346, %v2914, %v2916
    %2924 = vst.msk [vmem:[#allocation5 + $0x8] sm:$0xff] %vm2869, %v2907
    %2925 = vst.msk [vmem:[#allocation5 + $0x28] sm:$0xff] %vm2869, %v2909
    %2926 = vst.msk [vmem:[#allocation5 + $0x48] sm:$0xff] %vm2869, %v2911
    %2927 = vst.msk [vmem:[#allocation5 + $0x68] sm:$0xff] %vm2869, %v2913
    %2928 = vst.msk [vmem:[#allocation5 + $0x88] sm:$0xff] %vm2869, %v2915
    %2929 = vst.msk [vmem:[#allocation5 + $0xa8] sm:$0xff] %vm2869, %v2917
    %2930 = vst.msk [vmem:[#allocation5 + $0xc8] sm:$0xff] %vm2869, 0.0
    %2931 = vst.msk [vmem:[#allocation5 + $0xe8] sm:$0xff] %vm2869, 0.0
    %v2932 = vrot.slane %v2828, 2
    %v2933 = vrot.slane %v2829, 2
    %v2934 = vsel %vm398, %v2932, %v2933
    %v2935 = vrot.slane %v2830, 2
    %v2936 = vsel %vm398, %v2933, %v2935
    %v2937 = vrot.slane %v2831, 2
    %v2938 = vsel %vm398, %v2935, %v2937
    %v2939 = vrot.slane %v2832, 2
    %v2940 = vsel %vm398, %v2937, %v2939
    %v2941 = vrot.slane %v2833, 2
    %v2942 = vsel %vm398, %v2939, %v2941
    %v2943 = vrot.slane %v2834, 2
    %v2944 = vsel %vm398, %v2941, %v2943
    %2945 = vrot.lane.b32.xlu0 %v2934, 64
    %v2946 = vpop.permute.xlu0 %2945
    %2947 = vrot.lane.b32.xlu0 %v2936, 64
    %v2948 = vpop.permute.xlu0 %2947
    %2949 = vrot.lane.b32.xlu0 %v2938, 64
    %v2950 = vpop.permute.xlu0 %2949
    %2951 = vrot.lane.b32.xlu0 %v2940, 64
    %v2952 = vpop.permute.xlu0 %2951
    %2953 = vrot.lane.b32.xlu0 %v2942, 64
    %v2954 = vpop.permute.xlu0 %2953
    %2955 = vrot.lane.b32.xlu0 %v2944, 64
    %v2956 = vpop.permute.xlu0 %2955
    %2963 = vst.msk [vmem:[#allocation5 + $0x8] sm:$0xff] %vm2895, %v2946
    %2964 = vst.msk [vmem:[#allocation5 + $0x28] sm:$0xff] %vm2895, %v2948
    %2965 = vst.msk [vmem:[#allocation5 + $0x48] sm:$0xff] %vm2895, %v2950
    %2966 = vst.msk [vmem:[#allocation5 + $0x68] sm:$0xff] %vm2895, %v2952
    %2967 = vst.msk [vmem:[#allocation5 + $0x88] sm:$0xff] %vm2895, %v2954
    %2968 = vst.msk [vmem:[#allocation5 + $0xa8] sm:$0xff] %vm2895, %v2956
    %2969 = vst.msk [vmem:[#allocation5 + $0xc8] sm:$0xff] %vm2895, 0.0
    %2970 = vst.msk [vmem:[#allocation5 + $0xe8] sm:$0xff] %vm2895, 0.0
    %v2971 = vrot.slane %v2828, 3
    %v2972 = vrot.slane %v2829, 3
    %v2973 = vsel %vm450, %v2971, %v2972
    %v2974 = vrot.slane %v2830, 3
    %v2975 = vsel %vm450, %v2972, %v2974
    %v2976 = vrot.slane %v2831, 3
    %v2977 = vsel %vm450, %v2974, %v2976
    %v2978 = vrot.slane %v2832, 3
    %v2979 = vsel %vm450, %v2976, %v2978
    %v2980 = vrot.slane %v2833, 3
    %v2981 = vsel %vm450, %v2978, %v2980
    %v2982 = vrot.slane %v2834, 3
    %v2983 = vsel %vm450, %v2980, %v2982
    %2990 = vst.msk [vmem:[#allocation5 + $0x10] sm:$0xff] %vm2869, %v2973
    %2991 = vst.msk [vmem:[#allocation5 + $0x30] sm:$0xff] %vm2869, %v2975
    %2992 = vst.msk [vmem:[#allocation5 + $0x50] sm:$0xff] %vm2869, %v2977
    %2993 = vst.msk [vmem:[#allocation5 + $0x70] sm:$0xff] %vm2869, %v2979
    %2994 = vst.msk [vmem:[#allocation5 + $0x90] sm:$0xff] %vm2869, %v2981
    %2995 = vst.msk [vmem:[#allocation5 + $0xb0] sm:$0xff] %vm2869, %v2983
    %2996 = vst.msk [vmem:[#allocation5 + $0xd0] sm:$0xff] %vm2869, 0.0
    %2997 = vst.msk [vmem:[#allocation5 + $0xf0] sm:$0xff] %vm2869, 0.0
    %v2998 = vrot.slane %v2828, 4
    %v2999 = vrot.slane %v2829, 4
    %v3000 = vsel %vm483, %v2998, %v2999
    %v3001 = vrot.slane %v2830, 4
    %v3002 = vsel %vm483, %v2999, %v3001
    %v3003 = vrot.slane %v2831, 4
    %v3004 = vsel %vm483, %v3001, %v3003
    %v3005 = vrot.slane %v2832, 4
    %v3006 = vsel %vm483, %v3003, %v3005
    %v3007 = vrot.slane %v2833, 4
    %v3008 = vsel %vm483, %v3005, %v3007
    %v3009 = vrot.slane %v2834, 4
    %v3010 = vsel %vm483, %v3007, %v3009
    %3011 = vrot.lane.b32.xlu0 %v3000, 64
    %v3012 = vpop.permute.xlu0 %3011
    %3013 = vrot.lane.b32.xlu0 %v3002, 64
    %v3014 = vpop.permute.xlu0 %3013
    %3015 = vrot.lane.b32.xlu0 %v3004, 64
    %v3016 = vpop.permute.xlu0 %3015
    %3017 = vrot.lane.b32.xlu0 %v3006, 64
    %v3018 = vpop.permute.xlu0 %3017
    %3019 = vrot.lane.b32.xlu0 %v3008, 64
    %v3020 = vpop.permute.xlu0 %3019
    %3021 = vrot.lane.b32.xlu0 %v3010, 64
    %v3022 = vpop.permute.xlu0 %3021
    %3029 = vst.msk [vmem:[#allocation5 + $0x10] sm:$0xff] %vm2895, %v3012
    %3030 = vst.msk [vmem:[#allocation5 + $0x30] sm:$0xff] %vm2895, %v3014
    %3031 = vst.msk [vmem:[#allocation5 + $0x50] sm:$0xff] %vm2895, %v3016
    %3032 = vst.msk [vmem:[#allocation5 + $0x70] sm:$0xff] %vm2895, %v3018
    %3033 = vst.msk [vmem:[#allocation5 + $0x90] sm:$0xff] %vm2895, %v3020
    %3034 = vst.msk [vmem:[#allocation5 + $0xb0] sm:$0xff] %vm2895, %v3022
    %3035 = vst.msk [vmem:[#allocation5 + $0xd0] sm:$0xff] %vm2895, 0.0
    %3036 = vst.msk [vmem:[#allocation5 + $0xf0] sm:$0xff] %vm2895, 0.0
    %v3037 = vrot.slane %v2828, 5
    %v3038 = vrot.slane %v2829, 5
    %v3039 = vsel %vm532, %v3037, %v3038
    %v3040 = vrot.slane %v2830, 5
    %v3041 = vsel %vm532, %v3038, %v3040
    %v3042 = vrot.slane %v2831, 5
    %v3043 = vsel %vm532, %v3040, %v3042
    %v3044 = vrot.slane %v2832, 5
    %v3045 = vsel %vm532, %v3042, %v3044
    %v3046 = vrot.slane %v2833, 5
    %v3047 = vsel %vm532, %v3044, %v3046
    %v3048 = vrot.slane %v2834, 5
    %v3049 = vsel %vm532, %v3046, %v3048
    %3056 = vst.msk [vmem:[#allocation5 + $0x18] sm:$0xff] %vm2869, %v3039
    %3057 = vst.msk [vmem:[#allocation5 + $0x38] sm:$0xff] %vm2869, %v3041
    %3058 = vst.msk [vmem:[#allocation5 + $0x58] sm:$0xff] %vm2869, %v3043
    %3059 = vst.msk [vmem:[#allocation5 + $0x78] sm:$0xff] %vm2869, %v3045
    %3060 = vst.msk [vmem:[#allocation5 + $0x98] sm:$0xff] %vm2869, %v3047
    %vm3061 = vcmask 522240
    %3062 = vst.msk [vmem:[#allocation5 + $0xb8] sm:$0x7f] %vm3061, %v3049
    %vm3063 = vcmask 523271
    %3064 = vst.msk [vmem:[#allocation5 + $0xb8] sm:$0x80] %vm3063, 0.0
    %3065 = vst.msk [vmem:[#allocation5 + $0xd8] sm:$0xff] %vm2869, 0.0
    %3066 = vst.msk [vmem:[#allocation5 + $0xf8] sm:$0xff] %vm2869, 0.0
    %3067 = vst.msk [vmem:[#allocation5 + $0x100] sm:$0x1] %vm2842, 0.0
    %v3074 = vrot.slane %v2835, 7
    %v3075 = vrot.slane %v2836, 7
    %v3076 = vsel %vm273, %v3074, %v3075
    %v3077 = vrot.slane %v2837, 7
    %v3078 = vsel %vm273, %v3075, %v3077
    %v3079 = vrot.slane %v2838, 7
    %v3080 = vsel %vm273, %v3077, %v3079
    %v3081 = vrot.slane %v2839, 7
    %v3082 = vsel %vm273, %v3079, %v3081
    %v3083 = vrot.slane %v2840, 7
    %v3084 = vsel %vm273, %v3081, %v3083
    %3091 = vst.msk [vmem:[#allocation5 + $0x100] sm:$0xfe] %vm2867, %v3074
    %3092 = vst.msk [vmem:[#allocation5 + $0x120] sm:$0xff] %vm2869, %v3076
    %3093 = vst.msk [vmem:[#allocation5 + $0x140] sm:$0xff] %vm2869, %v3078
    %3094 = vst.msk [vmem:[#allocation5 + $0x160] sm:$0xff] %vm2869, %v3080
    %3095 = vst.msk [vmem:[#allocation5 + $0x180] sm:$0xff] %vm2869, %v3082
    %3096 = vst.msk [vmem:[#allocation5 + $0x1a0] sm:$0xff] %vm2869, %v3084
    %3097 = vst.msk [vmem:[#allocation5 + $0x1c0] sm:$0xff] %vm2869, 0.0
    %3098 = vst.msk [vmem:[#allocation5 + $0x1e0] sm:$0xff] %vm2869, 0.0
    %3099 = vrot.lane.b32.xlu0 %v2835, 64
    %v3100 = vpop.permute.xlu0 %3099
    %3101 = vrot.lane.b32.xlu0 %v2836, 64
    %v3102 = vpop.permute.xlu0 %3101
    %3103 = vrot.lane.b32.xlu0 %v2837, 64
    %v3104 = vpop.permute.xlu0 %3103
    %3105 = vrot.lane.b32.xlu0 %v2838, 64
    %v3106 = vpop.permute.xlu0 %3105
    %3107 = vrot.lane.b32.xlu0 %v2839, 64
    %v3108 = vpop.permute.xlu0 %3107
    %3109 = vrot.lane.b32.xlu0 %v2840, 64
    %v3110 = vpop.permute.xlu0 %3109
    %3117 = vst.msk [vmem:[#allocation5 + $0x100] sm:$0xff] %vm2895, %v3100
    %3118 = vst.msk [vmem:[#allocation5 + $0x120] sm:$0xff] %vm2895, %v3102
    %3119 = vst.msk [vmem:[#allocation5 + $0x140] sm:$0xff] %vm2895, %v3104
    %3120 = vst.msk [vmem:[#allocation5 + $0x160] sm:$0xff] %vm2895, %v3106
    %3121 = vst.msk [vmem:[#allocation5 + $0x180] sm:$0xff] %vm2895, %v3108
    %3122 = vst.msk [vmem:[#allocation5 + $0x1a0] sm:$0xff] %vm2895, %v3110
    %3123 = vst.msk [vmem:[#allocation5 + $0x1c0] sm:$0xff] %vm2895, 0.0
    %3124 = vst.msk [vmem:[#allocation5 + $0x1e0] sm:$0xff] %vm2895, 0.0
    %v3126 = vrot.slane %v2835, 1
    %v3127 = vrot.slane %v2836, 1
    %v3128 = vsel %vm346, %v3126, %v3127
    %v3129 = vrot.slane %v2837, 1
    %v3130 = vsel %vm346, %v3127, %v3129
    %v3131 = vrot.slane %v2838, 1
    %v3132 = vsel %vm346, %v3129, %v3131
    %v3133 = vrot.slane %v2839, 1
    %v3134 = vsel %vm346, %v3131, %v3133
    %v3135 = vrot.slane %v2840, 1
    %v3136 = vsel %vm346, %v3133, %v3135
    %v3137 = vrot.slane %v2841, 1
    %v3138 = vsel %vm346, %v3135, %v3137
    %3145 = vst.msk [vmem:[#allocation5 + $0x108] sm:$0xff] %vm2869, %v3128
    %3146 = vst.msk [vmem:[#allocation5 + $0x128] sm:$0xff] %vm2869, %v3130
    %3147 = vst.msk [vmem:[#allocation5 + $0x148] sm:$0xff] %vm2869, %v3132
    %3148 = vst.msk [vmem:[#allocation5 + $0x168] sm:$0xff] %vm2869, %v3134
    %3149 = vst.msk [vmem:[#allocation5 + $0x188] sm:$0xff] %vm2869, %v3136
    %3150 = vst.msk [vmem:[#allocation5 + $0x1a8] sm:$0xff] %vm2869, %v3138
    %3151 = vst.msk [vmem:[#allocation5 + $0x1c8] sm:$0xff] %vm2869, 0.0
    %3152 = vst.msk [vmem:[#allocation5 + $0x1e8] sm:$0xff] %vm2869, 0.0
    %v3153 = vrot.slane %v2835, 2
    %v3154 = vrot.slane %v2836, 2
    %v3155 = vsel %vm398, %v3153, %v3154
    %v3156 = vrot.slane %v2837, 2
    %v3157 = vsel %vm398, %v3154, %v3156
    %v3158 = vrot.slane %v2838, 2
    %v3159 = vsel %vm398, %v3156, %v3158
    %v3160 = vrot.slane %v2839, 2
    %v3161 = vsel %vm398, %v3158, %v3160
    %v3162 = vrot.slane %v2840, 2
    %v3163 = vsel %vm398, %v3160, %v3162
    %v3164 = vrot.slane %v2841, 2
    %v3165 = vsel %vm398, %v3162, %v3164
    %3166 = vrot.lane.b32.xlu0 %v3155, 64
    %v3167 = vpop.permute.xlu0 %3166
    %3168 = vrot.lane.b32.xlu0 %v3157, 64
    %v3169 = vpop.permute.xlu0 %3168
    %3170 = vrot.lane.b32.xlu0 %v3159, 64
    %v3171 = vpop.permute.xlu0 %3170
    %3172 = vrot.lane.b32.xlu0 %v3161, 64
    %v3173 = vpop.permute.xlu0 %3172
    %3174 = vrot.lane.b32.xlu0 %v3163, 64
    %v3175 = vpop.permute.xlu0 %3174
    %3176 = vrot.lane.b32.xlu0 %v3165, 64
    %v3177 = vpop.permute.xlu0 %3176
    %3184 = vst.msk [vmem:[#allocation5 + $0x108] sm:$0xff] %vm2895, %v3167
    %3185 = vst.msk [vmem:[#allocation5 + $0x128] sm:$0xff] %vm2895, %v3169
    %3186 = vst.msk [vmem:[#allocation5 + $0x148] sm:$0xff] %vm2895, %v3171
    %3187 = vst.msk [vmem:[#allocation5 + $0x168] sm:$0xff] %vm2895, %v3173
    %3188 = vst.msk [vmem:[#allocation5 + $0x188] sm:$0xff] %vm2895, %v3175
    %3189 = vst.msk [vmem:[#allocation5 + $0x1a8] sm:$0xff] %vm2895, %v3177
    %3190 = vst.msk [vmem:[#allocation5 + $0x1c8] sm:$0xff] %vm2895, 0.0
    %3191 = vst.msk [vmem:[#allocation5 + $0x1e8] sm:$0xff] %vm2895, 0.0
    %v3192 = vrot.slane %v2835, 3
    %v3193 = vrot.slane %v2836, 3
    %v3194 = vsel %vm450, %v3192, %v3193
    %v3195 = vrot.slane %v2837, 3
    %v3196 = vsel %vm450, %v3193, %v3195
    %v3197 = vrot.slane %v2838, 3
    %v3198 = vsel %vm450, %v3195, %v3197
    %v3199 = vrot.slane %v2839, 3
    %v3200 = vsel %vm450, %v3197, %v3199
    %v3201 = vrot.slane %v2840, 3
    %v3202 = vsel %vm450, %v3199, %v3201
    %v3203 = vrot.slane %v2841, 3
    %v3204 = vsel %vm450, %v3201, %v3203
    %3211 = vst.msk [vmem:[#allocation5 + $0x110] sm:$0xff] %vm2869, %v3194
    %3212 = vst.msk [vmem:[#allocation5 + $0x130] sm:$0xff] %vm2869, %v3196
    %3213 = vst.msk [vmem:[#allocation5 + $0x150] sm:$0xff] %vm2869, %v3198
    %3214 = vst.msk [vmem:[#allocation5 + $0x170] sm:$0xff] %vm2869, %v3200
    %3215 = vst.msk [vmem:[#allocation5 + $0x190] sm:$0xff] %vm2869, %v3202
    %3216 = vst.msk [vmem:[#allocation5 + $0x1b0] sm:$0xff] %vm2869, %v3204
    %3217 = vst.msk [vmem:[#allocation5 + $0x1d0] sm:$0xff] %vm2869, 0.0
    %3218 = vst.msk [vmem:[#allocation5 + $0x1f0] sm:$0xff] %vm2869, 0.0
    %v3219 = vrot.slane %v2835, 4
    %v3220 = vrot.slane %v2836, 4
    %v3221 = vsel %vm483, %v3219, %v3220
    %v3222 = vrot.slane %v2837, 4
    %v3223 = vsel %vm483, %v3220, %v3222
    %v3224 = vrot.slane %v2838, 4
    %v3225 = vsel %vm483, %v3222, %v3224
    %v3226 = vrot.slane %v2839, 4
    %v3227 = vsel %vm483, %v3224, %v3226
    %v3228 = vrot.slane %v2840, 4
    %v3229 = vsel %vm483, %v3226, %v3228
    %v3230 = vrot.slane %v2841, 4
    %v3231 = vsel %vm483, %v3228, %v3230
    %3232 = vrot.lane.b32.xlu0 %v3221, 64
    %v3233 = vpop.permute.xlu0 %3232
    %3234 = vrot.lane.b32.xlu0 %v3223, 64
    %v3235 = vpop.permute.xlu0 %3234
    %3236 = vrot.lane.b32.xlu0 %v3225, 64
    %v3237 = vpop.permute.xlu0 %3236
    %3238 = vrot.lane.b32.xlu0 %v3227, 64
    %v3239 = vpop.permute.xlu0 %3238
    %3240 = vrot.lane.b32.xlu0 %v3229, 64
    %v3241 = vpop.permute.xlu0 %3240
    %3242 = vrot.lane.b32.xlu0 %v3231, 64
    %v3243 = vpop.permute.xlu0 %3242
    %3250 = vst.msk [vmem:[#allocation5 + $0x110] sm:$0xff] %vm2895, %v3233
    %3251 = vst.msk [vmem:[#allocation5 + $0x130] sm:$0xff] %vm2895, %v3235
    %3252 = vst.msk [vmem:[#allocation5 + $0x150] sm:$0xff] %vm2895, %v3237
    %3253 = vst.msk [vmem:[#allocation5 + $0x170] sm:$0xff] %vm2895, %v3239
    %3254 = vst.msk [vmem:[#allocation5 + $0x190] sm:$0xff] %vm2895, %v3241
    %3255 = vst.msk [vmem:[#allocation5 + $0x1b0] sm:$0xff] %vm2895, %v3243
    %3256 = vst.msk [vmem:[#allocation5 + $0x1d0] sm:$0xff] %vm2895, 0.0
    %3257 = vst.msk [vmem:[#allocation5 + $0x1f0] sm:$0xff] %vm2895, 0.0
    %v3258 = vrot.slane %v2835, 5
    %v3259 = vrot.slane %v2836, 5
    %v3260 = vsel %vm532, %v3258, %v3259
    %v3261 = vrot.slane %v2837, 5
    %v3262 = vsel %vm532, %v3259, %v3261
    %v3263 = vrot.slane %v2838, 5
    %v3264 = vsel %vm532, %v3261, %v3263
    %v3265 = vrot.slane %v2839, 5
    %v3266 = vsel %vm532, %v3263, %v3265
    %v3267 = vrot.slane %v2840, 5
    %v3268 = vsel %vm532, %v3265, %v3267
    %v3269 = vrot.slane %v2841, 5
    %v3270 = vsel %vm532, %v3267, %v3269
    %3277 = vst.msk [vmem:[#allocation5 + $0x118] sm:$0xff] %vm2869, %v3260
    %3278 = vst.msk [vmem:[#allocation5 + $0x138] sm:$0xff] %vm2869, %v3262
    %3279 = vst.msk [vmem:[#allocation5 + $0x158] sm:$0xff] %vm2869, %v3264
    %3280 = vst.msk [vmem:[#allocation5 + $0x178] sm:$0xff] %vm2869, %v3266
    %3281 = vst.msk [vmem:[#allocation5 + $0x198] sm:$0xff] %vm2869, %v3268
    %3282 = vst.msk [vmem:[#allocation5 + $0x1b8] sm:$0x7f] %vm3061, %v3270
    %3283 = vst.msk [vmem:[#allocation5 + $0x1b8] sm:$0x80] %vm3063, 0.0
    %3284 = vst.msk [vmem:[#allocation5 + $0x1d8] sm:$0xff] %vm2869, 0.0
    %3285 = vst.msk [vmem:[#allocation5 + $0x1f8] sm:$0xff] %vm2869, 0.0
    %v3286 = vld [vmem:[#allocation5] sm:$0xff]
    %v3287 = vld [vmem:[#allocation5 + $0x8] sm:$0xff]
    %v3288 = vld [vmem:[#allocation5 + $0x10] sm:$0xff]
    %v3289 = vld [vmem:[#allocation5 + $0x18] sm:$0xff]
    %v3290 = vld [vmem:[#allocation5 + $0x20] sm:$0xff]
    %v3291 = vld [vmem:[#allocation5 + $0x28] sm:$0xff]
    %v3292 = vld [vmem:[#allocation5 + $0x30] sm:$0xff]
    %v3293 = vld [vmem:[#allocation5 + $0x38] sm:$0xff]
    %v3294 = vld [vmem:[#allocation5 + $0x40] sm:$0xff]
    %v3295 = vld [vmem:[#allocation5 + $0x48] sm:$0xff]
    %v3296 = vld [vmem:[#allocation5 + $0x50] sm:$0xff]
    %v3297 = vld [vmem:[#allocation5 + $0x58] sm:$0xff]
    %v3298 = vld [vmem:[#allocation5 + $0x60] sm:$0xff]
    %v3299 = vld [vmem:[#allocation5 + $0x68] sm:$0xff]
    %v3300 = vld [vmem:[#allocation5 + $0x70] sm:$0xff]
    %v3301 = vld [vmem:[#allocation5 + $0x78] sm:$0xff]
    %v3302 = vld [vmem:[#allocation5 + $0x80] sm:$0xff]
    %v3303 = vld [vmem:[#allocation5 + $0x88] sm:$0xff]
    %v3304 = vld [vmem:[#allocation5 + $0x90] sm:$0xff]
    %v3305 = vld [vmem:[#allocation5 + $0x98] sm:$0xff]
    %v3306 = vld [vmem:[#allocation5 + $0xa0] sm:$0xff]
    %v3307 = vld [vmem:[#allocation5 + $0xa8] sm:$0xff]
    %v3308 = vld [vmem:[#allocation5 + $0xb0] sm:$0xff]
    %v3309 = vld [vmem:[#allocation5 + $0xb8] sm:$0xff]
    %v3310 = vld [vmem:[#allocation5 + $0xc0] sm:$0xff]
    %v3311 = vld [vmem:[#allocation5 + $0xc8] sm:$0xff]
    %v3312 = vld [vmem:[#allocation5 + $0xd0] sm:$0xff]
    %v3313 = vld [vmem:[#allocation5 + $0xd8] sm:$0xff]
    %v3314 = vld [vmem:[#allocation5 + $0xe0] sm:$0xff]
    %v3315 = vld [vmem:[#allocation5 + $0xe8] sm:$0xff]
    %v3316 = vld [vmem:[#allocation5 + $0xf0] sm:$0xff]
    %v3317 = vld [vmem:[#allocation5 + $0xf8] sm:$0xff]
    %v3318 = vld [vmem:[#allocation5 + $0x100] sm:$0xff]
    %v3319 = vld [vmem:[#allocation5 + $0x108] sm:$0xff]
    %v3320 = vld [vmem:[#allocation5 + $0x110] sm:$0xff]
    %v3321 = vld [vmem:[#allocation5 + $0x118] sm:$0xff]
    %v3322 = vld [vmem:[#allocation5 + $0x120] sm:$0xff]
    %v3323 = vld [vmem:[#allocation5 + $0x128] sm:$0xff]
    %v3324 = vld [vmem:[#allocation5 + $0x130] sm:$0xff]
    %v3325 = vld [vmem:[#allocation5 + $0x138] sm:$0xff]
    %v3326 = vld [vmem:[#allocation5 + $0x140] sm:$0xff]
    %v3327 = vld [vmem:[#allocation5 + $0x148] sm:$0xff]
    %v3328 = vld [vmem:[#allocation5 + $0x150] sm:$0xff]
    %v3329 = vld [vmem:[#allocation5 + $0x158] sm:$0xff]
    %v3330 = vld [vmem:[#allocation5 + $0x160] sm:$0xff]
    %v3331 = vld [vmem:[#allocation5 + $0x168] sm:$0xff]
    %v3332 = vld [vmem:[#allocation5 + $0x170] sm:$0xff]
    %v3333 = vld [vmem:[#allocation5 + $0x178] sm:$0xff]
    %v3334 = vld [vmem:[#allocation5 + $0x180] sm:$0xff]
    %v3335 = vld [vmem:[#allocation5 + $0x188] sm:$0xff]
    %v3336 = vld [vmem:[#allocation5 + $0x190] sm:$0xff]
    %v3337 = vld [vmem:[#allocation5 + $0x198] sm:$0xff]
    %v3338 = vld [vmem:[#allocation5 + $0x1a0] sm:$0xff]
    %v3339 = vld [vmem:[#allocation5 + $0x1a8] sm:$0xff]
    %v3340 = vld [vmem:[#allocation5 + $0x1b0] sm:$0xff]
    %v3341 = vld [vmem:[#allocation5 + $0x1b8] sm:$0xff]
    %v3342 = vld [vmem:[#allocation5 + $0x1c0] sm:$0xff]
    %v3343 = vld [vmem:[#allocation5 + $0x1c8] sm:$0xff]
    %v3344 = vld [vmem:[#allocation5 + $0x1d0] sm:$0xff]
    %v3345 = vld [vmem:[#allocation5 + $0x1d8] sm:$0xff]
    %v3346 = vld [vmem:[#allocation5 + $0x1e0] sm:$0xff]
    %v3347 = vld [vmem:[#allocation5 + $0x1e8] sm:$0xff]
    %v3348 = vld [vmem:[#allocation5 + $0x1f0] sm:$0xff]
    %v3349 = vld [vmem:[#allocation5 + $0x1f8] sm:$0xff]
    %v3350 = vld [vmem:[%s9] sm:$0xff]
    %v3351 = vld [vmem:[%s9 + $0x8] sm:$0xff]
    %v3352 = vld [vmem:[%s9 + $0x10] sm:$0xff]
    %v3353 = vld [vmem:[%s9 + $0x18] sm:$0xff]
    %v3354 = vld [vmem:[%s9 + $0x20] sm:$0xff]
    %v3355 = vld [vmem:[%s9 + $0x28] sm:$0xff]
    %v3356 = vld [vmem:[%s9 + $0x30] sm:$0xff]
    %v3357 = vld [vmem:[%s9 + $0x38] sm:$0xff]
    %v3358 = vld [vmem:[%s9 + $0x40] sm:$0xff]
    %v3359 = vld [vmem:[%s9 + $0x48] sm:$0xff]
    %v3360 = vld [vmem:[%s9 + $0x50] sm:$0xff]
    %v3361 = vld [vmem:[%s9 + $0x58] sm:$0xff]
    %v3362 = vld [vmem:[%s9 + $0x60] sm:$0xff]
    %v3363 = vld [vmem:[%s9 + $0x68] sm:$0xff]
    %v3364 = vld [vmem:[%s9 + $0x70] sm:$0xff]
    %v3365 = vld [vmem:[%s9 + $0x78] sm:$0xff]
    %v3366 = vld [vmem:[%s9 + $0x80] sm:$0xff]
    %v3367 = vld [vmem:[%s9 + $0x88] sm:$0xff]
    %v3368 = vld [vmem:[%s9 + $0x90] sm:$0xff]
    %v3369 = vld [vmem:[%s9 + $0x98] sm:$0xff]
    %v3370 = vld [vmem:[%s9 + $0xa0] sm:$0xff]
    %v3371 = vld [vmem:[%s9 + $0xa8] sm:$0xff]
    %v3372 = vld [vmem:[%s9 + $0xb0] sm:$0xff]
    %v3373 = vld [vmem:[%s9 + $0xb8] sm:$0xff]
    %v3374 = vld [vmem:[%s9 + $0xc0] sm:$0xff]
    %v3375 = vld [vmem:[%s9 + $0xc8] sm:$0xff]
    %v3376 = vld [vmem:[%s9 + $0xd0] sm:$0xff]
    %v3377 = vld [vmem:[%s9 + $0xd8] sm:$0xff]
    %v3378 = vld [vmem:[%s9 + $0xe0] sm:$0xff]
    %v3379 = vld [vmem:[%s9 + $0xe8] sm:$0xff]
    %v3380 = vld [vmem:[%s9 + $0xf0] sm:$0xff]
    %v3381 = vld [vmem:[%s9 + $0xf8] sm:$0xff]
    %v3382 = vld [vmem:[%s9 + $0x100] sm:$0xff]
    %v3383 = vld [vmem:[%s9 + $0x108] sm:$0xff]
    %v3384 = vld [vmem:[%s9 + $0x110] sm:$0xff]
    %v3385 = vld [vmem:[%s9 + $0x118] sm:$0xff]
    %v3386 = vld [vmem:[%s9 + $0x120] sm:$0xff]
    %v3387 = vld [vmem:[%s9 + $0x128] sm:$0xff]
    %v3388 = vld [vmem:[%s9 + $0x130] sm:$0xff]
    %v3389 = vld [vmem:[%s9 + $0x138] sm:$0xff]
    %v3390 = vld [vmem:[%s9 + $0x140] sm:$0xff]
    %v3391 = vld [vmem:[%s9 + $0x148] sm:$0xff]
    %v3392 = vld [vmem:[%s9 + $0x150] sm:$0xff]
    %v3393 = vld [vmem:[%s9 + $0x158] sm:$0xff]
    %v3394 = vld [vmem:[%s9 + $0x160] sm:$0xff]
    %v3395 = vld [vmem:[%s9 + $0x168] sm:$0xff]
    %v3396 = vld [vmem:[%s9 + $0x170] sm:$0xff]
    %v3397 = vld [vmem:[%s9 + $0x178] sm:$0xff]
    %v3398 = vld [vmem:[%s9 + $0x180] sm:$0xff]
    %v3399 = vld [vmem:[%s9 + $0x188] sm:$0xff]
    %v3400 = vld [vmem:[%s9 + $0x190] sm:$0xff]
    %v3401 = vld [vmem:[%s9 + $0x198] sm:$0xff]
    %v3402 = vld [vmem:[%s9 + $0x1a0] sm:$0xff]
    %v3403 = vld [vmem:[%s9 + $0x1a8] sm:$0xff]
    %v3404 = vld [vmem:[%s9 + $0x1b0] sm:$0xff]
    %v3405 = vld [vmem:[%s9 + $0x1b8] sm:$0xff]
    %v3406 = vld [vmem:[%s10] sm:$0x1]
    %v3408 = vperm.slane %v3406, 0
    %v3411 = vsel %vm2869, %v3289, 0
    %v3414 = vsel %vm2869, %v3293, 0
    %v3417 = vsel %vm2869, %v3297, 0
    %v3420 = vsel %vm2869, %v3301, 0
    %v3423 = vsel %vm2869, %v3305, 0
    %v3426 = vsel %vm2869, %v3309, 0
    %v3429 = vsel %vm2869, %v3313, 0
    %v3432 = vsel %vm2869, %v3317, 0
    %v3435 = vsel %vm2869, %v3321, 0
    %v3438 = vsel %vm2869, %v3325, 0
    %v3441 = vsel %vm2869, %v3329, 0
    %v3444 = vsel %vm2869, %v3333, 0
    %v3447 = vsel %vm2869, %v3337, 0
    %v3450 = vsel %vm2869, %v3341, 0
    %v3453 = vsel %vm2869, %v3345, 0
    %v3456 = vsel %vm2869, %v3349, 0
    %3458 = vmatpush.msra.mxu0 %v3365
    %3459 = vmatpush.msra.mxu0 %v3364
    %3460 = vmatpush.msra.mxu0 %v3363
    %3461 = vmatpush.msra.mxu0 %v3362
    %3462 = vmatpush.msra.mxu0 %v3361
    %3463 = vmatpush.msra.mxu0 %v3360
    %3464 = vmatpush.msra.mxu0 %v3359
    %3465 = vmatpush.msra.mxu0 %v3358
    %3466 = vmatpush.msra.mxu0 %v3357
    %3467 = vmatpush.msra.mxu0 %v3356
    %3468 = vmatpush.msra.mxu0 %v3355
    %3469 = vmatpush.msra.mxu0 %v3354
    %3470 = vmatpush.msra.mxu0 %v3353
    %3471 = vmatpush.msra.mxu0 %v3352
    %3472 = vmatpush.msra.mxu0 %v3351
    %3473 = vmatpush.msra.mxu0 %v3350
    %3474 = vmatmul.f32.gmra.mxu0 %v3286
    %v3475 = vpop.f32.mrf.mxu0
    %v3476 = vadd.f32 %v3408, %v3475
    %3477 = vmatmul.f32.gmra.mxu0 %v3290
    %v3478 = vpop.f32.mrf.mxu0
    %v3479 = vadd.f32 %v3408, %v3478
    %3480 = vmatmul.f32.gmra.mxu0 %v3294
    %v3481 = vpop.f32.mrf.mxu0
    %v3482 = vadd.f32 %v3408, %v3481
    %3483 = vmatmul.f32.gmra.mxu0 %v3298
    %v3484 = vpop.f32.mrf.mxu0
    %v3485 = vadd.f32 %v3408, %v3484
    %3486 = vmatmul.f32.gmra.mxu0 %v3302
    %v3487 = vpop.f32.mrf.mxu0
    %v3488 = vadd.f32 %v3408, %v3487
    %3489 = vmatmul.f32.gmra.mxu0 %v3306
    %v3490 = vpop.f32.mrf.mxu0
    %v3491 = vadd.f32 %v3408, %v3490
    %3492 = vmatmul.f32.gmra.mxu0 %v3310
    %v3493 = vpop.f32.mrf.mxu0
    %v3494 = vadd.f32 %v3408, %v3493
    %3495 = vmatmul.f32.gmra.mxu0 %v3314
    %v3496 = vpop.f32.mrf.mxu0
    %v3497 = vadd.f32 %v3408, %v3496
    %3498 = vmatmul.f32.gmra.mxu0 %v3318
    %v3499 = vpop.f32.mrf.mxu0
    %v3500 = vadd.f32 %v3408, %v3499
    %3501 = vmatmul.f32.gmra.mxu0 %v3322
    %v3502 = vpop.f32.mrf.mxu0
    %v3503 = vadd.f32 %v3408, %v3502
    %3504 = vmatmul.f32.gmra.mxu0 %v3326
    %v3505 = vpop.f32.mrf.mxu0
    %v3506 = vadd.f32 %v3408, %v3505
    %3507 = vmatmul.f32.gmra.mxu0 %v3330
    %v3508 = vpop.f32.mrf.mxu0
    %v3509 = vadd.f32 %v3408, %v3508
    %3510 = vmatmul.f32.gmra.mxu0 %v3334
    %v3511 = vpop.f32.mrf.mxu0
    %v3512 = vadd.f32 %v3408, %v3511
    %3513 = vmatmul.f32.gmra.mxu0 %v3338
    %v3514 = vpop.f32.mrf.mxu0
    %v3515 = vadd.f32 %v3408, %v3514
    %3516 = vmatmul.f32.gmra.mxu0 %v3342
    %v3517 = vpop.f32.mrf.mxu0
    %v3518 = vadd.f32 %v3408, %v3517
    %3519 = vmatmul.f32.gmra.mxu0 %v3346
    %v3520 = vpop.f32.mrf.mxu0
    %v3521 = vadd.f32 %v3408, %v3520
    %3522 = vdwg.mxu0
    %3523 = vmatpush.msra.mxu0 %v3381
    %3524 = vmatpush.msra.mxu0 %v3380
    %3525 = vmatpush.msra.mxu0 %v3379
    %3526 = vmatpush.msra.mxu0 %v3378
    %3527 = vmatpush.msra.mxu0 %v3377
    %3528 = vmatpush.msra.mxu0 %v3376
    %3529 = vmatpush.msra.mxu0 %v3375
    %3530 = vmatpush.msra.mxu0 %v3374
    %3531 = vmatpush.msra.mxu0 %v3373
    %3532 = vmatpush.msra.mxu0 %v3372
    %3533 = vmatpush.msra.mxu0 %v3371
    %3534 = vmatpush.msra.mxu0 %v3370
    %3535 = vmatpush.msra.mxu0 %v3369
    %3536 = vmatpush.msra.mxu0 %v3368
    %3537 = vmatpush.msra.mxu0 %v3367
    %3538 = vmatpush.msra.mxu0 %v3366
    %3539 = vmatmul.f32.gmra.mxu0 %v3287
    %v3540 = vpop.f32.mrf.mxu0
    %v3541 = vadd.f32 %v3476, %v3540
    %3542 = vmatmul.f32.gmra.mxu0 %v3291
    %v3543 = vpop.f32.mrf.mxu0
    %v3544 = vadd.f32 %v3479, %v3543
    %3545 = vmatmul.f32.gmra.mxu0 %v3295
    %v3546 = vpop.f32.mrf.mxu0
    %v3547 = vadd.f32 %v3482, %v3546
    %3548 = vmatmul.f32.gmra.mxu0 %v3299
    %v3549 = vpop.f32.mrf.mxu0
    %v3550 = vadd.f32 %v3485, %v3549
    %3551 = vmatmul.f32.gmra.mxu0 %v3303
    %v3552 = vpop.f32.mrf.mxu0
    %v3553 = vadd.f32 %v3488, %v3552
    %3554 = vmatmul.f32.gmra.mxu0 %v3307
    %v3555 = vpop.f32.mrf.mxu0
    %v3556 = vadd.f32 %v3491, %v3555
    %3557 = vmatmul.f32.gmra.mxu0 %v3311
    %v3558 = vpop.f32.mrf.mxu0
    %v3559 = vadd.f32 %v3494, %v3558
    %3560 = vmatmul.f32.gmra.mxu0 %v3315
    %v3561 = vpop.f32.mrf.mxu0
    %v3562 = vadd.f32 %v3497, %v3561
    %3563 = vmatmul.f32.gmra.mxu0 %v3319
    %v3564 = vpop.f32.mrf.mxu0
    %v3565 = vadd.f32 %v3500, %v3564
    %3566 = vmatmul.f32.gmra.mxu0 %v3323
    %v3567 = vpop.f32.mrf.mxu0
    %v3568 = vadd.f32 %v3503, %v3567
    %3569 = vmatmul.f32.gmra.mxu0 %v3327
    %v3570 = vpop.f32.mrf.mxu0
    %v3571 = vadd.f32 %v3506, %v3570
    %3572 = vmatmul.f32.gmra.mxu0 %v3331
    %v3573 = vpop.f32.mrf.mxu0
    %v3574 = vadd.f32 %v3509, %v3573
    %3575 = vmatmul.f32.gmra.mxu0 %v3335
    %v3576 = vpop.f32.mrf.mxu0
    %v3577 = vadd.f32 %v3512, %v3576
    %3578 = vmatmul.f32.gmra.mxu0 %v3339
    %v3579 = vpop.f32.mrf.mxu0
    %v3580 = vadd.f32 %v3515, %v3579
    %3581 = vmatmul.f32.gmra.mxu0 %v3343
    %v3582 = vpop.f32.mrf.mxu0
    %v3583 = vadd.f32 %v3518, %v3582
    %3584 = vmatmul.f32.gmra.mxu0 %v3347
    %v3585 = vpop.f32.mrf.mxu0
    %v3586 = vadd.f32 %v3521, %v3585
    %3587 = vdwg.mxu0
    %3588 = vmatpush.msra.mxu0 %v3397
    %3589 = vmatpush.msra.mxu0 %v3396
    %3590 = vmatpush.msra.mxu0 %v3395
    %3591 = vmatpush.msra.mxu0 %v3394
    %3592 = vmatpush.msra.mxu0 %v3393
    %3593 = vmatpush.msra.mxu0 %v3392
    %3594 = vmatpush.msra.mxu0 %v3391
    %3595 = vmatpush.msra.mxu0 %v3390
    %3596 = vmatpush.msra.mxu0 %v3389
    %3597 = vmatpush.msra.mxu0 %v3388
    %3598 = vmatpush.msra.mxu0 %v3387
    %3599 = vmatpush.msra.mxu0 %v3386
    %3600 = vmatpush.msra.mxu0 %v3385
    %3601 = vmatpush.msra.mxu0 %v3384
    %3602 = vmatpush.msra.mxu0 %v3383
    %3603 = vmatpush.msra.mxu0 %v3382
    %3604 = vmatmul.f32.gmra.mxu0 %v3288
    %v3605 = vpop.f32.mrf.mxu0
    %v3606 = vadd.f32 %v3541, %v3605
    %3607 = vmatmul.f32.gmra.mxu0 %v3292
    %v3608 = vpop.f32.mrf.mxu0
    %v3609 = vadd.f32 %v3544, %v3608
    %3610 = vmatmul.f32.gmra.mxu0 %v3296
    %v3611 = vpop.f32.mrf.mxu0
    %v3612 = vadd.f32 %v3547, %v3611
    %3613 = vmatmul.f32.gmra.mxu0 %v3300
    %v3614 = vpop.f32.mrf.mxu0
    %v3615 = vadd.f32 %v3550, %v3614
    %3616 = vmatmul.f32.gmra.mxu0 %v3304
    %v3617 = vpop.f32.mrf.mxu0
    %v3618 = vadd.f32 %v3553, %v3617
    %3619 = vmatmul.f32.gmra.mxu0 %v3308
    %v3620 = vpop.f32.mrf.mxu0
    %v3621 = vadd.f32 %v3556, %v3620
    %3622 = vmatmul.f32.gmra.mxu0 %v3312
    %v3623 = vpop.f32.mrf.mxu0
    %v3624 = vadd.f32 %v3559, %v3623
    %3625 = vmatmul.f32.gmra.mxu0 %v3316
    %v3626 = vpop.f32.mrf.mxu0
    %v3627 = vadd.f32 %v3562, %v3626
    %3628 = vmatmul.f32.gmra.mxu0 %v3320
    %v3629 = vpop.f32.mrf.mxu0
    %v3630 = vadd.f32 %v3565, %v3629
    %3631 = vmatmul.f32.gmra.mxu0 %v3324
    %v3632 = vpop.f32.mrf.mxu0
    %v3633 = vadd.f32 %v3568, %v3632
    %3634 = vmatmul.f32.gmra.mxu0 %v3328
    %v3635 = vpop.f32.mrf.mxu0
    %v3636 = vadd.f32 %v3571, %v3635
    %3637 = vmatmul.f32.gmra.mxu0 %v3332
    %v3638 = vpop.f32.mrf.mxu0
    %v3639 = vadd.f32 %v3574, %v3638
    %3640 = vmatmul.f32.gmra.mxu0 %v3336
    %v3641 = vpop.f32.mrf.mxu0
    %v3642 = vadd.f32 %v3577, %v3641
    %3643 = vmatmul.f32.gmra.mxu0 %v3340
    %v3644 = vpop.f32.mrf.mxu0
    %v3645 = vadd.f32 %v3580, %v3644
    %3646 = vmatmul.f32.gmra.mxu0 %v3344
    %v3647 = vpop.f32.mrf.mxu0
    %v3648 = vadd.f32 %v3583, %v3647
    %3649 = vmatmul.f32.gmra.mxu0 %v3348
    %v3650 = vpop.f32.mrf.mxu0
    %v3651 = vadd.f32 %v3586, %v3650
    %3652 = vdwg.mxu0
    %3653 = vmatpush.msra.mxu0 0.0
    %3654 = vmatpush.msra.mxu0 0.0
    %3655 = vmatpush.msra.mxu0 0.0
    %3656 = vmatpush.msra.mxu0 0.0
    %3657 = vmatpush.msra.mxu0 0.0
    %3658 = vmatpush.msra.mxu0 0.0
    %3659 = vmatpush.msra.mxu0 0.0
    %3660 = vmatpush.msra.mxu0 0.0
    %3661 = vmatpush.msra.mxu0 %v3405
    %3662 = vmatpush.msra.mxu0 %v3404
    %3663 = vmatpush.msra.mxu0 %v3403
    %3664 = vmatpush.msra.mxu0 %v3402
    %3665 = vmatpush.msra.mxu0 %v3401
    %3666 = vmatpush.msra.mxu0 %v3400
    %3667 = vmatpush.msra.mxu0 %v3399
    %3668 = vmatpush.msra.mxu0 %v3398
    %3669 = vmatmul.f32.gmra.mxu0 %v3411
    %v3670 = vpop.f32.mrf.mxu0
    %v3671 = vadd.f32 %v3606, %v3670
    %3672 = vmatmul.f32.gmra.mxu0 %v3414
    %v3673 = vpop.f32.mrf.mxu0
    %v3674 = vadd.f32 %v3609, %v3673
    %3675 = vmatmul.f32.gmra.mxu0 %v3417
    %v3676 = vpop.f32.mrf.mxu0
    %v3677 = vadd.f32 %v3612, %v3676
    %3678 = vmatmul.f32.gmra.mxu0 %v3420
    %v3679 = vpop.f32.mrf.mxu0
    %v3680 = vadd.f32 %v3615, %v3679
    %3681 = vmatmul.f32.gmra.mxu0 %v3423
    %v3682 = vpop.f32.mrf.mxu0
    %v3683 = vadd.f32 %v3618, %v3682
    %3684 = vmatmul.f32.gmra.mxu0 %v3426
    %v3685 = vpop.f32.mrf.mxu0
    %v3686 = vadd.f32 %v3621, %v3685
    %3687 = vmatmul.f32.gmra.mxu0 %v3429
    %v3688 = vpop.f32.mrf.mxu0
    %v3689 = vadd.f32 %v3624, %v3688
    %3690 = vmatmul.f32.gmra.mxu0 %v3432
    %v3691 = vpop.f32.mrf.mxu0
    %v3692 = vadd.f32 %v3627, %v3691
    %3693 = vmatmul.f32.gmra.mxu0 %v3435
    %v3694 = vpop.f32.mrf.mxu0
    %v3695 = vadd.f32 %v3630, %v3694
    %3696 = vmatmul.f32.gmra.mxu0 %v3438
    %v3697 = vpop.f32.mrf.mxu0
    %v3698 = vadd.f32 %v3633, %v3697
    %3699 = vmatmul.f32.gmra.mxu0 %v3441
    %v3700 = vpop.f32.mrf.mxu0
    %v3701 = vadd.f32 %v3636, %v3700
    %3702 = vmatmul.f32.gmra.mxu0 %v3444
    %v3703 = vpop.f32.mrf.mxu0
    %v3704 = vadd.f32 %v3639, %v3703
    %3705 = vmatmul.f32.gmra.mxu0 %v3447
    %v3706 = vpop.f32.mrf.mxu0
    %v3707 = vadd.f32 %v3642, %v3706
    %3708 = vmatmul.f32.gmra.mxu0 %v3450
    %v3709 = vpop.f32.mrf.mxu0
    %v3710 = vadd.f32 %v3645, %v3709
    %3711 = vmatmul.f32.gmra.mxu0 %v3453
    %v3712 = vpop.f32.mrf.mxu0
    %v3713 = vadd.f32 %v3648, %v3712
    %3714 = vmatmul.f32.gmra.mxu0 %v3456
    %v3715 = vpop.f32.mrf.mxu0
    %v3716 = vadd.f32 %v3651, %v3715
    %3717 = vdwg.mxu0
    %v3718 = vld [vmem:[%s11] sm:$0xff]
    %v3719 = vld [vmem:[%s11 + $0x8] sm:$0xff]
    %v3720 = vld [vmem:[%s11 + $0x10] sm:$0xff]
    %v3721 = vld [vmem:[%s11 + $0x18] sm:$0xff]
    %v3722 = vld [vmem:[%s12] sm:$0x1]
    %v3724 = vperm.slane %v3722, 0
    %v3726 = vsel %vm299, %v2010, 0
    %v3728 = vsel %vm299, %v2011, 0
    %v3730 = vsel %vm299, %v2012, 0
    %v3732 = vsel %vm299, %v2013, 0
    %v3734 = vsel %vm299, %v2014, 0
    %v3736 = vsel %vm299, %v2015, 0
    %v3738 = vsel %vm299, %v2016, 0
    %v3741 = vsel %vm299, %v2017, 0
    %v3743 = vsel %vm299, %v2018, 0
    %v3745 = vsel %vm299, %v2019, 0
    %v3747 = vsel %vm299, %v2020, 0
    %v3749 = vsel %vm299, %v2021, 0
    %v3751 = vsel %vm299, %v2022, 0
    %v3753 = vsel %vm299, %v2023, 0
    %v3755 = vsel %vm299, %v2024, 0
    %v3758 = vsel %vm299, %v2025, 0
    %3760 = vmatpush.msra.mxu0 0.0
    %3761 = vmatpush.msra.mxu0 0.0
    %3762 = vmatpush.msra.mxu0 0.0
    %3763 = vmatpush.msra.mxu0 0.0
    %3764 = vmatpush.msra.mxu0 0.0
    %3765 = vmatpush.msra.mxu0 0.0
    %3766 = vmatpush.msra.mxu0 0.0
    %3767 = vmatpush.msra.mxu0 0.0
    %3768 = vmatpush.msra.mxu0 0.0
    %3769 = vmatpush.msra.mxu0 0.0
    %3770 = vmatpush.msra.mxu0 0.0
    %3771 = vmatpush.msra.mxu0 0.0
    %3772 = vmatpush.msra.mxu0 %v3721
    %3773 = vmatpush.msra.mxu0 %v3720
    %3774 = vmatpush.msra.mxu0 %v3719
    %3775 = vmatpush.msra.mxu0 %v3718
    %3776 = vmatmul.f32.gmra.mxu0 %v3726
    %v3777 = vpop.f32.mrf.mxu0
    %v3778 = vadd.f32 %v3724, %v3777
    %3779 = vmatmul.f32.gmra.mxu0 %v3728
    %v3780 = vpop.f32.mrf.mxu0
    %v3781 = vadd.f32 %v3724, %v3780
    %3782 = vmatmul.f32.gmra.mxu0 %v3730
    %v3783 = vpop.f32.mrf.mxu0
    %v3784 = vadd.f32 %v3724, %v3783
    %3785 = vmatmul.f32.gmra.mxu0 %v3732
    %v3786 = vpop.f32.mrf.mxu0
    %v3787 = vadd.f32 %v3724, %v3786
    %3788 = vmatmul.f32.gmra.mxu0 %v3734
    %v3789 = vpop.f32.mrf.mxu0
    %v3790 = vadd.f32 %v3724, %v3789
    %3791 = vmatmul.f32.gmra.mxu0 %v3736
    %v3792 = vpop.f32.mrf.mxu0
    %v3793 = vadd.f32 %v3724, %v3792
    %3794 = vmatmul.f32.gmra.mxu0 %v3738
    %v3795 = vpop.f32.mrf.mxu0
    %v3796 = vadd.f32 %v3724, %v3795
    %3797 = vmatmul.f32.gmra.mxu0 %v3741
    %v3798 = vpop.f32.mrf.mxu0
    %v3799 = vadd.f32 %v3724, %v3798
    %3800 = vmatmul.f32.gmra.mxu0 %v3743
    %v3801 = vpop.f32.mrf.mxu0
    %v3802 = vadd.f32 %v3724, %v3801
    %3803 = vmatmul.f32.gmra.mxu0 %v3745
    %v3804 = vpop.f32.mrf.mxu0
    %v3805 = vadd.f32 %v3724, %v3804
    %3806 = vmatmul.f32.gmra.mxu0 %v3747
    %v3807 = vpop.f32.mrf.mxu0
    %v3808 = vadd.f32 %v3724, %v3807
    %3809 = vmatmul.f32.gmra.mxu0 %v3749
    %v3810 = vpop.f32.mrf.mxu0
    %v3811 = vadd.f32 %v3724, %v3810
    %3812 = vmatmul.f32.gmra.mxu0 %v3751
    %v3813 = vpop.f32.mrf.mxu0
    %v3814 = vadd.f32 %v3724, %v3813
    %3815 = vmatmul.f32.gmra.mxu0 %v3753
    %v3816 = vpop.f32.mrf.mxu0
    %v3817 = vadd.f32 %v3724, %v3816
    %3818 = vmatmul.f32.gmra.mxu0 %v3755
    %v3819 = vpop.f32.mrf.mxu0
    %v3820 = vadd.f32 %v3724, %v3819
    %3821 = vmatmul.f32.gmra.mxu0 %v3758
    %v3822 = vpop.f32.mrf.mxu0
    %v3823 = vadd.f32 %v3724, %v3822
    %3824 = vdwg.mxu0
    %v3825 = vadd.f32 %v3671, %v3778
    %v3826 = vadd.f32 %v3674, %v3781
    %v3827 = vadd.f32 %v3677, %v3784
    %v3828 = vadd.f32 %v3680, %v3787
    %v3829 = vadd.f32 %v3683, %v3790
    %v3830 = vadd.f32 %v3686, %v3793
    %v3831 = vadd.f32 %v3689, %v3796
    %v3832 = vadd.f32 %v3692, %v3799
    %v3833 = vadd.f32 %v3695, %v3802
    %v3834 = vadd.f32 %v3698, %v3805
    %v3835 = vadd.f32 %v3701, %v3808
    %v3836 = vadd.f32 %v3704, %v3811
    %v3837 = vadd.f32 %v3707, %v3814
    %v3838 = vadd.f32 %v3710, %v3817
    %v3839 = vadd.f32 %v3713, %v3820
    %v3840 = vadd.f32 %v3716, %v3823
    %vm3841 = vcmp.ge.f32.partialorder %v3825, 0.0
    %vm3842 = vcmp.ge.f32.partialorder %v3826, 0.0
    %vm3843 = vcmp.ge.f32.partialorder %v3827, 0.0
    %vm3844 = vcmp.ge.f32.partialorder %v3828, 0.0
    %vm3845 = vcmp.ge.f32.partialorder %v3829, 0.0
    %vm3846 = vcmp.ge.f32.partialorder %v3830, 0.0
    %vm3847 = vcmp.ge.f32.partialorder %v3831, 0.0
    %vm3848 = vcmp.ge.f32.partialorder %v3832, 0.0
    %vm3849 = vcmp.ge.f32.partialorder %v3833, 0.0
    %vm3850 = vcmp.ge.f32.partialorder %v3834, 0.0
    %vm3851 = vcmp.ge.f32.partialorder %v3835, 0.0
    %vm3852 = vcmp.ge.f32.partialorder %v3836, 0.0
    %vm3853 = vcmp.ge.f32.partialorder %v3837, 0.0
    %vm3854 = vcmp.ge.f32.partialorder %v3838, 0.0
    %vm3855 = vcmp.ge.f32.partialorder %v3839, 0.0
    %vm3856 = vcmp.ge.f32.partialorder %v3840, 0.0
    %v3857 = vmul.f32 %v3825, 0.01
    %v3858 = vmul.f32 %v3826, 0.01
    %v3859 = vmul.f32 %v3827, 0.01
    %v3860 = vmul.f32 %v3828, 0.01
    %v3861 = vmul.f32 %v3829, 0.01
    %v3862 = vmul.f32 %v3830, 0.01
    %v3863 = vmul.f32 %v3831, 0.01
    %v3864 = vmul.f32 %v3832, 0.01
    %v3865 = vmul.f32 %v3833, 0.01
    %v3866 = vmul.f32 %v3834, 0.01
    %v3867 = vmul.f32 %v3835, 0.01
    %v3868 = vmul.f32 %v3836, 0.01
    %v3869 = vmul.f32 %v3837, 0.01
    %v3870 = vmul.f32 %v3838, 0.01
    %v3871 = vmul.f32 %v3839, 0.01
    %v3872 = vmul.f32 %v3840, 0.01
    %v3873 = vsel %vm3841, %v3825, %v3857
    %v3874 = vsel %vm3842, %v3826, %v3858
    %v3875 = vsel %vm3843, %v3827, %v3859
    %v3876 = vsel %vm3844, %v3828, %v3860
    %v3877 = vsel %vm3845, %v3829, %v3861
    %v3878 = vsel %vm3846, %v3830, %v3862
    %v3879 = vsel %vm3847, %v3831, %v3863
    %v3880 = vsel %vm3848, %v3832, %v3864
    %v3881 = vsel %vm3849, %v3833, %v3865
    %v3882 = vsel %vm3850, %v3834, %v3866
    %v3883 = vsel %vm3851, %v3835, %v3867
    %v3884 = vsel %vm3852, %v3836, %v3868
    %v3885 = vsel %vm3853, %v3837, %v3869
    %v3886 = vsel %vm3854, %v3838, %v3870
    %v3887 = vsel %vm3855, %v3839, %v3871
    %v3888 = vsel %vm3856, %v3840, %v3872
    %3889 = vst.msk [vmem:[#allocation6] sm:$0x1] %vm2842, 0.0
    %v3896 = vrot.slane %v3873, 7
    %v3897 = vrot.slane %v3874, 7
    %v3898 = vsel %vm273, %v3896, %v3897
    %v3899 = vrot.slane %v3875, 7
    %v3900 = vsel %vm273, %v3897, %v3899
    %v3901 = vrot.slane %v3876, 7
    %v3902 = vsel %vm273, %v3899, %v3901
    %v3903 = vrot.slane %v3877, 7
    %v3904 = vsel %vm273, %v3901, %v3903
    %v3905 = vrot.slane %v3878, 7
    %v3906 = vsel %vm273, %v3903, %v3905
    %3913 = vst.msk [vmem:[#allocation6] sm:$0xfe] %vm2867, %v3896
    %3914 = vst.msk [vmem:[#allocation6 + $0x20] sm:$0xff] %vm2869, %v3898
    %3915 = vst.msk [vmem:[#allocation6 + $0x40] sm:$0xff] %vm2869, %v3900
    %3916 = vst.msk [vmem:[#allocation6 + $0x60] sm:$0xff] %vm2869, %v3902
    %3917 = vst.msk [vmem:[#allocation6 + $0x80] sm:$0xff] %vm2869, %v3904
    %vm3918 = vcmask 519168
    %3919 = vst.msk [vmem:[#allocation6 + $0xa0] sm:$0xf] %vm3918, %v3906
    %vm3920 = vcmask 523268
    %3921 = vst.msk [vmem:[#allocation6 + $0xa0] sm:$0xf0] %vm3920, 0.0
    %3922 = vst.msk [vmem:[#allocation6 + $0xc0] sm:$0xff] %vm2869, 0.0
    %3923 = vst.msk [vmem:[#allocation6 + $0xe0] sm:$0xff] %vm2869, 0.0
    %3924 = vrot.lane.b32.xlu0 %v3873, 64
    %v3925 = vpop.permute.xlu0 %3924
    %3926 = vrot.lane.b32.xlu0 %v3874, 64
    %v3927 = vpop.permute.xlu0 %3926
    %3928 = vrot.lane.b32.xlu0 %v3875, 64
    %v3929 = vpop.permute.xlu0 %3928
    %3930 = vrot.lane.b32.xlu0 %v3876, 64
    %v3931 = vpop.permute.xlu0 %3930
    %3932 = vrot.lane.b32.xlu0 %v3877, 64
    %v3933 = vpop.permute.xlu0 %3932
    %3934 = vrot.lane.b32.xlu0 %v3878, 64
    %v3935 = vpop.permute.xlu0 %3934
    %3942 = vst.msk [vmem:[#allocation6] sm:$0xff] %vm2895, %v3925
    %3943 = vst.msk [vmem:[#allocation6 + $0x20] sm:$0xff] %vm2895, %v3927
    %3944 = vst.msk [vmem:[#allocation6 + $0x40] sm:$0xff] %vm2895, %v3929
    %3945 = vst.msk [vmem:[#allocation6 + $0x60] sm:$0xff] %vm2895, %v3931
    %3946 = vst.msk [vmem:[#allocation6 + $0x80] sm:$0xff] %vm2895, %v3933
    %vm3947 = vcmask 1043968
    %3948 = vst.msk [vmem:[#allocation6 + $0xa0] sm:$0xf] %vm3947, %v3935
    %vm3949 = vcmask 1048068
    %3950 = vst.msk [vmem:[#allocation6 + $0xa0] sm:$0xf0] %vm3949, 0.0
    %3951 = vst.msk [vmem:[#allocation6 + $0xc0] sm:$0xff] %vm2895, 0.0
    %3952 = vst.msk [vmem:[#allocation6 + $0xe0] sm:$0xff] %vm2895, 0.0
    %v3953 = vrot.slane %v3873, 1
    %v3954 = vrot.slane %v3874, 1
    %v3955 = vsel %vm346, %v3953, %v3954
    %v3956 = vrot.slane %v3875, 1
    %v3957 = vsel %vm346, %v3954, %v3956
    %v3958 = vrot.slane %v3876, 1
    %v3959 = vsel %vm346, %v3956, %v3958
    %v3960 = vrot.slane %v3877, 1
    %v3961 = vsel %vm346, %v3958, %v3960
    %v3962 = vrot.slane %v3878, 1
    %v3963 = vsel %vm346, %v3960, %v3962
    %3970 = vst.msk [vmem:[#allocation6 + $0x8] sm:$0xff] %vm2869, %v3955
    %3971 = vst.msk [vmem:[#allocation6 + $0x28] sm:$0xff] %vm2869, %v3957
    %3972 = vst.msk [vmem:[#allocation6 + $0x48] sm:$0xff] %vm2869, %v3959
    %3973 = vst.msk [vmem:[#allocation6 + $0x68] sm:$0xff] %vm2869, %v3961
    %3974 = vst.msk [vmem:[#allocation6 + $0x88] sm:$0xff] %vm2869, %v3963
    %3975 = vst.msk [vmem:[#allocation6 + $0xa8] sm:$0xf] %vm3918, %v3962
    %3976 = vst.msk [vmem:[#allocation6 + $0xa8] sm:$0xf0] %vm3920, 0.0
    %3977 = vst.msk [vmem:[#allocation6 + $0xc8] sm:$0xff] %vm2869, 0.0
    %3978 = vst.msk [vmem:[#allocation6 + $0xe8] sm:$0xff] %vm2869, 0.0
    %v3979 = vrot.slane %v3873, 2
    %v3980 = vrot.slane %v3874, 2
    %v3981 = vsel %vm398, %v3979, %v3980
    %v3982 = vrot.slane %v3875, 2
    %v3983 = vsel %vm398, %v3980, %v3982
    %v3984 = vrot.slane %v3876, 2
    %v3985 = vsel %vm398, %v3982, %v3984
    %v3986 = vrot.slane %v3877, 2
    %v3987 = vsel %vm398, %v3984, %v3986
    %v3988 = vrot.slane %v3878, 2
    %v3989 = vsel %vm398, %v3986, %v3988
    %3990 = vrot.lane.b32.xlu0 %v3981, 64
    %v3991 = vpop.permute.xlu0 %3990
    %3992 = vrot.lane.b32.xlu0 %v3983, 64
    %v3993 = vpop.permute.xlu0 %3992
    %3994 = vrot.lane.b32.xlu0 %v3985, 64
    %v3995 = vpop.permute.xlu0 %3994
    %3996 = vrot.lane.b32.xlu0 %v3987, 64
    %v3997 = vpop.permute.xlu0 %3996
    %3998 = vrot.lane.b32.xlu0 %v3989, 64
    %v3999 = vpop.permute.xlu0 %3998
    %4000 = vrot.lane.b32.xlu0 %v3988, 64
    %v4001 = vpop.permute.xlu0 %4000
    %4008 = vst.msk [vmem:[#allocation6 + $0x8] sm:$0xff] %vm2895, %v3991
    %4009 = vst.msk [vmem:[#allocation6 + $0x28] sm:$0xff] %vm2895, %v3993
    %4010 = vst.msk [vmem:[#allocation6 + $0x48] sm:$0xff] %vm2895, %v3995
    %4011 = vst.msk [vmem:[#allocation6 + $0x68] sm:$0xff] %vm2895, %v3997
    %4012 = vst.msk [vmem:[#allocation6 + $0x88] sm:$0xff] %vm2895, %v3999
    %4013 = vst.msk [vmem:[#allocation6 + $0xa8] sm:$0xf] %vm3947, %v4001
    %4014 = vst.msk [vmem:[#allocation6 + $0xa8] sm:$0xf0] %vm3949, 0.0
    %4015 = vst.msk [vmem:[#allocation6 + $0xc8] sm:$0xff] %vm2895, 0.0
    %4016 = vst.msk [vmem:[#allocation6 + $0xe8] sm:$0xff] %vm2895, 0.0
    %v4017 = vrot.slane %v3873, 3
    %v4018 = vrot.slane %v3874, 3
    %v4019 = vsel %vm450, %v4017, %v4018
    %v4020 = vrot.slane %v3875, 3
    %v4021 = vsel %vm450, %v4018, %v4020
    %v4022 = vrot.slane %v3876, 3
    %v4023 = vsel %vm450, %v4020, %v4022
    %v4024 = vrot.slane %v3877, 3
    %v4025 = vsel %vm450, %v4022, %v4024
    %v4026 = vrot.slane %v3878, 3
    %v4027 = vsel %vm450, %v4024, %v4026
    %4034 = vst.msk [vmem:[#allocation6 + $0x10] sm:$0xff] %vm2869, %v4019
    %4035 = vst.msk [vmem:[#allocation6 + $0x30] sm:$0xff] %vm2869, %v4021
    %4036 = vst.msk [vmem:[#allocation6 + $0x50] sm:$0xff] %vm2869, %v4023
    %4037 = vst.msk [vmem:[#allocation6 + $0x70] sm:$0xff] %vm2869, %v4025
    %4038 = vst.msk [vmem:[#allocation6 + $0x90] sm:$0xff] %vm2869, %v4027
    %4039 = vst.msk [vmem:[#allocation6 + $0xb0] sm:$0xf] %vm3918, %v4026
    %4040 = vst.msk [vmem:[#allocation6 + $0xb0] sm:$0xf0] %vm3920, 0.0
    %4041 = vst.msk [vmem:[#allocation6 + $0xd0] sm:$0xff] %vm2869, 0.0
    %4042 = vst.msk [vmem:[#allocation6 + $0xf0] sm:$0xff] %vm2869, 0.0
    %v4043 = vrot.slane %v3873, 4
    %v4044 = vrot.slane %v3874, 4
    %v4045 = vsel %vm483, %v4043, %v4044
    %v4046 = vrot.slane %v3875, 4
    %v4047 = vsel %vm483, %v4044, %v4046
    %v4048 = vrot.slane %v3876, 4
    %v4049 = vsel %vm483, %v4046, %v4048
    %v4050 = vrot.slane %v3877, 4
    %v4051 = vsel %vm483, %v4048, %v4050
    %v4052 = vrot.slane %v3878, 4
    %v4053 = vsel %vm483, %v4050, %v4052
    %4054 = vrot.lane.b32.xlu0 %v4045, 64
    %v4055 = vpop.permute.xlu0 %4054
    %4056 = vrot.lane.b32.xlu0 %v4047, 64
    %v4057 = vpop.permute.xlu0 %4056
    %4058 = vrot.lane.b32.xlu0 %v4049, 64
    %v4059 = vpop.permute.xlu0 %4058
    %4060 = vrot.lane.b32.xlu0 %v4051, 64
    %v4061 = vpop.permute.xlu0 %4060
    %4062 = vrot.lane.b32.xlu0 %v4053, 64
    %v4063 = vpop.permute.xlu0 %4062
    %4064 = vrot.lane.b32.xlu0 %v4052, 64
    %v4065 = vpop.permute.xlu0 %4064
    %4072 = vst.msk [vmem:[#allocation6 + $0x10] sm:$0xff] %vm2895, %v4055
    %4073 = vst.msk [vmem:[#allocation6 + $0x30] sm:$0xff] %vm2895, %v4057
    %4074 = vst.msk [vmem:[#allocation6 + $0x50] sm:$0xff] %vm2895, %v4059
    %4075 = vst.msk [vmem:[#allocation6 + $0x70] sm:$0xff] %vm2895, %v4061
    %4076 = vst.msk [vmem:[#allocation6 + $0x90] sm:$0xff] %vm2895, %v4063
    %4077 = vst.msk [vmem:[#allocation6 + $0xb0] sm:$0xf] %vm3947, %v4065
    %4078 = vst.msk [vmem:[#allocation6 + $0xb0] sm:$0xf0] %vm3949, 0.0
    %4079 = vst.msk [vmem:[#allocation6 + $0xd0] sm:$0xff] %vm2895, 0.0
    %4080 = vst.msk [vmem:[#allocation6 + $0xf0] sm:$0xff] %vm2895, 0.0
    %v4081 = vrot.slane %v3873, 5
    %v4082 = vrot.slane %v3874, 5
    %v4083 = vsel %vm532, %v4081, %v4082
    %v4084 = vrot.slane %v3875, 5
    %v4085 = vsel %vm532, %v4082, %v4084
    %v4086 = vrot.slane %v3876, 5
    %v4087 = vsel %vm532, %v4084, %v4086
    %v4088 = vrot.slane %v3877, 5
    %v4089 = vsel %vm532, %v4086, %v4088
    %v4090 = vrot.slane %v3878, 5
    %v4091 = vsel %vm532, %v4088, %v4090
    %4098 = vst.msk [vmem:[#allocation6 + $0x18] sm:$0xff] %vm2869, %v4083
    %4099 = vst.msk [vmem:[#allocation6 + $0x38] sm:$0xff] %vm2869, %v4085
    %4100 = vst.msk [vmem:[#allocation6 + $0x58] sm:$0xff] %vm2869, %v4087
    %4101 = vst.msk [vmem:[#allocation6 + $0x78] sm:$0xff] %vm2869, %v4089
    %4102 = vst.msk [vmem:[#allocation6 + $0x98] sm:$0xff] %vm2869, %v4091
    %vm4103 = vcmask 518144
    %4104 = vst.msk [vmem:[#allocation6 + $0xb8] sm:$0x7] %vm4103, %v4090
    %vm4105 = vcmask 523267
    %4106 = vst.msk [vmem:[#allocation6 + $0xb8] sm:$0xf8] %vm4105, 0.0
    %4107 = vst.msk [vmem:[#allocation6 + $0xd8] sm:$0xff] %vm2869, 0.0
    %4108 = vst.msk [vmem:[#allocation6 + $0xf8] sm:$0xff] %vm2869, 0.0
    %4109 = vst.msk [vmem:[#allocation6 + $0x100] sm:$0x1] %vm2842, 0.0
    %v4116 = vrot.slane %v3881, 7
    %v4117 = vrot.slane %v3882, 7
    %v4118 = vsel %vm273, %v4116, %v4117
    %v4119 = vrot.slane %v3883, 7
    %v4120 = vsel %vm273, %v4117, %v4119
    %v4121 = vrot.slane %v3884, 7
    %v4122 = vsel %vm273, %v4119, %v4121
    %v4123 = vrot.slane %v3885, 7
    %v4124 = vsel %vm273, %v4121, %v4123
    %v4125 = vrot.slane %v3886, 7
    %v4126 = vsel %vm273, %v4123, %v4125
    %4133 = vst.msk [vmem:[#allocation6 + $0x100] sm:$0xfe] %vm2867, %v4116
    %4134 = vst.msk [vmem:[#allocation6 + $0x120] sm:$0xff] %vm2869, %v4118
    %4135 = vst.msk [vmem:[#allocation6 + $0x140] sm:$0xff] %vm2869, %v4120
    %4136 = vst.msk [vmem:[#allocation6 + $0x160] sm:$0xff] %vm2869, %v4122
    %4137 = vst.msk [vmem:[#allocation6 + $0x180] sm:$0xff] %vm2869, %v4124
    %4138 = vst.msk [vmem:[#allocation6 + $0x1a0] sm:$0xf] %vm3918, %v4126
    %4139 = vst.msk [vmem:[#allocation6 + $0x1a0] sm:$0xf0] %vm3920, 0.0
    %4140 = vst.msk [vmem:[#allocation6 + $0x1c0] sm:$0xff] %vm2869, 0.0
    %4141 = vst.msk [vmem:[#allocation6 + $0x1e0] sm:$0xff] %vm2869, 0.0
    %4142 = vrot.lane.b32.xlu0 %v3881, 64
    %v4143 = vpop.permute.xlu0 %4142
    %4144 = vrot.lane.b32.xlu0 %v3882, 64
    %v4145 = vpop.permute.xlu0 %4144
    %4146 = vrot.lane.b32.xlu0 %v3883, 64
    %v4147 = vpop.permute.xlu0 %4146
    %4148 = vrot.lane.b32.xlu0 %v3884, 64
    %v4149 = vpop.permute.xlu0 %4148
    %4150 = vrot.lane.b32.xlu0 %v3885, 64
    %v4151 = vpop.permute.xlu0 %4150
    %4152 = vrot.lane.b32.xlu0 %v3886, 64
    %v4153 = vpop.permute.xlu0 %4152
    %4160 = vst.msk [vmem:[#allocation6 + $0x100] sm:$0xff] %vm2895, %v4143
    %4161 = vst.msk [vmem:[#allocation6 + $0x120] sm:$0xff] %vm2895, %v4145
    %4162 = vst.msk [vmem:[#allocation6 + $0x140] sm:$0xff] %vm2895, %v4147
    %4163 = vst.msk [vmem:[#allocation6 + $0x160] sm:$0xff] %vm2895, %v4149
    %4164 = vst.msk [vmem:[#allocation6 + $0x180] sm:$0xff] %vm2895, %v4151
    %4165 = vst.msk [vmem:[#allocation6 + $0x1a0] sm:$0xf] %vm3947, %v4153
    %4166 = vst.msk [vmem:[#allocation6 + $0x1a0] sm:$0xf0] %vm3949, 0.0
    %4167 = vst.msk [vmem:[#allocation6 + $0x1c0] sm:$0xff] %vm2895, 0.0
    %4168 = vst.msk [vmem:[#allocation6 + $0x1e0] sm:$0xff] %vm2895, 0.0
    %v4169 = vrot.slane %v3881, 1
    %v4170 = vrot.slane %v3882, 1
    %v4171 = vsel %vm346, %v4169, %v4170
    %v4172 = vrot.slane %v3883, 1
    %v4173 = vsel %vm346, %v4170, %v4172
    %v4174 = vrot.slane %v3884, 1
    %v4175 = vsel %vm346, %v4172, %v4174
    %v4176 = vrot.slane %v3885, 1
    %v4177 = vsel %vm346, %v4174, %v4176
    %v4178 = vrot.slane %v3886, 1
    %v4179 = vsel %vm346, %v4176, %v4178
    %4186 = vst.msk [vmem:[#allocation6 + $0x108] sm:$0xff] %vm2869, %v4171
    %4187 = vst.msk [vmem:[#allocation6 + $0x128] sm:$0xff] %vm2869, %v4173
    %4188 = vst.msk [vmem:[#allocation6 + $0x148] sm:$0xff] %vm2869, %v4175
    %4189 = vst.msk [vmem:[#allocation6 + $0x168] sm:$0xff] %vm2869, %v4177
    %4190 = vst.msk [vmem:[#allocation6 + $0x188] sm:$0xff] %vm2869, %v4179
    %4191 = vst.msk [vmem:[#allocation6 + $0x1a8] sm:$0xf] %vm3918, %v4178
    %4192 = vst.msk [vmem:[#allocation6 + $0x1a8] sm:$0xf0] %vm3920, 0.0
    %4193 = vst.msk [vmem:[#allocation6 + $0x1c8] sm:$0xff] %vm2869, 0.0
    %4194 = vst.msk [vmem:[#allocation6 + $0x1e8] sm:$0xff] %vm2869, 0.0
    %v4195 = vrot.slane %v3881, 2
    %v4196 = vrot.slane %v3882, 2
    %v4197 = vsel %vm398, %v4195, %v4196
    %v4198 = vrot.slane %v3883, 2
    %v4199 = vsel %vm398, %v4196, %v4198
    %v4200 = vrot.slane %v3884, 2
    %v4201 = vsel %vm398, %v4198, %v4200
    %v4202 = vrot.slane %v3885, 2
    %v4203 = vsel %vm398, %v4200, %v4202
    %v4204 = vrot.slane %v3886, 2
    %v4205 = vsel %vm398, %v4202, %v4204
    %4206 = vrot.lane.b32.xlu0 %v4197, 64
    %v4207 = vpop.permute.xlu0 %4206
    %4208 = vrot.lane.b32.xlu0 %v4199, 64
    %v4209 = vpop.permute.xlu0 %4208
    %4210 = vrot.lane.b32.xlu0 %v4201, 64
    %v4211 = vpop.permute.xlu0 %4210
    %4212 = vrot.lane.b32.xlu0 %v4203, 64
    %v4213 = vpop.permute.xlu0 %4212
    %4214 = vrot.lane.b32.xlu0 %v4205, 64
    %v4215 = vpop.permute.xlu0 %4214
    %4216 = vrot.lane.b32.xlu0 %v4204, 64
    %v4217 = vpop.permute.xlu0 %4216
    %4224 = vst.msk [vmem:[#allocation6 + $0x108] sm:$0xff] %vm2895, %v4207
    %4225 = vst.msk [vmem:[#allocation6 + $0x128] sm:$0xff] %vm2895, %v4209
    %4226 = vst.msk [vmem:[#allocation6 + $0x148] sm:$0xff] %vm2895, %v4211
    %4227 = vst.msk [vmem:[#allocation6 + $0x168] sm:$0xff] %vm2895, %v4213
    %4228 = vst.msk [vmem:[#allocation6 + $0x188] sm:$0xff] %vm2895, %v4215
    %4229 = vst.msk [vmem:[#allocation6 + $0x1a8] sm:$0xf] %vm3947, %v4217
    %4230 = vst.msk [vmem:[#allocation6 + $0x1a8] sm:$0xf0] %vm3949, 0.0
    %4231 = vst.msk [vmem:[#allocation6 + $0x1c8] sm:$0xff] %vm2895, 0.0
    %4232 = vst.msk [vmem:[#allocation6 + $0x1e8] sm:$0xff] %vm2895, 0.0
    %v4233 = vrot.slane %v3881, 3
    %v4234 = vrot.slane %v3882, 3
    %v4235 = vsel %vm450, %v4233, %v4234
    %v4236 = vrot.slane %v3883, 3
    %v4237 = vsel %vm450, %v4234, %v4236
    %v4238 = vrot.slane %v3884, 3
    %v4239 = vsel %vm450, %v4236, %v4238
    %v4240 = vrot.slane %v3885, 3
    %v4241 = vsel %vm450, %v4238, %v4240
    %v4242 = vrot.slane %v3886, 3
    %v4243 = vsel %vm450, %v4240, %v4242
    %4250 = vst.msk [vmem:[#allocation6 + $0x110] sm:$0xff] %vm2869, %v4235
    %4251 = vst.msk [vmem:[#allocation6 + $0x130] sm:$0xff] %vm2869, %v4237
    %4252 = vst.msk [vmem:[#allocation6 + $0x150] sm:$0xff] %vm2869, %v4239
    %4253 = vst.msk [vmem:[#allocation6 + $0x170] sm:$0xff] %vm2869, %v4241
    %4254 = vst.msk [vmem:[#allocation6 + $0x190] sm:$0xff] %vm2869, %v4243
    %4255 = vst.msk [vmem:[#allocation6 + $0x1b0] sm:$0xf] %vm3918, %v4242
    %4256 = vst.msk [vmem:[#allocation6 + $0x1b0] sm:$0xf0] %vm3920, 0.0
    %4257 = vst.msk [vmem:[#allocation6 + $0x1d0] sm:$0xff] %vm2869, 0.0
    %4258 = vst.msk [vmem:[#allocation6 + $0x1f0] sm:$0xff] %vm2869, 0.0
    %v4259 = vrot.slane %v3881, 4
    %v4260 = vrot.slane %v3882, 4
    %v4261 = vsel %vm483, %v4259, %v4260
    %v4262 = vrot.slane %v3883, 4
    %v4263 = vsel %vm483, %v4260, %v4262
    %v4264 = vrot.slane %v3884, 4
    %v4265 = vsel %vm483, %v4262, %v4264
    %v4266 = vrot.slane %v3885, 4
    %v4267 = vsel %vm483, %v4264, %v4266
    %v4268 = vrot.slane %v3886, 4
    %v4269 = vsel %vm483, %v4266, %v4268
    %4270 = vrot.lane.b32.xlu0 %v4261, 64
    %v4271 = vpop.permute.xlu0 %4270
    %4272 = vrot.lane.b32.xlu0 %v4263, 64
    %v4273 = vpop.permute.xlu0 %4272
    %4274 = vrot.lane.b32.xlu0 %v4265, 64
    %v4275 = vpop.permute.xlu0 %4274
    %4276 = vrot.lane.b32.xlu0 %v4267, 64
    %v4277 = vpop.permute.xlu0 %4276
    %4278 = vrot.lane.b32.xlu0 %v4269, 64
    %v4279 = vpop.permute.xlu0 %4278
    %4280 = vrot.lane.b32.xlu0 %v4268, 64
    %v4281 = vpop.permute.xlu0 %4280
    %4288 = vst.msk [vmem:[#allocation6 + $0x110] sm:$0xff] %vm2895, %v4271
    %4289 = vst.msk [vmem:[#allocation6 + $0x130] sm:$0xff] %vm2895, %v4273
    %4290 = vst.msk [vmem:[#allocation6 + $0x150] sm:$0xff] %vm2895, %v4275
    %4291 = vst.msk [vmem:[#allocation6 + $0x170] sm:$0xff] %vm2895, %v4277
    %4292 = vst.msk [vmem:[#allocation6 + $0x190] sm:$0xff] %vm2895, %v4279
    %4293 = vst.msk [vmem:[#allocation6 + $0x1b0] sm:$0xf] %vm3947, %v4281
    %4294 = vst.msk [vmem:[#allocation6 + $0x1b0] sm:$0xf0] %vm3949, 0.0
    %4295 = vst.msk [vmem:[#allocation6 + $0x1d0] sm:$0xff] %vm2895, 0.0
    %4296 = vst.msk [vmem:[#allocation6 + $0x1f0] sm:$0xff] %vm2895, 0.0
    %v4297 = vrot.slane %v3881, 5
    %v4298 = vrot.slane %v3882, 5
    %v4299 = vsel %vm532, %v4297, %v4298
    %v4300 = vrot.slane %v3883, 5
    %v4301 = vsel %vm532, %v4298, %v4300
    %v4302 = vrot.slane %v3884, 5
    %v4303 = vsel %vm532, %v4300, %v4302
    %v4304 = vrot.slane %v3885, 5
    %v4305 = vsel %vm532, %v4302, %v4304
    %v4306 = vrot.slane %v3886, 5
    %v4307 = vsel %vm532, %v4304, %v4306
    %4314 = vst.msk [vmem:[#allocation6 + $0x118] sm:$0xff] %vm2869, %v4299
    %4315 = vst.msk [vmem:[#allocation6 + $0x138] sm:$0xff] %vm2869, %v4301
    %4316 = vst.msk [vmem:[#allocation6 + $0x158] sm:$0xff] %vm2869, %v4303
    %4317 = vst.msk [vmem:[#allocation6 + $0x178] sm:$0xff] %vm2869, %v4305
    %4318 = vst.msk [vmem:[#allocation6 + $0x198] sm:$0xff] %vm2869, %v4307
    %4319 = vst.msk [vmem:[#allocation6 + $0x1b8] sm:$0x7] %vm4103, %v4306
    %4320 = vst.msk [vmem:[#allocation6 + $0x1b8] sm:$0xf8] %vm4105, 0.0
    %4321 = vst.msk [vmem:[#allocation6 + $0x1d8] sm:$0xff] %vm2869, 0.0
    %4322 = vst.msk [vmem:[#allocation6 + $0x1f8] sm:$0xff] %vm2869, 0.0
    %v4323 = vld [vmem:[#allocation6] sm:$0xff]
    %v4324 = vld [vmem:[#allocation6 + $0x8] sm:$0xff]
    %v4325 = vld [vmem:[#allocation6 + $0x10] sm:$0xff]
    %v4326 = vld [vmem:[#allocation6 + $0x18] sm:$0xff]
    %v4327 = vld [vmem:[#allocation6 + $0x20] sm:$0xff]
    %v4328 = vld [vmem:[#allocation6 + $0x28] sm:$0xff]
    %v4329 = vld [vmem:[#allocation6 + $0x30] sm:$0xff]
    %v4330 = vld [vmem:[#allocation6 + $0x38] sm:$0xff]
    %v4331 = vld [vmem:[#allocation6 + $0x40] sm:$0xff]
    %v4332 = vld [vmem:[#allocation6 + $0x48] sm:$0xff]
    %v4333 = vld [vmem:[#allocation6 + $0x50] sm:$0xff]
    %v4334 = vld [vmem:[#allocation6 + $0x58] sm:$0xff]
    %v4335 = vld [vmem:[#allocation6 + $0x60] sm:$0xff]
    %v4336 = vld [vmem:[#allocation6 + $0x68] sm:$0xff]
    %v4337 = vld [vmem:[#allocation6 + $0x70] sm:$0xff]
    %v4338 = vld [vmem:[#allocation6 + $0x78] sm:$0xff]
    %v4339 = vld [vmem:[#allocation6 + $0x80] sm:$0xff]
    %v4340 = vld [vmem:[#allocation6 + $0x88] sm:$0xff]
    %v4341 = vld [vmem:[#allocation6 + $0x90] sm:$0xff]
    %v4342 = vld [vmem:[#allocation6 + $0x98] sm:$0xff]
    %v4343 = vld [vmem:[#allocation6 + $0xa0] sm:$0xff]
    %v4344 = vld [vmem:[#allocation6 + $0xa8] sm:$0xff]
    %v4345 = vld [vmem:[#allocation6 + $0xb0] sm:$0xff]
    %v4346 = vld [vmem:[#allocation6 + $0xb8] sm:$0xff]
    %v4347 = vld [vmem:[#allocation6 + $0xc0] sm:$0xff]
    %v4348 = vld [vmem:[#allocation6 + $0xc8] sm:$0xff]
    %v4349 = vld [vmem:[#allocation6 + $0xd0] sm:$0xff]
    %v4350 = vld [vmem:[#allocation6 + $0xd8] sm:$0xff]
    %v4351 = vld [vmem:[#allocation6 + $0xe0] sm:$0xff]
    %v4352 = vld [vmem:[#allocation6 + $0xe8] sm:$0xff]
    %v4353 = vld [vmem:[#allocation6 + $0xf0] sm:$0xff]
    %v4354 = vld [vmem:[#allocation6 + $0xf8] sm:$0xff]
    %v4355 = vld [vmem:[#allocation6 + $0x100] sm:$0xff]
    %v4356 = vld [vmem:[#allocation6 + $0x108] sm:$0xff]
    %v4357 = vld [vmem:[#allocation6 + $0x110] sm:$0xff]
    %v4358 = vld [vmem:[#allocation6 + $0x118] sm:$0xff]
    %v4359 = vld [vmem:[#allocation6 + $0x120] sm:$0xff]
    %v4360 = vld [vmem:[#allocation6 + $0x128] sm:$0xff]
    %v4361 = vld [vmem:[#allocation6 + $0x130] sm:$0xff]
    %v4362 = vld [vmem:[#allocation6 + $0x138] sm:$0xff]
    %v4363 = vld [vmem:[#allocation6 + $0x140] sm:$0xff]
    %v4364 = vld [vmem:[#allocation6 + $0x148] sm:$0xff]
    %v4365 = vld [vmem:[#allocation6 + $0x150] sm:$0xff]
    %v4366 = vld [vmem:[#allocation6 + $0x158] sm:$0xff]
    %v4367 = vld [vmem:[#allocation6 + $0x160] sm:$0xff]
    %v4368 = vld [vmem:[#allocation6 + $0x168] sm:$0xff]
    %v4369 = vld [vmem:[#allocation6 + $0x170] sm:$0xff]
    %v4370 = vld [vmem:[#allocation6 + $0x178] sm:$0xff]
    %v4371 = vld [vmem:[#allocation6 + $0x180] sm:$0xff]
    %v4372 = vld [vmem:[#allocation6 + $0x188] sm:$0xff]
    %v4373 = vld [vmem:[#allocation6 + $0x190] sm:$0xff]
    %v4374 = vld [vmem:[#allocation6 + $0x198] sm:$0xff]
    %v4375 = vld [vmem:[#allocation6 + $0x1a0] sm:$0xff]
    %v4376 = vld [vmem:[#allocation6 + $0x1a8] sm:$0xff]
    %v4377 = vld [vmem:[#allocation6 + $0x1b0] sm:$0xff]
    %v4378 = vld [vmem:[#allocation6 + $0x1b8] sm:$0xff]
    %v4379 = vld [vmem:[#allocation6 + $0x1c0] sm:$0xff]
    %v4380 = vld [vmem:[#allocation6 + $0x1c8] sm:$0xff]
    %v4381 = vld [vmem:[#allocation6 + $0x1d0] sm:$0xff]
    %v4382 = vld [vmem:[#allocation6 + $0x1d8] sm:$0xff]
    %v4383 = vld [vmem:[#allocation6 + $0x1e0] sm:$0xff]
    %v4384 = vld [vmem:[#allocation6 + $0x1e8] sm:$0xff]
    %v4385 = vld [vmem:[#allocation6 + $0x1f0] sm:$0xff]
    %v4386 = vld [vmem:[#allocation6 + $0x1f8] sm:$0xff]
    %v4387 = vld [vmem:[#allocation8] sm:$0xff]
    %v4388 = vld [vmem:[#allocation8 + $0x8] sm:$0xff]
    %v4389 = vld [vmem:[#allocation8 + $0x10] sm:$0xff]
    %v4390 = vld [vmem:[#allocation8 + $0x18] sm:$0xff]
    %v4391 = vld [vmem:[#allocation8 + $0x20] sm:$0xff]
    %v4392 = vld [vmem:[#allocation8 + $0x28] sm:$0xff]
    %v4393 = vld [vmem:[#allocation8 + $0x30] sm:$0xff]
    %v4394 = vld [vmem:[#allocation8 + $0x38] sm:$0xff]
    %v4395 = vld [vmem:[#allocation8 + $0x40] sm:$0xff]
    %v4396 = vld [vmem:[#allocation8 + $0x48] sm:$0xff]
    %v4397 = vld [vmem:[#allocation8 + $0x50] sm:$0xff]
    %v4398 = vld [vmem:[#allocation8 + $0x58] sm:$0xff]
    %v4399 = vld [vmem:[#allocation8 + $0x60] sm:$0xff]
    %v4400 = vld [vmem:[#allocation8 + $0x68] sm:$0xff]
    %v4401 = vld [vmem:[#allocation8 + $0x70] sm:$0xff]
    %v4402 = vld [vmem:[#allocation8 + $0x78] sm:$0xff]
    %v4403 = vld [vmem:[#allocation8 + $0x80] sm:$0xff]
    %v4404 = vld [vmem:[#allocation8 + $0x88] sm:$0xff]
    %v4405 = vld [vmem:[#allocation8 + $0x90] sm:$0xff]
    %v4406 = vld [vmem:[#allocation8 + $0x98] sm:$0xff]
    %v4407 = vld [vmem:[#allocation8 + $0xa0] sm:$0xff]
    %v4408 = vld [vmem:[#allocation8 + $0xa8] sm:$0xff]
    %v4409 = vld [vmem:[#allocation8 + $0xb0] sm:$0xff]
    %v4410 = vld [vmem:[#allocation8 + $0xb8] sm:$0xff]
    %v4411 = vld [vmem:[#allocation8 + $0xc0] sm:$0xff]
    %v4412 = vld [vmem:[#allocation8 + $0xc8] sm:$0xff]
    %v4413 = vld [vmem:[#allocation8 + $0xd0] sm:$0xff]
    %v4414 = vld [vmem:[#allocation8 + $0xd8] sm:$0xff]
    %v4415 = vld [vmem:[#allocation8 + $0xe0] sm:$0xff]
    %v4416 = vld [vmem:[#allocation8 + $0xe8] sm:$0xff]
    %v4417 = vld [vmem:[#allocation8 + $0xf0] sm:$0xff]
    %v4418 = vld [vmem:[#allocation8 + $0xf8] sm:$0xff]
    %v4419 = vld [vmem:[#allocation8 + $0x100] sm:$0xff]
    %v4420 = vld [vmem:[#allocation8 + $0x108] sm:$0xff]
    %v4421 = vld [vmem:[#allocation8 + $0x110] sm:$0xff]
    %v4422 = vld [vmem:[#allocation8 + $0x118] sm:$0xff]
    %v4423 = vld [vmem:[#allocation8 + $0x120] sm:$0xff]
    %v4424 = vld [vmem:[#allocation8 + $0x128] sm:$0xff]
    %v4425 = vld [vmem:[#allocation8 + $0x130] sm:$0xff]
    %v4426 = vld [vmem:[#allocation8 + $0x138] sm:$0xff]
    %v4427 = vld [vmem:[#allocation8 + $0x140] sm:$0xff]
    %v4428 = vld [vmem:[#allocation8 + $0x148] sm:$0xff]
    %v4429 = vld [vmem:[#allocation8 + $0x150] sm:$0xff]
    %v4430 = vld [vmem:[#allocation8 + $0x158] sm:$0xff]
    %v4431 = vld [vmem:[#allocation8 + $0x160] sm:$0xff]
    %v4432 = vld [vmem:[#allocation8 + $0x168] sm:$0xff]
    %v4433 = vld [vmem:[#allocation8 + $0x170] sm:$0xff]
    %v4434 = vld [vmem:[#allocation8 + $0x178] sm:$0xff]
    %v4435 = vld [vmem:[#allocation8 + $0x180] sm:$0xff]
    %v4436 = vld [vmem:[#allocation8 + $0x188] sm:$0xff]
    %v4437 = vld [vmem:[#allocation8 + $0x190] sm:$0xff]
    %v4438 = vld [vmem:[#allocation8 + $0x198] sm:$0xff]
    %v4439 = vld [vmem:[#allocation8 + $0x1a0] sm:$0xff]
    %v4440 = vld [vmem:[#allocation8 + $0x1a8] sm:$0xff]
    %v4441 = vld [vmem:[#allocation8 + $0x1b0] sm:$0xff]
    %v4442 = vld [vmem:[#allocation8 + $0x1b8] sm:$0xff]
    %v4443 = vld [vmem:[%s14] sm:$0x1]
    %v4445 = vperm.slane %v4443, 0
    %v4448 = vsel %vm2869, %v4326, 0
    %v4451 = vsel %vm2869, %v4330, 0
    %v4454 = vsel %vm2869, %v4334, 0
    %v4457 = vsel %vm2869, %v4338, 0
    %v4460 = vsel %vm2869, %v4342, 0
    %v4463 = vsel %vm2869, %v4346, 0
    %v4466 = vsel %vm2869, %v4350, 0
    %v4469 = vsel %vm2869, %v4354, 0
    %v4472 = vsel %vm2869, %v4358, 0
    %v4475 = vsel %vm2869, %v4362, 0
    %v4478 = vsel %vm2869, %v4366, 0
    %v4481 = vsel %vm2869, %v4370, 0
    %v4484 = vsel %vm2869, %v4374, 0
    %v4487 = vsel %vm2869, %v4378, 0
    %v4490 = vsel %vm2869, %v4382, 0
    %v4493 = vsel %vm2869, %v4386, 0
    %4495 = vmatpush.msra.mxu0 %v4402
    %4496 = vmatpush.msra.mxu0 %v4401
    %4497 = vmatpush.msra.mxu0 %v4400
    %4498 = vmatpush.msra.mxu0 %v4399
    %4499 = vmatpush.msra.mxu0 %v4398
    %4500 = vmatpush.msra.mxu0 %v4397
    %4501 = vmatpush.msra.mxu0 %v4396
    %4502 = vmatpush.msra.mxu0 %v4395
    %4503 = vmatpush.msra.mxu0 %v4394
    %4504 = vmatpush.msra.mxu0 %v4393
    %4505 = vmatpush.msra.mxu0 %v4392
    %4506 = vmatpush.msra.mxu0 %v4391
    %4507 = vmatpush.msra.mxu0 %v4390
    %4508 = vmatpush.msra.mxu0 %v4389
    %4509 = vmatpush.msra.mxu0 %v4388
    %4510 = vmatpush.msra.mxu0 %v4387
    %4511 = vmatmul.f32.gmra.mxu0 %v4323
    %v4512 = vpop.f32.mrf.mxu0
    %v4513 = vadd.f32 %v4445, %v4512
    %4514 = vmatmul.f32.gmra.mxu0 %v4327
    %v4515 = vpop.f32.mrf.mxu0
    %v4516 = vadd.f32 %v4445, %v4515
    %4517 = vmatmul.f32.gmra.mxu0 %v4331
    %v4518 = vpop.f32.mrf.mxu0
    %v4519 = vadd.f32 %v4445, %v4518
    %4520 = vmatmul.f32.gmra.mxu0 %v4335
    %v4521 = vpop.f32.mrf.mxu0
    %v4522 = vadd.f32 %v4445, %v4521
    %4523 = vmatmul.f32.gmra.mxu0 %v4339
    %v4524 = vpop.f32.mrf.mxu0
    %v4525 = vadd.f32 %v4445, %v4524
    %4526 = vmatmul.f32.gmra.mxu0 %v4343
    %v4527 = vpop.f32.mrf.mxu0
    %v4528 = vadd.f32 %v4445, %v4527
    %4529 = vmatmul.f32.gmra.mxu0 %v4347
    %v4530 = vpop.f32.mrf.mxu0
    %4531 = vmatmul.f32.gmra.mxu0 %v4351
    %v4532 = vpop.f32.mrf.mxu0
    %4533 = vmatmul.f32.gmra.mxu0 %v4355
    %v4534 = vpop.f32.mrf.mxu0
    %v4535 = vadd.f32 %v4445, %v4534
    %4536 = vmatmul.f32.gmra.mxu0 %v4359
    %v4537 = vpop.f32.mrf.mxu0
    %v4538 = vadd.f32 %v4445, %v4537
    %4539 = vmatmul.f32.gmra.mxu0 %v4363
    %v4540 = vpop.f32.mrf.mxu0
    %v4541 = vadd.f32 %v4445, %v4540
    %4542 = vmatmul.f32.gmra.mxu0 %v4367
    %v4543 = vpop.f32.mrf.mxu0
    %v4544 = vadd.f32 %v4445, %v4543
    %4545 = vmatmul.f32.gmra.mxu0 %v4371
    %v4546 = vpop.f32.mrf.mxu0
    %v4547 = vadd.f32 %v4445, %v4546
    %4548 = vmatmul.f32.gmra.mxu0 %v4375
    %v4549 = vpop.f32.mrf.mxu0
    %v4550 = vadd.f32 %v4445, %v4549
    %4551 = vmatmul.f32.gmra.mxu0 %v4379
    %v4552 = vpop.f32.mrf.mxu0
    %4553 = vmatmul.f32.gmra.mxu0 %v4383
    %v4554 = vpop.f32.mrf.mxu0
    %4555 = vdwg.mxu0
    %4556 = vmatpush.msra.mxu0 %v4418
    %4557 = vmatpush.msra.mxu0 %v4417
    %4558 = vmatpush.msra.mxu0 %v4416
    %4559 = vmatpush.msra.mxu0 %v4415
    %4560 = vmatpush.msra.mxu0 %v4414
    %4561 = vmatpush.msra.mxu0 %v4413
    %4562 = vmatpush.msra.mxu0 %v4412
    %4563 = vmatpush.msra.mxu0 %v4411
    %4564 = vmatpush.msra.mxu0 %v4410
    %4565 = vmatpush.msra.mxu0 %v4409
    %4566 = vmatpush.msra.mxu0 %v4408
    %4567 = vmatpush.msra.mxu0 %v4407
    %4568 = vmatpush.msra.mxu0 %v4406
    %4569 = vmatpush.msra.mxu0 %v4405
    %4570 = vmatpush.msra.mxu0 %v4404
    %4571 = vmatpush.msra.mxu0 %v4403
    %4572 = vmatmul.f32.gmra.mxu0 %v4324
    %v4573 = vpop.f32.mrf.mxu0
    %v4574 = vadd.f32 %v4513, %v4573
    %4575 = vmatmul.f32.gmra.mxu0 %v4328
    %v4576 = vpop.f32.mrf.mxu0
    %v4577 = vadd.f32 %v4516, %v4576
    %4578 = vmatmul.f32.gmra.mxu0 %v4332
    %v4579 = vpop.f32.mrf.mxu0
    %v4580 = vadd.f32 %v4519, %v4579
    %4581 = vmatmul.f32.gmra.mxu0 %v4336
    %v4582 = vpop.f32.mrf.mxu0
    %v4583 = vadd.f32 %v4522, %v4582
    %4584 = vmatmul.f32.gmra.mxu0 %v4340
    %v4585 = vpop.f32.mrf.mxu0
    %v4586 = vadd.f32 %v4525, %v4585
    %4587 = vmatmul.f32.gmra.mxu0 %v4344
    %v4588 = vpop.f32.mrf.mxu0
    %v4589 = vadd.f32 %v4528, %v4588
    %4590 = vmatmul.f32.gmra.mxu0 %v4348
    %v4591 = vpop.f32.mrf.mxu0
    %4592 = vmatmul.f32.gmra.mxu0 %v4352
    %v4593 = vpop.f32.mrf.mxu0
    %4594 = vmatmul.f32.gmra.mxu0 %v4356
    %v4595 = vpop.f32.mrf.mxu0
    %v4596 = vadd.f32 %v4535, %v4595
    %4597 = vmatmul.f32.gmra.mxu0 %v4360
    %v4598 = vpop.f32.mrf.mxu0
    %v4599 = vadd.f32 %v4538, %v4598
    %4600 = vmatmul.f32.gmra.mxu0 %v4364
    %v4601 = vpop.f32.mrf.mxu0
    %v4602 = vadd.f32 %v4541, %v4601
    %4603 = vmatmul.f32.gmra.mxu0 %v4368
    %v4604 = vpop.f32.mrf.mxu0
    %v4605 = vadd.f32 %v4544, %v4604
    %4606 = vmatmul.f32.gmra.mxu0 %v4372
    %v4607 = vpop.f32.mrf.mxu0
    %v4608 = vadd.f32 %v4547, %v4607
    %4609 = vmatmul.f32.gmra.mxu0 %v4376
    %v4610 = vpop.f32.mrf.mxu0
    %v4611 = vadd.f32 %v4550, %v4610
    %4612 = vmatmul.f32.gmra.mxu0 %v4380
    %v4613 = vpop.f32.mrf.mxu0
    %4614 = vmatmul.f32.gmra.mxu0 %v4384
    %v4615 = vpop.f32.mrf.mxu0
    %4616 = vdwg.mxu0
    %4617 = vmatpush.msra.mxu0 %v4434
    %4618 = vmatpush.msra.mxu0 %v4433
    %4619 = vmatpush.msra.mxu0 %v4432
    %4620 = vmatpush.msra.mxu0 %v4431
    %4621 = vmatpush.msra.mxu0 %v4430
    %4622 = vmatpush.msra.mxu0 %v4429
    %4623 = vmatpush.msra.mxu0 %v4428
    %4624 = vmatpush.msra.mxu0 %v4427
    %4625 = vmatpush.msra.mxu0 %v4426
    %4626 = vmatpush.msra.mxu0 %v4425
    %4627 = vmatpush.msra.mxu0 %v4424
    %4628 = vmatpush.msra.mxu0 %v4423
    %4629 = vmatpush.msra.mxu0 %v4422
    %4630 = vmatpush.msra.mxu0 %v4421
    %4631 = vmatpush.msra.mxu0 %v4420
    %4632 = vmatpush.msra.mxu0 %v4419
    %4633 = vmatmul.f32.gmra.mxu0 %v4325
    %v4634 = vpop.f32.mrf.mxu0
    %v4635 = vadd.f32 %v4574, %v4634
    %4636 = vmatmul.f32.gmra.mxu0 %v4329
    %v4637 = vpop.f32.mrf.mxu0
    %v4638 = vadd.f32 %v4577, %v4637
    %4639 = vmatmul.f32.gmra.mxu0 %v4333
    %v4640 = vpop.f32.mrf.mxu0
    %v4641 = vadd.f32 %v4580, %v4640
    %4642 = vmatmul.f32.gmra.mxu0 %v4337
    %v4643 = vpop.f32.mrf.mxu0
    %v4644 = vadd.f32 %v4583, %v4643
    %4645 = vmatmul.f32.gmra.mxu0 %v4341
    %v4646 = vpop.f32.mrf.mxu0
    %v4647 = vadd.f32 %v4586, %v4646
    %4648 = vmatmul.f32.gmra.mxu0 %v4345
    %v4649 = vpop.f32.mrf.mxu0
    %v4650 = vadd.f32 %v4589, %v4649
    %4651 = vmatmul.f32.gmra.mxu0 %v4349
    %v4652 = vpop.f32.mrf.mxu0
    %4653 = vmatmul.f32.gmra.mxu0 %v4353
    %v4654 = vpop.f32.mrf.mxu0
    %4655 = vmatmul.f32.gmra.mxu0 %v4357
    %v4656 = vpop.f32.mrf.mxu0
    %v4657 = vadd.f32 %v4596, %v4656
    %4658 = vmatmul.f32.gmra.mxu0 %v4361
    %v4659 = vpop.f32.mrf.mxu0
    %v4660 = vadd.f32 %v4599, %v4659
    %4661 = vmatmul.f32.gmra.mxu0 %v4365
    %v4662 = vpop.f32.mrf.mxu0
    %v4663 = vadd.f32 %v4602, %v4662
    %4664 = vmatmul.f32.gmra.mxu0 %v4369
    %v4665 = vpop.f32.mrf.mxu0
    %v4666 = vadd.f32 %v4605, %v4665
    %4667 = vmatmul.f32.gmra.mxu0 %v4373
    %v4668 = vpop.f32.mrf.mxu0
    %v4669 = vadd.f32 %v4608, %v4668
    %4670 = vmatmul.f32.gmra.mxu0 %v4377
    %v4671 = vpop.f32.mrf.mxu0
    %v4672 = vadd.f32 %v4611, %v4671
    %4673 = vmatmul.f32.gmra.mxu0 %v4381
    %v4674 = vpop.f32.mrf.mxu0
    %4675 = vmatmul.f32.gmra.mxu0 %v4385
    %v4676 = vpop.f32.mrf.mxu0
    %4677 = vdwg.mxu0
    %4678 = vmatpush.msra.mxu0 0.0
    %4679 = vmatpush.msra.mxu0 0.0
    %4680 = vmatpush.msra.mxu0 0.0
    %4681 = vmatpush.msra.mxu0 0.0
    %4682 = vmatpush.msra.mxu0 0.0
    %4683 = vmatpush.msra.mxu0 0.0
    %4684 = vmatpush.msra.mxu0 0.0
    %4685 = vmatpush.msra.mxu0 0.0
    %4686 = vmatpush.msra.mxu0 %v4442
    %4687 = vmatpush.msra.mxu0 %v4441
    %4688 = vmatpush.msra.mxu0 %v4440
    %4689 = vmatpush.msra.mxu0 %v4439
    %4690 = vmatpush.msra.mxu0 %v4438
    %4691 = vmatpush.msra.mxu0 %v4437
    %4692 = vmatpush.msra.mxu0 %v4436
    %4693 = vmatpush.msra.mxu0 %v4435
    %4694 = vmatmul.f32.gmra.mxu0 %v4448
    %v4695 = vpop.f32.mrf.mxu0
    %v4696 = vadd.f32 %v4635, %v4695
    %4697 = vmatmul.f32.gmra.mxu0 %v4451
    %v4698 = vpop.f32.mrf.mxu0
    %v4699 = vadd.f32 %v4638, %v4698
    %4700 = vmatmul.f32.gmra.mxu0 %v4454
    %v4701 = vpop.f32.mrf.mxu0
    %v4702 = vadd.f32 %v4641, %v4701
    %4703 = vmatmul.f32.gmra.mxu0 %v4457
    %v4704 = vpop.f32.mrf.mxu0
    %v4705 = vadd.f32 %v4644, %v4704
    %4706 = vmatmul.f32.gmra.mxu0 %v4460
    %v4707 = vpop.f32.mrf.mxu0
    %v4708 = vadd.f32 %v4647, %v4707
    %4709 = vmatmul.f32.gmra.mxu0 %v4463
    %v4710 = vpop.f32.mrf.mxu0
    %v4711 = vadd.f32 %v4650, %v4710
    %4712 = vmatmul.f32.gmra.mxu0 %v4466
    %v4713 = vpop.f32.mrf.mxu0
    %4714 = vmatmul.f32.gmra.mxu0 %v4469
    %v4715 = vpop.f32.mrf.mxu0
    %4716 = vmatmul.f32.gmra.mxu0 %v4472
    %v4717 = vpop.f32.mrf.mxu0
    %v4718 = vadd.f32 %v4657, %v4717
    %4719 = vmatmul.f32.gmra.mxu0 %v4475
    %v4720 = vpop.f32.mrf.mxu0
    %v4721 = vadd.f32 %v4660, %v4720
    %4722 = vmatmul.f32.gmra.mxu0 %v4478
    %v4723 = vpop.f32.mrf.mxu0
    %v4724 = vadd.f32 %v4663, %v4723
    %4725 = vmatmul.f32.gmra.mxu0 %v4481
    %v4726 = vpop.f32.mrf.mxu0
    %v4727 = vadd.f32 %v4666, %v4726
    %4728 = vmatmul.f32.gmra.mxu0 %v4484
    %v4729 = vpop.f32.mrf.mxu0
    %v4730 = vadd.f32 %v4669, %v4729
    %4731 = vmatmul.f32.gmra.mxu0 %v4487
    %v4732 = vpop.f32.mrf.mxu0
    %v4733 = vadd.f32 %v4672, %v4732
    %4734 = vmatmul.f32.gmra.mxu0 %v4490
    %v4735 = vpop.f32.mrf.mxu0
    %4736 = vmatmul.f32.gmra.mxu0 %v4493
    %v4737 = vpop.f32.mrf.mxu0
    %4738 = vdwg.mxu0
    %vm4739 = vcmp.ge.f32.partialorder %v4696, 0.0
    %vm4740 = vcmp.ge.f32.partialorder %v4699, 0.0
    %vm4741 = vcmp.ge.f32.partialorder %v4702, 0.0
    %vm4742 = vcmp.ge.f32.partialorder %v4705, 0.0
    %vm4743 = vcmp.ge.f32.partialorder %v4708, 0.0
    %vm4744 = vcmp.ge.f32.partialorder %v4711, 0.0
    %vm4745 = vcmp.ge.f32.partialorder %v4718, 0.0
    %vm4746 = vcmp.ge.f32.partialorder %v4721, 0.0
    %vm4747 = vcmp.ge.f32.partialorder %v4724, 0.0
    %vm4748 = vcmp.ge.f32.partialorder %v4727, 0.0
    %vm4749 = vcmp.ge.f32.partialorder %v4730, 0.0
    %vm4750 = vcmp.ge.f32.partialorder %v4733, 0.0
    %v4751 = vmul.f32 %v4696, 0.01
    %v4752 = vmul.f32 %v4699, 0.01
    %v4753 = vmul.f32 %v4702, 0.01
    %v4754 = vmul.f32 %v4705, 0.01
    %v4755 = vmul.f32 %v4708, 0.01
    %v4756 = vmul.f32 %v4711, 0.01
    %v4757 = vmul.f32 %v4718, 0.01
    %v4758 = vmul.f32 %v4721, 0.01
    %v4759 = vmul.f32 %v4724, 0.01
    %v4760 = vmul.f32 %v4727, 0.01
    %v4761 = vmul.f32 %v4730, 0.01
    %v4762 = vmul.f32 %v4733, 0.01
    %v4763 = vsel %vm4739, %v4696, %v4751
    %v4764 = vsel %vm4740, %v4699, %v4752
    %v4765 = vsel %vm4741, %v4702, %v4753
    %v4766 = vsel %vm4742, %v4705, %v4754
    %v4767 = vsel %vm4743, %v4708, %v4755
    %v4768 = vsel %vm4744, %v4711, %v4756
    %v4769 = vsel %vm4745, %v4718, %v4757
    %v4770 = vsel %vm4746, %v4721, %v4758
    %v4771 = vsel %vm4747, %v4724, %v4759
    %v4772 = vsel %vm4748, %v4727, %v4760
    %v4773 = vsel %vm4749, %v4730, %v4761
    %v4774 = vsel %vm4750, %v4733, %v4762
    %4775 = vst [vmem:[#allocation7] sm:$0x1] 0.0
    %v4781 = vrot.slane %v4763, 7
    %v4782 = vrot.slane %v4764, 7
    %v4783 = vsel %vm273, %v4781, %v4782
    %v4784 = vrot.slane %v4765, 7
    %v4785 = vsel %vm273, %v4782, %v4784
    %v4786 = vrot.slane %v4766, 7
    %v4787 = vsel %vm273, %v4784, %v4786
    %v4788 = vrot.slane %v4767, 7
    %v4789 = vsel %vm273, %v4786, %v4788
    %4795 = vst [vmem:[#allocation7] sm:$0xfe] %v4781
    %4796 = vst [vmem:[#allocation7 + $0x38] sm:$0xff] %v4783
    %4797 = vst [vmem:[#allocation7 + $0x70] sm:$0xff] %v4785
    %4798 = vst [vmem:[#allocation7 + $0xa8] sm:$0xff] %v4787
    %4799 = vst [vmem:[#allocation7 + $0xe0] sm:$0xff] %v4789
    %4800 = vst [vmem:[#allocation7 + $0x118] sm:$0xff] 0.0
    %4801 = vst [vmem:[#allocation7 + $0x150] sm:$0xff] 0.0
    %4802 = vst [vmem:[#allocation7 + $0x188] sm:$0xff] 0.0
    %4803 = vst [vmem:[#allocation7 + $0x8] sm:$0xff] %v4763
    %4804 = vst [vmem:[#allocation7 + $0x40] sm:$0xff] %v4764
    %4805 = vst [vmem:[#allocation7 + $0x78] sm:$0xff] %v4765
    %4806 = vst [vmem:[#allocation7 + $0xb0] sm:$0xff] %v4766
    %4807 = vst [vmem:[#allocation7 + $0xe8] sm:$0xff] %v4767
    %4808 = vst [vmem:[#allocation7 + $0x120] sm:$0xff] 0.0
    %4809 = vst [vmem:[#allocation7 + $0x158] sm:$0xff] 0.0
    %4810 = vst [vmem:[#allocation7 + $0x190] sm:$0xff] 0.0
    %v4812 = vrot.slane %v4763, 1
    %v4813 = vrot.slane %v4764, 1
    %v4814 = vsel %vm346, %v4812, %v4813
    %v4815 = vrot.slane %v4765, 1
    %v4816 = vsel %vm346, %v4813, %v4815
    %v4817 = vrot.slane %v4766, 1
    %v4818 = vsel %vm346, %v4815, %v4817
    %v4819 = vrot.slane %v4767, 1
    %v4820 = vsel %vm346, %v4817, %v4819
    %v4821 = vrot.slane %v4768, 1
    %v4822 = vsel %vm346, %v4819, %v4821
    %4828 = vst [vmem:[#allocation7 + $0x10] sm:$0xff] %v4814
    %4829 = vst [vmem:[#allocation7 + $0x48] sm:$0xff] %v4816
    %4830 = vst [vmem:[#allocation7 + $0x80] sm:$0xff] %v4818
    %4831 = vst [vmem:[#allocation7 + $0xb8] sm:$0xff] %v4820
    %4832 = vst [vmem:[#allocation7 + $0xf0] sm:$0xff] %v4822
    %4833 = vst [vmem:[#allocation7 + $0x128] sm:$0xff] 0.0
    %4834 = vst [vmem:[#allocation7 + $0x160] sm:$0xff] 0.0
    %4835 = vst [vmem:[#allocation7 + $0x198] sm:$0xff] 0.0
    %v4836 = vrot.slane %v4763, 2
    %v4837 = vrot.slane %v4764, 2
    %v4838 = vsel %vm398, %v4836, %v4837
    %v4839 = vrot.slane %v4765, 2
    %v4840 = vsel %vm398, %v4837, %v4839
    %v4841 = vrot.slane %v4766, 2
    %v4842 = vsel %vm398, %v4839, %v4841
    %v4843 = vrot.slane %v4767, 2
    %v4844 = vsel %vm398, %v4841, %v4843
    %v4845 = vrot.slane %v4768, 2
    %v4846 = vsel %vm398, %v4843, %v4845
    %4852 = vst [vmem:[#allocation7 + $0x18] sm:$0xff] %v4838
    %4853 = vst [vmem:[#allocation7 + $0x50] sm:$0xff] %v4840
    %4854 = vst [vmem:[#allocation7 + $0x88] sm:$0xff] %v4842
    %4855 = vst [vmem:[#allocation7 + $0xc0] sm:$0xff] %v4844
    %4856 = vst [vmem:[#allocation7 + $0xf8] sm:$0xff] %v4846
    %4857 = vst [vmem:[#allocation7 + $0x130] sm:$0xff] 0.0
    %4858 = vst [vmem:[#allocation7 + $0x168] sm:$0xff] 0.0
    %4859 = vst [vmem:[#allocation7 + $0x1a0] sm:$0xff] 0.0
    %v4860 = vrot.slane %v4763, 3
    %v4861 = vrot.slane %v4764, 3
    %v4862 = vsel %vm450, %v4860, %v4861
    %v4863 = vrot.slane %v4765, 3
    %v4864 = vsel %vm450, %v4861, %v4863
    %v4865 = vrot.slane %v4766, 3
    %v4866 = vsel %vm450, %v4863, %v4865
    %v4867 = vrot.slane %v4767, 3
    %v4868 = vsel %vm450, %v4865, %v4867
    %v4869 = vrot.slane %v4768, 3
    %v4870 = vsel %vm450, %v4867, %v4869
    %4876 = vst [vmem:[#allocation7 + $0x20] sm:$0xff] %v4862
    %4877 = vst [vmem:[#allocation7 + $0x58] sm:$0xff] %v4864
    %4878 = vst [vmem:[#allocation7 + $0x90] sm:$0xff] %v4866
    %4879 = vst [vmem:[#allocation7 + $0xc8] sm:$0xff] %v4868
    %4880 = vst [vmem:[#allocation7 + $0x100] sm:$0xff] %v4870
    %4881 = vst [vmem:[#allocation7 + $0x138] sm:$0xff] 0.0
    %4882 = vst [vmem:[#allocation7 + $0x170] sm:$0xff] 0.0
    %4883 = vst [vmem:[#allocation7 + $0x1a8] sm:$0xff] 0.0
    %v4884 = vrot.slane %v4763, 4
    %v4885 = vrot.slane %v4764, 4
    %v4886 = vsel %vm483, %v4884, %v4885
    %v4887 = vrot.slane %v4765, 4
    %v4888 = vsel %vm483, %v4885, %v4887
    %v4889 = vrot.slane %v4766, 4
    %v4890 = vsel %vm483, %v4887, %v4889
    %v4891 = vrot.slane %v4767, 4
    %v4892 = vsel %vm483, %v4889, %v4891
    %v4893 = vrot.slane %v4768, 4
    %v4894 = vsel %vm483, %v4891, %v4893
    %4900 = vst [vmem:[#allocation7 + $0x28] sm:$0xff] %v4886
    %4901 = vst [vmem:[#allocation7 + $0x60] sm:$0xff] %v4888
    %4902 = vst [vmem:[#allocation7 + $0x98] sm:$0xff] %v4890
    %4903 = vst [vmem:[#allocation7 + $0xd0] sm:$0xff] %v4892
    %4904 = vst [vmem:[#allocation7 + $0x108] sm:$0xff] %v4894
    %4905 = vst [vmem:[#allocation7 + $0x140] sm:$0xff] 0.0
    %4906 = vst [vmem:[#allocation7 + $0x178] sm:$0xff] 0.0
    %4907 = vst [vmem:[#allocation7 + $0x1b0] sm:$0xff] 0.0
    %v4908 = vrot.slane %v4763, 5
    %v4909 = vrot.slane %v4764, 5
    %v4910 = vsel %vm532, %v4908, %v4909
    %v4911 = vrot.slane %v4765, 5
    %v4912 = vsel %vm532, %v4909, %v4911
    %v4913 = vrot.slane %v4766, 5
    %v4914 = vsel %vm532, %v4911, %v4913
    %v4915 = vrot.slane %v4767, 5
    %v4916 = vsel %vm532, %v4913, %v4915
    %v4917 = vrot.slane %v4768, 5
    %v4918 = vsel %vm532, %v4915, %v4917
    %4924 = vst [vmem:[#allocation7 + $0x30] sm:$0xff] %v4910
    %4925 = vst [vmem:[#allocation7 + $0x68] sm:$0xff] %v4912
    %4926 = vst [vmem:[#allocation7 + $0xa0] sm:$0xff] %v4914
    %4927 = vst [vmem:[#allocation7 + $0xd8] sm:$0xff] %v4916
    %4928 = vst [vmem:[#allocation7 + $0x110] sm:$0x7f] %v4918
    %4929 = vst [vmem:[#allocation7 + $0x110] sm:$0x80] 0.0
    %4930 = vst [vmem:[#allocation7 + $0x148] sm:$0xff] 0.0
    %4931 = vst [vmem:[#allocation7 + $0x180] sm:$0xff] 0.0
    %4932 = vst [vmem:[#allocation7 + $0x1b8] sm:$0xff] 0.0
    %4933 = vst [vmem:[#allocation7 + $0x1c0] sm:$0x1] 0.0
    %v4939 = vrot.slane %v4769, 7
    %v4940 = vrot.slane %v4770, 7
    %v4941 = vsel %vm273, %v4939, %v4940
    %v4942 = vrot.slane %v4771, 7
    %v4943 = vsel %vm273, %v4940, %v4942
    %v4944 = vrot.slane %v4772, 7
    %v4945 = vsel %vm273, %v4942, %v4944
    %v4946 = vrot.slane %v4773, 7
    %v4947 = vsel %vm273, %v4944, %v4946
    %4953 = vst [vmem:[#allocation7 + $0x1c0] sm:$0xfe] %v4939
    %4954 = vst [vmem:[#allocation7 + $0x1f8] sm:$0xff] %v4941
    %4955 = vst [vmem:[#allocation7 + $0x230] sm:$0xff] %v4943
    %4956 = vst [vmem:[#allocation7 + $0x268] sm:$0xff] %v4945
    %4957 = vst [vmem:[#allocation7 + $0x2a0] sm:$0xff] %v4947
    %4958 = vst [vmem:[#allocation7 + $0x2d8] sm:$0xff] 0.0
    %4959 = vst [vmem:[#allocation7 + $0x310] sm:$0xff] 0.0
    %4960 = vst [vmem:[#allocation7 + $0x348] sm:$0xff] 0.0
    %4961 = vst [vmem:[#allocation7 + $0x1c8] sm:$0xff] %v4769
    %4962 = vst [vmem:[#allocation7 + $0x200] sm:$0xff] %v4770
    %4963 = vst [vmem:[#allocation7 + $0x238] sm:$0xff] %v4771
    %4964 = vst [vmem:[#allocation7 + $0x270] sm:$0xff] %v4772
    %4965 = vst [vmem:[#allocation7 + $0x2a8] sm:$0xff] %v4773
    %4966 = vst [vmem:[#allocation7 + $0x2e0] sm:$0xff] 0.0
    %4967 = vst [vmem:[#allocation7 + $0x318] sm:$0xff] 0.0
    %4968 = vst [vmem:[#allocation7 + $0x350] sm:$0xff] 0.0
    %v4970 = vrot.slane %v4769, 1
    %v4971 = vrot.slane %v4770, 1
    %v4972 = vsel %vm346, %v4970, %v4971
    %v4973 = vrot.slane %v4771, 1
    %v4974 = vsel %vm346, %v4971, %v4973
    %v4975 = vrot.slane %v4772, 1
    %v4976 = vsel %vm346, %v4973, %v4975
    %v4977 = vrot.slane %v4773, 1
    %v4978 = vsel %vm346, %v4975, %v4977
    %v4979 = vrot.slane %v4774, 1
    %v4980 = vsel %vm346, %v4977, %v4979
    %4986 = vst [vmem:[#allocation7 + $0x1d0] sm:$0xff] %v4972
    %4987 = vst [vmem:[#allocation7 + $0x208] sm:$0xff] %v4974
    %4988 = vst [vmem:[#allocation7 + $0x240] sm:$0xff] %v4976
    %4989 = vst [vmem:[#allocation7 + $0x278] sm:$0xff] %v4978
    %4990 = vst [vmem:[#allocation7 + $0x2b0] sm:$0xff] %v4980
    %4991 = vst [vmem:[#allocation7 + $0x2e8] sm:$0xff] 0.0
    %4992 = vst [vmem:[#allocation7 + $0x320] sm:$0xff] 0.0
    %4993 = vst [vmem:[#allocation7 + $0x358] sm:$0xff] 0.0
    %v4994 = vrot.slane %v4769, 2
    %v4995 = vrot.slane %v4770, 2
    %v4996 = vsel %vm398, %v4994, %v4995
    %v4997 = vrot.slane %v4771, 2
    %v4998 = vsel %vm398, %v4995, %v4997
    %v4999 = vrot.slane %v4772, 2
    %v5000 = vsel %vm398, %v4997, %v4999
    %v5001 = vrot.slane %v4773, 2
    %v5002 = vsel %vm398, %v4999, %v5001
    %v5003 = vrot.slane %v4774, 2
    %v5004 = vsel %vm398, %v5001, %v5003
    %5010 = vst [vmem:[#allocation7 + $0x1d8] sm:$0xff] %v4996
    %5011 = vst [vmem:[#allocation7 + $0x210] sm:$0xff] %v4998
    %5012 = vst [vmem:[#allocation7 + $0x248] sm:$0xff] %v5000
    %5013 = vst [vmem:[#allocation7 + $0x280] sm:$0xff] %v5002
    %5014 = vst [vmem:[#allocation7 + $0x2b8] sm:$0xff] %v5004
    %5015 = vst [vmem:[#allocation7 + $0x2f0] sm:$0xff] 0.0
    %5016 = vst [vmem:[#allocation7 + $0x328] sm:$0xff] 0.0
    %5017 = vst [vmem:[#allocation7 + $0x360] sm:$0xff] 0.0
    %v5018 = vrot.slane %v4769, 3
    %v5019 = vrot.slane %v4770, 3
    %v5020 = vsel %vm450, %v5018, %v5019
    %v5021 = vrot.slane %v4771, 3
    %v5022 = vsel %vm450, %v5019, %v5021
    %v5023 = vrot.slane %v4772, 3
    %v5024 = vsel %vm450, %v5021, %v5023
    %v5025 = vrot.slane %v4773, 3
    %v5026 = vsel %vm450, %v5023, %v5025
    %v5027 = vrot.slane %v4774, 3
    %v5028 = vsel %vm450, %v5025, %v5027
    %5034 = vst [vmem:[#allocation7 + $0x1e0] sm:$0xff] %v5020
    %5035 = vst [vmem:[#allocation7 + $0x218] sm:$0xff] %v5022
    %5036 = vst [vmem:[#allocation7 + $0x250] sm:$0xff] %v5024
    %5037 = vst [vmem:[#allocation7 + $0x288] sm:$0xff] %v5026
    %5038 = vst [vmem:[#allocation7 + $0x2c0] sm:$0xff] %v5028
    %5039 = vst [vmem:[#allocation7 + $0x2f8] sm:$0xff] 0.0
    %5040 = vst [vmem:[#allocation7 + $0x330] sm:$0xff] 0.0
    %5041 = vst [vmem:[#allocation7 + $0x368] sm:$0xff] 0.0
    %v5042 = vrot.slane %v4769, 4
    %v5043 = vrot.slane %v4770, 4
    %v5044 = vsel %vm483, %v5042, %v5043
    %v5045 = vrot.slane %v4771, 4
    %v5046 = vsel %vm483, %v5043, %v5045
    %v5047 = vrot.slane %v4772, 4
    %v5048 = vsel %vm483, %v5045, %v5047
    %v5049 = vrot.slane %v4773, 4
    %v5050 = vsel %vm483, %v5047, %v5049
    %v5051 = vrot.slane %v4774, 4
    %v5052 = vsel %vm483, %v5049, %v5051
    %5058 = vst [vmem:[#allocation7 + $0x1e8] sm:$0xff] %v5044
    %5059 = vst [vmem:[#allocation7 + $0x220] sm:$0xff] %v5046
    %5060 = vst [vmem:[#allocation7 + $0x258] sm:$0xff] %v5048
    %5061 = vst [vmem:[#allocation7 + $0x290] sm:$0xff] %v5050
    %5062 = vst [vmem:[#allocation7 + $0x2c8] sm:$0xff] %v5052
    %5063 = vst [vmem:[#allocation7 + $0x300] sm:$0xff] 0.0
    %5064 = vst [vmem:[#allocation7 + $0x338] sm:$0xff] 0.0
    %5065 = vst [vmem:[#allocation7 + $0x370] sm:$0xff] 0.0
    %v5066 = vrot.slane %v4769, 5
    %v5067 = vrot.slane %v4770, 5
    %v5068 = vsel %vm532, %v5066, %v5067
    %v5069 = vrot.slane %v4771, 5
    %v5070 = vsel %vm532, %v5067, %v5069
    %v5071 = vrot.slane %v4772, 5
    %v5072 = vsel %vm532, %v5069, %v5071
    %v5073 = vrot.slane %v4773, 5
    %v5074 = vsel %vm532, %v5071, %v5073
    %v5075 = vrot.slane %v4774, 5
    %v5076 = vsel %vm532, %v5073, %v5075
    %5082 = vst [vmem:[#allocation7 + $0x1f0] sm:$0xff] %v5068
    %5083 = vst [vmem:[#allocation7 + $0x228] sm:$0xff] %v5070
    %5084 = vst [vmem:[#allocation7 + $0x260] sm:$0xff] %v5072
    %5085 = vst [vmem:[#allocation7 + $0x298] sm:$0xff] %v5074
    %5086 = vst [vmem:[#allocation7 + $0x2d0] sm:$0x7f] %v5076
    %5087 = vst [vmem:[#allocation7 + $0x2d0] sm:$0x80] 0.0
    %5088 = vst [vmem:[#allocation7 + $0x308] sm:$0xff] 0.0
    %5089 = vst [vmem:[#allocation7 + $0x340] sm:$0xff] 0.0
    %5090 = vst [vmem:[#allocation7 + $0x378] sm:$0xff] 0.0
    %v5091 = vld [vmem:[#allocation7] sm:$0xff]
    %v5092 = vld [vmem:[#allocation7 + $0x8] sm:$0xff]
    %v5093 = vld [vmem:[#allocation7 + $0x10] sm:$0xff]
    %v5094 = vld [vmem:[#allocation7 + $0x18] sm:$0xff]
    %v5095 = vld [vmem:[#allocation7 + $0x20] sm:$0xff]
    %v5096 = vld [vmem:[#allocation7 + $0x28] sm:$0xff]
    %v5097 = vld [vmem:[#allocation7 + $0x30] sm:$0xff]
    %v5098 = vld [vmem:[#allocation7 + $0x38] sm:$0xff]
    %v5099 = vld [vmem:[#allocation7 + $0x40] sm:$0xff]
    %v5100 = vld [vmem:[#allocation7 + $0x48] sm:$0xff]
    %v5101 = vld [vmem:[#allocation7 + $0x50] sm:$0xff]
    %v5102 = vld [vmem:[#allocation7 + $0x58] sm:$0xff]
    %v5103 = vld [vmem:[#allocation7 + $0x60] sm:$0xff]
    %v5104 = vld [vmem:[#allocation7 + $0x68] sm:$0xff]
    %v5105 = vld [vmem:[#allocation7 + $0x70] sm:$0xff]
    %v5106 = vld [vmem:[#allocation7 + $0x78] sm:$0xff]
    %v5107 = vld [vmem:[#allocation7 + $0x80] sm:$0xff]
    %v5108 = vld [vmem:[#allocation7 + $0x88] sm:$0xff]
    %v5109 = vld [vmem:[#allocation7 + $0x90] sm:$0xff]
    %v5110 = vld [vmem:[#allocation7 + $0x98] sm:$0xff]
    %v5111 = vld [vmem:[#allocation7 + $0xa0] sm:$0xff]
    %v5112 = vld [vmem:[#allocation7 + $0xa8] sm:$0xff]
    %v5113 = vld [vmem:[#allocation7 + $0xb0] sm:$0xff]
    %v5114 = vld [vmem:[#allocation7 + $0xb8] sm:$0xff]
    %v5115 = vld [vmem:[#allocation7 + $0xc0] sm:$0xff]
    %v5116 = vld [vmem:[#allocation7 + $0xc8] sm:$0xff]
    %v5117 = vld [vmem:[#allocation7 + $0xd0] sm:$0xff]
    %v5118 = vld [vmem:[#allocation7 + $0xd8] sm:$0xff]
    %v5119 = vld [vmem:[#allocation7 + $0xe0] sm:$0xff]
    %v5120 = vld [vmem:[#allocation7 + $0xe8] sm:$0xff]
    %v5121 = vld [vmem:[#allocation7 + $0xf0] sm:$0xff]
    %v5122 = vld [vmem:[#allocation7 + $0xf8] sm:$0xff]
    %v5123 = vld [vmem:[#allocation7 + $0x100] sm:$0xff]
    %v5124 = vld [vmem:[#allocation7 + $0x108] sm:$0xff]
    %v5125 = vld [vmem:[#allocation7 + $0x110] sm:$0xff]
    %v5126 = vld [vmem:[#allocation7 + $0x118] sm:$0xff]
    %v5127 = vld [vmem:[#allocation7 + $0x120] sm:$0xff]
    %v5128 = vld [vmem:[#allocation7 + $0x128] sm:$0xff]
    %v5129 = vld [vmem:[#allocation7 + $0x130] sm:$0xff]
    %v5130 = vld [vmem:[#allocation7 + $0x138] sm:$0xff]
    %v5131 = vld [vmem:[#allocation7 + $0x140] sm:$0xff]
    %v5132 = vld [vmem:[#allocation7 + $0x148] sm:$0xff]
    %v5133 = vld [vmem:[#allocation7 + $0x150] sm:$0xff]
    %v5134 = vld [vmem:[#allocation7 + $0x158] sm:$0xff]
    %v5135 = vld [vmem:[#allocation7 + $0x160] sm:$0xff]
    %v5136 = vld [vmem:[#allocation7 + $0x168] sm:$0xff]
    %v5137 = vld [vmem:[#allocation7 + $0x170] sm:$0xff]
    %v5138 = vld [vmem:[#allocation7 + $0x178] sm:$0xff]
    %v5139 = vld [vmem:[#allocation7 + $0x180] sm:$0xff]
    %v5140 = vld [vmem:[#allocation7 + $0x188] sm:$0xff]
    %v5141 = vld [vmem:[#allocation7 + $0x190] sm:$0xff]
    %v5142 = vld [vmem:[#allocation7 + $0x198] sm:$0xff]
    %v5143 = vld [vmem:[#allocation7 + $0x1a0] sm:$0xff]
    %v5144 = vld [vmem:[#allocation7 + $0x1a8] sm:$0xff]
    %v5145 = vld [vmem:[#allocation7 + $0x1b0] sm:$0xff]
    %v5146 = vld [vmem:[#allocation7 + $0x1b8] sm:$0xff]
    %v5147 = vld [vmem:[#allocation7 + $0x1c0] sm:$0xff]
    %v5148 = vld [vmem:[#allocation7 + $0x1c8] sm:$0xff]
    %v5149 = vld [vmem:[#allocation7 + $0x1d0] sm:$0xff]
    %v5150 = vld [vmem:[#allocation7 + $0x1d8] sm:$0xff]
    %v5151 = vld [vmem:[#allocation7 + $0x1e0] sm:$0xff]
    %v5152 = vld [vmem:[#allocation7 + $0x1e8] sm:$0xff]
    %v5153 = vld [vmem:[#allocation7 + $0x1f0] sm:$0xff]
    %v5154 = vld [vmem:[#allocation7 + $0x1f8] sm:$0xff]
    %v5155 = vld [vmem:[#allocation7 + $0x200] sm:$0xff]
    %v5156 = vld [vmem:[#allocation7 + $0x208] sm:$0xff]
    %v5157 = vld [vmem:[#allocation7 + $0x210] sm:$0xff]
    %v5158 = vld [vmem:[#allocation7 + $0x218] sm:$0xff]
    %v5159 = vld [vmem:[#allocation7 + $0x220] sm:$0xff]
    %v5160 = vld [vmem:[#allocation7 + $0x228] sm:$0xff]
    %v5161 = vld [vmem:[#allocation7 + $0x230] sm:$0xff]
    %v5162 = vld [vmem:[#allocation7 + $0x238] sm:$0xff]
    %v5163 = vld [vmem:[#allocation7 + $0x240] sm:$0xff]
    %v5164 = vld [vmem:[#allocation7 + $0x248] sm:$0xff]
    %v5165 = vld [vmem:[#allocation7 + $0x250] sm:$0xff]
    %v5166 = vld [vmem:[#allocation7 + $0x258] sm:$0xff]
    %v5167 = vld [vmem:[#allocation7 + $0x260] sm:$0xff]
    %v5168 = vld [vmem:[#allocation7 + $0x268] sm:$0xff]
    %v5169 = vld [vmem:[#allocation7 + $0x270] sm:$0xff]
    %v5170 = vld [vmem:[#allocation7 + $0x278] sm:$0xff]
    %v5171 = vld [vmem:[#allocation7 + $0x280] sm:$0xff]
    %v5172 = vld [vmem:[#allocation7 + $0x288] sm:$0xff]
    %v5173 = vld [vmem:[#allocation7 + $0x290] sm:$0xff]
    %v5174 = vld [vmem:[#allocation7 + $0x298] sm:$0xff]
    %v5175 = vld [vmem:[#allocation7 + $0x2a0] sm:$0xff]
    %v5176 = vld [vmem:[#allocation7 + $0x2a8] sm:$0xff]
    %v5177 = vld [vmem:[#allocation7 + $0x2b0] sm:$0xff]
    %v5178 = vld [vmem:[#allocation7 + $0x2b8] sm:$0xff]
    %v5179 = vld [vmem:[#allocation7 + $0x2c0] sm:$0xff]
    %v5180 = vld [vmem:[#allocation7 + $0x2c8] sm:$0xff]
    %v5181 = vld [vmem:[#allocation7 + $0x2d0] sm:$0xff]
    %v5182 = vld [vmem:[#allocation7 + $0x2d8] sm:$0xff]
    %v5183 = vld [vmem:[#allocation7 + $0x2e0] sm:$0xff]
    %v5184 = vld [vmem:[#allocation7 + $0x2e8] sm:$0xff]
    %v5185 = vld [vmem:[#allocation7 + $0x2f0] sm:$0xff]
    %v5186 = vld [vmem:[#allocation7 + $0x2f8] sm:$0xff]
    %v5187 = vld [vmem:[#allocation7 + $0x300] sm:$0xff]
    %v5188 = vld [vmem:[#allocation7 + $0x308] sm:$0xff]
    %v5189 = vld [vmem:[#allocation7 + $0x310] sm:$0xff]
    %v5190 = vld [vmem:[#allocation7 + $0x318] sm:$0xff]
    %v5191 = vld [vmem:[#allocation7 + $0x320] sm:$0xff]
    %v5192 = vld [vmem:[#allocation7 + $0x328] sm:$0xff]
    %v5193 = vld [vmem:[#allocation7 + $0x330] sm:$0xff]
    %v5194 = vld [vmem:[#allocation7 + $0x338] sm:$0xff]
    %v5195 = vld [vmem:[#allocation7 + $0x340] sm:$0xff]
    %v5196 = vld [vmem:[#allocation7 + $0x348] sm:$0xff]
    %v5197 = vld [vmem:[#allocation7 + $0x350] sm:$0xff]
    %v5198 = vld [vmem:[#allocation7 + $0x358] sm:$0xff]
    %v5199 = vld [vmem:[#allocation7 + $0x360] sm:$0xff]
    %v5200 = vld [vmem:[#allocation7 + $0x368] sm:$0xff]
    %v5201 = vld [vmem:[#allocation7 + $0x370] sm:$0xff]
    %v5202 = vld [vmem:[#allocation7 + $0x378] sm:$0xff]
    %v5203 = vld [vmem:[%s15] sm:$0xff]
    %v5204 = vld [vmem:[%s15 + $0x8] sm:$0xff]
    %v5205 = vld [vmem:[%s15 + $0x10] sm:$0xff]
    %v5206 = vld [vmem:[%s15 + $0x18] sm:$0xff]
    %v5207 = vld [vmem:[%s15 + $0x20] sm:$0xff]
    %v5208 = vld [vmem:[%s15 + $0x28] sm:$0xff]
    %v5209 = vld [vmem:[%s15 + $0x30] sm:$0xff]
    %v5210 = vld [vmem:[%s15 + $0x38] sm:$0xff]
    %v5211 = vld [vmem:[%s15 + $0x40] sm:$0xff]
    %v5212 = vld [vmem:[%s15 + $0x48] sm:$0xff]
    %v5213 = vld [vmem:[%s15 + $0x50] sm:$0xff]
    %v5214 = vld [vmem:[%s15 + $0x58] sm:$0xff]
    %v5215 = vld [vmem:[%s15 + $0x60] sm:$0xff]
    %v5216 = vld [vmem:[%s15 + $0x68] sm:$0xff]
    %v5217 = vld [vmem:[%s15 + $0x70] sm:$0xff]
    %v5218 = vld [vmem:[%s15 + $0x78] sm:$0xff]
    %v5219 = vld [vmem:[%s15 + $0x80] sm:$0xff]
    %v5220 = vld [vmem:[%s15 + $0x88] sm:$0xff]
    %v5221 = vld [vmem:[%s15 + $0x90] sm:$0xff]
    %v5222 = vld [vmem:[%s15 + $0x98] sm:$0xff]
    %v5223 = vld [vmem:[%s15 + $0xa0] sm:$0xff]
    %v5224 = vld [vmem:[%s15 + $0xa8] sm:$0xff]
    %v5225 = vld [vmem:[%s15 + $0xb0] sm:$0xff]
    %v5226 = vld [vmem:[%s15 + $0xb8] sm:$0xff]
    %v5227 = vld [vmem:[%s15 + $0xc0] sm:$0xff]
    %v5228 = vld [vmem:[%s15 + $0xc8] sm:$0xff]
    %v5229 = vld [vmem:[%s15 + $0xd0] sm:$0xff]
    %v5230 = vld [vmem:[%s15 + $0xd8] sm:$0xff]
    %v5231 = vld [vmem:[%s15 + $0xe0] sm:$0xff]
    %v5232 = vld [vmem:[%s15 + $0xe8] sm:$0xff]
    %v5233 = vld [vmem:[%s15 + $0xf0] sm:$0xff]
    %v5234 = vld [vmem:[%s15 + $0xf8] sm:$0xff]
    %v5235 = vld [vmem:[%s15 + $0x100] sm:$0xff]
    %v5236 = vld [vmem:[%s15 + $0x108] sm:$0xff]
    %v5237 = vld [vmem:[%s15 + $0x110] sm:$0xff]
    %v5238 = vld [vmem:[%s15 + $0x118] sm:$0xff]
    %v5239 = vld [vmem:[%s15 + $0x120] sm:$0xff]
    %v5240 = vld [vmem:[%s15 + $0x128] sm:$0xff]
    %v5241 = vld [vmem:[%s15 + $0x130] sm:$0xff]
    %v5242 = vld [vmem:[%s15 + $0x138] sm:$0xff]
    %v5243 = vld [vmem:[%s15 + $0x140] sm:$0xff]
    %v5244 = vld [vmem:[%s15 + $0x148] sm:$0xff]
    %v5245 = vld [vmem:[%s15 + $0x150] sm:$0xff]
    %v5246 = vld [vmem:[%s15 + $0x158] sm:$0xff]
    %v5247 = vld [vmem:[%s15 + $0x160] sm:$0xff]
    %v5248 = vld [vmem:[%s15 + $0x168] sm:$0xff]
    %v5249 = vld [vmem:[%s15 + $0x170] sm:$0xff]
    %v5250 = vld [vmem:[%s15 + $0x178] sm:$0xff]
    %v5251 = vld [vmem:[%s15 + $0x180] sm:$0xff]
    %v5252 = vld [vmem:[%s15 + $0x188] sm:$0xff]
    %v5253 = vld [vmem:[%s15 + $0x190] sm:$0xff]
    %v5254 = vld [vmem:[%s15 + $0x198] sm:$0xff]
    %v5255 = vld [vmem:[%s15 + $0x1a0] sm:$0xff]
    %v5256 = vld [vmem:[%s15 + $0x1a8] sm:$0xff]
    %v5257 = vld [vmem:[%s15 + $0x1b0] sm:$0xff]
    %v5258 = vld [vmem:[%s15 + $0x1b8] sm:$0xff]
    %v5259 = vld [vmem:[%s15 + $0x1c0] sm:$0xff]
    %v5260 = vld [vmem:[%s15 + $0x1c8] sm:$0xff]
    %v5261 = vld [vmem:[%s15 + $0x1d0] sm:$0xff]
    %v5262 = vld [vmem:[%s15 + $0x1d8] sm:$0xff]
    %v5263 = vld [vmem:[%s15 + $0x1e0] sm:$0xff]
    %v5264 = vld [vmem:[%s15 + $0x1e8] sm:$0xff]
    %v5265 = vld [vmem:[%s15 + $0x1f0] sm:$0xff]
    %v5266 = vld [vmem:[%s15 + $0x1f8] sm:$0xff]
    %v5267 = vld [vmem:[%s15 + $0x200] sm:$0xff]
    %v5268 = vld [vmem:[%s15 + $0x208] sm:$0xff]
    %v5269 = vld [vmem:[%s15 + $0x210] sm:$0xff]
    %v5270 = vld [vmem:[%s15 + $0x218] sm:$0xff]
    %v5271 = vld [vmem:[%s15 + $0x220] sm:$0xff]
    %v5272 = vld [vmem:[%s15 + $0x228] sm:$0xff]
    %v5273 = vld [vmem:[%s15 + $0x230] sm:$0xff]
    %v5274 = vld [vmem:[%s15 + $0x238] sm:$0xff]
    %v5275 = vld [vmem:[%s15 + $0x240] sm:$0xff]
    %v5276 = vld [vmem:[%s15 + $0x248] sm:$0xff]
    %v5277 = vld [vmem:[%s15 + $0x250] sm:$0xff]
    %v5278 = vld [vmem:[%s15 + $0x258] sm:$0xff]
    %v5279 = vld [vmem:[%s15 + $0x260] sm:$0xff]
    %v5280 = vld [vmem:[%s15 + $0x268] sm:$0xff]
    %v5281 = vld [vmem:[%s15 + $0x270] sm:$0xff]
    %v5282 = vld [vmem:[%s15 + $0x278] sm:$0xff]
    %v5283 = vld [vmem:[%s15 + $0x280] sm:$0xff]
    %v5284 = vld [vmem:[%s15 + $0x288] sm:$0xff]
    %v5285 = vld [vmem:[%s15 + $0x290] sm:$0xff]
    %v5286 = vld [vmem:[%s15 + $0x298] sm:$0xff]
    %v5287 = vld [vmem:[%s15 + $0x2a0] sm:$0xff]
    %v5288 = vld [vmem:[%s15 + $0x2a8] sm:$0xff]
    %v5289 = vld [vmem:[%s15 + $0x2b0] sm:$0xff]
    %v5290 = vld [vmem:[%s15 + $0x2b8] sm:$0xff]
    %v5291 = vld [vmem:[%s15 + $0x2c0] sm:$0xff]
    %v5292 = vld [vmem:[%s15 + $0x2c8] sm:$0xff]
    %v5293 = vld [vmem:[%s15 + $0x2d0] sm:$0xff]
    %v5294 = vld [vmem:[%s15 + $0x2d8] sm:$0xff]
    %v5295 = vld [vmem:[%s15 + $0x2e0] sm:$0xff]
    %v5296 = vld [vmem:[%s15 + $0x2e8] sm:$0xff]
    %v5297 = vld [vmem:[%s15 + $0x2f0] sm:$0xff]
    %v5298 = vld [vmem:[%s15 + $0x2f8] sm:$0xff]
    %v5299 = vld [vmem:[%s15 + $0x300] sm:$0xff]
    %v5300 = vld [vmem:[%s15 + $0x308] sm:$0xff]
    %v5301 = vld [vmem:[%s15 + $0x310] sm:$0xff]
    %v5302 = vld [vmem:[%s15 + $0x318] sm:$0xff]
    %v5303 = vld [vmem:[%s15 + $0x320] sm:$0xff]
    %v5304 = vld [vmem:[%s15 + $0x328] sm:$0xff]
    %v5305 = vld [vmem:[%s15 + $0x330] sm:$0xff]
    %v5306 = vld [vmem:[%s15 + $0x338] sm:$0xff]
    %v5307 = vld [vmem:[%s15 + $0x340] sm:$0xff]
    %v5308 = vld [vmem:[%s15 + $0x348] sm:$0xff]
    %v5309 = vld [vmem:[%s15 + $0x350] sm:$0xff]
    %v5310 = vld [vmem:[%s15 + $0x358] sm:$0xff]
    %v5311 = vld [vmem:[%s15 + $0x360] sm:$0xff]
    %v5312 = vld [vmem:[%s15 + $0x368] sm:$0xff]
    %v5313 = vld [vmem:[%s15 + $0x370] sm:$0xff]
    %v5314 = vld [vmem:[%s15 + $0x378] sm:$0xff]
    %v5315 = vld [vmem:[%s16] sm:$0x1]
    %v5317 = vperm.slane %v5315, 0
    %5319 = vmatpush.msra.mxu0 %v5218
    %5320 = vmatpush.msra.mxu0 %v5217
    %5321 = vmatpush.msra.mxu0 %v5216
    %5322 = vmatpush.msra.mxu0 %v5215
    %5323 = vmatpush.msra.mxu0 %v5214
    %5324 = vmatpush.msra.mxu0 %v5213
    %5325 = vmatpush.msra.mxu0 %v5212
    %5326 = vmatpush.msra.mxu0 %v5211
    %5327 = vmatpush.msra.mxu0 %v5210
    %5328 = vmatpush.msra.mxu0 %v5209
    %5329 = vmatpush.msra.mxu0 %v5208
    %5330 = vmatpush.msra.mxu0 %v5207
    %5331 = vmatpush.msra.mxu0 %v5206
    %5332 = vmatpush.msra.mxu0 %v5205
    %5333 = vmatpush.msra.mxu0 %v5204
    %5334 = vmatpush.msra.mxu0 %v5203
    %5335 = vmatmul.f32.gmra.mxu0 %v5091
    %v5336 = vpop.f32.mrf.mxu0
    %v5337 = vadd.f32 %v5317, %v5336
    %5338 = vmatmul.f32.gmra.mxu0 %v5098
    %v5339 = vpop.f32.mrf.mxu0
    %v5340 = vadd.f32 %v5317, %v5339
    %5341 = vmatmul.f32.gmra.mxu0 %v5105
    %v5342 = vpop.f32.mrf.mxu0
    %v5343 = vadd.f32 %v5317, %v5342
    %5344 = vmatmul.f32.gmra.mxu0 %v5112
    %v5345 = vpop.f32.mrf.mxu0
    %v5346 = vadd.f32 %v5317, %v5345
    %5347 = vmatmul.f32.gmra.mxu0 %v5119
    %v5348 = vpop.f32.mrf.mxu0
    %v5349 = vadd.f32 %v5317, %v5348
    %5350 = vmatmul.f32.gmra.mxu0 %v5126
    %v5351 = vpop.f32.mrf.mxu0
    %5352 = vmatmul.f32.gmra.mxu0 %v5133
    %v5353 = vpop.f32.mrf.mxu0
    %5354 = vmatmul.f32.gmra.mxu0 %v5140
    %v5355 = vpop.f32.mrf.mxu0
    %5356 = vmatmul.f32.gmra.mxu0 %v5147
    %v5357 = vpop.f32.mrf.mxu0
    %v5358 = vadd.f32 %v5317, %v5357
    %5359 = vmatmul.f32.gmra.mxu0 %v5154
    %v5360 = vpop.f32.mrf.mxu0
    %v5361 = vadd.f32 %v5317, %v5360
    %5362 = vmatmul.f32.gmra.mxu0 %v5161
    %v5363 = vpop.f32.mrf.mxu0
    %v5364 = vadd.f32 %v5317, %v5363
    %5365 = vmatmul.f32.gmra.mxu0 %v5168
    %v5366 = vpop.f32.mrf.mxu0
    %v5367 = vadd.f32 %v5317, %v5366
    %5368 = vmatmul.f32.gmra.mxu0 %v5175
    %v5369 = vpop.f32.mrf.mxu0
    %v5370 = vadd.f32 %v5317, %v5369
    %5371 = vmatmul.f32.gmra.mxu0 %v5182
    %v5372 = vpop.f32.mrf.mxu0
    %5373 = vmatmul.f32.gmra.mxu0 %v5189
    %v5374 = vpop.f32.mrf.mxu0
    %5375 = vmatmul.f32.gmra.mxu0 %v5196
    %v5376 = vpop.f32.mrf.mxu0
    %5377 = vdwg.mxu0
    %5378 = vmatpush.msra.mxu0 %v5234
    %5379 = vmatpush.msra.mxu0 %v5233
    %5380 = vmatpush.msra.mxu0 %v5232
    %5381 = vmatpush.msra.mxu0 %v5231
    %5382 = vmatpush.msra.mxu0 %v5230
    %5383 = vmatpush.msra.mxu0 %v5229
    %5384 = vmatpush.msra.mxu0 %v5228
    %5385 = vmatpush.msra.mxu0 %v5227
    %5386 = vmatpush.msra.mxu0 %v5226
    %5387 = vmatpush.msra.mxu0 %v5225
    %5388 = vmatpush.msra.mxu0 %v5224
    %5389 = vmatpush.msra.mxu0 %v5223
    %5390 = vmatpush.msra.mxu0 %v5222
    %5391 = vmatpush.msra.mxu0 %v5221
    %5392 = vmatpush.msra.mxu0 %v5220
    %5393 = vmatpush.msra.mxu0 %v5219
    %5394 = vmatmul.f32.gmra.mxu0 %v5092
    %v5395 = vpop.f32.mrf.mxu0
    %v5396 = vadd.f32 %v5337, %v5395
    %5397 = vmatmul.f32.gmra.mxu0 %v5099
    %v5398 = vpop.f32.mrf.mxu0
    %v5399 = vadd.f32 %v5340, %v5398
    %5400 = vmatmul.f32.gmra.mxu0 %v5106
    %v5401 = vpop.f32.mrf.mxu0
    %v5402 = vadd.f32 %v5343, %v5401
    %5403 = vmatmul.f32.gmra.mxu0 %v5113
    %v5404 = vpop.f32.mrf.mxu0
    %v5405 = vadd.f32 %v5346, %v5404
    %5406 = vmatmul.f32.gmra.mxu0 %v5120
    %v5407 = vpop.f32.mrf.mxu0
    %v5408 = vadd.f32 %v5349, %v5407
    %5409 = vmatmul.f32.gmra.mxu0 %v5127
    %v5410 = vpop.f32.mrf.mxu0
    %5411 = vmatmul.f32.gmra.mxu0 %v5134
    %v5412 = vpop.f32.mrf.mxu0
    %5413 = vmatmul.f32.gmra.mxu0 %v5141
    %v5414 = vpop.f32.mrf.mxu0
    %5415 = vmatmul.f32.gmra.mxu0 %v5148
    %v5416 = vpop.f32.mrf.mxu0
    %v5417 = vadd.f32 %v5358, %v5416
    %5418 = vmatmul.f32.gmra.mxu0 %v5155
    %v5419 = vpop.f32.mrf.mxu0
    %v5420 = vadd.f32 %v5361, %v5419
    %5421 = vmatmul.f32.gmra.mxu0 %v5162
    %v5422 = vpop.f32.mrf.mxu0
    %v5423 = vadd.f32 %v5364, %v5422
    %5424 = vmatmul.f32.gmra.mxu0 %v5169
    %v5425 = vpop.f32.mrf.mxu0
    %v5426 = vadd.f32 %v5367, %v5425
    %5427 = vmatmul.f32.gmra.mxu0 %v5176
    %v5428 = vpop.f32.mrf.mxu0
    %v5429 = vadd.f32 %v5370, %v5428
    %5430 = vmatmul.f32.gmra.mxu0 %v5183
    %v5431 = vpop.f32.mrf.mxu0
    %5432 = vmatmul.f32.gmra.mxu0 %v5190
    %v5433 = vpop.f32.mrf.mxu0
    %5434 = vmatmul.f32.gmra.mxu0 %v5197
    %v5435 = vpop.f32.mrf.mxu0
    %5436 = vdwg.mxu0
    %5437 = vmatpush.msra.mxu0 %v5250
    %5438 = vmatpush.msra.mxu0 %v5249
    %5439 = vmatpush.msra.mxu0 %v5248
    %5440 = vmatpush.msra.mxu0 %v5247
    %5441 = vmatpush.msra.mxu0 %v5246
    %5442 = vmatpush.msra.mxu0 %v5245
    %5443 = vmatpush.msra.mxu0 %v5244
    %5444 = vmatpush.msra.mxu0 %v5243
    %5445 = vmatpush.msra.mxu0 %v5242
    %5446 = vmatpush.msra.mxu0 %v5241
    %5447 = vmatpush.msra.mxu0 %v5240
    %5448 = vmatpush.msra.mxu0 %v5239
    %5449 = vmatpush.msra.mxu0 %v5238
    %5450 = vmatpush.msra.mxu0 %v5237
    %5451 = vmatpush.msra.mxu0 %v5236
    %5452 = vmatpush.msra.mxu0 %v5235
    %5453 = vmatmul.f32.gmra.mxu0 %v5093
    %v5454 = vpop.f32.mrf.mxu0
    %v5455 = vadd.f32 %v5396, %v5454
    %5456 = vmatmul.f32.gmra.mxu0 %v5100
    %v5457 = vpop.f32.mrf.mxu0
    %v5458 = vadd.f32 %v5399, %v5457
    %5459 = vmatmul.f32.gmra.mxu0 %v5107
    %v5460 = vpop.f32.mrf.mxu0
    %v5461 = vadd.f32 %v5402, %v5460
    %5462 = vmatmul.f32.gmra.mxu0 %v5114
    %v5463 = vpop.f32.mrf.mxu0
    %v5464 = vadd.f32 %v5405, %v5463
    %5465 = vmatmul.f32.gmra.mxu0 %v5121
    %v5466 = vpop.f32.mrf.mxu0
    %v5467 = vadd.f32 %v5408, %v5466
    %5468 = vmatmul.f32.gmra.mxu0 %v5128
    %v5469 = vpop.f32.mrf.mxu0
    %5470 = vmatmul.f32.gmra.mxu0 %v5135
    %v5471 = vpop.f32.mrf.mxu0
    %5472 = vmatmul.f32.gmra.mxu0 %v5142
    %v5473 = vpop.f32.mrf.mxu0
    %5474 = vmatmul.f32.gmra.mxu0 %v5149
    %v5475 = vpop.f32.mrf.mxu0
    %v5476 = vadd.f32 %v5417, %v5475
    %5477 = vmatmul.f32.gmra.mxu0 %v5156
    %v5478 = vpop.f32.mrf.mxu0
    %v5479 = vadd.f32 %v5420, %v5478
    %5480 = vmatmul.f32.gmra.mxu0 %v5163
    %v5481 = vpop.f32.mrf.mxu0
    %v5482 = vadd.f32 %v5423, %v5481
    %5483 = vmatmul.f32.gmra.mxu0 %v5170
    %v5484 = vpop.f32.mrf.mxu0
    %v5485 = vadd.f32 %v5426, %v5484
    %5486 = vmatmul.f32.gmra.mxu0 %v5177
    %v5487 = vpop.f32.mrf.mxu0
    %v5488 = vadd.f32 %v5429, %v5487
    %5489 = vmatmul.f32.gmra.mxu0 %v5184
    %v5490 = vpop.f32.mrf.mxu0
    %5491 = vmatmul.f32.gmra.mxu0 %v5191
    %v5492 = vpop.f32.mrf.mxu0
    %5493 = vmatmul.f32.gmra.mxu0 %v5198
    %v5494 = vpop.f32.mrf.mxu0
    %5495 = vdwg.mxu0
    %5496 = vmatpush.msra.mxu0 %v5266
    %5497 = vmatpush.msra.mxu0 %v5265
    %5498 = vmatpush.msra.mxu0 %v5264
    %5499 = vmatpush.msra.mxu0 %v5263
    %5500 = vmatpush.msra.mxu0 %v5262
    %5501 = vmatpush.msra.mxu0 %v5261
    %5502 = vmatpush.msra.mxu0 %v5260
    %5503 = vmatpush.msra.mxu0 %v5259
    %5504 = vmatpush.msra.mxu0 %v5258
    %5505 = vmatpush.msra.mxu0 %v5257
    %5506 = vmatpush.msra.mxu0 %v5256
    %5507 = vmatpush.msra.mxu0 %v5255
    %5508 = vmatpush.msra.mxu0 %v5254
    %5509 = vmatpush.msra.mxu0 %v5253
    %5510 = vmatpush.msra.mxu0 %v5252
    %5511 = vmatpush.msra.mxu0 %v5251
    %5512 = vmatmul.f32.gmra.mxu0 %v5094
    %v5513 = vpop.f32.mrf.mxu0
    %v5514 = vadd.f32 %v5455, %v5513
    %5515 = vmatmul.f32.gmra.mxu0 %v5101
    %v5516 = vpop.f32.mrf.mxu0
    %v5517 = vadd.f32 %v5458, %v5516
    %5518 = vmatmul.f32.gmra.mxu0 %v5108
    %v5519 = vpop.f32.mrf.mxu0
    %v5520 = vadd.f32 %v5461, %v5519
    %5521 = vmatmul.f32.gmra.mxu0 %v5115
    %v5522 = vpop.f32.mrf.mxu0
    %v5523 = vadd.f32 %v5464, %v5522
    %5524 = vmatmul.f32.gmra.mxu0 %v5122
    %v5525 = vpop.f32.mrf.mxu0
    %v5526 = vadd.f32 %v5467, %v5525
    %5527 = vmatmul.f32.gmra.mxu0 %v5129
    %v5528 = vpop.f32.mrf.mxu0
    %5529 = vmatmul.f32.gmra.mxu0 %v5136
    %v5530 = vpop.f32.mrf.mxu0
    %5531 = vmatmul.f32.gmra.mxu0 %v5143
    %v5532 = vpop.f32.mrf.mxu0
    %5533 = vmatmul.f32.gmra.mxu0 %v5150
    %v5534 = vpop.f32.mrf.mxu0
    %v5535 = vadd.f32 %v5476, %v5534
    %5536 = vmatmul.f32.gmra.mxu0 %v5157
    %v5537 = vpop.f32.mrf.mxu0
    %v5538 = vadd.f32 %v5479, %v5537
    %5539 = vmatmul.f32.gmra.mxu0 %v5164
    %v5540 = vpop.f32.mrf.mxu0
    %v5541 = vadd.f32 %v5482, %v5540
    %5542 = vmatmul.f32.gmra.mxu0 %v5171
    %v5543 = vpop.f32.mrf.mxu0
    %v5544 = vadd.f32 %v5485, %v5543
    %5545 = vmatmul.f32.gmra.mxu0 %v5178
    %v5546 = vpop.f32.mrf.mxu0
    %v5547 = vadd.f32 %v5488, %v5546
    %5548 = vmatmul.f32.gmra.mxu0 %v5185
    %v5549 = vpop.f32.mrf.mxu0
    %5550 = vmatmul.f32.gmra.mxu0 %v5192
    %v5551 = vpop.f32.mrf.mxu0
    %5552 = vmatmul.f32.gmra.mxu0 %v5199
    %v5553 = vpop.f32.mrf.mxu0
    %5554 = vdwg.mxu0
    %5555 = vmatpush.msra.mxu0 %v5282
    %5556 = vmatpush.msra.mxu0 %v5281
    %5557 = vmatpush.msra.mxu0 %v5280
    %5558 = vmatpush.msra.mxu0 %v5279
    %5559 = vmatpush.msra.mxu0 %v5278
    %5560 = vmatpush.msra.mxu0 %v5277
    %5561 = vmatpush.msra.mxu0 %v5276
    %5562 = vmatpush.msra.mxu0 %v5275
    %5563 = vmatpush.msra.mxu0 %v5274
    %5564 = vmatpush.msra.mxu0 %v5273
    %5565 = vmatpush.msra.mxu0 %v5272
    %5566 = vmatpush.msra.mxu0 %v5271
    %5567 = vmatpush.msra.mxu0 %v5270
    %5568 = vmatpush.msra.mxu0 %v5269
    %5569 = vmatpush.msra.mxu0 %v5268
    %5570 = vmatpush.msra.mxu0 %v5267
    %5571 = vmatmul.f32.gmra.mxu0 %v5095
    %v5572 = vpop.f32.mrf.mxu0
    %v5573 = vadd.f32 %v5514, %v5572
    %5574 = vmatmul.f32.gmra.mxu0 %v5102
    %v5575 = vpop.f32.mrf.mxu0
    %v5576 = vadd.f32 %v5517, %v5575
    %5577 = vmatmul.f32.gmra.mxu0 %v5109
    %v5578 = vpop.f32.mrf.mxu0
    %v5579 = vadd.f32 %v5520, %v5578
    %5580 = vmatmul.f32.gmra.mxu0 %v5116
    %v5581 = vpop.f32.mrf.mxu0
    %v5582 = vadd.f32 %v5523, %v5581
    %5583 = vmatmul.f32.gmra.mxu0 %v5123
    %v5584 = vpop.f32.mrf.mxu0
    %v5585 = vadd.f32 %v5526, %v5584
    %5586 = vmatmul.f32.gmra.mxu0 %v5130
    %v5587 = vpop.f32.mrf.mxu0
    %5588 = vmatmul.f32.gmra.mxu0 %v5137
    %v5589 = vpop.f32.mrf.mxu0
    %5590 = vmatmul.f32.gmra.mxu0 %v5144
    %v5591 = vpop.f32.mrf.mxu0
    %5592 = vmatmul.f32.gmra.mxu0 %v5151
    %v5593 = vpop.f32.mrf.mxu0
    %v5594 = vadd.f32 %v5535, %v5593
    %5595 = vmatmul.f32.gmra.mxu0 %v5158
    %v5596 = vpop.f32.mrf.mxu0
    %v5597 = vadd.f32 %v5538, %v5596
    %5598 = vmatmul.f32.gmra.mxu0 %v5165
    %v5599 = vpop.f32.mrf.mxu0
    %v5600 = vadd.f32 %v5541, %v5599
    %5601 = vmatmul.f32.gmra.mxu0 %v5172
    %v5602 = vpop.f32.mrf.mxu0
    %v5603 = vadd.f32 %v5544, %v5602
    %5604 = vmatmul.f32.gmra.mxu0 %v5179
    %v5605 = vpop.f32.mrf.mxu0
    %v5606 = vadd.f32 %v5547, %v5605
    %5607 = vmatmul.f32.gmra.mxu0 %v5186
    %v5608 = vpop.f32.mrf.mxu0
    %5609 = vmatmul.f32.gmra.mxu0 %v5193
    %v5610 = vpop.f32.mrf.mxu0
    %5611 = vmatmul.f32.gmra.mxu0 %v5200
    %v5612 = vpop.f32.mrf.mxu0
    %5613 = vdwg.mxu0
    %5614 = vmatpush.msra.mxu0 %v5298
    %5615 = vmatpush.msra.mxu0 %v5297
    %5616 = vmatpush.msra.mxu0 %v5296
    %5617 = vmatpush.msra.mxu0 %v5295
    %5618 = vmatpush.msra.mxu0 %v5294
    %5619 = vmatpush.msra.mxu0 %v5293
    %5620 = vmatpush.msra.mxu0 %v5292
    %5621 = vmatpush.msra.mxu0 %v5291
    %5622 = vmatpush.msra.mxu0 %v5290
    %5623 = vmatpush.msra.mxu0 %v5289
    %5624 = vmatpush.msra.mxu0 %v5288
    %5625 = vmatpush.msra.mxu0 %v5287
    %5626 = vmatpush.msra.mxu0 %v5286
    %5627 = vmatpush.msra.mxu0 %v5285
    %5628 = vmatpush.msra.mxu0 %v5284
    %5629 = vmatpush.msra.mxu0 %v5283
    %5630 = vmatmul.f32.gmra.mxu0 %v5096
    %v5631 = vpop.f32.mrf.mxu0
    %v5632 = vadd.f32 %v5573, %v5631
    %5633 = vmatmul.f32.gmra.mxu0 %v5103
    %v5634 = vpop.f32.mrf.mxu0
    %v5635 = vadd.f32 %v5576, %v5634
    %5636 = vmatmul.f32.gmra.mxu0 %v5110
    %v5637 = vpop.f32.mrf.mxu0
    %v5638 = vadd.f32 %v5579, %v5637
    %5639 = vmatmul.f32.gmra.mxu0 %v5117
    %v5640 = vpop.f32.mrf.mxu0
    %v5641 = vadd.f32 %v5582, %v5640
    %5642 = vmatmul.f32.gmra.mxu0 %v5124
    %v5643 = vpop.f32.mrf.mxu0
    %v5644 = vadd.f32 %v5585, %v5643
    %5645 = vmatmul.f32.gmra.mxu0 %v5131
    %v5646 = vpop.f32.mrf.mxu0
    %5647 = vmatmul.f32.gmra.mxu0 %v5138
    %v5648 = vpop.f32.mrf.mxu0
    %5649 = vmatmul.f32.gmra.mxu0 %v5145
    %v5650 = vpop.f32.mrf.mxu0
    %5651 = vmatmul.f32.gmra.mxu0 %v5152
    %v5652 = vpop.f32.mrf.mxu0
    %v5653 = vadd.f32 %v5594, %v5652
    %5654 = vmatmul.f32.gmra.mxu0 %v5159
    %v5655 = vpop.f32.mrf.mxu0
    %v5656 = vadd.f32 %v5597, %v5655
    %5657 = vmatmul.f32.gmra.mxu0 %v5166
    %v5658 = vpop.f32.mrf.mxu0
    %v5659 = vadd.f32 %v5600, %v5658
    %5660 = vmatmul.f32.gmra.mxu0 %v5173
    %v5661 = vpop.f32.mrf.mxu0
    %v5662 = vadd.f32 %v5603, %v5661
    %5663 = vmatmul.f32.gmra.mxu0 %v5180
    %v5664 = vpop.f32.mrf.mxu0
    %v5665 = vadd.f32 %v5606, %v5664
    %5666 = vmatmul.f32.gmra.mxu0 %v5187
    %v5667 = vpop.f32.mrf.mxu0
    %5668 = vmatmul.f32.gmra.mxu0 %v5194
    %v5669 = vpop.f32.mrf.mxu0
    %5670 = vmatmul.f32.gmra.mxu0 %v5201
    %v5671 = vpop.f32.mrf.mxu0
    %5672 = vdwg.mxu0
    %5673 = vmatpush.msra.mxu0 %v5314
    %5674 = vmatpush.msra.mxu0 %v5313
    %5675 = vmatpush.msra.mxu0 %v5312
    %5676 = vmatpush.msra.mxu0 %v5311
    %5677 = vmatpush.msra.mxu0 %v5310
    %5678 = vmatpush.msra.mxu0 %v5309
    %5679 = vmatpush.msra.mxu0 %v5308
    %5680 = vmatpush.msra.mxu0 %v5307
    %5681 = vmatpush.msra.mxu0 %v5306
    %5682 = vmatpush.msra.mxu0 %v5305
    %5683 = vmatpush.msra.mxu0 %v5304
    %5684 = vmatpush.msra.mxu0 %v5303
    %5685 = vmatpush.msra.mxu0 %v5302
    %5686 = vmatpush.msra.mxu0 %v5301
    %5687 = vmatpush.msra.mxu0 %v5300
    %5688 = vmatpush.msra.mxu0 %v5299
    %5689 = vmatmul.f32.gmra.mxu0 %v5097
    %v5690 = vpop.f32.mrf.mxu0
    %v5691 = vadd.f32 %v5632, %v5690
    %5692 = vmatmul.f32.gmra.mxu0 %v5104
    %v5693 = vpop.f32.mrf.mxu0
    %v5694 = vadd.f32 %v5635, %v5693
    %5695 = vmatmul.f32.gmra.mxu0 %v5111
    %v5696 = vpop.f32.mrf.mxu0
    %v5697 = vadd.f32 %v5638, %v5696
    %5698 = vmatmul.f32.gmra.mxu0 %v5118
    %v5699 = vpop.f32.mrf.mxu0
    %v5700 = vadd.f32 %v5641, %v5699
    %5701 = vmatmul.f32.gmra.mxu0 %v5125
    %v5702 = vpop.f32.mrf.mxu0
    %v5703 = vadd.f32 %v5644, %v5702
    %5704 = vmatmul.f32.gmra.mxu0 %v5132
    %v5705 = vpop.f32.mrf.mxu0
    %5706 = vmatmul.f32.gmra.mxu0 %v5139
    %v5707 = vpop.f32.mrf.mxu0
    %5708 = vmatmul.f32.gmra.mxu0 %v5146
    %v5709 = vpop.f32.mrf.mxu0
    %5710 = vmatmul.f32.gmra.mxu0 %v5153
    %v5711 = vpop.f32.mrf.mxu0
    %v5712 = vadd.f32 %v5653, %v5711
    %5713 = vmatmul.f32.gmra.mxu0 %v5160
    %v5714 = vpop.f32.mrf.mxu0
    %v5715 = vadd.f32 %v5656, %v5714
    %5716 = vmatmul.f32.gmra.mxu0 %v5167
    %v5717 = vpop.f32.mrf.mxu0
    %v5718 = vadd.f32 %v5659, %v5717
    %5719 = vmatmul.f32.gmra.mxu0 %v5174
    %v5720 = vpop.f32.mrf.mxu0
    %v5721 = vadd.f32 %v5662, %v5720
    %5722 = vmatmul.f32.gmra.mxu0 %v5181
    %v5723 = vpop.f32.mrf.mxu0
    %v5724 = vadd.f32 %v5665, %v5723
    %5725 = vmatmul.f32.gmra.mxu0 %v5188
    %v5726 = vpop.f32.mrf.mxu0
    %5727 = vmatmul.f32.gmra.mxu0 %v5195
    %v5728 = vpop.f32.mrf.mxu0
    %5729 = vmatmul.f32.gmra.mxu0 %v5202
    %v5730 = vpop.f32.mrf.mxu0
    %5731 = vdwg.mxu0
    %v5732 = vld [vmem:[%s17] sm:$0xff]
    %v5733 = vld [vmem:[%s17 + $0x8] sm:$0xff]
    %v5734 = vld [vmem:[%s17 + $0x10] sm:$0xff]
    %v5735 = vld [vmem:[%s17 + $0x18] sm:$0xff]
    %v5736 = vld [vmem:[%s17 + $0x20] sm:$0xff]
    %v5737 = vld [vmem:[%s17 + $0x28] sm:$0xff]
    %v5738 = vld [vmem:[%s17 + $0x30] sm:$0xff]
    %v5739 = vld [vmem:[%s17 + $0x38] sm:$0xff]
    %v5740 = vld [vmem:[%s18] sm:$0x1]
    %v5742 = vperm.slane %v5740, 0
    %v5744 = vsel %vm2869, %v3873, 0
    %v5746 = vsel %vm2869, %v3874, 0
    %v5748 = vsel %vm2869, %v3875, 0
    %v5750 = vsel %vm2869, %v3876, 0
    %v5752 = vsel %vm2869, %v3877, 0
    %v5754 = vsel %vm2869, %v3878, 0
    %v5757 = vsel %vm2869, %v3879, 0
    %v5760 = vsel %vm2869, %v3880, 0
    %v5762 = vsel %vm2869, %v3881, 0
    %v5764 = vsel %vm2869, %v3882, 0
    %v5766 = vsel %vm2869, %v3883, 0
    %v5768 = vsel %vm2869, %v3884, 0
    %v5770 = vsel %vm2869, %v3885, 0
    %v5772 = vsel %vm2869, %v3886, 0
    %v5775 = vsel %vm2869, %v3887, 0
    %v5778 = vsel %vm2869, %v3888, 0
    %5780 = vmatpush.msra.mxu0 0.0
    %5781 = vmatpush.msra.mxu0 0.0
    %5782 = vmatpush.msra.mxu0 0.0
    %5783 = vmatpush.msra.mxu0 0.0
    %5784 = vmatpush.msra.mxu0 0.0
    %5785 = vmatpush.msra.mxu0 0.0
    %5786 = vmatpush.msra.mxu0 0.0
    %5787 = vmatpush.msra.mxu0 0.0
    %5788 = vmatpush.msra.mxu0 %v5739
    %5789 = vmatpush.msra.mxu0 %v5738
    %5790 = vmatpush.msra.mxu0 %v5737
    %5791 = vmatpush.msra.mxu0 %v5736
    %5792 = vmatpush.msra.mxu0 %v5735
    %5793 = vmatpush.msra.mxu0 %v5734
    %5794 = vmatpush.msra.mxu0 %v5733
    %5795 = vmatpush.msra.mxu0 %v5732
    %5796 = vmatmul.f32.gmra.mxu0 %v5744
    %v5797 = vpop.f32.mrf.mxu0
    %v5798 = vadd.f32 %v5742, %v5797
    %5799 = vmatmul.f32.gmra.mxu0 %v5746
    %v5800 = vpop.f32.mrf.mxu0
    %v5801 = vadd.f32 %v5742, %v5800
    %5802 = vmatmul.f32.gmra.mxu0 %v5748
    %v5803 = vpop.f32.mrf.mxu0
    %v5804 = vadd.f32 %v5742, %v5803
    %5805 = vmatmul.f32.gmra.mxu0 %v5750
    %v5806 = vpop.f32.mrf.mxu0
    %v5807 = vadd.f32 %v5742, %v5806
    %5808 = vmatmul.f32.gmra.mxu0 %v5752
    %v5809 = vpop.f32.mrf.mxu0
    %v5810 = vadd.f32 %v5742, %v5809
    %5811 = vmatmul.f32.gmra.mxu0 %v5754
    %v5812 = vpop.f32.mrf.mxu0
    %5813 = vmatmul.f32.gmra.mxu0 %v5757
    %v5814 = vpop.f32.mrf.mxu0
    %5815 = vmatmul.f32.gmra.mxu0 %v5760
    %v5816 = vpop.f32.mrf.mxu0
    %5817 = vmatmul.f32.gmra.mxu0 %v5762
    %v5818 = vpop.f32.mrf.mxu0
    %v5819 = vadd.f32 %v5742, %v5818
    %5820 = vmatmul.f32.gmra.mxu0 %v5764
    %v5821 = vpop.f32.mrf.mxu0
    %v5822 = vadd.f32 %v5742, %v5821
    %5823 = vmatmul.f32.gmra.mxu0 %v5766
    %v5824 = vpop.f32.mrf.mxu0
    %v5825 = vadd.f32 %v5742, %v5824
    %5826 = vmatmul.f32.gmra.mxu0 %v5768
    %v5827 = vpop.f32.mrf.mxu0
    %v5828 = vadd.f32 %v5742, %v5827
    %5829 = vmatmul.f32.gmra.mxu0 %v5770
    %v5830 = vpop.f32.mrf.mxu0
    %v5831 = vadd.f32 %v5742, %v5830
    %5832 = vmatmul.f32.gmra.mxu0 %v5772
    %v5833 = vpop.f32.mrf.mxu0
    %5834 = vmatmul.f32.gmra.mxu0 %v5775
    %v5835 = vpop.f32.mrf.mxu0
    %5836 = vmatmul.f32.gmra.mxu0 %v5778
    %v5837 = vpop.f32.mrf.mxu0
    %5838 = vdwg.mxu0
    %v5839 = vadd.f32 %v5691, %v5798
    %v5840 = vadd.f32 %v5694, %v5801
    %v5841 = vadd.f32 %v5697, %v5804
    %v5842 = vadd.f32 %v5700, %v5807
    %v5843 = vadd.f32 %v5703, %v5810
    %v5844 = vadd.f32 %v5712, %v5819
    %v5845 = vadd.f32 %v5715, %v5822
    %v5846 = vadd.f32 %v5718, %v5825
    %v5847 = vadd.f32 %v5721, %v5828
    %v5848 = vadd.f32 %v5724, %v5831
    %vm5849 = vcmp.ge.f32.partialorder %v5839, 0.0
    %vm5850 = vcmp.ge.f32.partialorder %v5840, 0.0
    %vm5851 = vcmp.ge.f32.partialorder %v5841, 0.0
    %vm5852 = vcmp.ge.f32.partialorder %v5842, 0.0
    %vm5853 = vcmp.ge.f32.partialorder %v5843, 0.0
    %vm5854 = vcmp.ge.f32.partialorder %v5844, 0.0
    %vm5855 = vcmp.ge.f32.partialorder %v5845, 0.0
    %vm5856 = vcmp.ge.f32.partialorder %v5846, 0.0
    %vm5857 = vcmp.ge.f32.partialorder %v5847, 0.0
    %vm5858 = vcmp.ge.f32.partialorder %v5848, 0.0
    %v5859 = vmul.f32 %v5839, 0.01
    %v5860 = vmul.f32 %v5840, 0.01
    %v5861 = vmul.f32 %v5841, 0.01
    %v5862 = vmul.f32 %v5842, 0.01
    %v5863 = vmul.f32 %v5843, 0.01
    %v5864 = vmul.f32 %v5844, 0.01
    %v5865 = vmul.f32 %v5845, 0.01
    %v5866 = vmul.f32 %v5846, 0.01
    %v5867 = vmul.f32 %v5847, 0.01
    %v5868 = vmul.f32 %v5848, 0.01
    %v5869 = vsel %vm5849, %v5839, %v5859
    %v5870 = vsel %vm5850, %v5840, %v5860
    %v5871 = vsel %vm5851, %v5841, %v5861
    %v5872 = vsel %vm5852, %v5842, %v5862
    %v5873 = vsel %vm5853, %v5843, %v5863
    %v5874 = vsel %vm5854, %v5844, %v5864
    %v5875 = vsel %vm5855, %v5845, %v5865
    %v5876 = vsel %vm5856, %v5846, %v5866
    %v5877 = vsel %vm5857, %v5847, %v5867
    %v5878 = vsel %vm5858, %v5848, %v5868
    %5879 = vst [vmem:[#allocation11] sm:$0xff] %v5869
    %5880 = vst [vmem:[#allocation11 + $0x8] sm:$0xff] %v5870
    %5881 = vst [vmem:[#allocation11 + $0x10] sm:$0xff] %v5871
    %5882 = vst [vmem:[#allocation11 + $0x18] sm:$0xff] %v5872
    %5883 = vst [vmem:[#allocation11 + $0x20] sm:$0xff] %v5873
    %s5884 = scalar_lea.vmem [#allocation11], 40
    %5885 = vst [vmem:[%s5884] sm:$0xff] %v5874
    %5886 = vst [vmem:[%s5884 + $0x8] sm:$0xff] %v5875
    %5887 = vst [vmem:[%s5884 + $0x10] sm:$0xff] %v5876
    %5888 = vst [vmem:[%s5884 + $0x18] sm:$0xff] %v5877
    %5889 = vst [vmem:[%s5884 + $0x20] sm:$0xff] %v5878
    // Predicated region
    $region82: #{tpu_custom_call.1} parent=1 // pred_check
      _
    $region83: #{tpu_custom_call.1} parent=1 // pred_check_branch
      %5891 = sbr.rel (0) target = $region85
    $region84: #{tpu_custom_call.1} parent=1 // pred_region
      %5893 = vsyncadd [#allocation10], 0
      %s5894 = sshll.u32 [#allocation11], 4
      %s5895 = int_to_ptr.vmem [resolvable:$true] %s5894
      %s5896 = sshll.u32 %s19, 4
      %s5897 = int_to_ptr.hbm [resolvable:$true] %s5896
      %5902 = dma.vmem_to_hbm [thread:$0]  %s5895, 1280, %s5897, [#allocation10], 128, 128, 8
    $region85: #{tpu_custom_call.1} parent=1 // pred_fallthru
      _
    // Predicated region
    $region86: #{tpu_custom_call.1} parent=1 // pred_check
      _
    $region87: #{tpu_custom_call.1} parent=1 // pred_check_branch
      %5904 = sbr.rel (0) target = $region89
    $region88: #{tpu_custom_call.1} parent=1 // pred_region
      %5906 = dma.done [#allocation10], 1280
    $region89: #{tpu_custom_call.1} parent=1 // pred_fallthru
      _
    %5907 = vsyncpa [#allocation9], 1
    %5908 = vsyncpa [#allocation10], 1

</llo_original>
